<compile_context>
chip_gen: v5e
topology: v5e:2x2
jax: 0.10.0
libtpu: 0.0.40
codegen_flags: <defaults>
</compile_context>

<pallas_src>
import functools

import jax
import jax.numpy as jnp
from jax.experimental import pallas as pl
from jax.experimental.pallas import tpu as pltpu

NUM_GROUPS = 4      # GroupNorm(num_groups=4, affine=False)
GN_EPS = 1e-3
LEAKY_SLOPE = 0.01  # F.leaky_relu default


def self_attention_kernel(x_ref, xkv_ref, gmask_ref, *rest,
                          num_heads, n, dense_store, heads_leading):
    if dense_store:
        (wqf_ref, wkv_ref, wz_ref, w2_ref, bias_ref, out_ref, attn_ref) = rest
        sel_ref = rowmask_ref = None
    else:
        (sel_ref, rowmask_ref, wqf_ref, wkv_ref, wz_ref, w2_ref,
         bias_ref, out_ref, attn_ref) = rest

    x = x_ref[...]                      # (bt, r,  d) f32, r  = n * t
    xkv = xkv_ref[...]                  # (bt, rk, d) f32, rk = n * t_kv
    bt, r, d = x.shape
    rk = xkv.shape[1]
    t = r // n
    t_kv = rk // n
    dh = d // num_heads
    gs = d // NUM_GROUPS

    gmask = gmask_ref[...]              # (d, d) block-diag 0/1 group-broadcast

    def group_norm(z):
        # nn.GroupNorm(num_groups=4, affine=False, eps=1e-3): per-(batch, group)
        # stats over rows*gs values.  Two-pass (mean first, then squared
        # deviations) to avoid E[x^2]-mean^2 cancellation; group stats are
        # broadcast back to channels with one block-diagonal matmul so the whole
        # thing stays lane-dense.
        rows = z.shape[1]
        inv_cnt = 1.0 / (rows * gs)
        ch_sum = jnp.sum(z, axis=1)                                     # (bt, d)
        mean = jnp.dot(ch_sum, gmask, preferred_element_type=jnp.float32) * inv_cnt
        zc = z - mean[:, None, :]
        ch_sq = jnp.sum(zc * zc, axis=1)                                # (bt, d)
        var = jnp.dot(ch_sq, gmask, preferred_element_type=jnp.float32) * inv_cnt
        return zc * jax.lax.rsqrt(var + GN_EPS)[:, None, :]

    # ---- LN_1 / LN_2 (f32 stats), bf16 operands for the fused projections -----
    xn = group_norm(x)
    xkvn = group_norm(xkv)
    xn2 = xn.reshape(bt * r, d).astype(jnp.bfloat16)
    xkv2 = xkvn.reshape(bt * rk, d).astype(jnp.bfloat16)

    # Fused [Q | FC_1] and [K | V] projections (one wide matmul each, f32 accum).
    qf = jnp.dot(xn2, wqf_ref[...], preferred_element_type=jnp.float32)   # (bt*r, 2d)
    kv = jnp.dot(xkv2, wkv_ref[...], preferred_element_type=jnp.float32)  # (bt*rk, 2d)

    q = group_norm(qf[:, :d].reshape(bt, r, d))     # LN_3
    k = group_norm(kv[:, :d].reshape(bt, rk, d))    # LN_4
    v = kv[:, d:]                                   # (bt*rk, d)

    bias = bias_ref[...]                            # (2, d): [b1 ; bz + b2]
    b1 = bias[0:1, :]
    b_out = bias[1:2, :]

    # ---- MLP branch: FC_2(leaky_relu(FC_1(_in_f))); FC_1 already fused above.
    # `u` starts as the MLP output plus the fused output biases; the per-head
    # attention contributions (folded W_Z) accumulate on top of it.
    h1 = qf[:, d:] + b1
    h1 = jnp.where(h1 > 0, h1, LEAKY_SLOPE * h1)
    u = jnp.dot(h1.astype(jnp.bfloat16), w2_ref[...],
                preferred_element_type=jnp.float32) + b_out               # (bt*r, d)

    # ---- multi-head attention (heads = contiguous dh-wide channel blocks) -----
    scale = 1.0 / (dh ** 0.5)
    # Score matmul / softmax stay f32: attn weights are a direct module output.
    q3 = (q * scale).reshape(bt * n, t, d)
    k3 = k.reshape(bt * n, t_kv, d)
    v3 = v.astype(jnp.bfloat16).reshape(bt * n, t_kv, d)
    wz = wz_ref[...]                                # (d, d) bf16

    if not dense_store:
        sel = sel_ref[...]                          # (t_kv, flat) resident input
        rowmask = rowmask_ref[...]                  # (r,    flat) resident input
        flat = sel.shape[1]

    for h in range(num_heads):                      # static loop over heads
        sl = slice(h * dh, (h + 1) * dh)
        logits = jnp.einsum('zqd,zkd->zqk', q3[:, :, sl], k3[:, :, sl],
                            preferred_element_type=jnp.float32)           # (bt*n, t, t_kv)
        logits = logits - jnp.max(logits, axis=-1, keepdims=True)
        p = jnp.exp(logits)
        attn = p * pl.reciprocal(jnp.sum(p, axis=-1, keepdims=True), approx=True)

        if dense_store:
            # t_kv already lane-dense: store (bb, r, t_kv) slab directly.
            attn_ref[h] = attn.reshape(bt, r, t_kv).astype(attn_ref.dtype)
        else:
            # lane-dense flatten: (bt*n, t, t_kv) -> (bt, r*t_kv) via selector
            # matmul + masked sublane reduce (used when t_kv under-fills lanes).
            # TODO(synk): for large n*t with small t_kv, chunk this reduce per n
            # to bound the (bt, r, flat) intermediate.
            z = jnp.dot(attn.reshape(bt * r, t_kv), sel,
                        preferred_element_type=jnp.float32)               # (bt*r, flat)
            flat_h = jnp.sum(z.reshape(bt, r, flat) * rowmask[None, :, :], axis=1)
            if heads_leading:
                attn_ref[h] = flat_h.astype(attn_ref.dtype)                # dense slab
            else:
                attn_ref[:, h, :] = flat_h.astype(attn_ref.dtype)          # fallback

        ctx = jnp.einsum('zqk,zkd->zqd', attn.astype(jnp.bfloat16), v3[:, :, sl],
                         preferred_element_type=jnp.float32)               # (bt*n, t, dh)
        u = u + jnp.dot(ctx.reshape(bt * r, dh).astype(jnp.bfloat16), wz[sl, :],
                        preferred_element_type=jnp.float32)

    out_ref[...] = x + u.reshape(bt, r, d)


def _pick_batch_block(b, n, t, t_kv, d, num_heads,
                      target_rows=512, vmem_limit_bytes=48 * 1024 * 1024):
    """Per-step batch block:
       * ~target_rows matmul rows per step (amortize ~0.35us/step, fill MXU M;
         ideally bb*n*t lands on a multiple of 256 for the v6e/v7x MXU),
       * capped by a rough VMEM estimate,
       * capped so the single 'parallel' grid axis keeps >= 2 steps
         (v7x: 2 TensorCores share the grid),
       * and a divisor of b."""
    r, rk = n * t, n * t_kv
    flat = r * t_kv
    dense_store = (t_kv % 128 == 0)
    flatten_tmp = 0 if dense_store else r * flat
    per_batch = 4 * (2 * (2 * r * d + rk * d + num_heads * flat)   # dbl-buffered I/O
                     + 6 * r * d + 3 * rk * d + flatten_tmp)       # intermediates
    bb_cap = max(1, int(0.6 * vmem_limit_bytes) // max(per_batch, 1))
    bb = max(1, min(b, -(-target_rows // r), bb_cap))
    if b >= 2:
        bb = min(bb, b // 2)
    while b % bb:
        bb -= 1
    return max(bb, 1)


def self_attention(in_f, in_f_kv, params, num_heads=4, batch_block=None,
                   attn_dtype=jnp.float32, target_rows=512,
                   vmem_limit_bytes=48 * 1024 * 1024):
    """params = (wq_t, wk_t, wv_t, wz_t, bz, w1_t, b1, w2_t, b2);
    weights pre-transposed to (in, out), biases shaped (1, d).
    attn_dtype=jnp.bfloat16 halves the attention-weight HBM writeback (biggest
    win on v5e)."""
    b, n, t, d = in_f.shape
    t_kv = in_f_kv.shape[2]
    assert d % num_heads == 0 and d % NUM_GROUPS == 0
    wq_t, wk_t, wv_t, wz_t, bz, w1_t, b1, w2_t, b2 = params

    # Host-side weight fusion ([Q|FC_1], [K|V]) + bf16 cast; biases packed.
    wqf = jnp.concatenate([wq_t, w1_t], axis=1).astype(jnp.bfloat16)    # (d, 2d)
    wkv = jnp.concatenate([wk_t, wv_t], axis=1).astype(jnp.bfloat16)    # (d, 2d)
    wz = wz_t.astype(jnp.bfloat16)
    w2 = w2_t.astype(jnp.bfloat16)
    bias = jnp.concatenate([b1, bz + b2], axis=0).astype(jnp.float32)   # (2, d)

    # Constant masks built once on the host (not rebuilt every grid step).
    gs = d // NUM_GROUPS
    ch = jnp.arange(d)
    gmask = (ch[:, None] // gs == ch[None, :] // gs).astype(jnp.float32)  # (d, d)

    # Flatten (n, t) so the kernel sees (rows, d) slabs directly.
    x2 = in_f.astype(jnp.float32).reshape(b, n * t, d)
    xkv2 = in_f_kv.astype(jnp.float32).reshape(b, n * t_kv, d)
    r, rk = n * t, n * t_kv
    flat = r * t_kv

    bb = batch_block if batch_block is not None else _pick_batch_block(
        b, n, t, t_kv, d, num_heads, target_rows, vmem_limit_bytes)
    assert b % bb == 0
    grid = (b // bb,)

    dense_store = (t_kv % 128 == 0)
    # Head-leading attn layout needs the block's second-minor dim (bb) to be a
    # sublane multiple or the full batch; otherwise fall back to (b, H, flat).
    heads_leading = True if dense_store else (bb % 8 == 0 or bb == b)

    const = lambda i: (0, 0)
    in_specs = [
        pl.BlockSpec((bb, r, d), lambda i: (i, 0, 0)),
        pl.BlockSpec((bb, rk, d), lambda i: (i, 0, 0)),
        pl.BlockSpec((d, d), const),                   # gmask (resident)
    ]
    inputs = [x2, xkv2, gmask]
    if not dense_store:
        sel = (jnp.arange(flat)[None, :] % t_kv ==
               jnp.arange(t_kv)[:, None]).astype(jnp.float32)            # (t_kv, flat)
        rowmask = (jnp.arange(flat)[None, :] // t_kv ==
                   jnp.arange(r)[:, None]).astype(jnp.float32)           # (r, flat)
        in_specs += [pl.BlockSpec((t_kv, flat), const),
                     pl.BlockSpec((r, flat), const)]
        inputs += [sel, rowmask]
    in_specs += [
        pl.BlockSpec((d, 2 * d), const),    # [Wq | W1]
        pl.BlockSpec((d, 2 * d), const),    # [Wk | Wv]
        pl.BlockSpec((d, d), const),        # Wz
        pl.BlockSpec((d, d), const),        # W2
        pl.BlockSpec((2, d), const),        # [b1 ; bz + b2]
    ]
    inputs += [wqf, wkv, wz, w2, bias]

    out_spec_x = pl.BlockSpec((bb, r, d), lambda i: (i, 0, 0))
    if dense_store:
        attn_shape = (num_heads, b, r, t_kv)
        attn_spec = pl.BlockSpec((num_heads, bb, r, t_kv), lambda i: (0, i, 0, 0))
    elif heads_leading:
        attn_shape = (num_heads, b, flat)
        attn_spec = pl.BlockSpec((num_heads, bb, flat), lambda i: (0, i, 0))
    else:
        attn_shape = (b, num_heads, flat)
        attn_spec = pl.BlockSpec((bb, num_heads, flat), lambda i: (i, 0, 0))

    kernel = functools.partial(self_attention_kernel, num_heads=num_heads, n=n,
                               dense_store=dense_store, heads_leading=heads_leading)

    grid_spec = pltpu.PrefetchScalarGridSpec(
        num_scalar_prefetch=0,
        grid=grid,
        in_specs=in_specs,
        out_specs=[out_spec_x, attn_spec],
    )

    out2, attn_raw = pl.pallas_call(
        kernel,
        out_shape=(jax.ShapeDtypeStruct((b, r, d), jnp.float32),
                   jax.ShapeDtypeStruct(attn_shape, attn_dtype)),
        grid_spec=grid_spec,
        compiler_params=pltpu.CompilerParams(
            dimension_semantics=("parallel",),
            # 48 MiB is safe on v7x (64 MiB/TC); raise to 64-96 MiB on v5e/v6e
            # when enlarging the batch block.
            vmem_limit_bytes=vmem_limit_bytes),
    )(*inputs)

    out_f = out2.reshape(b, n, t, d)
    if dense_store or heads_leading:
        attn = attn_raw.reshape(num_heads, b, n, t, t_kv).transpose(1, 2, 0, 3, 4)
    else:
        attn = attn_raw.reshape(b, num_heads, n, t, t_kv).transpose(0, 2, 1, 3, 4)
    return out_f, attn


# ------------------------- pure-JAX reference (for checking) -------------------------
def _ref_group_norm(x):
    b, n, t, d = x.shape
    gs = d // NUM_GROUPS
    xg = x.reshape(b, n * t, NUM_GROUPS, gs)
    m = jnp.mean(xg, axis=(1, 3), keepdims=True)
    v = jnp.mean(jnp.square(xg - m), axis=(1, 3), keepdims=True)
    return ((xg - m) * jax.lax.rsqrt(v + GN_EPS)).reshape(b, n, t, d)


def _ref_forward(in_f, in_f_kv, params, num_heads=4):
    wq, wk, wv, wz, bz, w1, b1, w2, b2 = params
    b, n, t, d = in_f.shape
    dh = d // num_heads
    _x = _ref_group_norm(in_f)
    _xkv = _ref_group_norm(in_f_kv)
    q = _ref_group_norm(_x @ wq)
    k = _ref_group_norm(_xkv @ wk)
    v = _xkv @ wv
    def split(z):
        return z.reshape(b, n, -1, num_heads, dh).transpose(0, 1, 3, 2, 4)
    q, k, v = split(q) / jnp.sqrt(jnp.float32(dh)), split(k), split(v)
    logits = jnp.einsum('bnhqd,bnhkd->bnhqk', q, k)
    attn = jax.nn.softmax(logits, axis=-1)
    ctx = jnp.einsum('bnhqk,bnhkd->bnhqd', attn, v)
    ctx = ctx.transpose(0, 1, 3, 2, 4).reshape(b, n, t, d)
    u1 = ctx @ wz + bz[0]
    h1 = _x @ w1 + b1[0]
    h1 = jnp.where(h1 > 0, h1, LEAKY_SLOPE * h1)
    u2 = h1 @ w2 + b2[0]
    return in_f + u1 + u2, attn


if __name__ == "__main__":
    key = jax.random.PRNGKey(0)
    # b=16 so the batch-block picker gives bb=8 -> grid of 2 "parallel" steps
    # and a sublane-aligned, head-leading attention writeback.
    b, n, t, d, H = 16, 2, 8, 32, 4

    keys = jax.random.split(key, 11)
    in_f = jax.random.normal(keys[0], (b, n, t, d), jnp.float32)
    in_f_kv = jax.random.normal(keys[1], (b, n, t, d), jnp.float32)

    # xavier_uniform for all Linear weights (PyTorch shape (out, in) = (d, d)).
    bound = (6.0 / (d + d)) ** 0.5
    def xavier(k_):
        return jax.random.uniform(k_, (d, d), jnp.float32, -bound, bound)
    Wq, Wk, Wv, Wz, W1, W2 = (xavier(k_) for k_ in keys[2:8])
    # SelfAttention.init_weights zero-fills every Linear bias; small non-zero
    # values are used here purely to exercise the bias plumbing vs. the reference.
    bz = 0.05 * jax.random.normal(keys[8], (1, d), jnp.float32)
    b1 = 0.05 * jax.random.normal(keys[9], (1, d), jnp.float32)
    b2 = 0.05 * jax.random.normal(keys[10], (1, d), jnp.float32)

    # weights pre-transposed to (in, out): kernel computes x @ W == x @ W_pt.T
    params = (Wq.T, Wk.T, Wv.T, Wz.T, bz, W1.T, b1, W2.T, b2)

    out_f, attn_w = self_attention(in_f, in_f_kv, params, num_heads=H)
    jax.block_until_ready((out_f, attn_w))

    ref_out, ref_attn = _ref_forward(in_f, in_f_kv, params, num_heads=H)
    assert out_f.shape == (b, n, t, d) and attn_w.shape == (b, n, H, t, t)
    # bf16 matmul operands (f32 accumulation) through the projection / MLP / W_Z
    # chain give ~1e-2 typical absolute error at these magnitudes (1.14e-2 was
    # measured for this recipe); tolerances are set ~3-4x above that.  The
    # softmax path is f32, so attention weights are much tighter.
    assert jnp.allclose(out_f, ref_out, rtol=4e-2, atol=4e-2), \
        float(jnp.max(jnp.abs(out_f - ref_out)))
    assert jnp.allclose(attn_w, ref_attn, rtol=2e-2, atol=2e-2), \
        float(jnp.max(jnp.abs(attn_w - ref_attn)))

    print("KERNEL_OK")
</pallas_src>

<mosaic_0001>
module attributes {stable_mosaic.version = 11 : i64} {
  func.func @self_attention_kernel(%arg0: i32, %arg1: memref<8x16x32xf32, #tpu.memory_space<vmem>>, %arg2: memref<8x16x32xf32, #tpu.memory_space<vmem>>, %arg3: memref<32x32xf32, #tpu.memory_space<vmem>>, %arg4: memref<8x128xf32, #tpu.memory_space<vmem>>, %arg5: memref<16x128xf32, #tpu.memory_space<vmem>>, %arg6: memref<32x64xbf16, #tpu.memory_space<vmem>>, %arg7: memref<32x64xbf16, #tpu.memory_space<vmem>>, %arg8: memref<32x32xbf16, #tpu.memory_space<vmem>>, %arg9: memref<32x32xbf16, #tpu.memory_space<vmem>>, %arg10: memref<2x32xf32, #tpu.memory_space<vmem>>, %arg11: memref<8x16x32xf32, #tpu.memory_space<vmem>>, %arg12: memref<4x8x128xf32, #tpu.memory_space<vmem>>) attributes {dimension_semantics = [#tpu.dimension_semantics<parallel>], iteration_bounds = array<i64: 2>, scalar_prefetch = 0 : i64, scratch_operands = 0 : i64, tpu.core_type = #tpu.core_type<tc>, window_params = [{transform_indices = @transform_0, window_bounds = array<i64: 8, 16, 32>}, {transform_indices = @transform_1, window_bounds = array<i64: 8, 16, 32>}, {pipeline_mode = #tpu.pipeline_mode<synchronous>, transform_indices = @transform_2, window_bounds = array<i64: 32, 32>}, {pipeline_mode = #tpu.pipeline_mode<synchronous>, transform_indices = @transform_3, window_bounds = array<i64: 8, 128>}, {pipeline_mode = #tpu.pipeline_mode<synchronous>, transform_indices = @transform_4, window_bounds = array<i64: 16, 128>}, {pipeline_mode = #tpu.pipeline_mode<synchronous>, transform_indices = @transform_5, window_bounds = array<i64: 32, 64>}, {pipeline_mode = #tpu.pipeline_mode<synchronous>, transform_indices = @transform_6, window_bounds = array<i64: 32, 64>}, {pipeline_mode = #tpu.pipeline_mode<synchronous>, transform_indices = @transform_7, window_bounds = array<i64: 32, 32>}, {pipeline_mode = #tpu.pipeline_mode<synchronous>, transform_indices = @transform_8, window_bounds = array<i64: 32, 32>}, {pipeline_mode = #tpu.pipeline_mode<synchronous>, transform_indices = @transform_9, window_bounds = array<i64: 2, 32>}, {transform_indices = @transform_10, window_bounds = array<i64: 8, 16, 32>}, {transform_indices = @transform_11, window_bounds = array<i64: 4, 8, 128>}]} {
    %c0 = arith.constant 0 : index
    %c0_0 = arith.constant 0 : index
    %c0_1 = arith.constant 0 : index
    %0 = vector.load %arg1[%c0, %c0_0, %c0_1] : memref<8x16x32xf32, #tpu.memory_space<vmem>>, vector<8x16x32xf32>
    %c0_2 = arith.constant 0 : index
    %c0_3 = arith.constant 0 : index
    %c0_4 = arith.constant 0 : index
    %1 = vector.load %arg2[%c0_2, %c0_3, %c0_4] : memref<8x16x32xf32, #tpu.memory_space<vmem>>, vector<8x16x32xf32>
    %c0_5 = arith.constant 0 : index
    %c0_6 = arith.constant 0 : index
    %2 = vector.load %arg3[%c0_5, %c0_6] : memref<32x32xf32, #tpu.memory_space<vmem>>, vector<32x32xf32>
    %cst = arith.constant dense<0.000000e+00> : vector<8x32xf32>
    %3 = vector.multi_reduction <add>, %0, %cst [1] : vector<8x16x32xf32> to vector<8x32xf32>
    %cst_7 = arith.constant dense<0.000000e+00> : vector<8x32xf32>
    %4 = tpu.matmul %3, %2, %cst_7 {dimension_numbers = #tpu.dot_dimension_numbers<[1], [0], [0], [1], [0, 0, 1, 1], [], []>} : vector<8x32xf32>, vector<32x32xf32>, vector<8x32xf32> -> vector<8x32xf32>
    %cst_8 = arith.constant 7.812500e-03 : f32
    %5 = vector.broadcast %cst_8 : f32 to vector<8x32xf32>
    %6 = arith.mulf %4, %5 : vector<8x32xf32>
    %7 = vector.shape_cast %6 : vector<8x32xf32> to vector<8x1x32xf32>
    %8 = vector.broadcast %7 : vector<8x1x32xf32> to vector<8x16x32xf32>
    %9 = arith.subf %0, %8 : vector<8x16x32xf32>
    %10 = arith.mulf %9, %9 : vector<8x16x32xf32>
    %cst_9 = arith.constant dense<0.000000e+00> : vector<8x32xf32>
    %11 = vector.multi_reduction <add>, %10, %cst_9 [1] : vector<8x16x32xf32> to vector<8x32xf32>
    %cst_10 = arith.constant dense<0.000000e+00> : vector<8x32xf32>
    %12 = tpu.matmul %11, %2, %cst_10 {dimension_numbers = #tpu.dot_dimension_numbers<[1], [0], [0], [1], [0, 0, 1, 1], [], []>} : vector<8x32xf32>, vector<32x32xf32>, vector<8x32xf32> -> vector<8x32xf32>
    %cst_11 = arith.constant 7.812500e-03 : f32
    %13 = vector.broadcast %cst_11 : f32 to vector<8x32xf32>
    %14 = arith.mulf %12, %13 : vector<8x32xf32>
    %cst_12 = arith.constant 1.000000e-03 : f32
    %15 = vector.broadcast %cst_12 : f32 to vector<8x32xf32>
    %16 = arith.addf %14, %15 : vector<8x32xf32>
    %17 = math.rsqrt %16 : vector<8x32xf32>
    %18 = vector.shape_cast %17 : vector<8x32xf32> to vector<8x1x32xf32>
    %19 = vector.broadcast %18 : vector<8x1x32xf32> to vector<8x16x32xf32>
    %20 = arith.mulf %9, %19 : vector<8x16x32xf32>
    %cst_13 = arith.constant dense<0.000000e+00> : vector<8x32xf32>
    %21 = vector.multi_reduction <add>, %1, %cst_13 [1] : vector<8x16x32xf32> to vector<8x32xf32>
    %cst_14 = arith.constant dense<0.000000e+00> : vector<8x32xf32>
    %22 = tpu.matmul %21, %2, %cst_14 {dimension_numbers = #tpu.dot_dimension_numbers<[1], [0], [0], [1], [0, 0, 1, 1], [], []>} : vector<8x32xf32>, vector<32x32xf32>, vector<8x32xf32> -> vector<8x32xf32>
    %cst_15 = arith.constant 7.812500e-03 : f32
    %23 = vector.broadcast %cst_15 : f32 to vector<8x32xf32>
    %24 = arith.mulf %22, %23 : vector<8x32xf32>
    %25 = vector.shape_cast %24 : vector<8x32xf32> to vector<8x1x32xf32>
    %26 = vector.broadcast %25 : vector<8x1x32xf32> to vector<8x16x32xf32>
    %27 = arith.subf %1, %26 : vector<8x16x32xf32>
    %28 = arith.mulf %27, %27 : vector<8x16x32xf32>
    %cst_16 = arith.constant dense<0.000000e+00> : vector<8x32xf32>
    %29 = vector.multi_reduction <add>, %28, %cst_16 [1] : vector<8x16x32xf32> to vector<8x32xf32>
    %cst_17 = arith.constant dense<0.000000e+00> : vector<8x32xf32>
    %30 = tpu.matmul %29, %2, %cst_17 {dimension_numbers = #tpu.dot_dimension_numbers<[1], [0], [0], [1], [0, 0, 1, 1], [], []>} : vector<8x32xf32>, vector<32x32xf32>, vector<8x32xf32> -> vector<8x32xf32>
    %cst_18 = arith.constant 7.812500e-03 : f32
    %31 = vector.broadcast %cst_18 : f32 to vector<8x32xf32>
    %32 = arith.mulf %30, %31 : vector<8x32xf32>
    %cst_19 = arith.constant 1.000000e-03 : f32
    %33 = vector.broadcast %cst_19 : f32 to vector<8x32xf32>
    %34 = arith.addf %32, %33 : vector<8x32xf32>
    %35 = math.rsqrt %34 : vector<8x32xf32>
    %36 = vector.shape_cast %35 : vector<8x32xf32> to vector<8x1x32xf32>
    %37 = vector.broadcast %36 : vector<8x1x32xf32> to vector<8x16x32xf32>
    %38 = arith.mulf %27, %37 : vector<8x16x32xf32>
    %39 = vector.shape_cast %20 : vector<8x16x32xf32> to vector<128x32xf32>
    %40 = arith.truncf %39 : vector<128x32xf32> to vector<128x32xbf16>
    %41 = vector.shape_cast %38 : vector<8x16x32xf32> to vector<128x32xf32>
    %42 = arith.truncf %41 : vector<128x32xf32> to vector<128x32xbf16>
    %c0_20 = arith.constant 0 : index
    %c0_21 = arith.constant 0 : index
    %43 = vector.load %arg6[%c0_20, %c0_21] : memref<32x64xbf16, #tpu.memory_space<vmem>>, vector<32x64xbf16>
    %cst_22 = arith.constant dense<0.000000e+00> : vector<128x64xf32>
    %44 = tpu.matmul %40, %43, %cst_22 {dimension_numbers = #tpu.dot_dimension_numbers<[1], [0], [0], [1], [0, 0, 1, 1], [], []>} : vector<128x32xbf16>, vector<32x64xbf16>, vector<128x64xf32> -> vector<128x64xf32>
    %c0_23 = arith.constant 0 : index
    %c0_24 = arith.constant 0 : index
    %45 = vector.load %arg7[%c0_23, %c0_24] : memref<32x64xbf16, #tpu.memory_space<vmem>>, vector<32x64xbf16>
    %cst_25 = arith.constant dense<0.000000e+00> : vector<128x64xf32>
    %46 = tpu.matmul %42, %45, %cst_25 {dimension_numbers = #tpu.dot_dimension_numbers<[1], [0], [0], [1], [0, 0, 1, 1], [], []>} : vector<128x32xbf16>, vector<32x64xbf16>, vector<128x64xf32> -> vector<128x64xf32>
    %47 = vector.extract_strided_slice %44 {offsets = [0, 0], sizes = [128, 32], strides = [1, 1]} : vector<128x64xf32> to vector<128x32xf32>
    %48 = vector.shape_cast %47 : vector<128x32xf32> to vector<8x16x32xf32>
    %cst_26 = arith.constant dense<0.000000e+00> : vector<8x32xf32>
    %49 = vector.multi_reduction <add>, %48, %cst_26 [1] : vector<8x16x32xf32> to vector<8x32xf32>
    %cst_27 = arith.constant dense<0.000000e+00> : vector<8x32xf32>
    %50 = tpu.matmul %49, %2, %cst_27 {dimension_numbers = #tpu.dot_dimension_numbers<[1], [0], [0], [1], [0, 0, 1, 1], [], []>} : vector<8x32xf32>, vector<32x32xf32>, vector<8x32xf32> -> vector<8x32xf32>
    %cst_28 = arith.constant 7.812500e-03 : f32
    %51 = vector.broadcast %cst_28 : f32 to vector<8x32xf32>
    %52 = arith.mulf %50, %51 : vector<8x32xf32>
    %53 = vector.shape_cast %52 : vector<8x32xf32> to vector<8x1x32xf32>
    %54 = vector.broadcast %53 : vector<8x1x32xf32> to vector<8x16x32xf32>
    %55 = arith.subf %48, %54 : vector<8x16x32xf32>
    %56 = arith.mulf %55, %55 : vector<8x16x32xf32>
    %cst_29 = arith.constant dense<0.000000e+00> : vector<8x32xf32>
    %57 = vector.multi_reduction <add>, %56, %cst_29 [1] : vector<8x16x32xf32> to vector<8x32xf32>
    %cst_30 = arith.constant dense<0.000000e+00> : vector<8x32xf32>
    %58 = tpu.matmul %57, %2, %cst_30 {dimension_numbers = #tpu.dot_dimension_numbers<[1], [0], [0], [1], [0, 0, 1, 1], [], []>} : vector<8x32xf32>, vector<32x32xf32>, vector<8x32xf32> -> vector<8x32xf32>
    %cst_31 = arith.constant 7.812500e-03 : f32
    %59 = vector.broadcast %cst_31 : f32 to vector<8x32xf32>
    %60 = arith.mulf %58, %59 : vector<8x32xf32>
    %cst_32 = arith.constant 1.000000e-03 : f32
    %61 = vector.broadcast %cst_32 : f32 to vector<8x32xf32>
    %62 = arith.addf %60, %61 : vector<8x32xf32>
    %63 = math.rsqrt %62 : vector<8x32xf32>
    %64 = vector.shape_cast %63 : vector<8x32xf32> to vector<8x1x32xf32>
    %65 = vector.broadcast %64 : vector<8x1x32xf32> to vector<8x16x32xf32>
    %66 = arith.mulf %55, %65 : vector<8x16x32xf32>
    %67 = vector.extract_strided_slice %46 {offsets = [0, 0], sizes = [128, 32], strides = [1, 1]} : vector<128x64xf32> to vector<128x32xf32>
    %68 = vector.shape_cast %67 : vector<128x32xf32> to vector<8x16x32xf32>
    %cst_33 = arith.constant dense<0.000000e+00> : vector<8x32xf32>
    %69 = vector.multi_reduction <add>, %68, %cst_33 [1] : vector<8x16x32xf32> to vector<8x32xf32>
    %cst_34 = arith.constant dense<0.000000e+00> : vector<8x32xf32>
    %70 = tpu.matmul %69, %2, %cst_34 {dimension_numbers = #tpu.dot_dimension_numbers<[1], [0], [0], [1], [0, 0, 1, 1], [], []>} : vector<8x32xf32>, vector<32x32xf32>, vector<8x32xf32> -> vector<8x32xf32>
    %cst_35 = arith.constant 7.812500e-03 : f32
    %71 = vector.broadcast %cst_35 : f32 to vector<8x32xf32>
    %72 = arith.mulf %70, %71 : vector<8x32xf32>
    %73 = vector.shape_cast %72 : vector<8x32xf32> to vector<8x1x32xf32>
    %74 = vector.broadcast %73 : vector<8x1x32xf32> to vector<8x16x32xf32>
    %75 = arith.subf %68, %74 : vector<8x16x32xf32>
    %76 = arith.mulf %75, %75 : vector<8x16x32xf32>
    %cst_36 = arith.constant dense<0.000000e+00> : vector<8x32xf32>
    %77 = vector.multi_reduction <add>, %76, %cst_36 [1] : vector<8x16x32xf32> to vector<8x32xf32>
    %cst_37 = arith.constant dense<0.000000e+00> : vector<8x32xf32>
    %78 = tpu.matmul %77, %2, %cst_37 {dimension_numbers = #tpu.dot_dimension_numbers<[1], [0], [0], [1], [0, 0, 1, 1], [], []>} : vector<8x32xf32>, vector<32x32xf32>, vector<8x32xf32> -> vector<8x32xf32>
    %cst_38 = arith.constant 7.812500e-03 : f32
    %79 = vector.broadcast %cst_38 : f32 to vector<8x32xf32>
    %80 = arith.mulf %78, %79 : vector<8x32xf32>
    %cst_39 = arith.constant 1.000000e-03 : f32
    %81 = vector.broadcast %cst_39 : f32 to vector<8x32xf32>
    %82 = arith.addf %80, %81 : vector<8x32xf32>
    %83 = math.rsqrt %82 : vector<8x32xf32>
    %84 = vector.shape_cast %83 : vector<8x32xf32> to vector<8x1x32xf32>
    %85 = vector.broadcast %84 : vector<8x1x32xf32> to vector<8x16x32xf32>
    %86 = arith.mulf %75, %85 : vector<8x16x32xf32>
    %87 = vector.extract_strided_slice %46 {offsets = [0, 32], sizes = [128, 32], strides = [1, 1]} : vector<128x64xf32> to vector<128x32xf32>
    %c0_40 = arith.constant 0 : index
    %c0_41 = arith.constant 0 : index
    %88 = vector.load %arg10[%c0_40, %c0_41] : memref<2x32xf32, #tpu.memory_space<vmem>>, vector<2x32xf32>
    %89 = vector.extract_strided_slice %88 {offsets = [0, 0], sizes = [1, 32], strides = [1, 1]} : vector<2x32xf32> to vector<1x32xf32>
    %90 = vector.extract_strided_slice %88 {offsets = [1, 0], sizes = [1, 32], strides = [1, 1]} : vector<2x32xf32> to vector<1x32xf32>
    %91 = vector.extract_strided_slice %44 {offsets = [0, 32], sizes = [128, 32], strides = [1, 1]} : vector<128x64xf32> to vector<128x32xf32>
    %92 = vector.broadcast %89 : vector<1x32xf32> to vector<128x32xf32>
    %93 = arith.addf %91, %92 : vector<128x32xf32>
    %cst_42 = arith.constant 0.000000e+00 : f32
    %94 = vector.broadcast %cst_42 : f32 to vector<128x32xf32>
    %95 = arith.cmpf ogt, %93, %94 : vector<128x32xf32>
    %cst_43 = arith.constant 0.00999999977 : f32
    %96 = vector.broadcast %cst_43 : f32 to vector<128x32xf32>
    %97 = arith.mulf %96, %93 : vector<128x32xf32>
    %98 = arith.select %95, %93, %97 : vector<128x32xi1>, vector<128x32xf32>
    %99 = arith.truncf %98 : vector<128x32xf32> to vector<128x32xbf16>
    %c0_44 = arith.constant 0 : index
    %c0_45 = arith.constant 0 : index
    %100 = vector.load %arg9[%c0_44, %c0_45] : memref<32x32xbf16, #tpu.memory_space<vmem>>, vector<32x32xbf16>
    %cst_46 = arith.constant dense<0.000000e+00> : vector<128x32xf32>
    %101 = tpu.matmul %99, %100, %cst_46 {dimension_numbers = #tpu.dot_dimension_numbers<[1], [0], [0], [1], [0, 0, 1, 1], [], []>} : vector<128x32xbf16>, vector<32x32xbf16>, vector<128x32xf32> -> vector<128x32xf32>
    %102 = vector.broadcast %90 : vector<1x32xf32> to vector<128x32xf32>
    %103 = arith.addf %101, %102 : vector<128x32xf32>
    %cst_47 = arith.constant 0.353553385 : f32
    %104 = vector.broadcast %cst_47 : f32 to vector<8x16x32xf32>
    %105 = arith.mulf %66, %104 : vector<8x16x32xf32>
    %106 = vector.shape_cast %105 : vector<8x16x32xf32> to vector<16x8x32xf32>
    %107 = vector.shape_cast %86 : vector<8x16x32xf32> to vector<16x8x32xf32>
    %108 = arith.truncf %87 : vector<128x32xf32> to vector<128x32xbf16>
    %109 = vector.shape_cast %108 : vector<128x32xbf16> to vector<16x8x32xbf16>
    %c0_48 = arith.constant 0 : index
    %c0_49 = arith.constant 0 : index
    %110 = vector.load %arg8[%c0_48, %c0_49] : memref<32x32xbf16, #tpu.memory_space<vmem>>, vector<32x32xbf16>
    %c0_50 = arith.constant 0 : index
    %c0_51 = arith.constant 0 : index
    %111 = vector.load %arg4[%c0_50, %c0_51] : memref<8x128xf32, #tpu.memory_space<vmem>>, vector<8x128xf32>
    %c0_52 = arith.constant 0 : index
    %c0_53 = arith.constant 0 : index
    %112 = vector.load %arg5[%c0_52, %c0_53] : memref<16x128xf32, #tpu.memory_space<vmem>>, vector<16x128xf32>
    %113 = vector.extract_strided_slice %106 {offsets = [0, 0, 0], sizes = [16, 8, 8], strides = [1, 1, 1]} : vector<16x8x32xf32> to vector<16x8x8xf32>
    %114 = vector.extract_strided_slice %107 {offsets = [0, 0, 0], sizes = [16, 8, 8], strides = [1, 1, 1]} : vector<16x8x32xf32> to vector<16x8x8xf32>
    "tpu.trace_start"() <{level = 10 : i32, message = "zqd,zkd->zqk"}> : () -> ()
    %cst_54 = arith.constant dense<0.000000e+00> : vector<16x8x8xf32>
    %115 = tpu.matmul %113, %114, %cst_54 {dimension_numbers = #tpu.dot_dimension_numbers<[2], [2], [1], [1], [0, 0, 0, 1, 1, 1], [0], [0]>} : vector<16x8x8xf32>, vector<16x8x8xf32>, vector<16x8x8xf32> -> vector<16x8x8xf32>
    "tpu.trace_stop"() : () -> ()
    %cst_55 = arith.constant dense<0xFF800000> : vector<16x8xf32>
    %116 = vector.multi_reduction <maximumf>, %115, %cst_55 [2] : vector<16x8x8xf32> to vector<16x8xf32>
    %117 = vector.shape_cast %116 : vector<16x8xf32> to vector<16x8x1xf32>
    %118 = vector.broadcast %117 : vector<16x8x1xf32> to vector<16x8x8xf32>
    %119 = arith.subf %115, %118 : vector<16x8x8xf32>
    %120 = math.exp %119 : vector<16x8x8xf32>
    %cst_56 = arith.constant dense<0.000000e+00> : vector<16x8xf32>
    %121 = vector.multi_reduction <add>, %120, %cst_56 [2] : vector<16x8x8xf32> to vector<16x8xf32>
    %122 = vector.shape_cast %121 : vector<16x8xf32> to vector<16x8x1xf32>
    %123 = tpu.reciprocal %122 {approx = true} : vector<16x8x1xf32> -> vector<16x8x1xf32>
    %124 = vector.broadcast %123 : vector<16x8x1xf32> to vector<16x8x8xf32>
    %125 = arith.mulf %120, %124 : vector<16x8x8xf32>
    %126 = vector.shape_cast %125 : vector<16x8x8xf32> to vector<128x8xf32>
    %cst_57 = arith.constant dense<0.000000e+00> : vector<128x128xf32>
    %127 = tpu.matmul %126, %111, %cst_57 {dimension_numbers = #tpu.dot_dimension_numbers<[1], [0], [0], [1], [0, 0, 1, 1], [], []>} : vector<128x8xf32>, vector<8x128xf32>, vector<128x128xf32> -> vector<128x128xf32>
    %128 = vector.shape_cast %127 : vector<128x128xf32> to vector<8x16x128xf32>
    %129 = vector.shape_cast %112 : vector<16x128xf32> to vector<1x16x128xf32>
    %130 = vector.broadcast %129 : vector<1x16x128xf32> to vector<8x16x128xf32>
    %131 = arith.mulf %128, %130 : vector<8x16x128xf32>
    %cst_58 = arith.constant dense<0.000000e+00> : vector<8x128xf32>
    %132 = vector.multi_reduction <add>, %131, %cst_58 [1] : vector<8x16x128xf32> to vector<8x128xf32>
    %c0_59 = arith.constant 0 : index
    %c0_60 = arith.constant 0 : index
    %c0_61 = arith.constant 0 : index
    %133 = vector.load %arg12[%c0_59, %c0_60, %c0_61] : memref<4x8x128xf32, #tpu.memory_space<vmem>>, vector<1x8x128xf32>
    %134 = vector.shape_cast %133 : vector<1x8x128xf32> to vector<8x128xf32>
    %135 = vector.shape_cast %132 : vector<8x128xf32> to vector<1x8x128xf32>
    tpu.vector_store %arg12[%c0_59, %c0_60, %c0_61], %135 {strides = array<i32>} : memref<4x8x128xf32, #tpu.memory_space<vmem>>, vector<1x8x128xf32>,
    %136 = arith.truncf %125 : vector<16x8x8xf32> to vector<16x8x8xbf16>
    %137 = vector.extract_strided_slice %109 {offsets = [0, 0, 0], sizes = [16, 8, 8], strides = [1, 1, 1]} : vector<16x8x32xbf16> to vector<16x8x8xbf16>
    "tpu.trace_start"() <{level = 10 : i32, message = "zqk,zkd->zqd"}> : () -> ()
    %cst_62 = arith.constant dense<0.000000e+00> : vector<16x8x8xf32>
    %138 = tpu.matmul %136, %137, %cst_62 {dimension_numbers = #tpu.dot_dimension_numbers<[2], [1], [1], [2], [0, 0, 0, 1, 1, 2], [0], [0]>} : vector<16x8x8xbf16>, vector<16x8x8xbf16>, vector<16x8x8xf32> -> vector<16x8x8xf32>
    "tpu.trace_stop"() : () -> ()
    %139 = vector.shape_cast %138 : vector<16x8x8xf32> to vector<128x8xf32>
    %140 = arith.truncf %139 : vector<128x8xf32> to vector<128x8xbf16>
    %141 = vector.extract_strided_slice %110 {offsets = [0, 0], sizes = [8, 32], strides = [1, 1]} : vector<32x32xbf16> to vector<8x32xbf16>
    %cst_63 = arith.constant dense<0.000000e+00> : vector<128x32xf32>
    %142 = tpu.matmul %140, %141, %cst_63 {dimension_numbers = #tpu.dot_dimension_numbers<[1], [0], [0], [1], [0, 0, 1, 1], [], []>} : vector<128x8xbf16>, vector<8x32xbf16>, vector<128x32xf32> -> vector<128x32xf32>
    %143 = arith.addf %103, %142 : vector<128x32xf32>
    %144 = vector.extract_strided_slice %106 {offsets = [0, 0, 8], sizes = [16, 8, 8], strides = [1, 1, 1]} : vector<16x8x32xf32> to vector<16x8x8xf32>
    %145 = vector.extract_strided_slice %107 {offsets = [0, 0, 8], sizes = [16, 8, 8], strides = [1, 1, 1]} : vector<16x8x32xf32> to vector<16x8x8xf32>
    "tpu.trace_start"() <{level = 10 : i32, message = "zqd,zkd->zqk"}> : () -> ()
    %cst_64 = arith.constant dense<0.000000e+00> : vector<16x8x8xf32>
    %146 = tpu.matmul %144, %145, %cst_64 {dimension_numbers = #tpu.dot_dimension_numbers<[2], [2], [1], [1], [0, 0, 0, 1, 1, 1], [0], [0]>} : vector<16x8x8xf32>, vector<16x8x8xf32>, vector<16x8x8xf32> -> vector<16x8x8xf32>
    "tpu.trace_stop"() : () -> ()
    %cst_65 = arith.constant dense<0xFF800000> : vector<16x8xf32>
    %147 = vector.multi_reduction <maximumf>, %146, %cst_65 [2] : vector<16x8x8xf32> to vector<16x8xf32>
    %148 = vector.shape_cast %147 : vector<16x8xf32> to vector<16x8x1xf32>
    %149 = vector.broadcast %148 : vector<16x8x1xf32> to vector<16x8x8xf32>
    %150 = arith.subf %146, %149 : vector<16x8x8xf32>
    %151 = math.exp %150 : vector<16x8x8xf32>
    %cst_66 = arith.constant dense<0.000000e+00> : vector<16x8xf32>
    %152 = vector.multi_reduction <add>, %151, %cst_66 [2] : vector<16x8x8xf32> to vector<16x8xf32>
    %153 = vector.shape_cast %152 : vector<16x8xf32> to vector<16x8x1xf32>
    %154 = tpu.reciprocal %153 {approx = true} : vector<16x8x1xf32> -> vector<16x8x1xf32>
    %155 = vector.broadcast %154 : vector<16x8x1xf32> to vector<16x8x8xf32>
    %156 = arith.mulf %151, %155 : vector<16x8x8xf32>
    %157 = vector.shape_cast %156 : vector<16x8x8xf32> to vector<128x8xf32>
    %cst_67 = arith.constant dense<0.000000e+00> : vector<128x128xf32>
    %158 = tpu.matmul %157, %111, %cst_67 {dimension_numbers = #tpu.dot_dimension_numbers<[1], [0], [0], [1], [0, 0, 1, 1], [], []>} : vector<128x8xf32>, vector<8x128xf32>, vector<128x128xf32> -> vector<128x128xf32>
    %159 = vector.shape_cast %158 : vector<128x128xf32> to vector<8x16x128xf32>
    %160 = vector.shape_cast %112 : vector<16x128xf32> to vector<1x16x128xf32>
    %161 = vector.broadcast %160 : vector<1x16x128xf32> to vector<8x16x128xf32>
    %162 = arith.mulf %159, %161 : vector<8x16x128xf32>
    %cst_68 = arith.constant dense<0.000000e+00> : vector<8x128xf32>
    %163 = vector.multi_reduction <add>, %162, %cst_68 [1] : vector<8x16x128xf32> to vector<8x128xf32>
    %c1 = arith.constant 1 : index
    %c0_69 = arith.constant 0 : index
    %c0_70 = arith.constant 0 : index
    %164 = vector.load %arg12[%c1, %c0_69, %c0_70] : memref<4x8x128xf32, #tpu.memory_space<vmem>>, vector<1x8x128xf32>
    %165 = vector.shape_cast %164 : vector<1x8x128xf32> to vector<8x128xf32>
    %166 = vector.shape_cast %163 : vector<8x128xf32> to vector<1x8x128xf32>
    tpu.vector_store %arg12[%c1, %c0_69, %c0_70], %166 {strides = array<i32>} : memref<4x8x128xf32, #tpu.memory_space<vmem>>, vector<1x8x128xf32>,
    %167 = arith.truncf %156 : vector<16x8x8xf32> to vector<16x8x8xbf16>
    %168 = vector.extract_strided_slice %109 {offsets = [0, 0, 8], sizes = [16, 8, 8], strides = [1, 1, 1]} : vector<16x8x32xbf16> to vector<16x8x8xbf16>
    "tpu.trace_start"() <{level = 10 : i32, message = "zqk,zkd->zqd"}> : () -> ()
    %cst_71 = arith.constant dense<0.000000e+00> : vector<16x8x8xf32>
    %169 = tpu.matmul %167, %168, %cst_71 {dimension_numbers = #tpu.dot_dimension_numbers<[2], [1], [1], [2], [0, 0, 0, 1, 1, 2], [0], [0]>} : vector<16x8x8xbf16>, vector<16x8x8xbf16>, vector<16x8x8xf32> -> vector<16x8x8xf32>
    "tpu.trace_stop"() : () -> ()
    %170 = vector.shape_cast %169 : vector<16x8x8xf32> to vector<128x8xf32>
    %171 = arith.truncf %170 : vector<128x8xf32> to vector<128x8xbf16>
    %172 = vector.extract_strided_slice %110 {offsets = [8, 0], sizes = [8, 32], strides = [1, 1]} : vector<32x32xbf16> to vector<8x32xbf16>
    %cst_72 = arith.constant dense<0.000000e+00> : vector<128x32xf32>
    %173 = tpu.matmul %171, %172, %cst_72 {dimension_numbers = #tpu.dot_dimension_numbers<[1], [0], [0], [1], [0, 0, 1, 1], [], []>} : vector<128x8xbf16>, vector<8x32xbf16>, vector<128x32xf32> -> vector<128x32xf32>
    %174 = arith.addf %143, %173 : vector<128x32xf32>
    %175 = vector.extract_strided_slice %106 {offsets = [0, 0, 16], sizes = [16, 8, 8], strides = [1, 1, 1]} : vector<16x8x32xf32> to vector<16x8x8xf32>
    %176 = vector.extract_strided_slice %107 {offsets = [0, 0, 16], sizes = [16, 8, 8], strides = [1, 1, 1]} : vector<16x8x32xf32> to vector<16x8x8xf32>
    "tpu.trace_start"() <{level = 10 : i32, message = "zqd,zkd->zqk"}> : () -> ()
    %cst_73 = arith.constant dense<0.000000e+00> : vector<16x8x8xf32>
    %177 = tpu.matmul %175, %176, %cst_73 {dimension_numbers = #tpu.dot_dimension_numbers<[2], [2], [1], [1], [0, 0, 0, 1, 1, 1], [0], [0]>} : vector<16x8x8xf32>, vector<16x8x8xf32>, vector<16x8x8xf32> -> vector<16x8x8xf32>
    "tpu.trace_stop"() : () -> ()
    %cst_74 = arith.constant dense<0xFF800000> : vector<16x8xf32>
    %178 = vector.multi_reduction <maximumf>, %177, %cst_74 [2] : vector<16x8x8xf32> to vector<16x8xf32>
    %179 = vector.shape_cast %178 : vector<16x8xf32> to vector<16x8x1xf32>
    %180 = vector.broadcast %179 : vector<16x8x1xf32> to vector<16x8x8xf32>
    %181 = arith.subf %177, %180 : vector<16x8x8xf32>
    %182 = math.exp %181 : vector<16x8x8xf32>
    %cst_75 = arith.constant dense<0.000000e+00> : vector<16x8xf32>
    %183 = vector.multi_reduction <add>, %182, %cst_75 [2] : vector<16x8x8xf32> to vector<16x8xf32>
    %184 = vector.shape_cast %183 : vector<16x8xf32> to vector<16x8x1xf32>
    %185 = tpu.reciprocal %184 {approx = true} : vector<16x8x1xf32> -> vector<16x8x1xf32>
    %186 = vector.broadcast %185 : vector<16x8x1xf32> to vector<16x8x8xf32>
    %187 = arith.mulf %182, %186 : vector<16x8x8xf32>
    %188 = vector.shape_cast %187 : vector<16x8x8xf32> to vector<128x8xf32>
    %cst_76 = arith.constant dense<0.000000e+00> : vector<128x128xf32>
    %189 = tpu.matmul %188, %111, %cst_76 {dimension_numbers = #tpu.dot_dimension_numbers<[1], [0], [0], [1], [0, 0, 1, 1], [], []>} : vector<128x8xf32>, vector<8x128xf32>, vector<128x128xf32> -> vector<128x128xf32>
    %190 = vector.shape_cast %189 : vector<128x128xf32> to vector<8x16x128xf32>
    %191 = vector.shape_cast %112 : vector<16x128xf32> to vector<1x16x128xf32>
    %192 = vector.broadcast %191 : vector<1x16x128xf32> to vector<8x16x128xf32>
    %193 = arith.mulf %190, %192 : vector<8x16x128xf32>
    %cst_77 = arith.constant dense<0.000000e+00> : vector<8x128xf32>
    %194 = vector.multi_reduction <add>, %193, %cst_77 [1] : vector<8x16x128xf32> to vector<8x128xf32>
    %c2 = arith.constant 2 : index
    %c0_78 = arith.constant 0 : index
    %c0_79 = arith.constant 0 : index
    %195 = vector.load %arg12[%c2, %c0_78, %c0_79] : memref<4x8x128xf32, #tpu.memory_space<vmem>>, vector<1x8x128xf32>
    %196 = vector.shape_cast %195 : vector<1x8x128xf32> to vector<8x128xf32>
    %197 = vector.shape_cast %194 : vector<8x128xf32> to vector<1x8x128xf32>
    tpu.vector_store %arg12[%c2, %c0_78, %c0_79], %197 {strides = array<i32>} : memref<4x8x128xf32, #tpu.memory_space<vmem>>, vector<1x8x128xf32>,
    %198 = arith.truncf %187 : vector<16x8x8xf32> to vector<16x8x8xbf16>
    %199 = vector.extract_strided_slice %109 {offsets = [0, 0, 16], sizes = [16, 8, 8], strides = [1, 1, 1]} : vector<16x8x32xbf16> to vector<16x8x8xbf16>
    "tpu.trace_start"() <{level = 10 : i32, message = "zqk,zkd->zqd"}> : () -> ()
    %cst_80 = arith.constant dense<0.000000e+00> : vector<16x8x8xf32>
    %200 = tpu.matmul %198, %199, %cst_80 {dimension_numbers = #tpu.dot_dimension_numbers<[2], [1], [1], [2], [0, 0, 0, 1, 1, 2], [0], [0]>} : vector<16x8x8xbf16>, vector<16x8x8xbf16>, vector<16x8x8xf32> -> vector<16x8x8xf32>
    "tpu.trace_stop"() : () -> ()
    %201 = vector.shape_cast %200 : vector<16x8x8xf32> to vector<128x8xf32>
    %202 = arith.truncf %201 : vector<128x8xf32> to vector<128x8xbf16>
    %203 = vector.extract_strided_slice %110 {offsets = [16, 0], sizes = [8, 32], strides = [1, 1]} : vector<32x32xbf16> to vector<8x32xbf16>
    %cst_81 = arith.constant dense<0.000000e+00> : vector<128x32xf32>
    %204 = tpu.matmul %202, %203, %cst_81 {dimension_numbers = #tpu.dot_dimension_numbers<[1], [0], [0], [1], [0, 0, 1, 1], [], []>} : vector<128x8xbf16>, vector<8x32xbf16>, vector<128x32xf32> -> vector<128x32xf32>
    %205 = arith.addf %174, %204 : vector<128x32xf32>
    %206 = vector.extract_strided_slice %106 {offsets = [0, 0, 24], sizes = [16, 8, 8], strides = [1, 1, 1]} : vector<16x8x32xf32> to vector<16x8x8xf32>
    %207 = vector.extract_strided_slice %107 {offsets = [0, 0, 24], sizes = [16, 8, 8], strides = [1, 1, 1]} : vector<16x8x32xf32> to vector<16x8x8xf32>
    "tpu.trace_start"() <{level = 10 : i32, message = "zqd,zkd->zqk"}> : () -> ()
    %cst_82 = arith.constant dense<0.000000e+00> : vector<16x8x8xf32>
    %208 = tpu.matmul %206, %207, %cst_82 {dimension_numbers = #tpu.dot_dimension_numbers<[2], [2], [1], [1], [0, 0, 0, 1, 1, 1], [0], [0]>} : vector<16x8x8xf32>, vector<16x8x8xf32>, vector<16x8x8xf32> -> vector<16x8x8xf32>
    "tpu.trace_stop"() : () -> ()
    %cst_83 = arith.constant dense<0xFF800000> : vector<16x8xf32>
    %209 = vector.multi_reduction <maximumf>, %208, %cst_83 [2] : vector<16x8x8xf32> to vector<16x8xf32>
    %210 = vector.shape_cast %209 : vector<16x8xf32> to vector<16x8x1xf32>
    %211 = vector.broadcast %210 : vector<16x8x1xf32> to vector<16x8x8xf32>
    %212 = arith.subf %208, %211 : vector<16x8x8xf32>
    %213 = math.exp %212 : vector<16x8x8xf32>
    %cst_84 = arith.constant dense<0.000000e+00> : vector<16x8xf32>
    %214 = vector.multi_reduction <add>, %213, %cst_84 [2] : vector<16x8x8xf32> to vector<16x8xf32>
    %215 = vector.shape_cast %214 : vector<16x8xf32> to vector<16x8x1xf32>
    %216 = tpu.reciprocal %215 {approx = true} : vector<16x8x1xf32> -> vector<16x8x1xf32>
    %217 = vector.broadcast %216 : vector<16x8x1xf32> to vector<16x8x8xf32>
    %218 = arith.mulf %213, %217 : vector<16x8x8xf32>
    %219 = vector.shape_cast %218 : vector<16x8x8xf32> to vector<128x8xf32>
    %cst_85 = arith.constant dense<0.000000e+00> : vector<128x128xf32>
    %220 = tpu.matmul %219, %111, %cst_85 {dimension_numbers = #tpu.dot_dimension_numbers<[1], [0], [0], [1], [0, 0, 1, 1], [], []>} : vector<128x8xf32>, vector<8x128xf32>, vector<128x128xf32> -> vector<128x128xf32>
    %221 = vector.shape_cast %220 : vector<128x128xf32> to vector<8x16x128xf32>
    %222 = vector.shape_cast %112 : vector<16x128xf32> to vector<1x16x128xf32>
    %223 = vector.broadcast %222 : vector<1x16x128xf32> to vector<8x16x128xf32>
    %224 = arith.mulf %221, %223 : vector<8x16x128xf32>
    %cst_86 = arith.constant dense<0.000000e+00> : vector<8x128xf32>
    %225 = vector.multi_reduction <add>, %224, %cst_86 [1] : vector<8x16x128xf32> to vector<8x128xf32>
    %c3 = arith.constant 3 : index
    %c0_87 = arith.constant 0 : index
    %c0_88 = arith.constant 0 : index
    %226 = vector.load %arg12[%c3, %c0_87, %c0_88] : memref<4x8x128xf32, #tpu.memory_space<vmem>>, vector<1x8x128xf32>
    %227 = vector.shape_cast %226 : vector<1x8x128xf32> to vector<8x128xf32>
    %228 = vector.shape_cast %225 : vector<8x128xf32> to vector<1x8x128xf32>
    tpu.vector_store %arg12[%c3, %c0_87, %c0_88], %228 {strides = array<i32>} : memref<4x8x128xf32, #tpu.memory_space<vmem>>, vector<1x8x128xf32>,
    %229 = arith.truncf %218 : vector<16x8x8xf32> to vector<16x8x8xbf16>
    %230 = vector.extract_strided_slice %109 {offsets = [0, 0, 24], sizes = [16, 8, 8], strides = [1, 1, 1]} : vector<16x8x32xbf16> to vector<16x8x8xbf16>
    "tpu.trace_start"() <{level = 10 : i32, message = "zqk,zkd->zqd"}> : () -> ()
    %cst_89 = arith.constant dense<0.000000e+00> : vector<16x8x8xf32>
    %231 = tpu.matmul %229, %230, %cst_89 {dimension_numbers = #tpu.dot_dimension_numbers<[2], [1], [1], [2], [0, 0, 0, 1, 1, 2], [0], [0]>} : vector<16x8x8xbf16>, vector<16x8x8xbf16>, vector<16x8x8xf32> -> vector<16x8x8xf32>
    "tpu.trace_stop"() : () -> ()
    %232 = vector.shape_cast %231 : vector<16x8x8xf32> to vector<128x8xf32>
    %233 = arith.truncf %232 : vector<128x8xf32> to vector<128x8xbf16>
    %234 = vector.extract_strided_slice %110 {offsets = [24, 0], sizes = [8, 32], strides = [1, 1]} : vector<32x32xbf16> to vector<8x32xbf16>
    %cst_90 = arith.constant dense<0.000000e+00> : vector<128x32xf32>
    %235 = tpu.matmul %233, %234, %cst_90 {dimension_numbers = #tpu.dot_dimension_numbers<[1], [0], [0], [1], [0, 0, 1, 1], [], []>} : vector<128x8xbf16>, vector<8x32xbf16>, vector<128x32xf32> -> vector<128x32xf32>
    %236 = arith.addf %205, %235 : vector<128x32xf32>
    %237 = vector.shape_cast %236 : vector<128x32xf32> to vector<8x16x32xf32>
    %238 = arith.addf %0, %237 : vector<8x16x32xf32>
    %c0_91 = arith.constant 0 : index
    %c0_92 = arith.constant 0 : index
    %c0_93 = arith.constant 0 : index
    %239 = vector.load %arg11[%c0_91, %c0_92, %c0_93] : memref<8x16x32xf32, #tpu.memory_space<vmem>>, vector<8x16x32xf32>
    tpu.vector_store %arg11[%c0_91, %c0_92, %c0_93], %238 {strides = array<i32>} : memref<8x16x32xf32, #tpu.memory_space<vmem>>, vector<8x16x32xf32>,
    return
  }
  func.func @transform_0(%arg0: i32) -> (i32, i32, i32) {
    %c0_i32 = arith.constant 0 : i32
    %c0_i32_0 = arith.constant 0 : i32
    %c0_i32_1 = arith.constant 0 : i32
    return %arg0, %c0_i32, %c0_i32_0 : i32, i32, i32
  }
  func.func @transform_1(%arg0: i32) -> (i32, i32, i32) {
    %c0_i32 = arith.constant 0 : i32
    %c0_i32_0 = arith.constant 0 : i32
    %c0_i32_1 = arith.constant 0 : i32
    return %arg0, %c0_i32, %c0_i32_0 : i32, i32, i32
  }
  func.func @transform_2(%arg0: i32) -> (i32, i32) {
    %c0_i32 = arith.constant 0 : i32
    %c0_i32_0 = arith.constant 0 : i32
    %c0_i32_1 = arith.constant 0 : i32
    return %c0_i32, %c0_i32_0 : i32, i32
  }
  func.func @transform_3(%arg0: i32) -> (i32, i32) {
    %c0_i32 = arith.constant 0 : i32
    %c0_i32_0 = arith.constant 0 : i32
    %c0_i32_1 = arith.constant 0 : i32
    return %c0_i32, %c0_i32_0 : i32, i32
  }
  func.func @transform_4(%arg0: i32) -> (i32, i32) {
    %c0_i32 = arith.constant 0 : i32
    %c0_i32_0 = arith.constant 0 : i32
    %c0_i32_1 = arith.constant 0 : i32
    return %c0_i32, %c0_i32_0 : i32, i32
  }
  func.func @transform_5(%arg0: i32) -> (i32, i32) {
    %c0_i32 = arith.constant 0 : i32
    %c0_i32_0 = arith.constant 0 : i32
    %c0_i32_1 = arith.constant 0 : i32
    return %c0_i32, %c0_i32_0 : i32, i32
  }
  func.func @transform_6(%arg0: i32) -> (i32, i32) {
    %c0_i32 = arith.constant 0 : i32
    %c0_i32_0 = arith.constant 0 : i32
    %c0_i32_1 = arith.constant 0 : i32
    return %c0_i32, %c0_i32_0 : i32, i32
  }
  func.func @transform_7(%arg0: i32) -> (i32, i32) {
    %c0_i32 = arith.constant 0 : i32
    %c0_i32_0 = arith.constant 0 : i32
    %c0_i32_1 = arith.constant 0 : i32
    return %c0_i32, %c0_i32_0 : i32, i32
  }
  func.func @transform_8(%arg0: i32) -> (i32, i32) {
    %c0_i32 = arith.constant 0 : i32
    %c0_i32_0 = arith.constant 0 : i32
    %c0_i32_1 = arith.constant 0 : i32
    return %c0_i32, %c0_i32_0 : i32, i32
  }
  func.func @transform_9(%arg0: i32) -> (i32, i32) {
    %c0_i32 = arith.constant 0 : i32
    %c0_i32_0 = arith.constant 0 : i32
    %c0_i32_1 = arith.constant 0 : i32
    return %c0_i32, %c0_i32_0 : i32, i32
  }
  func.func @transform_10(%arg0: i32) -> (i32, i32, i32) {
    %c0_i32 = arith.constant 0 : i32
    %c0_i32_0 = arith.constant 0 : i32
    %c0_i32_1 = arith.constant 0 : i32
    return %arg0, %c0_i32, %c0_i32_0 : i32, i32, i32
  }
  func.func @transform_11(%arg0: i32) -> (i32, i32, i32) {
    %c0_i32 = arith.constant 0 : i32
    %c0_i32_0 = arith.constant 0 : i32
    %c0_i32_1 = arith.constant 0 : i32
    return %c0_i32, %arg0, %c0_i32_0 : i32, i32, i32
  }
}

</mosaic_0001>

<llo_original>
// kernel: tpu_custom_call.1
$region0: #{tpu_custom_call.1}
  #allocation0 [shape = 'u32[]', space=smem, size = 0x4, offset = 0x4, fixed_abs, tag = 'smem constant byte address 0x4 - core index']
  #allocation1 [shape = 'u32[72,128]{1,0:T(1,128)}', space=vmem, size = 0x9000, scoped, tag = 'internal scratch']
  %s0 = inlined_call_operand.hbm [shape: f32[16,16,32], index: 0, kind: input, shape index: {}]
  %s1 = inlined_call_operand.hbm [shape: f32[16,16,32], index: 1, kind: input, shape index: {}]
  %s2 = inlined_call_operand.hbm [shape: f32[32,32], index: 2, kind: input, shape index: {}]
  %s3 = inlined_call_operand.hbm [shape: f32[8,128], index: 3, kind: input, shape index: {}]
  %s4 = inlined_call_operand.hbm [shape: f32[16,128], index: 4, kind: input, shape index: {}]
  %s5 = inlined_call_operand.hbm [shape: bf16[32,64], index: 5, kind: input, shape index: {}]
  %s6 = inlined_call_operand.hbm [shape: bf16[32,64], index: 6, kind: input, shape index: {}]
  %s7 = inlined_call_operand.hbm [shape: bf16[32,32], index: 7, kind: input, shape index: {}]
  %s8 = inlined_call_operand.hbm [shape: bf16[32,32], index: 8, kind: input, shape index: {}]
  %s9 = inlined_call_operand.vmem [shape: f32[2,32], index: 9, kind: input, shape index: {}]
  %s10 = inlined_call_operand.hbm [shape: f32[16,16,32], index: 10, kind: output, shape index: {0}]
  %s11 = inlined_call_operand.hbm [shape: f32[4,16,128], index: 11, kind: output, shape index: {1}]
  %12 = xla_tuple %s10, %s11
  %s13 = sld [smem:[#allocation0]]
  $region117: #{tpu_custom_call.1} parent=0
    _
  %s15 = ssub.s32 1, %s13
  %s16 = scalar_select 0, %s15, %s13
  $region1: #{tpu_custom_call.1} parent=0
    #allocation2 [shape = 'u8[131072]{0}', space=vmem, size = 0x20000, scoped, tag = 'input window, operand 0']
    #allocation3 [shape = 's32[2]{0}', space=sflag, size = 0x8, scoped, tag = 'scoped memory for tpu_custom_call.1']
    #allocation4 [shape = 's32[2]{0}', space=sflag, size = 0x8, scoped, tag = 'scoped memory for tpu_custom_call.1']
    #allocation5 [shape = 'u8[131072]{0}', space=vmem, size = 0x20000, scoped, tag = 'input window, operand 1']
    #allocation6 [shape = 's32[2]{0}', space=sflag, size = 0x8, scoped, tag = 'scoped memory for tpu_custom_call.1']
    #allocation7 [shape = 'u8[16384]{0}', space=vmem, size = 0x4000, scoped, tag = 'input window, operand 2, single buffered']
    #allocation8 [shape = 'u8[4096]{0}', space=vmem, size = 0x1000, scoped, tag = 'input window, operand 3, single buffered']
    #allocation9 [shape = 's32[1]{0}', space=sflag, size = 0x4, scoped, tag = 'scoped memory for tpu_custom_call.1']
    #allocation10 [shape = 'u8[8192]{0}', space=vmem, size = 0x2000, scoped, tag = 'input window, operand 4, single buffered']
    #allocation11 [shape = 'u8[8192]{0}', space=vmem, size = 0x2000, scoped, tag = 'input window, operand 5, single buffered']
    #allocation12 [shape = 's32[1]{0}', space=sflag, size = 0x4, scoped, tag = 'scoped memory for tpu_custom_call.1']
    #allocation13 [shape = 'u8[8192]{0}', space=vmem, size = 0x2000, scoped, tag = 'input window, operand 6, single buffered']
    #allocation14 [shape = 'u8[8192]{0}', space=vmem, size = 0x2000, scoped, tag = 'input window, operand 7, single buffered']
    #allocation15 [shape = 's32[1]{0}', space=sflag, size = 0x4, scoped, tag = 'scoped memory for tpu_custom_call.1']
    #allocation16 [shape = 'u8[8192]{0}', space=vmem, size = 0x2000, scoped, tag = 'input window, operand 8, single buffered']
    #allocation17 [shape = 'u8[131072]{0}', space=vmem, size = 0x20000, scoped, tag = 'output window, operand 0']
    #allocation18 [shape = 'u8[32768]{0}', space=vmem, size = 0x8000, scoped, tag = 'output window, operand 1']
    #allocation19 [shape = 's32[2]{0}', space=sflag, size = 0x8, scoped, tag = 'scoped memory for tpu_custom_call.1']
    %17 = vsyncpa [#allocation3], 0
    %s18 = scalar_lea.sflag [#allocation3], 1
    %19 = vsyncpa %s18, 0
    %20 = vsyncpa [#allocation6], 0
    %s21 = scalar_lea.sflag [#allocation6], 1
    %22 = vsyncpa %s21, 0
    %23 = vsyncpa [#allocation9], 0
    %24 = vsyncpa [#allocation12], 0
    %25 = vsyncpa [#allocation15], 0
    %26 = vsyncpa [#allocation4], 0
    %s27 = scalar_lea.sflag [#allocation4], 1
    %28 = vsyncpa %s27, 0
    %29 = vsyncpa [#allocation19], 0
    %s30 = scalar_lea.sflag [#allocation19], 1
    %31 = vsyncpa %s30, 0
    loop: start=0, step=1, limit=4
    $region2: #{tpu_custom_call.1} parent=1 // loop_pre_header
      _
    $region3: #{tpu_custom_call.1} parent=1 // loop_header
      %s33 = sphi 0, %s37
      %p34 = scmp.ge.s32.totalorder %s33, 4
      %s43 = sphi 0, %s45
      %s46 = sphi 0, %s43
      %s47 = sphi 0, %s46
      %s63 = sphi 0, %s47
      %s69 = sphi 0, %s71
      %s72 = sphi 0, %s69
      %s73 = sphi 0, %s72
      %s89 = sphi 0, %s73
      %s93 = sphi 0, %s93
      %s95 = sphi 0, %s93
      %s96 = sphi 0, %s95
      %s110 = sphi 0, %s96
      %s114 = sphi 0, %s114
      %s116 = sphi 0, %s114
      %s117 = sphi 0, %s116
      %s131 = sphi 0, %s117
      %s135 = sphi 0, %s135
      %s137 = sphi 0, %s135
      %s138 = sphi 0, %s137
      %s152 = sphi 0, %s138
      %s156 = sphi 0, %s156
      %s158 = sphi 0, %s156
      %s159 = sphi 0, %s158
      %s173 = sphi 0, %s159
      %s177 = sphi 0, %s177
      %s179 = sphi 0, %s177
      %s180 = sphi 0, %s179
      %s194 = sphi 0, %s180
      %s198 = sphi 0, %s198
      %s200 = sphi 0, %s198
      %s201 = sphi 0, %s200
      %s215 = sphi 0, %s201
      %s219 = sphi 0, %s219
      %s221 = sphi 0, %s219
      %s222 = sphi 0, %s221
      %s236 = sphi 0, %s222
      %s240 = sphi 0, %s240
      %s242 = sphi 0, %s240
      %s243 = sphi 0, %s242
      %s257 = sphi 0, %s243
      %s263 = sphi 0, %s265
      %s266 = sphi 0, %s263
      %s267 = sphi 0, %s266
      %s283 = sphi 0, %s267
      %s289 = sphi 0, %s291
      %s292 = sphi 0, %s289
      %s293 = sphi 0, %s292
      %s309 = sphi 0, %s293
    $region4: #{tpu_custom_call.1} parent=1 // loop_header_branch
      %36 = sbr.rel (%p34) target = $region8
    $region5: #{tpu_custom_call.1} parent=1 // loop_body
      %s38 = ssub.s32 %s33, 1
      %s39 = ssub.s32 %s33, 2
      %s40 = sadd.s32 %s33, 1
      %s41 = ssub.s32 %s33, %s40
      %p42 = scmp.eq.s32.totalorder %s41, 0
      %s44 = sadd.s32 %s43, 1
      %s45 = scalar_select %p42, %s43, %s44
      %p48 = pneg %p42
      %p49 = scmp.eq.s32.totalorder %s33, 1
      %p50 = por %p48, %p49
      %p51 = scmp.ne.s32.totalorder %s43, %s46
      %p52 = scmp.eq.s32.totalorder %s33, 0
      %p53 = por %p51, %p52
      %p54 = scmp.ne.s32.totalorder %s43, %s46
      %p55 = scmp.eq.s32.totalorder %s38, 1
      %p56 = por %p54, %p55
      %p57 = scmp.ne.s32.totalorder %s46, %s47
      %p58 = scmp.eq.s32.totalorder %s38, 0
      %p59 = por %p57, %p58
      %p60 = scmp.ne.s32.totalorder %s46, %s47
      %p61 = scmp.eq.s32.totalorder %s39, 1
      %p62 = por %p60, %p61
      %p64 = scmp.ne.s32.totalorder %s47, %s63
      %p65 = scmp.eq.s32.totalorder %s39, 0
      %p66 = por %p64, %p65
      %s67 = ssub.s32 %s33, %s40
      %p68 = scmp.eq.s32.totalorder %s67, 0
      %s70 = sadd.s32 %s69, 1
      %s71 = scalar_select %p68, %s69, %s70
      %p74 = pneg %p68
      %p75 = scmp.eq.s32.totalorder %s33, 1
      %p76 = por %p74, %p75
      %p77 = scmp.ne.s32.totalorder %s69, %s72
      %p78 = scmp.eq.s32.totalorder %s33, 0
      %p79 = por %p77, %p78
      %p80 = scmp.ne.s32.totalorder %s69, %s72
      %p81 = scmp.eq.s32.totalorder %s38, 1
      %p82 = por %p80, %p81
      %p83 = scmp.ne.s32.totalorder %s72, %s73
      %p84 = scmp.eq.s32.totalorder %s38, 0
      %p85 = por %p83, %p84
      %p86 = scmp.ne.s32.totalorder %s72, %s73
      %p87 = scmp.eq.s32.totalorder %s39, 1
      %p88 = por %p86, %p87
      %p90 = scmp.ne.s32.totalorder %s73, %s89
      %p91 = scmp.eq.s32.totalorder %s39, 0
      %p92 = por %p90, %p91
      %s94 = sadd.s32 %s93, 1
      %p97 = scmp.eq.s32.totalorder %s33, 1
      %p98 = scmp.ne.s32.totalorder %s93, %s95
      %p99 = scmp.eq.s32.totalorder %s33, 0
      %p100 = por %p98, %p99
      %p101 = scmp.ne.s32.totalorder %s93, %s95
      %p102 = scmp.eq.s32.totalorder %s38, 1
      %p103 = por %p101, %p102
      %p104 = scmp.ne.s32.totalorder %s95, %s96
      %p105 = scmp.eq.s32.totalorder %s38, 0
      %p106 = por %p104, %p105
      %p107 = scmp.ne.s32.totalorder %s95, %s96
      %p108 = scmp.eq.s32.totalorder %s39, 1
      %p109 = por %p107, %p108
      %p111 = scmp.ne.s32.totalorder %s96, %s110
      %p112 = scmp.eq.s32.totalorder %s39, 0
      %p113 = por %p111, %p112
      %s115 = sadd.s32 %s114, 1
      %p118 = scmp.eq.s32.totalorder %s33, 1
      %p119 = scmp.ne.s32.totalorder %s114, %s116
      %p120 = scmp.eq.s32.totalorder %s33, 0
      %p121 = por %p119, %p120
      %p122 = scmp.ne.s32.totalorder %s114, %s116
      %p123 = scmp.eq.s32.totalorder %s38, 1
      %p124 = por %p122, %p123
      %p125 = scmp.ne.s32.totalorder %s116, %s117
      %p126 = scmp.eq.s32.totalorder %s38, 0
      %p127 = por %p125, %p126
      %p128 = scmp.ne.s32.totalorder %s116, %s117
      %p129 = scmp.eq.s32.totalorder %s39, 1
      %p130 = por %p128, %p129
      %p132 = scmp.ne.s32.totalorder %s117, %s131
      %p133 = scmp.eq.s32.totalorder %s39, 0
      %p134 = por %p132, %p133
      %s136 = sadd.s32 %s135, 1
      %p139 = scmp.eq.s32.totalorder %s33, 1
      %p140 = scmp.ne.s32.totalorder %s135, %s137
      %p141 = scmp.eq.s32.totalorder %s33, 0
      %p142 = por %p140, %p141
      %p143 = scmp.ne.s32.totalorder %s135, %s137
      %p144 = scmp.eq.s32.totalorder %s38, 1
      %p145 = por %p143, %p144
      %p146 = scmp.ne.s32.totalorder %s137, %s138
      %p147 = scmp.eq.s32.totalorder %s38, 0
      %p148 = por %p146, %p147
      %p149 = scmp.ne.s32.totalorder %s137, %s138
      %p150 = scmp.eq.s32.totalorder %s39, 1
      %p151 = por %p149, %p150
      %p153 = scmp.ne.s32.totalorder %s138, %s152
      %p154 = scmp.eq.s32.totalorder %s39, 0
      %p155 = por %p153, %p154
      %s157 = sadd.s32 %s156, 1
      %p160 = scmp.eq.s32.totalorder %s33, 1
      %p161 = scmp.ne.s32.totalorder %s156, %s158
      %p162 = scmp.eq.s32.totalorder %s33, 0
      %p163 = por %p161, %p162
      %p164 = scmp.ne.s32.totalorder %s156, %s158
      %p165 = scmp.eq.s32.totalorder %s38, 1
      %p166 = por %p164, %p165
      %p167 = scmp.ne.s32.totalorder %s158, %s159
      %p168 = scmp.eq.s32.totalorder %s38, 0
      %p169 = por %p167, %p168
      %p170 = scmp.ne.s32.totalorder %s158, %s159
      %p171 = scmp.eq.s32.totalorder %s39, 1
      %p172 = por %p170, %p171
      %p174 = scmp.ne.s32.totalorder %s159, %s173
      %p175 = scmp.eq.s32.totalorder %s39, 0
      %p176 = por %p174, %p175
      %s178 = sadd.s32 %s177, 1
      %p181 = scmp.eq.s32.totalorder %s33, 1
      %p182 = scmp.ne.s32.totalorder %s177, %s179
      %p183 = scmp.eq.s32.totalorder %s33, 0
      %p184 = por %p182, %p183
      %p185 = scmp.ne.s32.totalorder %s177, %s179
      %p186 = scmp.eq.s32.totalorder %s38, 1
      %p187 = por %p185, %p186
      %p188 = scmp.ne.s32.totalorder %s179, %s180
      %p189 = scmp.eq.s32.totalorder %s38, 0
      %p190 = por %p188, %p189
      %p191 = scmp.ne.s32.totalorder %s179, %s180
      %p192 = scmp.eq.s32.totalorder %s39, 1
      %p193 = por %p191, %p192
      %p195 = scmp.ne.s32.totalorder %s180, %s194
      %p196 = scmp.eq.s32.totalorder %s39, 0
      %p197 = por %p195, %p196
      %s199 = sadd.s32 %s198, 1
      %p202 = scmp.eq.s32.totalorder %s33, 1
      %p203 = scmp.ne.s32.totalorder %s198, %s200
      %p204 = scmp.eq.s32.totalorder %s33, 0
      %p205 = por %p203, %p204
      %p206 = scmp.ne.s32.totalorder %s198, %s200
      %p207 = scmp.eq.s32.totalorder %s38, 1
      %p208 = por %p206, %p207
      %p209 = scmp.ne.s32.totalorder %s200, %s201
      %p210 = scmp.eq.s32.totalorder %s38, 0
      %p211 = por %p209, %p210
      %p212 = scmp.ne.s32.totalorder %s200, %s201
      %p213 = scmp.eq.s32.totalorder %s39, 1
      %p214 = por %p212, %p213
      %p216 = scmp.ne.s32.totalorder %s201, %s215
      %p217 = scmp.eq.s32.totalorder %s39, 0
      %p218 = por %p216, %p217
      %s220 = sadd.s32 %s219, 1
      %p223 = scmp.eq.s32.totalorder %s33, 1
      %p224 = scmp.ne.s32.totalorder %s219, %s221
      %p225 = scmp.eq.s32.totalorder %s33, 0
      %p226 = por %p224, %p225
      %p227 = scmp.ne.s32.totalorder %s219, %s221
      %p228 = scmp.eq.s32.totalorder %s38, 1
      %p229 = por %p227, %p228
      %p230 = scmp.ne.s32.totalorder %s221, %s222
      %p231 = scmp.eq.s32.totalorder %s38, 0
      %p232 = por %p230, %p231
      %p233 = scmp.ne.s32.totalorder %s221, %s222
      %p234 = scmp.eq.s32.totalorder %s39, 1
      %p235 = por %p233, %p234
      %p237 = scmp.ne.s32.totalorder %s222, %s236
      %p238 = scmp.eq.s32.totalorder %s39, 0
      %p239 = por %p237, %p238
      %s241 = sadd.s32 %s240, 1
      %p244 = scmp.eq.s32.totalorder %s33, 1
      %p245 = scmp.ne.s32.totalorder %s240, %s242
      %p246 = scmp.eq.s32.totalorder %s33, 0
      %p247 = por %p245, %p246
      %p248 = scmp.ne.s32.totalorder %s240, %s242
      %p249 = scmp.eq.s32.totalorder %s38, 1
      %p250 = por %p248, %p249
      %p251 = scmp.ne.s32.totalorder %s242, %s243
      %p252 = scmp.eq.s32.totalorder %s38, 0
      %p253 = por %p251, %p252
      %p254 = scmp.ne.s32.totalorder %s242, %s243
      %p255 = scmp.eq.s32.totalorder %s39, 1
      %p256 = por %p254, %p255
      %p258 = scmp.ne.s32.totalorder %s243, %s257
      %p259 = scmp.eq.s32.totalorder %s39, 0
      %p260 = por %p258, %p259
      %s261 = ssub.s32 %s33, %s40
      %p262 = scmp.eq.s32.totalorder %s261, 0
      %s264 = sadd.s32 %s263, 1
      %s265 = scalar_select %p262, %s263, %s264
      %p268 = pneg %p262
      %p269 = scmp.eq.s32.totalorder %s33, 1
      %p270 = por %p268, %p269
      %p271 = scmp.ne.s32.totalorder %s263, %s266
      %p272 = scmp.eq.s32.totalorder %s33, 0
      %p273 = por %p271, %p272
      %p274 = scmp.ne.s32.totalorder %s263, %s266
      %p275 = scmp.eq.s32.totalorder %s38, 1
      %p276 = por %p274, %p275
      %p277 = scmp.ne.s32.totalorder %s266, %s267
      %p278 = scmp.eq.s32.totalorder %s38, 0
      %p279 = por %p277, %p278
      %p280 = scmp.ne.s32.totalorder %s266, %s267
      %p281 = scmp.eq.s32.totalorder %s39, 1
      %p282 = por %p280, %p281
      %p284 = scmp.ne.s32.totalorder %s267, %s283
      %p285 = scmp.eq.s32.totalorder %s39, 0
      %p286 = por %p284, %p285
      %s287 = ssub.s32 %s33, %s40
      %p288 = scmp.eq.s32.totalorder %s287, 0
      %s290 = sadd.s32 %s289, 1
      %s291 = scalar_select %p288, %s289, %s290
      %p294 = pneg %p288
      %p295 = scmp.eq.s32.totalorder %s33, 1
      %p296 = por %p294, %p295
      %p297 = scmp.ne.s32.totalorder %s289, %s292
      %p298 = scmp.eq.s32.totalorder %s33, 0
      %p299 = por %p297, %p298
      %p300 = scmp.ne.s32.totalorder %s289, %s292
      %p301 = scmp.eq.s32.totalorder %s38, 1
      %p302 = por %p300, %p301
      %p303 = scmp.ne.s32.totalorder %s292, %s293
      %p304 = scmp.eq.s32.totalorder %s38, 0
      %p305 = por %p303, %p304
      %p306 = scmp.ne.s32.totalorder %s292, %s293
      %p307 = scmp.eq.s32.totalorder %s39, 1
      %p308 = por %p306, %p307
      %p310 = scmp.ne.s32.totalorder %s293, %s309
      %p311 = scmp.eq.s32.totalorder %s39, 0
      %p312 = por %p310, %p311
      %p313 = scmp.le.s32.totalorder 1, %s33
      %p314 = scmp.lt.s32.totalorder %s33, 3
      %p315 = pnand %p313, %p314
      %p316 = pneg %p315
      // Predicated region
      $region9: #{tpu_custom_call.1} parent=5 // pred_check
        _
      $region10: #{tpu_custom_call.1} parent=5 // pred_check_branch
        %318 = sbr.rel (%p315) target = $region12
      $region11: #{tpu_custom_call.1} parent=5 // pred_region
        %s319 = ssub.s32 %s33, 1
        // Predicated region
        $region13: #{tpu_custom_call.1} parent=11 // pred_check
          %p320 = pneg %p106
        $region14: #{tpu_custom_call.1} parent=11 // pred_check_branch
          %322 = sbr.rel (%p320) target = $region16
        $region15: #{tpu_custom_call.1} parent=11 // pred_region
          %324 = vsyncadd [#allocation6], 0
          %s325 = sshll.u32 %s2, 4
          %s326 = int_to_ptr.hbm [resolvable:$true] %s325
          %s327 = sshll.u32 [#allocation7], 4
          %s328 = int_to_ptr.vmem [resolvable:$true] %s327
          %333 = dma.hbm_to_vmem [thread:$0]  %s326, 512, %s328, [#allocation6], 128, 128, 8
        $region16: #{tpu_custom_call.1} parent=11 // pred_fallthru
          _
        // Predicated region
        $region17: #{tpu_custom_call.1} parent=11 // pred_check
          %p334 = pneg %p127
        $region18: #{tpu_custom_call.1} parent=11 // pred_check_branch
          %336 = sbr.rel (%p334) target = $region20
        $region19: #{tpu_custom_call.1} parent=11 // pred_region
          %338 = vsyncadd [#allocation9], 0
          %s340 = sshll.u32 %s3, 4
          %s341 = int_to_ptr.hbm [resolvable:$true] %s340
          %s342 = sshll.u32 [#allocation8], 4
          %s343 = int_to_ptr.vmem [resolvable:$true] %s342
          %345 = dma.hbm_to_vmem [thread:$0]  %s341, 128, %s343, [#allocation9]
        $region20: #{tpu_custom_call.1} parent=11 // pred_fallthru
          _
        // Predicated region
        $region21: #{tpu_custom_call.1} parent=11 // pred_check
          %p346 = pneg %p148
        $region22: #{tpu_custom_call.1} parent=11 // pred_check_branch
          %348 = sbr.rel (%p346) target = $region24
        $region23: #{tpu_custom_call.1} parent=11 // pred_region
          %350 = vsyncadd [#allocation9], 0
          %s351 = sshll.u32 %s4, 4
          %s352 = int_to_ptr.hbm [resolvable:$true] %s351
          %s353 = sshll.u32 [#allocation10], 4
          %s354 = int_to_ptr.vmem [resolvable:$true] %s353
          %359 = dma.hbm_to_vmem [thread:$0]  %s352, 256, %s354, [#allocation9], 128, 128, 8
        $region24: #{tpu_custom_call.1} parent=11 // pred_fallthru
          _
        // Predicated region
        $region25: #{tpu_custom_call.1} parent=11 // pred_check
          %p360 = pneg %p169
        $region26: #{tpu_custom_call.1} parent=11 // pred_check_branch
          %362 = sbr.rel (%p360) target = $region28
        $region27: #{tpu_custom_call.1} parent=11 // pred_region
          %364 = vsyncadd [#allocation12], 0
          %s365 = sshll.u32 %s5, 4
          %s366 = int_to_ptr.hbm [resolvable:$true] %s365
          %s367 = sshll.u32 [#allocation11], 4
          %s368 = int_to_ptr.vmem [resolvable:$true] %s367
          %373 = dma.hbm_to_vmem [thread:$0]  %s366, 256, %s368, [#allocation12], 64, 64, 4
        $region28: #{tpu_custom_call.1} parent=11 // pred_fallthru
          _
        // Predicated region
        $region29: #{tpu_custom_call.1} parent=11 // pred_check
          %p374 = pneg %p190
        $region30: #{tpu_custom_call.1} parent=11 // pred_check_branch
          %376 = sbr.rel (%p374) target = $region32
        $region31: #{tpu_custom_call.1} parent=11 // pred_region
          %378 = vsyncadd [#allocation12], 0
          %s379 = sshll.u32 %s6, 4
          %s380 = int_to_ptr.hbm [resolvable:$true] %s379
          %s381 = sshll.u32 [#allocation13], 4
          %s382 = int_to_ptr.vmem [resolvable:$true] %s381
          %387 = dma.hbm_to_vmem [thread:$0]  %s380, 256, %s382, [#allocation12], 64, 64, 4
        $region32: #{tpu_custom_call.1} parent=11 // pred_fallthru
          _
        // Predicated region
        $region33: #{tpu_custom_call.1} parent=11 // pred_check
          %p388 = pneg %p211
        $region34: #{tpu_custom_call.1} parent=11 // pred_check_branch
          %390 = sbr.rel (%p388) target = $region36
        $region35: #{tpu_custom_call.1} parent=11 // pred_region
          %392 = vsyncadd [#allocation15], 0
          %s393 = sshll.u32 %s7, 4
          %s394 = int_to_ptr.hbm [resolvable:$true] %s393
          %s395 = sshll.u32 [#allocation14], 4
          %s396 = int_to_ptr.vmem [resolvable:$true] %s395
          %401 = dma.hbm_to_vmem [thread:$0]  %s394, 256, %s396, [#allocation15], 64, 64, 4
        $region36: #{tpu_custom_call.1} parent=11 // pred_fallthru
          _
        // Predicated region
        $region37: #{tpu_custom_call.1} parent=11 // pred_check
          %p402 = pneg %p232
        $region38: #{tpu_custom_call.1} parent=11 // pred_check_branch
          %404 = sbr.rel (%p402) target = $region40
        $region39: #{tpu_custom_call.1} parent=11 // pred_region
          %406 = vsyncadd [#allocation15], 0
          %s407 = sshll.u32 %s8, 4
          %s408 = int_to_ptr.hbm [resolvable:$true] %s407
          %s409 = sshll.u32 [#allocation16], 4
          %s410 = int_to_ptr.vmem [resolvable:$true] %s409
          %415 = dma.hbm_to_vmem [thread:$0]  %s408, 256, %s410, [#allocation15], 64, 64, 4
        $region40: #{tpu_custom_call.1} parent=11 // pred_fallthru
          _
        // Predicated region
        $region41: #{tpu_custom_call.1} parent=11 // pred_check
          %p416 = pneg %p253
        $region42: #{tpu_custom_call.1} parent=11 // pred_check_branch
          %418 = sbr.rel (%p416) target = $region44
        $region43: #{tpu_custom_call.1} parent=11 // pred_region
          _
        $region44: #{tpu_custom_call.1} parent=11 // pred_fallthru
          _
      $region12: #{tpu_custom_call.1} parent=5 // pred_fallthru
        _
      %p419 = scmp.lt.s32.totalorder %s33, 2
      // Predicated region
      $region45: #{tpu_custom_call.1} parent=5 // pred_check
        %p420 = pneg %p419
      $region46: #{tpu_custom_call.1} parent=5 // pred_check_branch
        %422 = sbr.rel (%p420) target = $region48
      $region47: #{tpu_custom_call.1} parent=5 // pred_region
        // Predicated region
        $region49: #{tpu_custom_call.1} parent=47 // pred_check
          %p423 = pneg %p53
        $region50: #{tpu_custom_call.1} parent=47 // pred_check_branch
          %425 = sbr.rel (%p423) target = $region52
        $region51: #{tpu_custom_call.1} parent=47 // pred_region
          %s426 = sand.u32 %s43, 1
          %s427 = scalar_lea.sflag [#allocation3], %s426
          %s428 = sand.u32 %s43, 1
          %s429 = smul.addr %s428, 128
          %s430 = scalar_lea.vmem [#allocation2], %s429
          %s431 = smul.u32 8, %s33
          %433 = vsyncadd %s427, 0
          %s434 = smul.addr %s431, 2
          %s435 = smul.addr %s434, 8
          %s436 = scalar_lea.hbm %s0, %s435
          %s437 = sshll.u32 %s436, 4
          %s438 = int_to_ptr.hbm [resolvable:$true] %s437
          %s439 = sshll.u32 %s430, 4
          %s440 = int_to_ptr.vmem [resolvable:$true] %s439
          %445 = dma.hbm_to_vmem [thread:$0]  %s438, 2048, %s440, %s427, 128, 128, 8
        $region52: #{tpu_custom_call.1} parent=47 // pred_fallthru
          _
        // Predicated region
        $region53: #{tpu_custom_call.1} parent=47 // pred_check
          %p446 = pneg %p79
        $region54: #{tpu_custom_call.1} parent=47 // pred_check_branch
          %448 = sbr.rel (%p446) target = $region56
        $region55: #{tpu_custom_call.1} parent=47 // pred_region
          %s449 = sand.u32 %s33, 1
          %s450 = scalar_lea.sflag [#allocation6], %s449
          %s451 = sand.u32 %s69, 1
          %s452 = smul.addr %s451, 128
          %s453 = scalar_lea.vmem [#allocation5], %s452
          %s454 = smul.u32 8, %s33
          %456 = vsyncadd %s450, 0
          %s457 = smul.addr %s454, 2
          %s458 = smul.addr %s457, 8
          %s459 = scalar_lea.hbm %s1, %s458
          %s460 = sshll.u32 %s459, 4
          %s461 = int_to_ptr.hbm [resolvable:$true] %s460
          %s462 = sshll.u32 %s453, 4
          %s463 = int_to_ptr.vmem [resolvable:$true] %s462
          %468 = dma.hbm_to_vmem [thread:$0]  %s461, 2048, %s463, %s450, 128, 128, 8
        $region56: #{tpu_custom_call.1} parent=47 // pred_fallthru
          _
      $region48: #{tpu_custom_call.1} parent=5 // pred_fallthru
        _
      %p469 = scmp.le.s32.totalorder 1, %s33
      %p470 = scmp.lt.s32.totalorder %s33, 3
      %p471 = pnand %p469, %p470
      %p472 = pneg %p471
      // Predicated region
      $region57: #{tpu_custom_call.1} parent=5 // pred_check
        _
      $region58: #{tpu_custom_call.1} parent=5 // pred_check_branch
        %474 = sbr.rel (%p471) target = $region60
      $region59: #{tpu_custom_call.1} parent=5 // pred_region
        %s475 = ssub.s32 %s33, 1
        %s476 = sand.u32 %s46, 1
        %s477 = scalar_lea.sflag [#allocation3], %s476
        %s478 = sand.u32 %s46, 1
        %s479 = smul.addr %s478, 128
        %s480 = scalar_lea.vmem [#allocation2], %s479
        // Predicated region
        $region61: #{tpu_custom_call.1} parent=59 // pred_check
          %p481 = pneg %p59
        $region62: #{tpu_custom_call.1} parent=59 // pred_check_branch
          %483 = sbr.rel (%p481) target = $region64
        $region63: #{tpu_custom_call.1} parent=59 // pred_region
          %485 = dma.done %s477, 2048
        $region64: #{tpu_custom_call.1} parent=59 // pred_fallthru
          _
        %s486 = sand.u32 %s38, 1
        %s487 = scalar_lea.sflag [#allocation6], %s486
        %s488 = sand.u32 %s72, 1
        %s489 = smul.addr %s488, 128
        %s490 = scalar_lea.vmem [#allocation5], %s489
        // Predicated region
        $region65: #{tpu_custom_call.1} parent=59 // pred_check
          %p491 = pneg %p85
        $region66: #{tpu_custom_call.1} parent=59 // pred_check_branch
          %493 = sbr.rel (%p491) target = $region68
        $region67: #{tpu_custom_call.1} parent=59 // pred_region
          %495 = dma.done %s487, 2048
        $region68: #{tpu_custom_call.1} parent=59 // pred_fallthru
          _
        // Predicated region
        $region69: #{tpu_custom_call.1} parent=59 // pred_check
          %p496 = pneg %p106
        $region70: #{tpu_custom_call.1} parent=59 // pred_check_branch
          %498 = sbr.rel (%p496) target = $region72
        $region71: #{tpu_custom_call.1} parent=59 // pred_region
          %500 = dma.done [#allocation6], 512
        $region72: #{tpu_custom_call.1} parent=59 // pred_fallthru
          _
        // Predicated region
        $region73: #{tpu_custom_call.1} parent=59 // pred_check
          %p501 = pneg %p127
        $region74: #{tpu_custom_call.1} parent=59 // pred_check_branch
          %503 = sbr.rel (%p501) target = $region76
        $region75: #{tpu_custom_call.1} parent=59 // pred_region
          %505 = dma.done [#allocation9], 128
        $region76: #{tpu_custom_call.1} parent=59 // pred_fallthru
          _
        // Predicated region
        $region77: #{tpu_custom_call.1} parent=59 // pred_check
          %p506 = pneg %p148
        $region78: #{tpu_custom_call.1} parent=59 // pred_check_branch
          %508 = sbr.rel (%p506) target = $region80
        $region79: #{tpu_custom_call.1} parent=59 // pred_region
          %510 = dma.done [#allocation9], 256
        $region80: #{tpu_custom_call.1} parent=59 // pred_fallthru
          _
        // Predicated region
        $region81: #{tpu_custom_call.1} parent=59 // pred_check
          %p511 = pneg %p169
        $region82: #{tpu_custom_call.1} parent=59 // pred_check_branch
          %513 = sbr.rel (%p511) target = $region84
        $region83: #{tpu_custom_call.1} parent=59 // pred_region
          %515 = dma.done [#allocation12], 256
        $region84: #{tpu_custom_call.1} parent=59 // pred_fallthru
          _
        // Predicated region
        $region85: #{tpu_custom_call.1} parent=59 // pred_check
          %p516 = pneg %p190
        $region86: #{tpu_custom_call.1} parent=59 // pred_check_branch
          %518 = sbr.rel (%p516) target = $region88
        $region87: #{tpu_custom_call.1} parent=59 // pred_region
          %520 = dma.done [#allocation12], 256
        $region88: #{tpu_custom_call.1} parent=59 // pred_fallthru
          _
        // Predicated region
        $region89: #{tpu_custom_call.1} parent=59 // pred_check
          %p521 = pneg %p211
        $region90: #{tpu_custom_call.1} parent=59 // pred_check_branch
          %523 = sbr.rel (%p521) target = $region92
        $region91: #{tpu_custom_call.1} parent=59 // pred_region
          %525 = dma.done [#allocation15], 256
        $region92: #{tpu_custom_call.1} parent=59 // pred_fallthru
          _
        // Predicated region
        $region93: #{tpu_custom_call.1} parent=59 // pred_check
          %p526 = pneg %p232
        $region94: #{tpu_custom_call.1} parent=59 // pred_check_branch
          %528 = sbr.rel (%p526) target = $region96
        $region95: #{tpu_custom_call.1} parent=59 // pred_region
          %530 = dma.done [#allocation15], 256
        $region96: #{tpu_custom_call.1} parent=59 // pred_fallthru
          _
        %s531 = sand.u32 %s46, 1
        %s532 = scalar_lea.sflag [#allocation3], %s531
        %s533 = sand.u32 %s46, 1
        %s534 = smul.addr %s533, 128
        %s535 = scalar_lea.vmem [#allocation2], %s534
        %p536 = pneg %p59
        %p537 = pneg %p56
        %s538 = sand.u32 %s38, 1
        %s539 = scalar_lea.sflag [#allocation6], %s538
        %s540 = sand.u32 %s72, 1
        %s541 = smul.addr %s540, 128
        %s542 = scalar_lea.vmem [#allocation5], %s541
        %p543 = pneg %p85
        %p544 = pneg %p82
        %p545 = pneg %p106
        %p546 = pneg %p103
        %p547 = pneg %p127
        %p548 = pneg %p124
        %p549 = pneg %p148
        %p550 = pneg %p145
        %p551 = pneg %p169
        %p552 = pneg %p166
        %p553 = pneg %p190
        %p554 = pneg %p187
        %p555 = pneg %p211
        %p556 = pneg %p208
        %p557 = pneg %p232
        %p558 = pneg %p229
        %p559 = pneg %p253
        %p560 = pneg %p250
        %p561 = pneg %p279
        %p562 = pneg %p276
        %s563 = sand.u32 %s266, 1
        %s564 = scalar_lea.sflag [#allocation4], %s563
        %s565 = sand.u32 %s266, 1
        %s566 = smul.addr %s565, 128
        %s567 = scalar_lea.vmem [#allocation17], %s566
        %p568 = pneg %p305
        %p569 = pneg %p302
        %s570 = sand.u32 %s292, 1
        %s571 = scalar_lea.sflag [#allocation19], %s570
        %s572 = sand.u32 %s292, 1
        %s573 = smul.addr %s572, 32
        %s574 = scalar_lea.vmem [#allocation18], %s573
        %s575 = smul.u32 8, %s38
        %s576 = smul.u32 8, %s38
        %s577 = smul.u32 8, %s38
        %v579 = vld [vmem:[%s480] sm:$0xff]
        %v580 = vld [vmem:[%s480 + $0x8] sm:$0xff]
        %v581 = vld [vmem:[%s480 + $0x10] sm:$0xff]
        %v582 = vld [vmem:[%s480 + $0x18] sm:$0xff]
        %v583 = vld [vmem:[%s480 + $0x20] sm:$0xff]
        %v584 = vld [vmem:[%s480 + $0x28] sm:$0xff]
        %v585 = vld [vmem:[%s480 + $0x30] sm:$0xff]
        %v586 = vld [vmem:[%s480 + $0x38] sm:$0xff]
        %v587 = vld [vmem:[%s480 + $0x40] sm:$0xff]
        %v588 = vld [vmem:[%s480 + $0x48] sm:$0xff]
        %v589 = vld [vmem:[%s480 + $0x50] sm:$0xff]
        %v590 = vld [vmem:[%s480 + $0x58] sm:$0xff]
        %v591 = vld [vmem:[%s480 + $0x60] sm:$0xff]
        %v592 = vld [vmem:[%s480 + $0x68] sm:$0xff]
        %v593 = vld [vmem:[%s480 + $0x70] sm:$0xff]
        %v594 = vld [vmem:[%s480 + $0x78] sm:$0xff]
        %v595 = vld [vmem:[%s490] sm:$0xff]
        %v596 = vld [vmem:[%s490 + $0x8] sm:$0xff]
        %v597 = vld [vmem:[%s490 + $0x10] sm:$0xff]
        %v598 = vld [vmem:[%s490 + $0x18] sm:$0xff]
        %v599 = vld [vmem:[%s490 + $0x20] sm:$0xff]
        %v600 = vld [vmem:[%s490 + $0x28] sm:$0xff]
        %v601 = vld [vmem:[%s490 + $0x30] sm:$0xff]
        %v602 = vld [vmem:[%s490 + $0x38] sm:$0xff]
        %v603 = vld [vmem:[%s490 + $0x40] sm:$0xff]
        %v604 = vld [vmem:[%s490 + $0x48] sm:$0xff]
        %v605 = vld [vmem:[%s490 + $0x50] sm:$0xff]
        %v606 = vld [vmem:[%s490 + $0x58] sm:$0xff]
        %v607 = vld [vmem:[%s490 + $0x60] sm:$0xff]
        %v608 = vld [vmem:[%s490 + $0x68] sm:$0xff]
        %v609 = vld [vmem:[%s490 + $0x70] sm:$0xff]
        %v610 = vld [vmem:[%s490 + $0x78] sm:$0xff]
        %v611 = vld [vmem:[#allocation7] sm:$0xff]
        %v612 = vld [vmem:[#allocation7 + $0x8] sm:$0xff]
        %v613 = vld [vmem:[#allocation7 + $0x10] sm:$0xff]
        %v614 = vld [vmem:[#allocation7 + $0x18] sm:$0xff]
        %vm615 = vcmask 261120
        %v616 = vsel %vm615, %v579, 0.0
        %v617 = vsel %vm615, %v580, 0.0
        %v618 = vadd.f32 %v616, %v617
        %v619 = vrot.slane %v618, 4
        %v620 = vadd.f32 %v618, %v619
        %v621 = vrot.slane %v620, 2
        %v622 = vadd.f32 %v620, %v621
        %v623 = vrot.slane %v622, 1
        %v624 = vadd.f32 %v622, %v623
        %v625 = vsel %vm615, %v581, 0.0
        %v626 = vsel %vm615, %v582, 0.0
        %v627 = vadd.f32 %v625, %v626
        %v628 = vrot.slane %v627, 4
        %v629 = vadd.f32 %v627, %v628
        %v630 = vrot.slane %v629, 2
        %v631 = vadd.f32 %v629, %v630
        %v632 = vrot.slane %v631, 1
        %v633 = vadd.f32 %v631, %v632
        %v634 = vsel %vm615, %v583, 0.0
        %v635 = vsel %vm615, %v584, 0.0
        %v636 = vadd.f32 %v634, %v635
        %v637 = vrot.slane %v636, 4
        %v638 = vadd.f32 %v636, %v637
        %v639 = vrot.slane %v638, 2
        %v640 = vadd.f32 %v638, %v639
        %v641 = vrot.slane %v640, 1
        %v642 = vadd.f32 %v640, %v641
        %v643 = vsel %vm615, %v585, 0.0
        %v644 = vsel %vm615, %v586, 0.0
        %v645 = vadd.f32 %v643, %v644
        %v646 = vrot.slane %v645, 4
        %v647 = vadd.f32 %v645, %v646
        %v648 = vrot.slane %v647, 2
        %v649 = vadd.f32 %v647, %v648
        %v650 = vrot.slane %v649, 1
        %v651 = vadd.f32 %v649, %v650
        %v652 = vsel %vm615, %v587, 0.0
        %v653 = vsel %vm615, %v588, 0.0
        %v654 = vadd.f32 %v652, %v653
        %v655 = vrot.slane %v654, 4
        %v656 = vadd.f32 %v654, %v655
        %v657 = vrot.slane %v656, 2
        %v658 = vadd.f32 %v656, %v657
        %v659 = vrot.slane %v658, 1
        %v660 = vadd.f32 %v658, %v659
        %v661 = vsel %vm615, %v589, 0.0
        %v662 = vsel %vm615, %v590, 0.0
        %v663 = vadd.f32 %v661, %v662
        %v664 = vrot.slane %v663, 4
        %v665 = vadd.f32 %v663, %v664
        %v666 = vrot.slane %v665, 2
        %v667 = vadd.f32 %v665, %v666
        %v668 = vrot.slane %v667, 1
        %v669 = vadd.f32 %v667, %v668
        %v670 = vsel %vm615, %v591, 0.0
        %v671 = vsel %vm615, %v592, 0.0
        %v672 = vadd.f32 %v670, %v671
        %v673 = vrot.slane %v672, 4
        %v674 = vadd.f32 %v672, %v673
        %v675 = vrot.slane %v674, 2
        %v676 = vadd.f32 %v674, %v675
        %v677 = vrot.slane %v676, 1
        %v678 = vadd.f32 %v676, %v677
        %v679 = vsel %vm615, %v593, 0.0
        %v680 = vsel %vm615, %v594, 0.0
        %v681 = vadd.f32 %v679, %v680
        %v682 = vrot.slane %v681, 4
        %v683 = vadd.f32 %v681, %v682
        %v684 = vrot.slane %v683, 2
        %v685 = vadd.f32 %v683, %v684
        %v686 = vrot.slane %v685, 1
        %v687 = vadd.f32 %v685, %v686
        %vm696 = vcmask 1041409
        %v697 = vsel %vm696, %v633, %v624
        %vm698 = vcmask 1042434
        %v699 = vsel %vm698, %v642, %v697
        %vm700 = vcmask 1043459
        %v701 = vsel %vm700, %v651, %v699
        %vm702 = vcmask 1044484
        %v703 = vsel %vm702, %v660, %v701
        %vm704 = vcmask 1045509
        %v705 = vsel %vm704, %v669, %v703
        %vm706 = vcmask 1046534
        %v707 = vsel %vm706, %v678, %v705
        %vm708 = vcmask 1047559
        %v709 = vsel %vm708, %v687, %v707
        %v710 = vsel %vm615, %v709, 0
        %712 = vmatpush.msra.mxu0 0.0
        %713 = vmatpush.msra.mxu0 0.0
        %714 = vmatpush.msra.mxu0 0.0
        %715 = vmatpush.msra.mxu0 0.0
        %716 = vmatpush.msra.mxu0 0.0
        %717 = vmatpush.msra.mxu0 0.0
        %718 = vmatpush.msra.mxu0 0.0
        %719 = vmatpush.msra.mxu0 0.0
        %720 = vmatpush.msra.mxu0 0.0
        %721 = vmatpush.msra.mxu0 0.0
        %722 = vmatpush.msra.mxu0 0.0
        %723 = vmatpush.msra.mxu0 0.0
        %724 = vmatpush.msra.mxu0 %v614
        %725 = vmatpush.msra.mxu0 %v613
        %726 = vmatpush.msra.mxu0 %v612
        %727 = vmatpush.msra.mxu0 %v611
        %728 = vmatmul.f32.gmra.mxu0 %v710
        %v729 = vpop.f32.mrf.mxu0
        %v730 = vadd.f32 0.0, %v729
        %731 = vdwg.mxu0
        %v732 = vmul.f32 %v730, 0.0078125
        %v734 = vrot.slane %v732, 1
        %v735 = vrot.slane %v732, 2
        %v736 = vrot.slane %v732, 3
        %v737 = vrot.slane %v732, 4
        %v738 = vrot.slane %v732, 5
        %v739 = vrot.slane %v732, 6
        %v740 = vrot.slane %v732, 7
        %v741 = vperm.slane %v732, 0
        %v742 = vperm.slane %v734, 0
        %v743 = vperm.slane %v735, 0
        %v744 = vperm.slane %v736, 0
        %v745 = vperm.slane %v737, 0
        %v746 = vperm.slane %v738, 0
        %v747 = vperm.slane %v739, 0
        %v748 = vperm.slane %v740, 0
        %v757 = vsub.f32 %v579, %v741
        %v758 = vsub.f32 %v580, %v741
        %v759 = vsub.f32 %v581, %v742
        %v760 = vsub.f32 %v582, %v742
        %v761 = vsub.f32 %v583, %v743
        %v762 = vsub.f32 %v584, %v743
        %v763 = vsub.f32 %v585, %v744
        %v764 = vsub.f32 %v586, %v744
        %v765 = vsub.f32 %v587, %v745
        %v766 = vsub.f32 %v588, %v745
        %v767 = vsub.f32 %v589, %v746
        %v768 = vsub.f32 %v590, %v746
        %v769 = vsub.f32 %v591, %v747
        %v770 = vsub.f32 %v592, %v747
        %v771 = vsub.f32 %v593, %v748
        %v772 = vsub.f32 %v594, %v748
        %v773 = vmul.f32 %v757, %v757
        %v774 = vmul.f32 %v758, %v758
        %v775 = vmul.f32 %v759, %v759
        %v776 = vmul.f32 %v760, %v760
        %v777 = vmul.f32 %v761, %v761
        %v778 = vmul.f32 %v762, %v762
        %v779 = vmul.f32 %v763, %v763
        %v780 = vmul.f32 %v764, %v764
        %v781 = vmul.f32 %v765, %v765
        %v782 = vmul.f32 %v766, %v766
        %v783 = vmul.f32 %v767, %v767
        %v784 = vmul.f32 %v768, %v768
        %v785 = vmul.f32 %v769, %v769
        %v786 = vmul.f32 %v770, %v770
        %v787 = vmul.f32 %v771, %v771
        %v788 = vmul.f32 %v772, %v772
        %v789 = vsel %vm615, %v773, 0.0
        %v790 = vsel %vm615, %v774, 0.0
        %v791 = vadd.f32 %v789, %v790
        %v792 = vrot.slane %v791, 4
        %v793 = vadd.f32 %v791, %v792
        %v794 = vrot.slane %v793, 2
        %v795 = vadd.f32 %v793, %v794
        %v796 = vrot.slane %v795, 1
        %v797 = vadd.f32 %v795, %v796
        %v798 = vsel %vm615, %v775, 0.0
        %v799 = vsel %vm615, %v776, 0.0
        %v800 = vadd.f32 %v798, %v799
        %v801 = vrot.slane %v800, 4
        %v802 = vadd.f32 %v800, %v801
        %v803 = vrot.slane %v802, 2
        %v804 = vadd.f32 %v802, %v803
        %v805 = vrot.slane %v804, 1
        %v806 = vadd.f32 %v804, %v805
        %v807 = vsel %vm615, %v777, 0.0
        %v808 = vsel %vm615, %v778, 0.0
        %v809 = vadd.f32 %v807, %v808
        %v810 = vrot.slane %v809, 4
        %v811 = vadd.f32 %v809, %v810
        %v812 = vrot.slane %v811, 2
        %v813 = vadd.f32 %v811, %v812
        %v814 = vrot.slane %v813, 1
        %v815 = vadd.f32 %v813, %v814
        %v816 = vsel %vm615, %v779, 0.0
        %v817 = vsel %vm615, %v780, 0.0
        %v818 = vadd.f32 %v816, %v817
        %v819 = vrot.slane %v818, 4
        %v820 = vadd.f32 %v818, %v819
        %v821 = vrot.slane %v820, 2
        %v822 = vadd.f32 %v820, %v821
        %v823 = vrot.slane %v822, 1
        %v824 = vadd.f32 %v822, %v823
        %v825 = vsel %vm615, %v781, 0.0
        %v826 = vsel %vm615, %v782, 0.0
        %v827 = vadd.f32 %v825, %v826
        %v828 = vrot.slane %v827, 4
        %v829 = vadd.f32 %v827, %v828
        %v830 = vrot.slane %v829, 2
        %v831 = vadd.f32 %v829, %v830
        %v832 = vrot.slane %v831, 1
        %v833 = vadd.f32 %v831, %v832
        %v834 = vsel %vm615, %v783, 0.0
        %v835 = vsel %vm615, %v784, 0.0
        %v836 = vadd.f32 %v834, %v835
        %v837 = vrot.slane %v836, 4
        %v838 = vadd.f32 %v836, %v837
        %v839 = vrot.slane %v838, 2
        %v840 = vadd.f32 %v838, %v839
        %v841 = vrot.slane %v840, 1
        %v842 = vadd.f32 %v840, %v841
        %v843 = vsel %vm615, %v785, 0.0
        %v844 = vsel %vm615, %v786, 0.0
        %v845 = vadd.f32 %v843, %v844
        %v846 = vrot.slane %v845, 4
        %v847 = vadd.f32 %v845, %v846
        %v848 = vrot.slane %v847, 2
        %v849 = vadd.f32 %v847, %v848
        %v850 = vrot.slane %v849, 1
        %v851 = vadd.f32 %v849, %v850
        %v852 = vsel %vm615, %v787, 0.0
        %v853 = vsel %vm615, %v788, 0.0
        %v854 = vadd.f32 %v852, %v853
        %v855 = vrot.slane %v854, 4
        %v856 = vadd.f32 %v854, %v855
        %v857 = vrot.slane %v856, 2
        %v858 = vadd.f32 %v856, %v857
        %v859 = vrot.slane %v858, 1
        %v860 = vadd.f32 %v858, %v859
        %v869 = vsel %vm696, %v806, %v797
        %v870 = vsel %vm698, %v815, %v869
        %v871 = vsel %vm700, %v824, %v870
        %v872 = vsel %vm702, %v833, %v871
        %v873 = vsel %vm704, %v842, %v872
        %v874 = vsel %vm706, %v851, %v873
        %v875 = vsel %vm708, %v860, %v874
        %v876 = vsel %vm615, %v875, 0
        %878 = vmatpush.msra.mxu0 0.0
        %879 = vmatpush.msra.mxu0 0.0
        %880 = vmatpush.msra.mxu0 0.0
        %881 = vmatpush.msra.mxu0 0.0
        %882 = vmatpush.msra.mxu0 0.0
        %883 = vmatpush.msra.mxu0 0.0
        %884 = vmatpush.msra.mxu0 0.0
        %885 = vmatpush.msra.mxu0 0.0
        %886 = vmatpush.msra.mxu0 0.0
        %887 = vmatpush.msra.mxu0 0.0
        %888 = vmatpush.msra.mxu0 0.0
        %889 = vmatpush.msra.mxu0 0.0
        %890 = vmatpush.msra.mxu0 %v614
        %891 = vmatpush.msra.mxu0 %v613
        %892 = vmatpush.msra.mxu0 %v612
        %893 = vmatpush.msra.mxu0 %v611
        %894 = vmatmul.f32.gmra.mxu0 %v876
        %v895 = vpop.f32.mrf.mxu0
        %v896 = vadd.f32 0.0, %v895
        %897 = vdwg.mxu0
        %v898 = vmul.f32 %v896, 0.0078125
        %v899 = vadd.f32 %v898, 0.001
        %v900 = vrsqrt.pop %v899
        %v901 = vmul.f32 %v900, %v899
        %v902 = vmul.f32 %v901, %v900
        %v903 = vmul.f32 0.5, %v902
        %v904 = vsub.f32 1.5, %v903
        %v905 = vmul.f32 %v900, %v904
        %vm906 = vweird.f32 %v899
        %vm907 = vweird.f32 %v900
        %vm908 = vmor %vm906, %vm907
        %v909 = vsel %vm908, %v900, %v905
        %v911 = vrot.slane %v909, 1
        %v912 = vrot.slane %v909, 2
        %v913 = vrot.slane %v909, 3
        %v914 = vrot.slane %v909, 4
        %v915 = vrot.slane %v909, 5
        %v916 = vrot.slane %v909, 6
        %v917 = vrot.slane %v909, 7
        %v918 = vperm.slane %v909, 0
        %v919 = vperm.slane %v911, 0
        %v920 = vperm.slane %v912, 0
        %v921 = vperm.slane %v913, 0
        %v922 = vperm.slane %v914, 0
        %v923 = vperm.slane %v915, 0
        %v924 = vperm.slane %v916, 0
        %v925 = vperm.slane %v917, 0
        %v934 = vmul.f32 %v757, %v918
        %v935 = vmul.f32 %v758, %v918
        %v936 = vmul.f32 %v759, %v919
        %v937 = vmul.f32 %v760, %v919
        %v938 = vmul.f32 %v761, %v920
        %v939 = vmul.f32 %v762, %v920
        %v940 = vmul.f32 %v763, %v921
        %v941 = vmul.f32 %v764, %v921
        %v942 = vmul.f32 %v765, %v922
        %v943 = vmul.f32 %v766, %v922
        %v944 = vmul.f32 %v767, %v923
        %v945 = vmul.f32 %v768, %v923
        %v946 = vmul.f32 %v769, %v924
        %v947 = vmul.f32 %v770, %v924
        %v948 = vmul.f32 %v771, %v925
        %v949 = vmul.f32 %v772, %v925
        %v950 = vsel %vm615, %v595, 0.0
        %v951 = vsel %vm615, %v596, 0.0
        %v952 = vadd.f32 %v950, %v951
        %v953 = vrot.slane %v952, 4
        %v954 = vadd.f32 %v952, %v953
        %v955 = vrot.slane %v954, 2
        %v956 = vadd.f32 %v954, %v955
        %v957 = vrot.slane %v956, 1
        %v958 = vadd.f32 %v956, %v957
        %v959 = vsel %vm615, %v597, 0.0
        %v960 = vsel %vm615, %v598, 0.0
        %v961 = vadd.f32 %v959, %v960
        %v962 = vrot.slane %v961, 4
        %v963 = vadd.f32 %v961, %v962
        %v964 = vrot.slane %v963, 2
        %v965 = vadd.f32 %v963, %v964
        %v966 = vrot.slane %v965, 1
        %v967 = vadd.f32 %v965, %v966
        %v968 = vsel %vm615, %v599, 0.0
        %v969 = vsel %vm615, %v600, 0.0
        %v970 = vadd.f32 %v968, %v969
        %v971 = vrot.slane %v970, 4
        %v972 = vadd.f32 %v970, %v971
        %v973 = vrot.slane %v972, 2
        %v974 = vadd.f32 %v972, %v973
        %v975 = vrot.slane %v974, 1
        %v976 = vadd.f32 %v974, %v975
        %v977 = vsel %vm615, %v601, 0.0
        %v978 = vsel %vm615, %v602, 0.0
        %v979 = vadd.f32 %v977, %v978
        %v980 = vrot.slane %v979, 4
        %v981 = vadd.f32 %v979, %v980
        %v982 = vrot.slane %v981, 2
        %v983 = vadd.f32 %v981, %v982
        %v984 = vrot.slane %v983, 1
        %v985 = vadd.f32 %v983, %v984
        %v986 = vsel %vm615, %v603, 0.0
        %v987 = vsel %vm615, %v604, 0.0
        %v988 = vadd.f32 %v986, %v987
        %v989 = vrot.slane %v988, 4
        %v990 = vadd.f32 %v988, %v989
        %v991 = vrot.slane %v990, 2
        %v992 = vadd.f32 %v990, %v991
        %v993 = vrot.slane %v992, 1
        %v994 = vadd.f32 %v992, %v993
        %v995 = vsel %vm615, %v605, 0.0
        %v996 = vsel %vm615, %v606, 0.0
        %v997 = vadd.f32 %v995, %v996
        %v998 = vrot.slane %v997, 4
        %v999 = vadd.f32 %v997, %v998
        %v1000 = vrot.slane %v999, 2
        %v1001 = vadd.f32 %v999, %v1000
        %v1002 = vrot.slane %v1001, 1
        %v1003 = vadd.f32 %v1001, %v1002
        %v1004 = vsel %vm615, %v607, 0.0
        %v1005 = vsel %vm615, %v608, 0.0
        %v1006 = vadd.f32 %v1004, %v1005
        %v1007 = vrot.slane %v1006, 4
        %v1008 = vadd.f32 %v1006, %v1007
        %v1009 = vrot.slane %v1008, 2
        %v1010 = vadd.f32 %v1008, %v1009
        %v1011 = vrot.slane %v1010, 1
        %v1012 = vadd.f32 %v1010, %v1011
        %v1013 = vsel %vm615, %v609, 0.0
        %v1014 = vsel %vm615, %v610, 0.0
        %v1015 = vadd.f32 %v1013, %v1014
        %v1016 = vrot.slane %v1015, 4
        %v1017 = vadd.f32 %v1015, %v1016
        %v1018 = vrot.slane %v1017, 2
        %v1019 = vadd.f32 %v1017, %v1018
        %v1020 = vrot.slane %v1019, 1
        %v1021 = vadd.f32 %v1019, %v1020
        %v1030 = vsel %vm696, %v967, %v958
        %v1031 = vsel %vm698, %v976, %v1030
        %v1032 = vsel %vm700, %v985, %v1031
        %v1033 = vsel %vm702, %v994, %v1032
        %v1034 = vsel %vm704, %v1003, %v1033
        %v1035 = vsel %vm706, %v1012, %v1034
        %v1036 = vsel %vm708, %v1021, %v1035
        %v1037 = vsel %vm615, %v1036, 0
        %1039 = vmatpush.msra.mxu0 0.0
        %1040 = vmatpush.msra.mxu0 0.0
        %1041 = vmatpush.msra.mxu0 0.0
        %1042 = vmatpush.msra.mxu0 0.0
        %1043 = vmatpush.msra.mxu0 0.0
        %1044 = vmatpush.msra.mxu0 0.0
        %1045 = vmatpush.msra.mxu0 0.0
        %1046 = vmatpush.msra.mxu0 0.0
        %1047 = vmatpush.msra.mxu0 0.0
        %1048 = vmatpush.msra.mxu0 0.0
        %1049 = vmatpush.msra.mxu0 0.0
        %1050 = vmatpush.msra.mxu0 0.0
        %1051 = vmatpush.msra.mxu0 %v614
        %1052 = vmatpush.msra.mxu0 %v613
        %1053 = vmatpush.msra.mxu0 %v612
        %1054 = vmatpush.msra.mxu0 %v611
        %1055 = vmatmul.f32.gmra.mxu0 %v1037
        %v1056 = vpop.f32.mrf.mxu0
        %v1057 = vadd.f32 0.0, %v1056
        %1058 = vdwg.mxu0
        %v1059 = vmul.f32 %v1057, 0.0078125
        %v1061 = vrot.slane %v1059, 1
        %v1062 = vrot.slane %v1059, 2
        %v1063 = vrot.slane %v1059, 3
        %v1064 = vrot.slane %v1059, 4
        %v1065 = vrot.slane %v1059, 5
        %v1066 = vrot.slane %v1059, 6
        %v1067 = vrot.slane %v1059, 7
        %v1068 = vperm.slane %v1059, 0
        %v1069 = vperm.slane %v1061, 0
        %v1070 = vperm.slane %v1062, 0
        %v1071 = vperm.slane %v1063, 0
        %v1072 = vperm.slane %v1064, 0
        %v1073 = vperm.slane %v1065, 0
        %v1074 = vperm.slane %v1066, 0
        %v1075 = vperm.slane %v1067, 0
        %v1084 = vsub.f32 %v595, %v1068
        %v1085 = vsub.f32 %v596, %v1068
        %v1086 = vsub.f32 %v597, %v1069
        %v1087 = vsub.f32 %v598, %v1069
        %v1088 = vsub.f32 %v599, %v1070
        %v1089 = vsub.f32 %v600, %v1070
        %v1090 = vsub.f32 %v601, %v1071
        %v1091 = vsub.f32 %v602, %v1071
        %v1092 = vsub.f32 %v603, %v1072
        %v1093 = vsub.f32 %v604, %v1072
        %v1094 = vsub.f32 %v605, %v1073
        %v1095 = vsub.f32 %v606, %v1073
        %v1096 = vsub.f32 %v607, %v1074
        %v1097 = vsub.f32 %v608, %v1074
        %v1098 = vsub.f32 %v609, %v1075
        %v1099 = vsub.f32 %v610, %v1075
        %v1100 = vmul.f32 %v1084, %v1084
        %v1101 = vmul.f32 %v1085, %v1085
        %v1102 = vmul.f32 %v1086, %v1086
        %v1103 = vmul.f32 %v1087, %v1087
        %v1104 = vmul.f32 %v1088, %v1088
        %v1105 = vmul.f32 %v1089, %v1089
        %v1106 = vmul.f32 %v1090, %v1090
        %v1107 = vmul.f32 %v1091, %v1091
        %v1108 = vmul.f32 %v1092, %v1092
        %v1109 = vmul.f32 %v1093, %v1093
        %v1110 = vmul.f32 %v1094, %v1094
        %v1111 = vmul.f32 %v1095, %v1095
        %v1112 = vmul.f32 %v1096, %v1096
        %v1113 = vmul.f32 %v1097, %v1097
        %v1114 = vmul.f32 %v1098, %v1098
        %v1115 = vmul.f32 %v1099, %v1099
        %v1116 = vsel %vm615, %v1100, 0.0
        %v1117 = vsel %vm615, %v1101, 0.0
        %v1118 = vadd.f32 %v1116, %v1117
        %v1119 = vrot.slane %v1118, 4
        %v1120 = vadd.f32 %v1118, %v1119
        %v1121 = vrot.slane %v1120, 2
        %v1122 = vadd.f32 %v1120, %v1121
        %v1123 = vrot.slane %v1122, 1
        %v1124 = vadd.f32 %v1122, %v1123
        %v1125 = vsel %vm615, %v1102, 0.0
        %v1126 = vsel %vm615, %v1103, 0.0
        %v1127 = vadd.f32 %v1125, %v1126
        %v1128 = vrot.slane %v1127, 4
        %v1129 = vadd.f32 %v1127, %v1128
        %v1130 = vrot.slane %v1129, 2
        %v1131 = vadd.f32 %v1129, %v1130
        %v1132 = vrot.slane %v1131, 1
        %v1133 = vadd.f32 %v1131, %v1132
        %v1134 = vsel %vm615, %v1104, 0.0
        %v1135 = vsel %vm615, %v1105, 0.0
        %v1136 = vadd.f32 %v1134, %v1135
        %v1137 = vrot.slane %v1136, 4
        %v1138 = vadd.f32 %v1136, %v1137
        %v1139 = vrot.slane %v1138, 2
        %v1140 = vadd.f32 %v1138, %v1139
        %v1141 = vrot.slane %v1140, 1
        %v1142 = vadd.f32 %v1140, %v1141
        %v1143 = vsel %vm615, %v1106, 0.0
        %v1144 = vsel %vm615, %v1107, 0.0
        %v1145 = vadd.f32 %v1143, %v1144
        %v1146 = vrot.slane %v1145, 4
        %v1147 = vadd.f32 %v1145, %v1146
        %v1148 = vrot.slane %v1147, 2
        %v1149 = vadd.f32 %v1147, %v1148
        %v1150 = vrot.slane %v1149, 1
        %v1151 = vadd.f32 %v1149, %v1150
        %v1152 = vsel %vm615, %v1108, 0.0
        %v1153 = vsel %vm615, %v1109, 0.0
        %v1154 = vadd.f32 %v1152, %v1153
        %v1155 = vrot.slane %v1154, 4
        %v1156 = vadd.f32 %v1154, %v1155
        %v1157 = vrot.slane %v1156, 2
        %v1158 = vadd.f32 %v1156, %v1157
        %v1159 = vrot.slane %v1158, 1
        %v1160 = vadd.f32 %v1158, %v1159
        %v1161 = vsel %vm615, %v1110, 0.0
        %v1162 = vsel %vm615, %v1111, 0.0
        %v1163 = vadd.f32 %v1161, %v1162
        %v1164 = vrot.slane %v1163, 4
        %v1165 = vadd.f32 %v1163, %v1164
        %v1166 = vrot.slane %v1165, 2
        %v1167 = vadd.f32 %v1165, %v1166
        %v1168 = vrot.slane %v1167, 1
        %v1169 = vadd.f32 %v1167, %v1168
        %v1170 = vsel %vm615, %v1112, 0.0
        %v1171 = vsel %vm615, %v1113, 0.0
        %v1172 = vadd.f32 %v1170, %v1171
        %v1173 = vrot.slane %v1172, 4
        %v1174 = vadd.f32 %v1172, %v1173
        %v1175 = vrot.slane %v1174, 2
        %v1176 = vadd.f32 %v1174, %v1175
        %v1177 = vrot.slane %v1176, 1
        %v1178 = vadd.f32 %v1176, %v1177
        %v1179 = vsel %vm615, %v1114, 0.0
        %v1180 = vsel %vm615, %v1115, 0.0
        %v1181 = vadd.f32 %v1179, %v1180
        %v1182 = vrot.slane %v1181, 4
        %v1183 = vadd.f32 %v1181, %v1182
        %v1184 = vrot.slane %v1183, 2
        %v1185 = vadd.f32 %v1183, %v1184
        %v1186 = vrot.slane %v1185, 1
        %v1187 = vadd.f32 %v1185, %v1186
        %v1196 = vsel %vm696, %v1133, %v1124
        %v1197 = vsel %vm698, %v1142, %v1196
        %v1198 = vsel %vm700, %v1151, %v1197
        %v1199 = vsel %vm702, %v1160, %v1198
        %v1200 = vsel %vm704, %v1169, %v1199
        %v1201 = vsel %vm706, %v1178, %v1200
        %v1202 = vsel %vm708, %v1187, %v1201
        %v1203 = vsel %vm615, %v1202, 0
        %1205 = vmatpush.msra.mxu0 0.0
        %1206 = vmatpush.msra.mxu0 0.0
        %1207 = vmatpush.msra.mxu0 0.0
        %1208 = vmatpush.msra.mxu0 0.0
        %1209 = vmatpush.msra.mxu0 0.0
        %1210 = vmatpush.msra.mxu0 0.0
        %1211 = vmatpush.msra.mxu0 0.0
        %1212 = vmatpush.msra.mxu0 0.0
        %1213 = vmatpush.msra.mxu0 0.0
        %1214 = vmatpush.msra.mxu0 0.0
        %1215 = vmatpush.msra.mxu0 0.0
        %1216 = vmatpush.msra.mxu0 0.0
        %1217 = vmatpush.msra.mxu0 %v614
        %1218 = vmatpush.msra.mxu0 %v613
        %1219 = vmatpush.msra.mxu0 %v612
        %1220 = vmatpush.msra.mxu0 %v611
        %1221 = vmatmul.f32.gmra.mxu0 %v1203
        %v1222 = vpop.f32.mrf.mxu0
        %v1223 = vadd.f32 0.0, %v1222
        %1224 = vdwg.mxu0
        %v1225 = vmul.f32 %v1223, 0.0078125
        %v1226 = vadd.f32 %v1225, 0.001
        %v1227 = vrsqrt.pop %v1226
        %v1228 = vmul.f32 %v1227, %v1226
        %v1229 = vmul.f32 %v1228, %v1227
        %v1230 = vmul.f32 0.5, %v1229
        %v1231 = vsub.f32 1.5, %v1230
        %v1232 = vmul.f32 %v1227, %v1231
        %vm1233 = vweird.f32 %v1226
        %vm1234 = vweird.f32 %v1227
        %vm1235 = vmor %vm1233, %vm1234
        %v1236 = vsel %vm1235, %v1227, %v1232
        %v1238 = vrot.slane %v1236, 1
        %v1239 = vrot.slane %v1236, 2
        %v1240 = vrot.slane %v1236, 3
        %v1241 = vrot.slane %v1236, 4
        %v1242 = vrot.slane %v1236, 5
        %v1243 = vrot.slane %v1236, 6
        %v1244 = vrot.slane %v1236, 7
        %v1245 = vperm.slane %v1236, 0
        %v1246 = vperm.slane %v1238, 0
        %v1247 = vperm.slane %v1239, 0
        %v1248 = vperm.slane %v1240, 0
        %v1249 = vperm.slane %v1241, 0
        %v1250 = vperm.slane %v1242, 0
        %v1251 = vperm.slane %v1243, 0
        %v1252 = vperm.slane %v1244, 0
        %v1261 = vmul.f32 %v1084, %v1245
        %v1262 = vmul.f32 %v1085, %v1245
        %v1263 = vmul.f32 %v1086, %v1246
        %v1264 = vmul.f32 %v1087, %v1246
        %v1265 = vmul.f32 %v1088, %v1247
        %v1266 = vmul.f32 %v1089, %v1247
        %v1267 = vmul.f32 %v1090, %v1248
        %v1268 = vmul.f32 %v1091, %v1248
        %v1269 = vmul.f32 %v1092, %v1249
        %v1270 = vmul.f32 %v1093, %v1249
        %v1271 = vmul.f32 %v1094, %v1250
        %v1272 = vmul.f32 %v1095, %v1250
        %v1273 = vmul.f32 %v1096, %v1251
        %v1274 = vmul.f32 %v1097, %v1251
        %v1275 = vmul.f32 %v1098, %v1252
        %v1276 = vmul.f32 %v1099, %v1252
        %v1277 = vpack.c.bf16 %v935, %v934
        %v1278 = vpack.c.bf16 %v937, %v936
        %v1279 = vpack.c.bf16 %v939, %v938
        %v1280 = vpack.c.bf16 %v941, %v940
        %v1281 = vpack.c.bf16 %v943, %v942
        %v1282 = vpack.c.bf16 %v945, %v944
        %v1283 = vpack.c.bf16 %v947, %v946
        %v1284 = vpack.c.bf16 %v949, %v948
        %v1285 = vpack.c.bf16 %v1262, %v1261
        %v1286 = vpack.c.bf16 %v1264, %v1263
        %v1287 = vpack.c.bf16 %v1266, %v1265
        %v1288 = vpack.c.bf16 %v1268, %v1267
        %v1289 = vpack.c.bf16 %v1270, %v1269
        %v1290 = vpack.c.bf16 %v1272, %v1271
        %v1291 = vpack.c.bf16 %v1274, %v1273
        %v1292 = vpack.c.bf16 %v1276, %v1275
        %v1293 = vld [vmem:[#allocation11] sm:$0xf]
        %v1294 = vld [vmem:[#allocation11 + $0x4] sm:$0xf]
        %v1295 = vld [vmem:[#allocation11 + $0x8] sm:$0xf]
        %v1296 = vld [vmem:[#allocation11 + $0xc] sm:$0xf]
        %v1301 = vunpack.c.l.b16 %v1293
        %v1302 = vunpack.c.l.b16 %v1294
        %v1303 = vunpack.c.l.b16 %v1295
        %v1304 = vunpack.c.l.b16 %v1296
        %v1305 = vpack.c.b16 %v1302, %v1301
        %v1306 = vpack.c.b16 %v1304, %v1303
        %v1310 = vsel %vm615, %v1277, 0
        %v1313 = vsel %vm615, %v1278, 0
        %v1316 = vsel %vm615, %v1279, 0
        %v1319 = vsel %vm615, %v1280, 0
        %v1322 = vsel %vm615, %v1281, 0
        %v1325 = vsel %vm615, %v1282, 0
        %v1328 = vsel %vm615, %v1283, 0
        %v1331 = vsel %vm615, %v1284, 0
        %1333 = vmatpush.bf16.msra.mxu0 0
        %1334 = vmatpush.bf16.msra.mxu0 0
        %1335 = vmatpush.bf16.msra.mxu0 0
        %1336 = vmatpush.bf16.msra.mxu0 0
        %1337 = vmatpush.bf16.msra.mxu0 0
        %1338 = vmatpush.bf16.msra.mxu0 0
        %1339 = vmatpush.bf16.msra.mxu0 %v1306
        %1340 = vmatpush.bf16.msra.mxu0 %v1305
        %1341 = vmatmul.bf16.gmra.mxu0 %v1310
        %v1342 = vpop.f32.mrf.mxu0
        %v1343 = vadd.f32 0.0, %v1342
        %v1344 = vpop.f32.mrf.mxu0
        %v1345 = vadd.f32 0.0, %v1344
        %1346 = vmatmul.bf16.gmra.mxu0 %v1313
        %v1347 = vpop.f32.mrf.mxu0
        %v1348 = vadd.f32 0.0, %v1347
        %v1349 = vpop.f32.mrf.mxu0
        %v1350 = vadd.f32 0.0, %v1349
        %1351 = vmatmul.bf16.gmra.mxu0 %v1316
        %v1352 = vpop.f32.mrf.mxu0
        %v1353 = vadd.f32 0.0, %v1352
        %v1354 = vpop.f32.mrf.mxu0
        %v1355 = vadd.f32 0.0, %v1354
        %1356 = vmatmul.bf16.gmra.mxu0 %v1319
        %v1357 = vpop.f32.mrf.mxu0
        %v1358 = vadd.f32 0.0, %v1357
        %v1359 = vpop.f32.mrf.mxu0
        %v1360 = vadd.f32 0.0, %v1359
        %1361 = vmatmul.bf16.gmra.mxu0 %v1322
        %v1362 = vpop.f32.mrf.mxu0
        %v1363 = vadd.f32 0.0, %v1362
        %v1364 = vpop.f32.mrf.mxu0
        %v1365 = vadd.f32 0.0, %v1364
        %1366 = vmatmul.bf16.gmra.mxu0 %v1325
        %v1367 = vpop.f32.mrf.mxu0
        %v1368 = vadd.f32 0.0, %v1367
        %v1369 = vpop.f32.mrf.mxu0
        %v1370 = vadd.f32 0.0, %v1369
        %1371 = vmatmul.bf16.gmra.mxu0 %v1328
        %v1372 = vpop.f32.mrf.mxu0
        %v1373 = vadd.f32 0.0, %v1372
        %v1374 = vpop.f32.mrf.mxu0
        %v1375 = vadd.f32 0.0, %v1374
        %1376 = vmatmul.bf16.gmra.mxu0 %v1331
        %v1377 = vpop.f32.mrf.mxu0
        %v1378 = vadd.f32 0.0, %v1377
        %v1379 = vpop.f32.mrf.mxu0
        %v1380 = vadd.f32 0.0, %v1379
        %1381 = vdwg.mxu0
        %v1382 = vld [vmem:[#allocation13] sm:$0xf]
        %v1383 = vld [vmem:[#allocation13 + $0x4] sm:$0xf]
        %v1384 = vld [vmem:[#allocation13 + $0x8] sm:$0xf]
        %v1385 = vld [vmem:[#allocation13 + $0xc] sm:$0xf]
        %v1390 = vunpack.c.l.b16 %v1382
        %v1391 = vunpack.c.l.b16 %v1383
        %v1392 = vunpack.c.l.b16 %v1384
        %v1393 = vunpack.c.l.b16 %v1385
        %v1394 = vpack.c.b16 %v1391, %v1390
        %v1395 = vpack.c.b16 %v1393, %v1392
        %v1399 = vsel %vm615, %v1285, 0
        %v1402 = vsel %vm615, %v1286, 0
        %v1405 = vsel %vm615, %v1287, 0
        %v1408 = vsel %vm615, %v1288, 0
        %v1411 = vsel %vm615, %v1289, 0
        %v1414 = vsel %vm615, %v1290, 0
        %v1417 = vsel %vm615, %v1291, 0
        %v1420 = vsel %vm615, %v1292, 0
        %1422 = vmatpush.bf16.msra.mxu0 0
        %1423 = vmatpush.bf16.msra.mxu0 0
        %1424 = vmatpush.bf16.msra.mxu0 0
        %1425 = vmatpush.bf16.msra.mxu0 0
        %1426 = vmatpush.bf16.msra.mxu0 0
        %1427 = vmatpush.bf16.msra.mxu0 0
        %1428 = vmatpush.bf16.msra.mxu0 %v1395
        %1429 = vmatpush.bf16.msra.mxu0 %v1394
        %1430 = vmatmul.bf16.gmra.mxu0 %v1399
        %v1431 = vpop.f32.mrf.mxu0
        %v1432 = vadd.f32 0.0, %v1431
        %v1433 = vpop.f32.mrf.mxu0
        %v1434 = vadd.f32 0.0, %v1433
        %1435 = vmatmul.bf16.gmra.mxu0 %v1402
        %v1436 = vpop.f32.mrf.mxu0
        %v1437 = vadd.f32 0.0, %v1436
        %v1438 = vpop.f32.mrf.mxu0
        %v1439 = vadd.f32 0.0, %v1438
        %1440 = vmatmul.bf16.gmra.mxu0 %v1405
        %v1441 = vpop.f32.mrf.mxu0
        %v1442 = vadd.f32 0.0, %v1441
        %v1443 = vpop.f32.mrf.mxu0
        %v1444 = vadd.f32 0.0, %v1443
        %1445 = vmatmul.bf16.gmra.mxu0 %v1408
        %v1446 = vpop.f32.mrf.mxu0
        %v1447 = vadd.f32 0.0, %v1446
        %v1448 = vpop.f32.mrf.mxu0
        %v1449 = vadd.f32 0.0, %v1448
        %1450 = vmatmul.bf16.gmra.mxu0 %v1411
        %v1451 = vpop.f32.mrf.mxu0
        %v1452 = vadd.f32 0.0, %v1451
        %v1453 = vpop.f32.mrf.mxu0
        %v1454 = vadd.f32 0.0, %v1453
        %1455 = vmatmul.bf16.gmra.mxu0 %v1414
        %v1456 = vpop.f32.mrf.mxu0
        %v1457 = vadd.f32 0.0, %v1456
        %v1458 = vpop.f32.mrf.mxu0
        %v1459 = vadd.f32 0.0, %v1458
        %1460 = vmatmul.bf16.gmra.mxu0 %v1417
        %v1461 = vpop.f32.mrf.mxu0
        %v1462 = vadd.f32 0.0, %v1461
        %v1463 = vpop.f32.mrf.mxu0
        %v1464 = vadd.f32 0.0, %v1463
        %1465 = vmatmul.bf16.gmra.mxu0 %v1420
        %v1466 = vpop.f32.mrf.mxu0
        %v1467 = vadd.f32 0.0, %v1466
        %v1468 = vpop.f32.mrf.mxu0
        %v1469 = vadd.f32 0.0, %v1468
        %1470 = vdwg.mxu0
        %v1471 = vsel %vm615, %v1343, 0.0
        %v1472 = vsel %vm615, %v1345, 0.0
        %v1473 = vadd.f32 %v1471, %v1472
        %v1474 = vrot.slane %v1473, 4
        %v1475 = vadd.f32 %v1473, %v1474
        %v1476 = vrot.slane %v1475, 2
        %v1477 = vadd.f32 %v1475, %v1476
        %v1478 = vrot.slane %v1477, 1
        %v1479 = vadd.f32 %v1477, %v1478
        %v1480 = vsel %vm615, %v1348, 0.0
        %v1481 = vsel %vm615, %v1350, 0.0
        %v1482 = vadd.f32 %v1480, %v1481
        %v1483 = vrot.slane %v1482, 4
        %v1484 = vadd.f32 %v1482, %v1483
        %v1485 = vrot.slane %v1484, 2
        %v1486 = vadd.f32 %v1484, %v1485
        %v1487 = vrot.slane %v1486, 1
        %v1488 = vadd.f32 %v1486, %v1487
        %v1489 = vsel %vm615, %v1353, 0.0
        %v1490 = vsel %vm615, %v1355, 0.0
        %v1491 = vadd.f32 %v1489, %v1490
        %v1492 = vrot.slane %v1491, 4
        %v1493 = vadd.f32 %v1491, %v1492
        %v1494 = vrot.slane %v1493, 2
        %v1495 = vadd.f32 %v1493, %v1494
        %v1496 = vrot.slane %v1495, 1
        %v1497 = vadd.f32 %v1495, %v1496
        %v1498 = vsel %vm615, %v1358, 0.0
        %v1499 = vsel %vm615, %v1360, 0.0
        %v1500 = vadd.f32 %v1498, %v1499
        %v1501 = vrot.slane %v1500, 4
        %v1502 = vadd.f32 %v1500, %v1501
        %v1503 = vrot.slane %v1502, 2
        %v1504 = vadd.f32 %v1502, %v1503
        %v1505 = vrot.slane %v1504, 1
        %v1506 = vadd.f32 %v1504, %v1505
        %v1507 = vsel %vm615, %v1363, 0.0
        %v1508 = vsel %vm615, %v1365, 0.0
        %v1509 = vadd.f32 %v1507, %v1508
        %v1510 = vrot.slane %v1509, 4
        %v1511 = vadd.f32 %v1509, %v1510
        %v1512 = vrot.slane %v1511, 2
        %v1513 = vadd.f32 %v1511, %v1512
        %v1514 = vrot.slane %v1513, 1
        %v1515 = vadd.f32 %v1513, %v1514
        %v1516 = vsel %vm615, %v1368, 0.0
        %v1517 = vsel %vm615, %v1370, 0.0
        %v1518 = vadd.f32 %v1516, %v1517
        %v1519 = vrot.slane %v1518, 4
        %v1520 = vadd.f32 %v1518, %v1519
        %v1521 = vrot.slane %v1520, 2
        %v1522 = vadd.f32 %v1520, %v1521
        %v1523 = vrot.slane %v1522, 1
        %v1524 = vadd.f32 %v1522, %v1523
        %v1525 = vsel %vm615, %v1373, 0.0
        %v1526 = vsel %vm615, %v1375, 0.0
        %v1527 = vadd.f32 %v1525, %v1526
        %v1528 = vrot.slane %v1527, 4
        %v1529 = vadd.f32 %v1527, %v1528
        %v1530 = vrot.slane %v1529, 2
        %v1531 = vadd.f32 %v1529, %v1530
        %v1532 = vrot.slane %v1531, 1
        %v1533 = vadd.f32 %v1531, %v1532
        %v1534 = vsel %vm615, %v1378, 0.0
        %v1535 = vsel %vm615, %v1380, 0.0
        %v1536 = vadd.f32 %v1534, %v1535
        %v1537 = vrot.slane %v1536, 4
        %v1538 = vadd.f32 %v1536, %v1537
        %v1539 = vrot.slane %v1538, 2
        %v1540 = vadd.f32 %v1538, %v1539
        %v1541 = vrot.slane %v1540, 1
        %v1542 = vadd.f32 %v1540, %v1541
        %v1551 = vsel %vm696, %v1488, %v1479
        %v1552 = vsel %vm698, %v1497, %v1551
        %v1553 = vsel %vm700, %v1506, %v1552
        %v1554 = vsel %vm702, %v1515, %v1553
        %v1555 = vsel %vm704, %v1524, %v1554
        %v1556 = vsel %vm706, %v1533, %v1555
        %v1557 = vsel %vm708, %v1542, %v1556
        %v1558 = vsel %vm615, %v1557, 0
        %1560 = vmatpush.msra.mxu0 0.0
        %1561 = vmatpush.msra.mxu0 0.0
        %1562 = vmatpush.msra.mxu0 0.0
        %1563 = vmatpush.msra.mxu0 0.0
        %1564 = vmatpush.msra.mxu0 0.0
        %1565 = vmatpush.msra.mxu0 0.0
        %1566 = vmatpush.msra.mxu0 0.0
        %1567 = vmatpush.msra.mxu0 0.0
        %1568 = vmatpush.msra.mxu0 0.0
        %1569 = vmatpush.msra.mxu0 0.0
        %1570 = vmatpush.msra.mxu0 0.0
        %1571 = vmatpush.msra.mxu0 0.0
        %1572 = vmatpush.msra.mxu0 %v614
        %1573 = vmatpush.msra.mxu0 %v613
        %1574 = vmatpush.msra.mxu0 %v612
        %1575 = vmatpush.msra.mxu0 %v611
        %1576 = vmatmul.f32.gmra.mxu0 %v1558
        %v1577 = vpop.f32.mrf.mxu0
        %v1578 = vadd.f32 0.0, %v1577
        %1579 = vdwg.mxu0
        %v1580 = vmul.f32 %v1578, 0.0078125
        %v1582 = vrot.slane %v1580, 1
        %v1583 = vrot.slane %v1580, 2
        %v1584 = vrot.slane %v1580, 3
        %v1585 = vrot.slane %v1580, 4
        %v1586 = vrot.slane %v1580, 5
        %v1587 = vrot.slane %v1580, 6
        %v1588 = vrot.slane %v1580, 7
        %v1589 = vperm.slane %v1580, 0
        %v1590 = vperm.slane %v1582, 0
        %v1591 = vperm.slane %v1583, 0
        %v1592 = vperm.slane %v1584, 0
        %v1593 = vperm.slane %v1585, 0
        %v1594 = vperm.slane %v1586, 0
        %v1595 = vperm.slane %v1587, 0
        %v1596 = vperm.slane %v1588, 0
        %v1605 = vsub.f32 %v1343, %v1589
        %v1606 = vsub.f32 %v1345, %v1589
        %v1607 = vsub.f32 %v1348, %v1590
        %v1608 = vsub.f32 %v1350, %v1590
        %v1609 = vsub.f32 %v1353, %v1591
        %v1610 = vsub.f32 %v1355, %v1591
        %v1611 = vsub.f32 %v1358, %v1592
        %v1612 = vsub.f32 %v1360, %v1592
        %v1613 = vsub.f32 %v1363, %v1593
        %v1614 = vsub.f32 %v1365, %v1593
        %v1615 = vsub.f32 %v1368, %v1594
        %v1616 = vsub.f32 %v1370, %v1594
        %v1617 = vsub.f32 %v1373, %v1595
        %v1618 = vsub.f32 %v1375, %v1595
        %v1619 = vsub.f32 %v1378, %v1596
        %v1620 = vsub.f32 %v1380, %v1596
        %v1621 = vmul.f32 %v1605, %v1605
        %v1622 = vmul.f32 %v1606, %v1606
        %v1623 = vmul.f32 %v1607, %v1607
        %v1624 = vmul.f32 %v1608, %v1608
        %v1625 = vmul.f32 %v1609, %v1609
        %v1626 = vmul.f32 %v1610, %v1610
        %v1627 = vmul.f32 %v1611, %v1611
        %v1628 = vmul.f32 %v1612, %v1612
        %v1629 = vmul.f32 %v1613, %v1613
        %v1630 = vmul.f32 %v1614, %v1614
        %v1631 = vmul.f32 %v1615, %v1615
        %v1632 = vmul.f32 %v1616, %v1616
        %v1633 = vmul.f32 %v1617, %v1617
        %v1634 = vmul.f32 %v1618, %v1618
        %v1635 = vmul.f32 %v1619, %v1619
        %v1636 = vmul.f32 %v1620, %v1620
        %v1637 = vsel %vm615, %v1621, 0.0
        %v1638 = vsel %vm615, %v1622, 0.0
        %v1639 = vadd.f32 %v1637, %v1638
        %v1640 = vrot.slane %v1639, 4
        %v1641 = vadd.f32 %v1639, %v1640
        %v1642 = vrot.slane %v1641, 2
        %v1643 = vadd.f32 %v1641, %v1642
        %v1644 = vrot.slane %v1643, 1
        %v1645 = vadd.f32 %v1643, %v1644
        %v1646 = vsel %vm615, %v1623, 0.0
        %v1647 = vsel %vm615, %v1624, 0.0
        %v1648 = vadd.f32 %v1646, %v1647
        %v1649 = vrot.slane %v1648, 4
        %v1650 = vadd.f32 %v1648, %v1649
        %v1651 = vrot.slane %v1650, 2
        %v1652 = vadd.f32 %v1650, %v1651
        %v1653 = vrot.slane %v1652, 1
        %v1654 = vadd.f32 %v1652, %v1653
        %v1655 = vsel %vm615, %v1625, 0.0
        %v1656 = vsel %vm615, %v1626, 0.0
        %v1657 = vadd.f32 %v1655, %v1656
        %v1658 = vrot.slane %v1657, 4
        %v1659 = vadd.f32 %v1657, %v1658
        %v1660 = vrot.slane %v1659, 2
        %v1661 = vadd.f32 %v1659, %v1660
        %v1662 = vrot.slane %v1661, 1
        %v1663 = vadd.f32 %v1661, %v1662
        %v1664 = vsel %vm615, %v1627, 0.0
        %v1665 = vsel %vm615, %v1628, 0.0
        %v1666 = vadd.f32 %v1664, %v1665
        %v1667 = vrot.slane %v1666, 4
        %v1668 = vadd.f32 %v1666, %v1667
        %v1669 = vrot.slane %v1668, 2
        %v1670 = vadd.f32 %v1668, %v1669
        %v1671 = vrot.slane %v1670, 1
        %v1672 = vadd.f32 %v1670, %v1671
        %v1673 = vsel %vm615, %v1629, 0.0
        %v1674 = vsel %vm615, %v1630, 0.0
        %v1675 = vadd.f32 %v1673, %v1674
        %v1676 = vrot.slane %v1675, 4
        %v1677 = vadd.f32 %v1675, %v1676
        %v1678 = vrot.slane %v1677, 2
        %v1679 = vadd.f32 %v1677, %v1678
        %v1680 = vrot.slane %v1679, 1
        %v1681 = vadd.f32 %v1679, %v1680
        %v1682 = vsel %vm615, %v1631, 0.0
        %v1683 = vsel %vm615, %v1632, 0.0
        %v1684 = vadd.f32 %v1682, %v1683
        %v1685 = vrot.slane %v1684, 4
        %v1686 = vadd.f32 %v1684, %v1685
        %v1687 = vrot.slane %v1686, 2
        %v1688 = vadd.f32 %v1686, %v1687
        %v1689 = vrot.slane %v1688, 1
        %v1690 = vadd.f32 %v1688, %v1689
        %v1691 = vsel %vm615, %v1633, 0.0
        %v1692 = vsel %vm615, %v1634, 0.0
        %v1693 = vadd.f32 %v1691, %v1692
        %v1694 = vrot.slane %v1693, 4
        %v1695 = vadd.f32 %v1693, %v1694
        %v1696 = vrot.slane %v1695, 2
        %v1697 = vadd.f32 %v1695, %v1696
        %v1698 = vrot.slane %v1697, 1
        %v1699 = vadd.f32 %v1697, %v1698
        %v1700 = vsel %vm615, %v1635, 0.0
        %v1701 = vsel %vm615, %v1636, 0.0
        %v1702 = vadd.f32 %v1700, %v1701
        %v1703 = vrot.slane %v1702, 4
        %v1704 = vadd.f32 %v1702, %v1703
        %v1705 = vrot.slane %v1704, 2
        %v1706 = vadd.f32 %v1704, %v1705
        %v1707 = vrot.slane %v1706, 1
        %v1708 = vadd.f32 %v1706, %v1707
        %v1717 = vsel %vm696, %v1654, %v1645
        %v1718 = vsel %vm698, %v1663, %v1717
        %v1719 = vsel %vm700, %v1672, %v1718
        %v1720 = vsel %vm702, %v1681, %v1719
        %v1721 = vsel %vm704, %v1690, %v1720
        %v1722 = vsel %vm706, %v1699, %v1721
        %v1723 = vsel %vm708, %v1708, %v1722
        %v1724 = vsel %vm615, %v1723, 0
        %1726 = vmatpush.msra.mxu0 0.0
        %1727 = vmatpush.msra.mxu0 0.0
        %1728 = vmatpush.msra.mxu0 0.0
        %1729 = vmatpush.msra.mxu0 0.0
        %1730 = vmatpush.msra.mxu0 0.0
        %1731 = vmatpush.msra.mxu0 0.0
        %1732 = vmatpush.msra.mxu0 0.0
        %1733 = vmatpush.msra.mxu0 0.0
        %1734 = vmatpush.msra.mxu0 0.0
        %1735 = vmatpush.msra.mxu0 0.0
        %1736 = vmatpush.msra.mxu0 0.0
        %1737 = vmatpush.msra.mxu0 0.0
        %1738 = vmatpush.msra.mxu0 %v614
        %1739 = vmatpush.msra.mxu0 %v613
        %1740 = vmatpush.msra.mxu0 %v612
        %1741 = vmatpush.msra.mxu0 %v611
        %1742 = vmatmul.f32.gmra.mxu0 %v1724
        %v1743 = vpop.f32.mrf.mxu0
        %v1744 = vadd.f32 0.0, %v1743
        %1745 = vdwg.mxu0
        %v1746 = vmul.f32 %v1744, 0.0078125
        %v1747 = vadd.f32 %v1746, 0.001
        %v1748 = vrsqrt.pop %v1747
        %v1749 = vmul.f32 %v1748, %v1747
        %v1750 = vmul.f32 %v1749, %v1748
        %v1751 = vmul.f32 0.5, %v1750
        %v1752 = vsub.f32 1.5, %v1751
        %v1753 = vmul.f32 %v1748, %v1752
        %vm1754 = vweird.f32 %v1747
        %vm1755 = vweird.f32 %v1748
        %vm1756 = vmor %vm1754, %vm1755
        %v1757 = vsel %vm1756, %v1748, %v1753
        %v1759 = vrot.slane %v1757, 1
        %v1760 = vrot.slane %v1757, 2
        %v1761 = vrot.slane %v1757, 3
        %v1762 = vrot.slane %v1757, 4
        %v1763 = vrot.slane %v1757, 5
        %v1764 = vrot.slane %v1757, 6
        %v1765 = vrot.slane %v1757, 7
        %v1766 = vperm.slane %v1757, 0
        %v1767 = vperm.slane %v1759, 0
        %v1768 = vperm.slane %v1760, 0
        %v1769 = vperm.slane %v1761, 0
        %v1770 = vperm.slane %v1762, 0
        %v1771 = vperm.slane %v1763, 0
        %v1772 = vperm.slane %v1764, 0
        %v1773 = vperm.slane %v1765, 0
        %v1782 = vmul.f32 %v1605, %v1766
        %v1783 = vmul.f32 %v1606, %v1766
        %v1784 = vmul.f32 %v1607, %v1767
        %v1785 = vmul.f32 %v1608, %v1767
        %v1786 = vmul.f32 %v1609, %v1768
        %v1787 = vmul.f32 %v1610, %v1768
        %v1788 = vmul.f32 %v1611, %v1769
        %v1789 = vmul.f32 %v1612, %v1769
        %v1790 = vmul.f32 %v1613, %v1770
        %v1791 = vmul.f32 %v1614, %v1770
        %v1792 = vmul.f32 %v1615, %v1771
        %v1793 = vmul.f32 %v1616, %v1771
        %v1794 = vmul.f32 %v1617, %v1772
        %v1795 = vmul.f32 %v1618, %v1772
        %v1796 = vmul.f32 %v1619, %v1773
        %v1797 = vmul.f32 %v1620, %v1773
        %v1798 = vsel %vm615, %v1432, 0.0
        %v1799 = vsel %vm615, %v1434, 0.0
        %v1800 = vadd.f32 %v1798, %v1799
        %v1801 = vrot.slane %v1800, 4
        %v1802 = vadd.f32 %v1800, %v1801
        %v1803 = vrot.slane %v1802, 2
        %v1804 = vadd.f32 %v1802, %v1803
        %v1805 = vrot.slane %v1804, 1
        %v1806 = vadd.f32 %v1804, %v1805
        %v1807 = vsel %vm615, %v1437, 0.0
        %v1808 = vsel %vm615, %v1439, 0.0
        %v1809 = vadd.f32 %v1807, %v1808
        %v1810 = vrot.slane %v1809, 4
        %v1811 = vadd.f32 %v1809, %v1810
        %v1812 = vrot.slane %v1811, 2
        %v1813 = vadd.f32 %v1811, %v1812
        %v1814 = vrot.slane %v1813, 1
        %v1815 = vadd.f32 %v1813, %v1814
        %v1816 = vsel %vm615, %v1442, 0.0
        %v1817 = vsel %vm615, %v1444, 0.0
        %v1818 = vadd.f32 %v1816, %v1817
        %v1819 = vrot.slane %v1818, 4
        %v1820 = vadd.f32 %v1818, %v1819
        %v1821 = vrot.slane %v1820, 2
        %v1822 = vadd.f32 %v1820, %v1821
        %v1823 = vrot.slane %v1822, 1
        %v1824 = vadd.f32 %v1822, %v1823
        %v1825 = vsel %vm615, %v1447, 0.0
        %v1826 = vsel %vm615, %v1449, 0.0
        %v1827 = vadd.f32 %v1825, %v1826
        %v1828 = vrot.slane %v1827, 4
        %v1829 = vadd.f32 %v1827, %v1828
        %v1830 = vrot.slane %v1829, 2
        %v1831 = vadd.f32 %v1829, %v1830
        %v1832 = vrot.slane %v1831, 1
        %v1833 = vadd.f32 %v1831, %v1832
        %v1834 = vsel %vm615, %v1452, 0.0
        %v1835 = vsel %vm615, %v1454, 0.0
        %v1836 = vadd.f32 %v1834, %v1835
        %v1837 = vrot.slane %v1836, 4
        %v1838 = vadd.f32 %v1836, %v1837
        %v1839 = vrot.slane %v1838, 2
        %v1840 = vadd.f32 %v1838, %v1839
        %v1841 = vrot.slane %v1840, 1
        %v1842 = vadd.f32 %v1840, %v1841
        %v1843 = vsel %vm615, %v1457, 0.0
        %v1844 = vsel %vm615, %v1459, 0.0
        %v1845 = vadd.f32 %v1843, %v1844
        %v1846 = vrot.slane %v1845, 4
        %v1847 = vadd.f32 %v1845, %v1846
        %v1848 = vrot.slane %v1847, 2
        %v1849 = vadd.f32 %v1847, %v1848
        %v1850 = vrot.slane %v1849, 1
        %v1851 = vadd.f32 %v1849, %v1850
        %v1852 = vsel %vm615, %v1462, 0.0
        %v1853 = vsel %vm615, %v1464, 0.0
        %v1854 = vadd.f32 %v1852, %v1853
        %v1855 = vrot.slane %v1854, 4
        %v1856 = vadd.f32 %v1854, %v1855
        %v1857 = vrot.slane %v1856, 2
        %v1858 = vadd.f32 %v1856, %v1857
        %v1859 = vrot.slane %v1858, 1
        %v1860 = vadd.f32 %v1858, %v1859
        %v1861 = vsel %vm615, %v1467, 0.0
        %v1862 = vsel %vm615, %v1469, 0.0
        %v1863 = vadd.f32 %v1861, %v1862
        %v1864 = vrot.slane %v1863, 4
        %v1865 = vadd.f32 %v1863, %v1864
        %v1866 = vrot.slane %v1865, 2
        %v1867 = vadd.f32 %v1865, %v1866
        %v1868 = vrot.slane %v1867, 1
        %v1869 = vadd.f32 %v1867, %v1868
        %v1878 = vsel %vm696, %v1815, %v1806
        %v1879 = vsel %vm698, %v1824, %v1878
        %v1880 = vsel %vm700, %v1833, %v1879
        %v1881 = vsel %vm702, %v1842, %v1880
        %v1882 = vsel %vm704, %v1851, %v1881
        %v1883 = vsel %vm706, %v1860, %v1882
        %v1884 = vsel %vm708, %v1869, %v1883
        %v1885 = vsel %vm615, %v1884, 0
        %1887 = vmatpush.msra.mxu0 0.0
        %1888 = vmatpush.msra.mxu0 0.0
        %1889 = vmatpush.msra.mxu0 0.0
        %1890 = vmatpush.msra.mxu0 0.0
        %1891 = vmatpush.msra.mxu0 0.0
        %1892 = vmatpush.msra.mxu0 0.0
        %1893 = vmatpush.msra.mxu0 0.0
        %1894 = vmatpush.msra.mxu0 0.0
        %1895 = vmatpush.msra.mxu0 0.0
        %1896 = vmatpush.msra.mxu0 0.0
        %1897 = vmatpush.msra.mxu0 0.0
        %1898 = vmatpush.msra.mxu0 0.0
        %1899 = vmatpush.msra.mxu0 %v614
        %1900 = vmatpush.msra.mxu0 %v613
        %1901 = vmatpush.msra.mxu0 %v612
        %1902 = vmatpush.msra.mxu0 %v611
        %1903 = vmatmul.f32.gmra.mxu0 %v1885
        %v1904 = vpop.f32.mrf.mxu0
        %v1905 = vadd.f32 0.0, %v1904
        %1906 = vdwg.mxu0
        %v1907 = vmul.f32 %v1905, 0.0078125
        %v1909 = vrot.slane %v1907, 1
        %v1910 = vrot.slane %v1907, 2
        %v1911 = vrot.slane %v1907, 3
        %v1912 = vrot.slane %v1907, 4
        %v1913 = vrot.slane %v1907, 5
        %v1914 = vrot.slane %v1907, 6
        %v1915 = vrot.slane %v1907, 7
        %v1916 = vperm.slane %v1907, 0
        %v1917 = vperm.slane %v1909, 0
        %v1918 = vperm.slane %v1910, 0
        %v1919 = vperm.slane %v1911, 0
        %v1920 = vperm.slane %v1912, 0
        %v1921 = vperm.slane %v1913, 0
        %v1922 = vperm.slane %v1914, 0
        %v1923 = vperm.slane %v1915, 0
        %v1932 = vsub.f32 %v1432, %v1916
        %v1933 = vsub.f32 %v1434, %v1916
        %v1934 = vsub.f32 %v1437, %v1917
        %v1935 = vsub.f32 %v1439, %v1917
        %v1936 = vsub.f32 %v1442, %v1918
        %v1937 = vsub.f32 %v1444, %v1918
        %v1938 = vsub.f32 %v1447, %v1919
        %v1939 = vsub.f32 %v1449, %v1919
        %v1940 = vsub.f32 %v1452, %v1920
        %v1941 = vsub.f32 %v1454, %v1920
        %v1942 = vsub.f32 %v1457, %v1921
        %v1943 = vsub.f32 %v1459, %v1921
        %v1944 = vsub.f32 %v1462, %v1922
        %v1945 = vsub.f32 %v1464, %v1922
        %v1946 = vsub.f32 %v1467, %v1923
        %v1947 = vsub.f32 %v1469, %v1923
        %v1948 = vmul.f32 %v1932, %v1932
        %v1949 = vmul.f32 %v1933, %v1933
        %v1950 = vmul.f32 %v1934, %v1934
        %v1951 = vmul.f32 %v1935, %v1935
        %v1952 = vmul.f32 %v1936, %v1936
        %v1953 = vmul.f32 %v1937, %v1937
        %v1954 = vmul.f32 %v1938, %v1938
        %v1955 = vmul.f32 %v1939, %v1939
        %v1956 = vmul.f32 %v1940, %v1940
        %v1957 = vmul.f32 %v1941, %v1941
        %v1958 = vmul.f32 %v1942, %v1942
        %v1959 = vmul.f32 %v1943, %v1943
        %v1960 = vmul.f32 %v1944, %v1944
        %v1961 = vmul.f32 %v1945, %v1945
        %v1962 = vmul.f32 %v1946, %v1946
        %v1963 = vmul.f32 %v1947, %v1947
        %v1964 = vsel %vm615, %v1948, 0.0
        %v1965 = vsel %vm615, %v1949, 0.0
        %v1966 = vadd.f32 %v1964, %v1965
        %v1967 = vrot.slane %v1966, 4
        %v1968 = vadd.f32 %v1966, %v1967
        %v1969 = vrot.slane %v1968, 2
        %v1970 = vadd.f32 %v1968, %v1969
        %v1971 = vrot.slane %v1970, 1
        %v1972 = vadd.f32 %v1970, %v1971
        %v1973 = vsel %vm615, %v1950, 0.0
        %v1974 = vsel %vm615, %v1951, 0.0
        %v1975 = vadd.f32 %v1973, %v1974
        %v1976 = vrot.slane %v1975, 4
        %v1977 = vadd.f32 %v1975, %v1976
        %v1978 = vrot.slane %v1977, 2
        %v1979 = vadd.f32 %v1977, %v1978
        %v1980 = vrot.slane %v1979, 1
        %v1981 = vadd.f32 %v1979, %v1980
        %v1982 = vsel %vm615, %v1952, 0.0
        %v1983 = vsel %vm615, %v1953, 0.0
        %v1984 = vadd.f32 %v1982, %v1983
        %v1985 = vrot.slane %v1984, 4
        %v1986 = vadd.f32 %v1984, %v1985
        %v1987 = vrot.slane %v1986, 2
        %v1988 = vadd.f32 %v1986, %v1987
        %v1989 = vrot.slane %v1988, 1
        %v1990 = vadd.f32 %v1988, %v1989
        %v1991 = vsel %vm615, %v1954, 0.0
        %v1992 = vsel %vm615, %v1955, 0.0
        %v1993 = vadd.f32 %v1991, %v1992
        %v1994 = vrot.slane %v1993, 4
        %v1995 = vadd.f32 %v1993, %v1994
        %v1996 = vrot.slane %v1995, 2
        %v1997 = vadd.f32 %v1995, %v1996
        %v1998 = vrot.slane %v1997, 1
        %v1999 = vadd.f32 %v1997, %v1998
        %v2000 = vsel %vm615, %v1956, 0.0
        %v2001 = vsel %vm615, %v1957, 0.0
        %v2002 = vadd.f32 %v2000, %v2001
        %v2003 = vrot.slane %v2002, 4
        %v2004 = vadd.f32 %v2002, %v2003
        %v2005 = vrot.slane %v2004, 2
        %v2006 = vadd.f32 %v2004, %v2005
        %v2007 = vrot.slane %v2006, 1
        %v2008 = vadd.f32 %v2006, %v2007
        %v2009 = vsel %vm615, %v1958, 0.0
        %v2010 = vsel %vm615, %v1959, 0.0
        %v2011 = vadd.f32 %v2009, %v2010
        %v2012 = vrot.slane %v2011, 4
        %v2013 = vadd.f32 %v2011, %v2012
        %v2014 = vrot.slane %v2013, 2
        %v2015 = vadd.f32 %v2013, %v2014
        %v2016 = vrot.slane %v2015, 1
        %v2017 = vadd.f32 %v2015, %v2016
        %v2018 = vsel %vm615, %v1960, 0.0
        %v2019 = vsel %vm615, %v1961, 0.0
        %v2020 = vadd.f32 %v2018, %v2019
        %v2021 = vrot.slane %v2020, 4
        %v2022 = vadd.f32 %v2020, %v2021
        %v2023 = vrot.slane %v2022, 2
        %v2024 = vadd.f32 %v2022, %v2023
        %v2025 = vrot.slane %v2024, 1
        %v2026 = vadd.f32 %v2024, %v2025
        %v2027 = vsel %vm615, %v1962, 0.0
        %v2028 = vsel %vm615, %v1963, 0.0
        %v2029 = vadd.f32 %v2027, %v2028
        %v2030 = vrot.slane %v2029, 4
        %v2031 = vadd.f32 %v2029, %v2030
        %v2032 = vrot.slane %v2031, 2
        %v2033 = vadd.f32 %v2031, %v2032
        %v2034 = vrot.slane %v2033, 1
        %v2035 = vadd.f32 %v2033, %v2034
        %v2044 = vsel %vm696, %v1981, %v1972
        %v2045 = vsel %vm698, %v1990, %v2044
        %v2046 = vsel %vm700, %v1999, %v2045
        %v2047 = vsel %vm702, %v2008, %v2046
        %v2048 = vsel %vm704, %v2017, %v2047
        %v2049 = vsel %vm706, %v2026, %v2048
        %v2050 = vsel %vm708, %v2035, %v2049
        %v2051 = vsel %vm615, %v2050, 0
        %2053 = vmatpush.msra.mxu0 0.0
        %2054 = vmatpush.msra.mxu0 0.0
        %2055 = vmatpush.msra.mxu0 0.0
        %2056 = vmatpush.msra.mxu0 0.0
        %2057 = vmatpush.msra.mxu0 0.0
        %2058 = vmatpush.msra.mxu0 0.0
        %2059 = vmatpush.msra.mxu0 0.0
        %2060 = vmatpush.msra.mxu0 0.0
        %2061 = vmatpush.msra.mxu0 0.0
        %2062 = vmatpush.msra.mxu0 0.0
        %2063 = vmatpush.msra.mxu0 0.0
        %2064 = vmatpush.msra.mxu0 0.0
        %2065 = vmatpush.msra.mxu0 %v614
        %2066 = vmatpush.msra.mxu0 %v613
        %2067 = vmatpush.msra.mxu0 %v612
        %2068 = vmatpush.msra.mxu0 %v611
        %2069 = vmatmul.f32.gmra.mxu0 %v2051
        %v2070 = vpop.f32.mrf.mxu0
        %v2071 = vadd.f32 0.0, %v2070
        %2072 = vdwg.mxu0
        %v2073 = vmul.f32 %v2071, 0.0078125
        %v2074 = vadd.f32 %v2073, 0.001
        %v2075 = vrsqrt.pop %v2074
        %v2076 = vmul.f32 %v2075, %v2074
        %v2077 = vmul.f32 %v2076, %v2075
        %v2078 = vmul.f32 0.5, %v2077
        %v2079 = vsub.f32 1.5, %v2078
        %v2080 = vmul.f32 %v2075, %v2079
        %vm2081 = vweird.f32 %v2074
        %vm2082 = vweird.f32 %v2075
        %vm2083 = vmor %vm2081, %vm2082
        %v2084 = vsel %vm2083, %v2075, %v2080
        %v2086 = vrot.slane %v2084, 1
        %v2087 = vrot.slane %v2084, 2
        %v2088 = vrot.slane %v2084, 3
        %v2089 = vrot.slane %v2084, 4
        %v2090 = vrot.slane %v2084, 5
        %v2091 = vrot.slane %v2084, 6
        %v2092 = vrot.slane %v2084, 7
        %v2093 = vperm.slane %v2084, 0
        %v2094 = vperm.slane %v2086, 0
        %v2095 = vperm.slane %v2087, 0
        %v2096 = vperm.slane %v2088, 0
        %v2097 = vperm.slane %v2089, 0
        %v2098 = vperm.slane %v2090, 0
        %v2099 = vperm.slane %v2091, 0
        %v2100 = vperm.slane %v2092, 0
        %v2109 = vmul.f32 %v1932, %v2093
        %v2110 = vmul.f32 %v1933, %v2093
        %v2111 = vmul.f32 %v1934, %v2094
        %v2112 = vmul.f32 %v1935, %v2094
        %v2113 = vmul.f32 %v1936, %v2095
        %v2114 = vmul.f32 %v1937, %v2095
        %v2115 = vmul.f32 %v1938, %v2096
        %v2116 = vmul.f32 %v1939, %v2096
        %v2117 = vmul.f32 %v1940, %v2097
        %v2118 = vmul.f32 %v1941, %v2097
        %v2119 = vmul.f32 %v1942, %v2098
        %v2120 = vmul.f32 %v1943, %v2098
        %v2121 = vmul.f32 %v1944, %v2099
        %v2122 = vmul.f32 %v1945, %v2099
        %v2123 = vmul.f32 %v1946, %v2100
        %v2124 = vmul.f32 %v1947, %v2100
        %v2125 = vld [vmem:[%s9] sm:$0x3]
        %v2126 = vperm.slane %v2125, 0
        %2128 = vrot.lane.b32.xlu0 %v2126, 32
        %v2129 = vpop.permute.xlu0 %2128
        %v2131 = vadd.f32 %v1343, %v2129
        %v2132 = vadd.f32 %v1345, %v2129
        %v2133 = vadd.f32 %v1348, %v2129
        %v2134 = vadd.f32 %v1350, %v2129
        %v2135 = vadd.f32 %v1353, %v2129
        %v2136 = vadd.f32 %v1355, %v2129
        %v2137 = vadd.f32 %v1358, %v2129
        %v2138 = vadd.f32 %v1360, %v2129
        %v2139 = vadd.f32 %v1363, %v2129
        %v2140 = vadd.f32 %v1365, %v2129
        %v2141 = vadd.f32 %v1368, %v2129
        %v2142 = vadd.f32 %v1370, %v2129
        %v2143 = vadd.f32 %v1373, %v2129
        %v2144 = vadd.f32 %v1375, %v2129
        %v2145 = vadd.f32 %v1378, %v2129
        %v2146 = vadd.f32 %v1380, %v2129
        %vm2147 = vcmp.gt.f32.partialorder %v2131, 0.0
        %vm2148 = vcmp.gt.f32.partialorder %v2132, 0.0
        %vm2149 = vcmp.gt.f32.partialorder %v2133, 0.0
        %vm2150 = vcmp.gt.f32.partialorder %v2134, 0.0
        %vm2151 = vcmp.gt.f32.partialorder %v2135, 0.0
        %vm2152 = vcmp.gt.f32.partialorder %v2136, 0.0
        %vm2153 = vcmp.gt.f32.partialorder %v2137, 0.0
        %vm2154 = vcmp.gt.f32.partialorder %v2138, 0.0
        %vm2155 = vcmp.gt.f32.partialorder %v2139, 0.0
        %vm2156 = vcmp.gt.f32.partialorder %v2140, 0.0
        %vm2157 = vcmp.gt.f32.partialorder %v2141, 0.0
        %vm2158 = vcmp.gt.f32.partialorder %v2142, 0.0
        %vm2159 = vcmp.gt.f32.partialorder %v2143, 0.0
        %vm2160 = vcmp.gt.f32.partialorder %v2144, 0.0
        %vm2161 = vcmp.gt.f32.partialorder %v2145, 0.0
        %vm2162 = vcmp.gt.f32.partialorder %v2146, 0.0
        %v2163 = vmul.f32 %v2131, 0.01
        %v2164 = vmul.f32 %v2132, 0.01
        %v2165 = vmul.f32 %v2133, 0.01
        %v2166 = vmul.f32 %v2134, 0.01
        %v2167 = vmul.f32 %v2135, 0.01
        %v2168 = vmul.f32 %v2136, 0.01
        %v2169 = vmul.f32 %v2137, 0.01
        %v2170 = vmul.f32 %v2138, 0.01
        %v2171 = vmul.f32 %v2139, 0.01
        %v2172 = vmul.f32 %v2140, 0.01
        %v2173 = vmul.f32 %v2141, 0.01
        %v2174 = vmul.f32 %v2142, 0.01
        %v2175 = vmul.f32 %v2143, 0.01
        %v2176 = vmul.f32 %v2144, 0.01
        %v2177 = vmul.f32 %v2145, 0.01
        %v2178 = vmul.f32 %v2146, 0.01
        %v2179 = vsel %vm2147, %v2131, %v2163
        %v2180 = vsel %vm2148, %v2132, %v2164
        %v2181 = vsel %vm2149, %v2133, %v2165
        %v2182 = vsel %vm2150, %v2134, %v2166
        %v2183 = vsel %vm2151, %v2135, %v2167
        %v2184 = vsel %vm2152, %v2136, %v2168
        %v2185 = vsel %vm2153, %v2137, %v2169
        %v2186 = vsel %vm2154, %v2138, %v2170
        %v2187 = vsel %vm2155, %v2139, %v2171
        %v2188 = vsel %vm2156, %v2140, %v2172
        %v2189 = vsel %vm2157, %v2141, %v2173
        %v2190 = vsel %vm2158, %v2142, %v2174
        %v2191 = vsel %vm2159, %v2143, %v2175
        %v2192 = vsel %vm2160, %v2144, %v2176
        %v2193 = vsel %vm2161, %v2145, %v2177
        %v2194 = vsel %vm2162, %v2146, %v2178
        %v2195 = vpack.c.bf16 %v2180, %v2179
        %v2196 = vpack.c.bf16 %v2182, %v2181
        %v2197 = vpack.c.bf16 %v2184, %v2183
        %v2198 = vpack.c.bf16 %v2186, %v2185
        %v2199 = vpack.c.bf16 %v2188, %v2187
        %v2200 = vpack.c.bf16 %v2190, %v2189
        %v2201 = vpack.c.bf16 %v2192, %v2191
        %v2202 = vpack.c.bf16 %v2194, %v2193
        %v2203 = vld [vmem:[#allocation16] sm:$0xf]
        %v2204 = vld [vmem:[#allocation16 + $0x4] sm:$0xf]
        %v2205 = vld [vmem:[#allocation16 + $0x8] sm:$0xf]
        %v2206 = vld [vmem:[#allocation16 + $0xc] sm:$0xf]
        %v2207 = vperm.slane %v2125, 1
        %2216 = vrot.lane.b32.xlu0 %v2195, 96
        %v2217 = vpop.permute.xlu0 %2216
        %2218 = vrot.lane.b32.xlu0 %v2196, 96
        %v2219 = vpop.permute.xlu0 %2218
        %2220 = vrot.lane.b32.xlu0 %v2197, 96
        %v2221 = vpop.permute.xlu0 %2220
        %2222 = vrot.lane.b32.xlu0 %v2198, 96
        %v2223 = vpop.permute.xlu0 %2222
        %2224 = vrot.lane.b32.xlu0 %v2199, 96
        %v2225 = vpop.permute.xlu0 %2224
        %2226 = vrot.lane.b32.xlu0 %v2200, 96
        %v2227 = vpop.permute.xlu0 %2226
        %2228 = vrot.lane.b32.xlu0 %v2201, 96
        %v2229 = vpop.permute.xlu0 %2228
        %2230 = vrot.lane.b32.xlu0 %v2202, 96
        %v2231 = vpop.permute.xlu0 %2230
        %v2236 = vunpack.c.l.b16 %v2203
        %v2237 = vunpack.c.l.b16 %v2204
        %v2238 = vunpack.c.l.b16 %v2205
        %v2239 = vunpack.c.l.b16 %v2206
        %v2240 = vpack.c.b16 %v2237, %v2236
        %v2241 = vpack.c.b16 %v2239, %v2238
        %v2245 = vsel %vm615, %v2217, 0
        %v2248 = vsel %vm615, %v2219, 0
        %v2251 = vsel %vm615, %v2221, 0
        %v2254 = vsel %vm615, %v2223, 0
        %v2257 = vsel %vm615, %v2225, 0
        %v2260 = vsel %vm615, %v2227, 0
        %v2263 = vsel %vm615, %v2229, 0
        %v2266 = vsel %vm615, %v2231, 0
        %2268 = vmatpush.bf16.msra.mxu0 0
        %2269 = vmatpush.bf16.msra.mxu0 0
        %2270 = vmatpush.bf16.msra.mxu0 0
        %2271 = vmatpush.bf16.msra.mxu0 0
        %2272 = vmatpush.bf16.msra.mxu0 0
        %2273 = vmatpush.bf16.msra.mxu0 0
        %2274 = vmatpush.bf16.msra.mxu0 %v2241
        %2275 = vmatpush.bf16.msra.mxu0 %v2240
        %2276 = vmatmul.bf16.gmra.mxu0 %v2245
        %v2277 = vpop.f32.mrf.mxu0
        %v2278 = vadd.f32 %v2207, %v2277
        %v2279 = vpop.f32.mrf.mxu0
        %v2280 = vadd.f32 %v2207, %v2279
        %2281 = vmatmul.bf16.gmra.mxu0 %v2248
        %v2282 = vpop.f32.mrf.mxu0
        %v2283 = vadd.f32 %v2207, %v2282
        %v2284 = vpop.f32.mrf.mxu0
        %v2285 = vadd.f32 %v2207, %v2284
        %2286 = vmatmul.bf16.gmra.mxu0 %v2251
        %v2287 = vpop.f32.mrf.mxu0
        %v2288 = vadd.f32 %v2207, %v2287
        %v2289 = vpop.f32.mrf.mxu0
        %v2290 = vadd.f32 %v2207, %v2289
        %2291 = vmatmul.bf16.gmra.mxu0 %v2254
        %v2292 = vpop.f32.mrf.mxu0
        %v2293 = vadd.f32 %v2207, %v2292
        %v2294 = vpop.f32.mrf.mxu0
        %v2295 = vadd.f32 %v2207, %v2294
        %2296 = vmatmul.bf16.gmra.mxu0 %v2257
        %v2297 = vpop.f32.mrf.mxu0
        %v2298 = vadd.f32 %v2207, %v2297
        %v2299 = vpop.f32.mrf.mxu0
        %v2300 = vadd.f32 %v2207, %v2299
        %2301 = vmatmul.bf16.gmra.mxu0 %v2260
        %v2302 = vpop.f32.mrf.mxu0
        %v2303 = vadd.f32 %v2207, %v2302
        %v2304 = vpop.f32.mrf.mxu0
        %v2305 = vadd.f32 %v2207, %v2304
        %2306 = vmatmul.bf16.gmra.mxu0 %v2263
        %v2307 = vpop.f32.mrf.mxu0
        %v2308 = vadd.f32 %v2207, %v2307
        %v2309 = vpop.f32.mrf.mxu0
        %v2310 = vadd.f32 %v2207, %v2309
        %2311 = vmatmul.bf16.gmra.mxu0 %v2266
        %v2312 = vpop.f32.mrf.mxu0
        %v2313 = vadd.f32 %v2207, %v2312
        %v2314 = vpop.f32.mrf.mxu0
        %v2315 = vadd.f32 %v2207, %v2314
        %2316 = vdwg.mxu0
        %v2317 = vmul.f32 %v1782, 0.35355338
        %v2318 = vmul.f32 %v1783, 0.35355338
        %v2319 = vmul.f32 %v1784, 0.35355338
        %v2320 = vmul.f32 %v1785, 0.35355338
        %v2321 = vmul.f32 %v1786, 0.35355338
        %v2322 = vmul.f32 %v1787, 0.35355338
        %v2323 = vmul.f32 %v1788, 0.35355338
        %v2324 = vmul.f32 %v1789, 0.35355338
        %v2325 = vmul.f32 %v1790, 0.35355338
        %v2326 = vmul.f32 %v1791, 0.35355338
        %v2327 = vmul.f32 %v1792, 0.35355338
        %v2328 = vmul.f32 %v1793, 0.35355338
        %v2329 = vmul.f32 %v1794, 0.35355338
        %v2330 = vmul.f32 %v1795, 0.35355338
        %v2331 = vmul.f32 %v1796, 0.35355338
        %v2332 = vmul.f32 %v1797, 0.35355338
        %v2333 = vpack.c.bf16 %v1432, %v1432
        %v2334 = vpack.c.bf16 %v1434, %v1434
        %v2335 = vpack.c.bf16 %v1437, %v1437
        %v2336 = vpack.c.bf16 %v1439, %v1439
        %v2337 = vpack.c.bf16 %v1442, %v1442
        %v2338 = vpack.c.bf16 %v1444, %v1444
        %v2339 = vpack.c.bf16 %v1447, %v1447
        %v2340 = vpack.c.bf16 %v1449, %v1449
        %v2341 = vpack.c.bf16 %v1452, %v1452
        %v2342 = vpack.c.bf16 %v1454, %v1454
        %v2343 = vpack.c.bf16 %v1457, %v1457
        %v2344 = vpack.c.bf16 %v1459, %v1459
        %v2345 = vpack.c.bf16 %v1462, %v1462
        %v2346 = vpack.c.bf16 %v1464, %v1464
        %v2347 = vpack.c.bf16 %v1467, %v1467
        %v2348 = vpack.c.bf16 %v1469, %v1469
        %v2349 = vld [vmem:[#allocation14] sm:$0xf]
        %v2350 = vld [vmem:[#allocation14 + $0x4] sm:$0xf]
        %v2351 = vld [vmem:[#allocation14 + $0x8] sm:$0xf]
        %v2352 = vld [vmem:[#allocation14 + $0xc] sm:$0xf]
        %v2353 = vld [vmem:[#allocation8] sm:$0xff]
        %v2354 = vld [vmem:[#allocation10] sm:$0xff]
        %v2355 = vld [vmem:[#allocation10 + $0x8] sm:$0xff]
        %vm2356 = vcmask 64512
        %v2358 = vsel %vm2356, %v2317, 0
        %v2361 = vsel %vm2356, %v2109, 0
        %2363 = vmatpush.xpose.msra.mxu0 0.0
        %2364 = vmatpush.xpose.msra.mxu0 0.0
        %2365 = vmatpush.xpose.msra.mxu0 0.0
        %2366 = vmatpush.xpose.msra.mxu0 0.0
        %2367 = vmatpush.xpose.msra.mxu0 0.0
        %2368 = vmatpush.xpose.msra.mxu0 0.0
        %2369 = vmatpush.xpose.msra.mxu0 0.0
        %2370 = vmatpush.xpose.msra.mxu0 0.0
        %2371 = vmatpush.xpose.msra.mxu0 0.0
        %2372 = vmatpush.xpose.msra.mxu0 0.0
        %2373 = vmatpush.xpose.msra.mxu0 0.0
        %2374 = vmatpush.xpose.msra.mxu0 0.0
        %2375 = vmatpush.xpose.msra.mxu0 0.0
        %2376 = vmatpush.xpose.msra.mxu0 0.0
        %2377 = vmatpush.xpose.msra.mxu0 0.0
        %2378 = vmatpush.xpose.msra.mxu0 %v2361
        %2379 = vmatmul.f32.gmra.mxu0 %v2358
        %v2380 = vpop.f32.mrf.mxu0
        %v2381 = vadd.f32 0.0, %v2380
        %2382 = vdwg.mxu0
        %v2384 = vsel %vm2356, %v2318, 0
        %v2387 = vsel %vm2356, %v2110, 0
        %2389 = vmatpush.xpose.msra.mxu0 0.0
        %2390 = vmatpush.xpose.msra.mxu0 0.0
        %2391 = vmatpush.xpose.msra.mxu0 0.0
        %2392 = vmatpush.xpose.msra.mxu0 0.0
        %2393 = vmatpush.xpose.msra.mxu0 0.0
        %2394 = vmatpush.xpose.msra.mxu0 0.0
        %2395 = vmatpush.xpose.msra.mxu0 0.0
        %2396 = vmatpush.xpose.msra.mxu0 0.0
        %2397 = vmatpush.xpose.msra.mxu0 0.0
        %2398 = vmatpush.xpose.msra.mxu0 0.0
        %2399 = vmatpush.xpose.msra.mxu0 0.0
        %2400 = vmatpush.xpose.msra.mxu0 0.0
        %2401 = vmatpush.xpose.msra.mxu0 0.0
        %2402 = vmatpush.xpose.msra.mxu0 0.0
        %2403 = vmatpush.xpose.msra.mxu0 0.0
        %2404 = vmatpush.xpose.msra.mxu0 %v2387
        %2405 = vmatmul.f32.gmra.mxu0 %v2384
        %v2406 = vpop.f32.mrf.mxu0
        %v2407 = vadd.f32 0.0, %v2406
        %2408 = vdwg.mxu0
        %v2410 = vsel %vm2356, %v2319, 0
        %v2413 = vsel %vm2356, %v2111, 0
        %2415 = vmatpush.xpose.msra.mxu0 0.0
        %2416 = vmatpush.xpose.msra.mxu0 0.0
        %2417 = vmatpush.xpose.msra.mxu0 0.0
        %2418 = vmatpush.xpose.msra.mxu0 0.0
        %2419 = vmatpush.xpose.msra.mxu0 0.0
        %2420 = vmatpush.xpose.msra.mxu0 0.0
        %2421 = vmatpush.xpose.msra.mxu0 0.0
        %2422 = vmatpush.xpose.msra.mxu0 0.0
        %2423 = vmatpush.xpose.msra.mxu0 0.0
        %2424 = vmatpush.xpose.msra.mxu0 0.0
        %2425 = vmatpush.xpose.msra.mxu0 0.0
        %2426 = vmatpush.xpose.msra.mxu0 0.0
        %2427 = vmatpush.xpose.msra.mxu0 0.0
        %2428 = vmatpush.xpose.msra.mxu0 0.0
        %2429 = vmatpush.xpose.msra.mxu0 0.0
        %2430 = vmatpush.xpose.msra.mxu0 %v2413
        %2431 = vmatmul.f32.gmra.mxu0 %v2410
        %v2432 = vpop.f32.mrf.mxu0
        %v2433 = vadd.f32 0.0, %v2432
        %2434 = vdwg.mxu0
        %v2436 = vsel %vm2356, %v2320, 0
        %v2439 = vsel %vm2356, %v2112, 0
        %2441 = vmatpush.xpose.msra.mxu0 0.0
        %2442 = vmatpush.xpose.msra.mxu0 0.0
        %2443 = vmatpush.xpose.msra.mxu0 0.0
        %2444 = vmatpush.xpose.msra.mxu0 0.0
        %2445 = vmatpush.xpose.msra.mxu0 0.0
        %2446 = vmatpush.xpose.msra.mxu0 0.0
        %2447 = vmatpush.xpose.msra.mxu0 0.0
        %2448 = vmatpush.xpose.msra.mxu0 0.0
        %2449 = vmatpush.xpose.msra.mxu0 0.0
        %2450 = vmatpush.xpose.msra.mxu0 0.0
        %2451 = vmatpush.xpose.msra.mxu0 0.0
        %2452 = vmatpush.xpose.msra.mxu0 0.0
        %2453 = vmatpush.xpose.msra.mxu0 0.0
        %2454 = vmatpush.xpose.msra.mxu0 0.0
        %2455 = vmatpush.xpose.msra.mxu0 0.0
        %2456 = vmatpush.xpose.msra.mxu0 %v2439
        %2457 = vmatmul.f32.gmra.mxu0 %v2436
        %v2458 = vpop.f32.mrf.mxu0
        %v2459 = vadd.f32 0.0, %v2458
        %2460 = vdwg.mxu0
        %v2462 = vsel %vm2356, %v2321, 0
        %v2465 = vsel %vm2356, %v2113, 0
        %2467 = vmatpush.xpose.msra.mxu0 0.0
        %2468 = vmatpush.xpose.msra.mxu0 0.0
        %2469 = vmatpush.xpose.msra.mxu0 0.0
        %2470 = vmatpush.xpose.msra.mxu0 0.0
        %2471 = vmatpush.xpose.msra.mxu0 0.0
        %2472 = vmatpush.xpose.msra.mxu0 0.0
        %2473 = vmatpush.xpose.msra.mxu0 0.0
        %2474 = vmatpush.xpose.msra.mxu0 0.0
        %2475 = vmatpush.xpose.msra.mxu0 0.0
        %2476 = vmatpush.xpose.msra.mxu0 0.0
        %2477 = vmatpush.xpose.msra.mxu0 0.0
        %2478 = vmatpush.xpose.msra.mxu0 0.0
        %2479 = vmatpush.xpose.msra.mxu0 0.0
        %2480 = vmatpush.xpose.msra.mxu0 0.0
        %2481 = vmatpush.xpose.msra.mxu0 0.0
        %2482 = vmatpush.xpose.msra.mxu0 %v2465
        %2483 = vmatmul.f32.gmra.mxu0 %v2462
        %v2484 = vpop.f32.mrf.mxu0
        %v2485 = vadd.f32 0.0, %v2484
        %2486 = vdwg.mxu0
        %v2488 = vsel %vm2356, %v2322, 0
        %v2491 = vsel %vm2356, %v2114, 0
        %2493 = vmatpush.xpose.msra.mxu0 0.0
        %2494 = vmatpush.xpose.msra.mxu0 0.0
        %2495 = vmatpush.xpose.msra.mxu0 0.0
        %2496 = vmatpush.xpose.msra.mxu0 0.0
        %2497 = vmatpush.xpose.msra.mxu0 0.0
        %2498 = vmatpush.xpose.msra.mxu0 0.0
        %2499 = vmatpush.xpose.msra.mxu0 0.0
        %2500 = vmatpush.xpose.msra.mxu0 0.0
        %2501 = vmatpush.xpose.msra.mxu0 0.0
        %2502 = vmatpush.xpose.msra.mxu0 0.0
        %2503 = vmatpush.xpose.msra.mxu0 0.0
        %2504 = vmatpush.xpose.msra.mxu0 0.0
        %2505 = vmatpush.xpose.msra.mxu0 0.0
        %2506 = vmatpush.xpose.msra.mxu0 0.0
        %2507 = vmatpush.xpose.msra.mxu0 0.0
        %2508 = vmatpush.xpose.msra.mxu0 %v2491
        %2509 = vmatmul.f32.gmra.mxu0 %v2488
        %v2510 = vpop.f32.mrf.mxu0
        %v2511 = vadd.f32 0.0, %v2510
        %2512 = vdwg.mxu0
        %v2514 = vsel %vm2356, %v2323, 0
        %v2517 = vsel %vm2356, %v2115, 0
        %2519 = vmatpush.xpose.msra.mxu0 0.0
        %2520 = vmatpush.xpose.msra.mxu0 0.0
        %2521 = vmatpush.xpose.msra.mxu0 0.0
        %2522 = vmatpush.xpose.msra.mxu0 0.0
        %2523 = vmatpush.xpose.msra.mxu0 0.0
        %2524 = vmatpush.xpose.msra.mxu0 0.0
        %2525 = vmatpush.xpose.msra.mxu0 0.0
        %2526 = vmatpush.xpose.msra.mxu0 0.0
        %2527 = vmatpush.xpose.msra.mxu0 0.0
        %2528 = vmatpush.xpose.msra.mxu0 0.0
        %2529 = vmatpush.xpose.msra.mxu0 0.0
        %2530 = vmatpush.xpose.msra.mxu0 0.0
        %2531 = vmatpush.xpose.msra.mxu0 0.0
        %2532 = vmatpush.xpose.msra.mxu0 0.0
        %2533 = vmatpush.xpose.msra.mxu0 0.0
        %2534 = vmatpush.xpose.msra.mxu0 %v2517
        %2535 = vmatmul.f32.gmra.mxu0 %v2514
        %v2536 = vpop.f32.mrf.mxu0
        %v2537 = vadd.f32 0.0, %v2536
        %2538 = vdwg.mxu0
        %v2540 = vsel %vm2356, %v2324, 0
        %v2543 = vsel %vm2356, %v2116, 0
        %2545 = vmatpush.xpose.msra.mxu0 0.0
        %2546 = vmatpush.xpose.msra.mxu0 0.0
        %2547 = vmatpush.xpose.msra.mxu0 0.0
        %2548 = vmatpush.xpose.msra.mxu0 0.0
        %2549 = vmatpush.xpose.msra.mxu0 0.0
        %2550 = vmatpush.xpose.msra.mxu0 0.0
        %2551 = vmatpush.xpose.msra.mxu0 0.0
        %2552 = vmatpush.xpose.msra.mxu0 0.0
        %2553 = vmatpush.xpose.msra.mxu0 0.0
        %2554 = vmatpush.xpose.msra.mxu0 0.0
        %2555 = vmatpush.xpose.msra.mxu0 0.0
        %2556 = vmatpush.xpose.msra.mxu0 0.0
        %2557 = vmatpush.xpose.msra.mxu0 0.0
        %2558 = vmatpush.xpose.msra.mxu0 0.0
        %2559 = vmatpush.xpose.msra.mxu0 0.0
        %2560 = vmatpush.xpose.msra.mxu0 %v2543
        %2561 = vmatmul.f32.gmra.mxu0 %v2540
        %v2562 = vpop.f32.mrf.mxu0
        %v2563 = vadd.f32 0.0, %v2562
        %2564 = vdwg.mxu0
        %v2566 = vsel %vm2356, %v2325, 0
        %v2569 = vsel %vm2356, %v2117, 0
        %2571 = vmatpush.xpose.msra.mxu0 0.0
        %2572 = vmatpush.xpose.msra.mxu0 0.0
        %2573 = vmatpush.xpose.msra.mxu0 0.0
        %2574 = vmatpush.xpose.msra.mxu0 0.0
        %2575 = vmatpush.xpose.msra.mxu0 0.0
        %2576 = vmatpush.xpose.msra.mxu0 0.0
        %2577 = vmatpush.xpose.msra.mxu0 0.0
        %2578 = vmatpush.xpose.msra.mxu0 0.0
        %2579 = vmatpush.xpose.msra.mxu0 0.0
        %2580 = vmatpush.xpose.msra.mxu0 0.0
        %2581 = vmatpush.xpose.msra.mxu0 0.0
        %2582 = vmatpush.xpose.msra.mxu0 0.0
        %2583 = vmatpush.xpose.msra.mxu0 0.0
        %2584 = vmatpush.xpose.msra.mxu0 0.0
        %2585 = vmatpush.xpose.msra.mxu0 0.0
        %2586 = vmatpush.xpose.msra.mxu0 %v2569
        %2587 = vmatmul.f32.gmra.mxu0 %v2566
        %v2588 = vpop.f32.mrf.mxu0
        %v2589 = vadd.f32 0.0, %v2588
        %2590 = vdwg.mxu0
        %v2592 = vsel %vm2356, %v2326, 0
        %v2595 = vsel %vm2356, %v2118, 0
        %2597 = vmatpush.xpose.msra.mxu0 0.0
        %2598 = vmatpush.xpose.msra.mxu0 0.0
        %2599 = vmatpush.xpose.msra.mxu0 0.0
        %2600 = vmatpush.xpose.msra.mxu0 0.0
        %2601 = vmatpush.xpose.msra.mxu0 0.0
        %2602 = vmatpush.xpose.msra.mxu0 0.0
        %2603 = vmatpush.xpose.msra.mxu0 0.0
        %2604 = vmatpush.xpose.msra.mxu0 0.0
        %2605 = vmatpush.xpose.msra.mxu0 0.0
        %2606 = vmatpush.xpose.msra.mxu0 0.0
        %2607 = vmatpush.xpose.msra.mxu0 0.0
        %2608 = vmatpush.xpose.msra.mxu0 0.0
        %2609 = vmatpush.xpose.msra.mxu0 0.0
        %2610 = vmatpush.xpose.msra.mxu0 0.0
        %2611 = vmatpush.xpose.msra.mxu0 0.0
        %2612 = vmatpush.xpose.msra.mxu0 %v2595
        %2613 = vmatmul.f32.gmra.mxu0 %v2592
        %v2614 = vpop.f32.mrf.mxu0
        %v2615 = vadd.f32 0.0, %v2614
        %2616 = vdwg.mxu0
        %v2618 = vsel %vm2356, %v2327, 0
        %v2621 = vsel %vm2356, %v2119, 0
        %2623 = vmatpush.xpose.msra.mxu0 0.0
        %2624 = vmatpush.xpose.msra.mxu0 0.0
        %2625 = vmatpush.xpose.msra.mxu0 0.0
        %2626 = vmatpush.xpose.msra.mxu0 0.0
        %2627 = vmatpush.xpose.msra.mxu0 0.0
        %2628 = vmatpush.xpose.msra.mxu0 0.0
        %2629 = vmatpush.xpose.msra.mxu0 0.0
        %2630 = vmatpush.xpose.msra.mxu0 0.0
        %2631 = vmatpush.xpose.msra.mxu0 0.0
        %2632 = vmatpush.xpose.msra.mxu0 0.0
        %2633 = vmatpush.xpose.msra.mxu0 0.0
        %2634 = vmatpush.xpose.msra.mxu0 0.0
        %2635 = vmatpush.xpose.msra.mxu0 0.0
        %2636 = vmatpush.xpose.msra.mxu0 0.0
        %2637 = vmatpush.xpose.msra.mxu0 0.0
        %2638 = vmatpush.xpose.msra.mxu0 %v2621
        %2639 = vmatmul.f32.gmra.mxu0 %v2618
        %v2640 = vpop.f32.mrf.mxu0
        %v2641 = vadd.f32 0.0, %v2640
        %2642 = vdwg.mxu0
        %v2644 = vsel %vm2356, %v2328, 0
        %v2647 = vsel %vm2356, %v2120, 0
        %2649 = vmatpush.xpose.msra.mxu0 0.0
        %2650 = vmatpush.xpose.msra.mxu0 0.0
        %2651 = vmatpush.xpose.msra.mxu0 0.0
        %2652 = vmatpush.xpose.msra.mxu0 0.0
        %2653 = vmatpush.xpose.msra.mxu0 0.0
        %2654 = vmatpush.xpose.msra.mxu0 0.0
        %2655 = vmatpush.xpose.msra.mxu0 0.0
        %2656 = vmatpush.xpose.msra.mxu0 0.0
        %2657 = vmatpush.xpose.msra.mxu0 0.0
        %2658 = vmatpush.xpose.msra.mxu0 0.0
        %2659 = vmatpush.xpose.msra.mxu0 0.0
        %2660 = vmatpush.xpose.msra.mxu0 0.0
        %2661 = vmatpush.xpose.msra.mxu0 0.0
        %2662 = vmatpush.xpose.msra.mxu0 0.0
        %2663 = vmatpush.xpose.msra.mxu0 0.0
        %2664 = vmatpush.xpose.msra.mxu0 %v2647
        %2665 = vmatmul.f32.gmra.mxu0 %v2644
        %v2666 = vpop.f32.mrf.mxu0
        %v2667 = vadd.f32 0.0, %v2666
        %2668 = vdwg.mxu0
        %v2670 = vsel %vm2356, %v2329, 0
        %v2673 = vsel %vm2356, %v2121, 0
        %2675 = vmatpush.xpose.msra.mxu0 0.0
        %2676 = vmatpush.xpose.msra.mxu0 0.0
        %2677 = vmatpush.xpose.msra.mxu0 0.0
        %2678 = vmatpush.xpose.msra.mxu0 0.0
        %2679 = vmatpush.xpose.msra.mxu0 0.0
        %2680 = vmatpush.xpose.msra.mxu0 0.0
        %2681 = vmatpush.xpose.msra.mxu0 0.0
        %2682 = vmatpush.xpose.msra.mxu0 0.0
        %2683 = vmatpush.xpose.msra.mxu0 0.0
        %2684 = vmatpush.xpose.msra.mxu0 0.0
        %2685 = vmatpush.xpose.msra.mxu0 0.0
        %2686 = vmatpush.xpose.msra.mxu0 0.0
        %2687 = vmatpush.xpose.msra.mxu0 0.0
        %2688 = vmatpush.xpose.msra.mxu0 0.0
        %2689 = vmatpush.xpose.msra.mxu0 0.0
        %2690 = vmatpush.xpose.msra.mxu0 %v2673
        %2691 = vmatmul.f32.gmra.mxu0 %v2670
        %v2692 = vpop.f32.mrf.mxu0
        %v2693 = vadd.f32 0.0, %v2692
        %2694 = vdwg.mxu0
        %v2696 = vsel %vm2356, %v2330, 0
        %v2699 = vsel %vm2356, %v2122, 0
        %2701 = vmatpush.xpose.msra.mxu0 0.0
        %2702 = vmatpush.xpose.msra.mxu0 0.0
        %2703 = vmatpush.xpose.msra.mxu0 0.0
        %2704 = vmatpush.xpose.msra.mxu0 0.0
        %2705 = vmatpush.xpose.msra.mxu0 0.0
        %2706 = vmatpush.xpose.msra.mxu0 0.0
        %2707 = vmatpush.xpose.msra.mxu0 0.0
        %2708 = vmatpush.xpose.msra.mxu0 0.0
        %2709 = vmatpush.xpose.msra.mxu0 0.0
        %2710 = vmatpush.xpose.msra.mxu0 0.0
        %2711 = vmatpush.xpose.msra.mxu0 0.0
        %2712 = vmatpush.xpose.msra.mxu0 0.0
        %2713 = vmatpush.xpose.msra.mxu0 0.0
        %2714 = vmatpush.xpose.msra.mxu0 0.0
        %2715 = vmatpush.xpose.msra.mxu0 0.0
        %2716 = vmatpush.xpose.msra.mxu0 %v2699
        %2717 = vmatmul.f32.gmra.mxu0 %v2696
        %v2718 = vpop.f32.mrf.mxu0
        %v2719 = vadd.f32 0.0, %v2718
        %2720 = vdwg.mxu0
        %v2722 = vsel %vm2356, %v2331, 0
        %v2725 = vsel %vm2356, %v2123, 0
        %2727 = vmatpush.xpose.msra.mxu0 0.0
        %2728 = vmatpush.xpose.msra.mxu0 0.0
        %2729 = vmatpush.xpose.msra.mxu0 0.0
        %2730 = vmatpush.xpose.msra.mxu0 0.0
        %2731 = vmatpush.xpose.msra.mxu0 0.0
        %2732 = vmatpush.xpose.msra.mxu0 0.0
        %2733 = vmatpush.xpose.msra.mxu0 0.0
        %2734 = vmatpush.xpose.msra.mxu0 0.0
        %2735 = vmatpush.xpose.msra.mxu0 0.0
        %2736 = vmatpush.xpose.msra.mxu0 0.0
        %2737 = vmatpush.xpose.msra.mxu0 0.0
        %2738 = vmatpush.xpose.msra.mxu0 0.0
        %2739 = vmatpush.xpose.msra.mxu0 0.0
        %2740 = vmatpush.xpose.msra.mxu0 0.0
        %2741 = vmatpush.xpose.msra.mxu0 0.0
        %2742 = vmatpush.xpose.msra.mxu0 %v2725
        %2743 = vmatmul.f32.gmra.mxu0 %v2722
        %v2744 = vpop.f32.mrf.mxu0
        %v2745 = vadd.f32 0.0, %v2744
        %2746 = vdwg.mxu0
        %v2748 = vsel %vm2356, %v2332, 0
        %v2751 = vsel %vm2356, %v2124, 0
        %2753 = vmatpush.xpose.msra.mxu0 0.0
        %2754 = vmatpush.xpose.msra.mxu0 0.0
        %2755 = vmatpush.xpose.msra.mxu0 0.0
        %2756 = vmatpush.xpose.msra.mxu0 0.0
        %2757 = vmatpush.xpose.msra.mxu0 0.0
        %2758 = vmatpush.xpose.msra.mxu0 0.0
        %2759 = vmatpush.xpose.msra.mxu0 0.0
        %2760 = vmatpush.xpose.msra.mxu0 0.0
        %2761 = vmatpush.xpose.msra.mxu0 0.0
        %2762 = vmatpush.xpose.msra.mxu0 0.0
        %2763 = vmatpush.xpose.msra.mxu0 0.0
        %2764 = vmatpush.xpose.msra.mxu0 0.0
        %2765 = vmatpush.xpose.msra.mxu0 0.0
        %2766 = vmatpush.xpose.msra.mxu0 0.0
        %2767 = vmatpush.xpose.msra.mxu0 0.0
        %2768 = vmatpush.xpose.msra.mxu0 %v2751
        %2769 = vmatmul.f32.gmra.mxu0 %v2748
        %v2770 = vpop.f32.mrf.mxu0
        %v2771 = vadd.f32 0.0, %v2770
        %2772 = vdwg.mxu0
        %v2773 = vsel %vm2356, %v2381, -inf
        %2774 = vmax.xlane.f32.xlu0 %v2773
        %v2775 = vpop.xlane.xlu0 %2774
        %v2776 = vsel %vm2356, %v2407, -inf
        %2777 = vmax.xlane.f32.xlu0 %v2776
        %v2778 = vpop.xlane.xlu0 %2777
        %v2779 = vsel %vm2356, %v2433, -inf
        %2780 = vmax.xlane.f32.xlu0 %v2779
        %v2781 = vpop.xlane.xlu0 %2780
        %v2782 = vsel %vm2356, %v2459, -inf
        %2783 = vmax.xlane.f32.xlu0 %v2782
        %v2784 = vpop.xlane.xlu0 %2783
        %v2785 = vsel %vm2356, %v2485, -inf
        %2786 = vmax.xlane.f32.xlu0 %v2785
        %v2787 = vpop.xlane.xlu0 %2786
        %v2788 = vsel %vm2356, %v2511, -inf
        %2789 = vmax.xlane.f32.xlu0 %v2788
        %v2790 = vpop.xlane.xlu0 %2789
        %v2791 = vsel %vm2356, %v2537, -inf
        %2792 = vmax.xlane.f32.xlu0 %v2791
        %v2793 = vpop.xlane.xlu0 %2792
        %v2794 = vsel %vm2356, %v2563, -inf
        %2795 = vmax.xlane.f32.xlu0 %v2794
        %v2796 = vpop.xlane.xlu0 %2795
        %v2797 = vsel %vm2356, %v2589, -inf
        %2798 = vmax.xlane.f32.xlu0 %v2797
        %v2799 = vpop.xlane.xlu0 %2798
        %v2800 = vsel %vm2356, %v2615, -inf
        %2801 = vmax.xlane.f32.xlu0 %v2800
        %v2802 = vpop.xlane.xlu0 %2801
        %v2803 = vsel %vm2356, %v2641, -inf
        %2804 = vmax.xlane.f32.xlu0 %v2803
        %v2805 = vpop.xlane.xlu0 %2804
        %v2806 = vsel %vm2356, %v2667, -inf
        %2807 = vmax.xlane.f32.xlu0 %v2806
        %v2808 = vpop.xlane.xlu0 %2807
        %v2809 = vsel %vm2356, %v2693, -inf
        %2810 = vmax.xlane.f32.xlu0 %v2809
        %v2811 = vpop.xlane.xlu0 %2810
        %v2812 = vsel %vm2356, %v2719, -inf
        %2813 = vmax.xlane.f32.xlu0 %v2812
        %v2814 = vpop.xlane.xlu0 %2813
        %v2815 = vsel %vm2356, %v2745, -inf
        %2816 = vmax.xlane.f32.xlu0 %v2815
        %v2817 = vpop.xlane.xlu0 %2816
        %v2818 = vsel %vm2356, %v2771, -inf
        %2819 = vmax.xlane.f32.xlu0 %v2818
        %v2820 = vpop.xlane.xlu0 %2819
        %v2821 = vsub.f32 %v2381, %v2775
        %v2822 = vsub.f32 %v2407, %v2778
        %v2823 = vsub.f32 %v2433, %v2781
        %v2824 = vsub.f32 %v2459, %v2784
        %v2825 = vsub.f32 %v2485, %v2787
        %v2826 = vsub.f32 %v2511, %v2790
        %v2827 = vsub.f32 %v2537, %v2793
        %v2828 = vsub.f32 %v2563, %v2796
        %v2829 = vsub.f32 %v2589, %v2799
        %v2830 = vsub.f32 %v2615, %v2802
        %v2831 = vsub.f32 %v2641, %v2805
        %v2832 = vsub.f32 %v2667, %v2808
        %v2833 = vsub.f32 %v2693, %v2811
        %v2834 = vsub.f32 %v2719, %v2814
        %v2835 = vsub.f32 %v2745, %v2817
        %v2836 = vsub.f32 %v2771, %v2820
        %v2837 = vmul.f32 %v2821, 1.442695
        %v2838 = vpow.pop %v2837
        %v2839 = vmul.f32 %v2822, 1.442695
        %v2840 = vpow.pop %v2839
        %v2841 = vmul.f32 %v2823, 1.442695
        %v2842 = vpow.pop %v2841
        %v2843 = vmul.f32 %v2824, 1.442695
        %v2844 = vpow.pop %v2843
        %v2845 = vmul.f32 %v2825, 1.442695
        %v2846 = vpow.pop %v2845
        %v2847 = vmul.f32 %v2826, 1.442695
        %v2848 = vpow.pop %v2847
        %v2849 = vmul.f32 %v2827, 1.442695
        %v2850 = vpow.pop %v2849
        %v2851 = vmul.f32 %v2828, 1.442695
        %v2852 = vpow.pop %v2851
        %v2853 = vmul.f32 %v2829, 1.442695
        %v2854 = vpow.pop %v2853
        %v2855 = vmul.f32 %v2830, 1.442695
        %v2856 = vpow.pop %v2855
        %v2857 = vmul.f32 %v2831, 1.442695
        %v2858 = vpow.pop %v2857
        %v2859 = vmul.f32 %v2832, 1.442695
        %v2860 = vpow.pop %v2859
        %v2861 = vmul.f32 %v2833, 1.442695
        %v2862 = vpow.pop %v2861
        %v2863 = vmul.f32 %v2834, 1.442695
        %v2864 = vpow.pop %v2863
        %v2865 = vmul.f32 %v2835, 1.442695
        %v2866 = vpow.pop %v2865
        %v2867 = vmul.f32 %v2836, 1.442695
        %v2868 = vpow.pop %v2867
        %v2869 = vsel %vm2356, %v2838, 0.0
        %2870 = vadd.xlane.f32.xlu0 %v2869
        %v2871 = vpop.xlane.xlu0 %2870
        %v2872 = vsel %vm2356, %v2840, 0.0
        %2873 = vadd.xlane.f32.xlu0 %v2872
        %v2874 = vpop.xlane.xlu0 %2873
        %v2875 = vsel %vm2356, %v2842, 0.0
        %2876 = vadd.xlane.f32.xlu0 %v2875
        %v2877 = vpop.xlane.xlu0 %2876
        %v2878 = vsel %vm2356, %v2844, 0.0
        %2879 = vadd.xlane.f32.xlu0 %v2878
        %v2880 = vpop.xlane.xlu0 %2879
        %v2881 = vsel %vm2356, %v2846, 0.0
        %2882 = vadd.xlane.f32.xlu0 %v2881
        %v2883 = vpop.xlane.xlu0 %2882
        %v2884 = vsel %vm2356, %v2848, 0.0
        %2885 = vadd.xlane.f32.xlu0 %v2884
        %v2886 = vpop.xlane.xlu0 %2885
        %v2887 = vsel %vm2356, %v2850, 0.0
        %2888 = vadd.xlane.f32.xlu0 %v2887
        %v2889 = vpop.xlane.xlu0 %2888
        %v2890 = vsel %vm2356, %v2852, 0.0
        %2891 = vadd.xlane.f32.xlu0 %v2890
        %v2892 = vpop.xlane.xlu0 %2891
        %v2893 = vsel %vm2356, %v2854, 0.0
        %2894 = vadd.xlane.f32.xlu0 %v2893
        %v2895 = vpop.xlane.xlu0 %2894
        %v2896 = vsel %vm2356, %v2856, 0.0
        %2897 = vadd.xlane.f32.xlu0 %v2896
        %v2898 = vpop.xlane.xlu0 %2897
        %v2899 = vsel %vm2356, %v2858, 0.0
        %2900 = vadd.xlane.f32.xlu0 %v2899
        %v2901 = vpop.xlane.xlu0 %2900
        %v2902 = vsel %vm2356, %v2860, 0.0
        %2903 = vadd.xlane.f32.xlu0 %v2902
        %v2904 = vpop.xlane.xlu0 %2903
        %v2905 = vsel %vm2356, %v2862, 0.0
        %2906 = vadd.xlane.f32.xlu0 %v2905
        %v2907 = vpop.xlane.xlu0 %2906
        %v2908 = vsel %vm2356, %v2864, 0.0
        %2909 = vadd.xlane.f32.xlu0 %v2908
        %v2910 = vpop.xlane.xlu0 %2909
        %v2911 = vsel %vm2356, %v2866, 0.0
        %2912 = vadd.xlane.f32.xlu0 %v2911
        %v2913 = vpop.xlane.xlu0 %2912
        %v2914 = vsel %vm2356, %v2868, 0.0
        %2915 = vadd.xlane.f32.xlu0 %v2914
        %v2916 = vpop.xlane.xlu0 %2915
        %v2917 = vrcp.pop %v2871
        %v2918 = vrcp.pop %v2874
        %v2919 = vrcp.pop %v2877
        %v2920 = vrcp.pop %v2880
        %v2921 = vrcp.pop %v2883
        %v2922 = vrcp.pop %v2886
        %v2923 = vrcp.pop %v2889
        %v2924 = vrcp.pop %v2892
        %v2925 = vrcp.pop %v2895
        %v2926 = vrcp.pop %v2898
        %v2927 = vrcp.pop %v2901
        %v2928 = vrcp.pop %v2904
        %v2929 = vrcp.pop %v2907
        %v2930 = vrcp.pop %v2910
        %v2931 = vrcp.pop %v2913
        %v2932 = vrcp.pop %v2916
        %v2933 = vmul.f32 %v2838, %v2917
        %v2934 = vmul.f32 %v2840, %v2918
        %v2935 = vmul.f32 %v2842, %v2919
        %v2936 = vmul.f32 %v2844, %v2920
        %v2937 = vmul.f32 %v2846, %v2921
        %v2938 = vmul.f32 %v2848, %v2922
        %v2939 = vmul.f32 %v2850, %v2923
        %v2940 = vmul.f32 %v2852, %v2924
        %v2941 = vmul.f32 %v2854, %v2925
        %v2942 = vmul.f32 %v2856, %v2926
        %v2943 = vmul.f32 %v2858, %v2927
        %v2944 = vmul.f32 %v2860, %v2928
        %v2945 = vmul.f32 %v2862, %v2929
        %v2946 = vmul.f32 %v2864, %v2930
        %v2947 = vmul.f32 %v2866, %v2931
        %v2948 = vmul.f32 %v2868, %v2932
        %v2950 = vsel %vm2356, %v2933, 0
        %v2953 = vsel %vm2356, %v2934, 0
        %v2956 = vsel %vm2356, %v2935, 0
        %v2959 = vsel %vm2356, %v2936, 0
        %v2962 = vsel %vm2356, %v2937, 0
        %v2965 = vsel %vm2356, %v2938, 0
        %v2968 = vsel %vm2356, %v2939, 0
        %v2971 = vsel %vm2356, %v2940, 0
        %v2974 = vsel %vm2356, %v2941, 0
        %v2977 = vsel %vm2356, %v2942, 0
        %v2980 = vsel %vm2356, %v2943, 0
        %v2983 = vsel %vm2356, %v2944, 0
        %v2986 = vsel %vm2356, %v2945, 0
        %v2989 = vsel %vm2356, %v2946, 0
        %v2992 = vsel %vm2356, %v2947, 0
        %v2995 = vsel %vm2356, %v2948, 0
        %2997 = vmatpush.msra.mxu0 0.0
        %2998 = vmatpush.msra.mxu0 0.0
        %2999 = vmatpush.msra.mxu0 0.0
        %3000 = vmatpush.msra.mxu0 0.0
        %3001 = vmatpush.msra.mxu0 0.0
        %3002 = vmatpush.msra.mxu0 0.0
        %3003 = vmatpush.msra.mxu0 0.0
        %3004 = vmatpush.msra.mxu0 0.0
        %3005 = vmatpush.msra.mxu0 0.0
        %3006 = vmatpush.msra.mxu0 0.0
        %3007 = vmatpush.msra.mxu0 0.0
        %3008 = vmatpush.msra.mxu0 0.0
        %3009 = vmatpush.msra.mxu0 0.0
        %3010 = vmatpush.msra.mxu0 0.0
        %3011 = vmatpush.msra.mxu0 0.0
        %3012 = vmatpush.msra.mxu0 %v2353
        %3013 = vmatmul.f32.gmra.mxu0 %v2950
        %v3014 = vpop.f32.mrf.mxu0
        %v3015 = vadd.f32 0.0, %v3014
        %3016 = vmatmul.f32.gmra.mxu0 %v2953
        %v3017 = vpop.f32.mrf.mxu0
        %v3018 = vadd.f32 0.0, %v3017
        %3019 = vmatmul.f32.gmra.mxu0 %v2956
        %v3020 = vpop.f32.mrf.mxu0
        %v3021 = vadd.f32 0.0, %v3020
        %3022 = vmatmul.f32.gmra.mxu0 %v2959
        %v3023 = vpop.f32.mrf.mxu0
        %v3024 = vadd.f32 0.0, %v3023
        %3025 = vmatmul.f32.gmra.mxu0 %v2962
        %v3026 = vpop.f32.mrf.mxu0
        %v3027 = vadd.f32 0.0, %v3026
        %3028 = vmatmul.f32.gmra.mxu0 %v2965
        %v3029 = vpop.f32.mrf.mxu0
        %v3030 = vadd.f32 0.0, %v3029
        %3031 = vmatmul.f32.gmra.mxu0 %v2968
        %v3032 = vpop.f32.mrf.mxu0
        %v3033 = vadd.f32 0.0, %v3032
        %3034 = vmatmul.f32.gmra.mxu0 %v2971
        %v3035 = vpop.f32.mrf.mxu0
        %v3036 = vadd.f32 0.0, %v3035
        %3037 = vmatmul.f32.gmra.mxu0 %v2974
        %v3038 = vpop.f32.mrf.mxu0
        %v3039 = vadd.f32 0.0, %v3038
        %3040 = vmatmul.f32.gmra.mxu0 %v2977
        %v3041 = vpop.f32.mrf.mxu0
        %v3042 = vadd.f32 0.0, %v3041
        %3043 = vmatmul.f32.gmra.mxu0 %v2980
        %v3044 = vpop.f32.mrf.mxu0
        %v3045 = vadd.f32 0.0, %v3044
        %3046 = vmatmul.f32.gmra.mxu0 %v2983
        %v3047 = vpop.f32.mrf.mxu0
        %v3048 = vadd.f32 0.0, %v3047
        %3049 = vmatmul.f32.gmra.mxu0 %v2986
        %v3050 = vpop.f32.mrf.mxu0
        %v3051 = vadd.f32 0.0, %v3050
        %3052 = vmatmul.f32.gmra.mxu0 %v2989
        %v3053 = vpop.f32.mrf.mxu0
        %v3054 = vadd.f32 0.0, %v3053
        %3055 = vmatmul.f32.gmra.mxu0 %v2992
        %v3056 = vpop.f32.mrf.mxu0
        %v3057 = vadd.f32 0.0, %v3056
        %3058 = vmatmul.f32.gmra.mxu0 %v2995
        %v3059 = vpop.f32.mrf.mxu0
        %v3060 = vadd.f32 0.0, %v3059
        %3061 = vdwg.mxu0
        %v3062 = vmul.f32 %v3015, %v2354
        %v3063 = vmul.f32 %v3018, %v2355
        %v3064 = vmul.f32 %v3021, %v2354
        %v3065 = vmul.f32 %v3024, %v2355
        %v3066 = vmul.f32 %v3027, %v2354
        %v3067 = vmul.f32 %v3030, %v2355
        %v3068 = vmul.f32 %v3033, %v2354
        %v3069 = vmul.f32 %v3036, %v2355
        %v3070 = vmul.f32 %v3039, %v2354
        %v3071 = vmul.f32 %v3042, %v2355
        %v3072 = vmul.f32 %v3045, %v2354
        %v3073 = vmul.f32 %v3048, %v2355
        %v3074 = vmul.f32 %v3051, %v2354
        %v3075 = vmul.f32 %v3054, %v2355
        %v3076 = vmul.f32 %v3057, %v2354
        %v3077 = vmul.f32 %v3060, %v2355
        %v3078 = vadd.f32 %v3062, %v3063
        %v3079 = vrot.slane %v3078, 4
        %v3080 = vadd.f32 %v3078, %v3079
        %v3081 = vrot.slane %v3080, 2
        %v3082 = vadd.f32 %v3080, %v3081
        %v3083 = vrot.slane %v3082, 1
        %v3084 = vadd.f32 %v3082, %v3083
        %v3085 = vadd.f32 %v3064, %v3065
        %v3086 = vrot.slane %v3085, 4
        %v3087 = vadd.f32 %v3085, %v3086
        %v3088 = vrot.slane %v3087, 2
        %v3089 = vadd.f32 %v3087, %v3088
        %v3090 = vrot.slane %v3089, 1
        %v3091 = vadd.f32 %v3089, %v3090
        %v3092 = vadd.f32 %v3066, %v3067
        %v3093 = vrot.slane %v3092, 4
        %v3094 = vadd.f32 %v3092, %v3093
        %v3095 = vrot.slane %v3094, 2
        %v3096 = vadd.f32 %v3094, %v3095
        %v3097 = vrot.slane %v3096, 1
        %v3098 = vadd.f32 %v3096, %v3097
        %v3099 = vadd.f32 %v3068, %v3069
        %v3100 = vrot.slane %v3099, 4
        %v3101 = vadd.f32 %v3099, %v3100
        %v3102 = vrot.slane %v3101, 2
        %v3103 = vadd.f32 %v3101, %v3102
        %v3104 = vrot.slane %v3103, 1
        %v3105 = vadd.f32 %v3103, %v3104
        %v3106 = vadd.f32 %v3070, %v3071
        %v3107 = vrot.slane %v3106, 4
        %v3108 = vadd.f32 %v3106, %v3107
        %v3109 = vrot.slane %v3108, 2
        %v3110 = vadd.f32 %v3108, %v3109
        %v3111 = vrot.slane %v3110, 1
        %v3112 = vadd.f32 %v3110, %v3111
        %v3113 = vadd.f32 %v3072, %v3073
        %v3114 = vrot.slane %v3113, 4
        %v3115 = vadd.f32 %v3113, %v3114
        %v3116 = vrot.slane %v3115, 2
        %v3117 = vadd.f32 %v3115, %v3116
        %v3118 = vrot.slane %v3117, 1
        %v3119 = vadd.f32 %v3117, %v3118
        %v3120 = vadd.f32 %v3074, %v3075
        %v3121 = vrot.slane %v3120, 4
        %v3122 = vadd.f32 %v3120, %v3121
        %v3123 = vrot.slane %v3122, 2
        %v3124 = vadd.f32 %v3122, %v3123
        %v3125 = vrot.slane %v3124, 1
        %v3126 = vadd.f32 %v3124, %v3125
        %v3127 = vadd.f32 %v3076, %v3077
        %v3128 = vrot.slane %v3127, 4
        %v3129 = vadd.f32 %v3127, %v3128
        %v3130 = vrot.slane %v3129, 2
        %v3131 = vadd.f32 %v3129, %v3130
        %v3132 = vrot.slane %v3131, 1
        %v3133 = vadd.f32 %v3131, %v3132
        %v3142 = vsel %vm696, %v3091, %v3084
        %v3143 = vsel %vm698, %v3098, %v3142
        %v3144 = vsel %vm700, %v3105, %v3143
        %v3145 = vsel %vm702, %v3112, %v3144
        %v3146 = vsel %vm704, %v3119, %v3145
        %v3147 = vsel %vm706, %v3126, %v3146
        %v3148 = vsel %vm708, %v3133, %v3147
        %3150 = vst [vmem:[%s574] sm:$0xff] %v3148
        %v3151 = vpack.c.bf16 %v2933, %v2933
        %v3152 = vpack.c.bf16 %v2934, %v2934
        %v3153 = vpack.c.bf16 %v2935, %v2935
        %v3154 = vpack.c.bf16 %v2936, %v2936
        %v3155 = vpack.c.bf16 %v2937, %v2937
        %v3156 = vpack.c.bf16 %v2938, %v2938
        %v3157 = vpack.c.bf16 %v2939, %v2939
        %v3158 = vpack.c.bf16 %v2940, %v2940
        %v3159 = vpack.c.bf16 %v2941, %v2941
        %v3160 = vpack.c.bf16 %v2942, %v2942
        %v3161 = vpack.c.bf16 %v2943, %v2943
        %v3162 = vpack.c.bf16 %v2944, %v2944
        %v3163 = vpack.c.bf16 %v2945, %v2945
        %v3164 = vpack.c.bf16 %v2946, %v2946
        %v3165 = vpack.c.bf16 %v2947, %v2947
        %v3166 = vpack.c.bf16 %v2948, %v2948
        %v3168 = vunpack.c.l.b16 %v2333
        %v3169 = vpack.c.b16 %v3168, %v3168
        %3170 = vrot.lane.b32.xlu0 %v3169, 96
        %v3171 = vpop.permute.xlu0 %3170
        %v3173 = vsel %vm2356, %v3151, 0
        %vm3175 = vcmask 1043456
        %v3177 = vsel %vm3175, %v3171, 0
        %3179 = vmatpush.bf16.msra.mxu0 0
        %3180 = vmatpush.bf16.msra.mxu0 0
        %3181 = vmatpush.bf16.msra.mxu0 0
        %3182 = vmatpush.bf16.msra.mxu0 0
        %3183 = vmatpush.bf16.msra.mxu0 0
        %3184 = vmatpush.bf16.msra.mxu0 0
        %3185 = vmatpush.bf16.msra.mxu0 0
        %3186 = vmatpush.bf16.msra.mxu0 %v3177
        %3187 = vmatmul.bf16.gmra.mxu0 %v3173
        %v3188 = vpop.f32.mrf.mxu0
        %v3189 = vadd.f32 0.0, %v3188
        %v3190 = vpop.f32.mrf.mxu0
        %3191 = vdwg.mxu0
        %v3193 = vunpack.c.l.b16 %v2334
        %v3194 = vpack.c.b16 %v3193, %v3193
        %3195 = vrot.lane.b32.xlu0 %v3194, 96
        %v3196 = vpop.permute.xlu0 %3195
        %v3198 = vsel %vm2356, %v3152, 0
        %v3201 = vsel %vm3175, %v3196, 0
        %3203 = vmatpush.bf16.msra.mxu0 0
        %3204 = vmatpush.bf16.msra.mxu0 0
        %3205 = vmatpush.bf16.msra.mxu0 0
        %3206 = vmatpush.bf16.msra.mxu0 0
        %3207 = vmatpush.bf16.msra.mxu0 0
        %3208 = vmatpush.bf16.msra.mxu0 0
        %3209 = vmatpush.bf16.msra.mxu0 0
        %3210 = vmatpush.bf16.msra.mxu0 %v3201
        %3211 = vmatmul.bf16.gmra.mxu0 %v3198
        %v3212 = vpop.f32.mrf.mxu0
        %v3213 = vadd.f32 0.0, %v3212
        %v3214 = vpop.f32.mrf.mxu0
        %3215 = vdwg.mxu0
        %v3217 = vunpack.c.l.b16 %v2335
        %v3218 = vpack.c.b16 %v3217, %v3217
        %3219 = vrot.lane.b32.xlu0 %v3218, 96
        %v3220 = vpop.permute.xlu0 %3219
        %v3222 = vsel %vm2356, %v3153, 0
        %v3225 = vsel %vm3175, %v3220, 0
        %3227 = vmatpush.bf16.msra.mxu0 0
        %3228 = vmatpush.bf16.msra.mxu0 0
        %3229 = vmatpush.bf16.msra.mxu0 0
        %3230 = vmatpush.bf16.msra.mxu0 0
        %3231 = vmatpush.bf16.msra.mxu0 0
        %3232 = vmatpush.bf16.msra.mxu0 0
        %3233 = vmatpush.bf16.msra.mxu0 0
        %3234 = vmatpush.bf16.msra.mxu0 %v3225
        %3235 = vmatmul.bf16.gmra.mxu0 %v3222
        %v3236 = vpop.f32.mrf.mxu0
        %v3237 = vadd.f32 0.0, %v3236
        %v3238 = vpop.f32.mrf.mxu0
        %3239 = vdwg.mxu0
        %v3241 = vunpack.c.l.b16 %v2336
        %v3242 = vpack.c.b16 %v3241, %v3241
        %3243 = vrot.lane.b32.xlu0 %v3242, 96
        %v3244 = vpop.permute.xlu0 %3243
        %v3246 = vsel %vm2356, %v3154, 0
        %v3249 = vsel %vm3175, %v3244, 0
        %3251 = vmatpush.bf16.msra.mxu0 0
        %3252 = vmatpush.bf16.msra.mxu0 0
        %3253 = vmatpush.bf16.msra.mxu0 0
        %3254 = vmatpush.bf16.msra.mxu0 0
        %3255 = vmatpush.bf16.msra.mxu0 0
        %3256 = vmatpush.bf16.msra.mxu0 0
        %3257 = vmatpush.bf16.msra.mxu0 0
        %3258 = vmatpush.bf16.msra.mxu0 %v3249
        %3259 = vmatmul.bf16.gmra.mxu0 %v3246
        %v3260 = vpop.f32.mrf.mxu0
        %v3261 = vadd.f32 0.0, %v3260
        %v3262 = vpop.f32.mrf.mxu0
        %3263 = vdwg.mxu0
        %v3265 = vunpack.c.l.b16 %v2337
        %v3266 = vpack.c.b16 %v3265, %v3265
        %3267 = vrot.lane.b32.xlu0 %v3266, 96
        %v3268 = vpop.permute.xlu0 %3267
        %v3270 = vsel %vm2356, %v3155, 0
        %v3273 = vsel %vm3175, %v3268, 0
        %3275 = vmatpush.bf16.msra.mxu0 0
        %3276 = vmatpush.bf16.msra.mxu0 0
        %3277 = vmatpush.bf16.msra.mxu0 0
        %3278 = vmatpush.bf16.msra.mxu0 0
        %3279 = vmatpush.bf16.msra.mxu0 0
        %3280 = vmatpush.bf16.msra.mxu0 0
        %3281 = vmatpush.bf16.msra.mxu0 0
        %3282 = vmatpush.bf16.msra.mxu0 %v3273
        %3283 = vmatmul.bf16.gmra.mxu0 %v3270
        %v3284 = vpop.f32.mrf.mxu0
        %v3285 = vadd.f32 0.0, %v3284
        %v3286 = vpop.f32.mrf.mxu0
        %3287 = vdwg.mxu0
        %v3289 = vunpack.c.l.b16 %v2338
        %v3290 = vpack.c.b16 %v3289, %v3289
        %3291 = vrot.lane.b32.xlu0 %v3290, 96
        %v3292 = vpop.permute.xlu0 %3291
        %v3294 = vsel %vm2356, %v3156, 0
        %v3297 = vsel %vm3175, %v3292, 0
        %3299 = vmatpush.bf16.msra.mxu0 0
        %3300 = vmatpush.bf16.msra.mxu0 0
        %3301 = vmatpush.bf16.msra.mxu0 0
        %3302 = vmatpush.bf16.msra.mxu0 0
        %3303 = vmatpush.bf16.msra.mxu0 0
        %3304 = vmatpush.bf16.msra.mxu0 0
        %3305 = vmatpush.bf16.msra.mxu0 0
        %3306 = vmatpush.bf16.msra.mxu0 %v3297
        %3307 = vmatmul.bf16.gmra.mxu0 %v3294
        %v3308 = vpop.f32.mrf.mxu0
        %v3309 = vadd.f32 0.0, %v3308
        %v3310 = vpop.f32.mrf.mxu0
        %3311 = vdwg.mxu0
        %v3313 = vunpack.c.l.b16 %v2339
        %v3314 = vpack.c.b16 %v3313, %v3313
        %3315 = vrot.lane.b32.xlu0 %v3314, 96
        %v3316 = vpop.permute.xlu0 %3315
        %v3318 = vsel %vm2356, %v3157, 0
        %v3321 = vsel %vm3175, %v3316, 0
        %3323 = vmatpush.bf16.msra.mxu0 0
        %3324 = vmatpush.bf16.msra.mxu0 0
        %3325 = vmatpush.bf16.msra.mxu0 0
        %3326 = vmatpush.bf16.msra.mxu0 0
        %3327 = vmatpush.bf16.msra.mxu0 0
        %3328 = vmatpush.bf16.msra.mxu0 0
        %3329 = vmatpush.bf16.msra.mxu0 0
        %3330 = vmatpush.bf16.msra.mxu0 %v3321
        %3331 = vmatmul.bf16.gmra.mxu0 %v3318
        %v3332 = vpop.f32.mrf.mxu0
        %v3333 = vadd.f32 0.0, %v3332
        %v3334 = vpop.f32.mrf.mxu0
        %3335 = vdwg.mxu0
        %v3337 = vunpack.c.l.b16 %v2340
        %v3338 = vpack.c.b16 %v3337, %v3337
        %3339 = vrot.lane.b32.xlu0 %v3338, 96
        %v3340 = vpop.permute.xlu0 %3339
        %v3342 = vsel %vm2356, %v3158, 0
        %v3345 = vsel %vm3175, %v3340, 0
        %3347 = vmatpush.bf16.msra.mxu0 0
        %3348 = vmatpush.bf16.msra.mxu0 0
        %3349 = vmatpush.bf16.msra.mxu0 0
        %3350 = vmatpush.bf16.msra.mxu0 0
        %3351 = vmatpush.bf16.msra.mxu0 0
        %3352 = vmatpush.bf16.msra.mxu0 0
        %3353 = vmatpush.bf16.msra.mxu0 0
        %3354 = vmatpush.bf16.msra.mxu0 %v3345
        %3355 = vmatmul.bf16.gmra.mxu0 %v3342
        %v3356 = vpop.f32.mrf.mxu0
        %v3357 = vadd.f32 0.0, %v3356
        %v3358 = vpop.f32.mrf.mxu0
        %3359 = vdwg.mxu0
        %v3361 = vunpack.c.l.b16 %v2341
        %v3362 = vpack.c.b16 %v3361, %v3361
        %3363 = vrot.lane.b32.xlu0 %v3362, 96
        %v3364 = vpop.permute.xlu0 %3363
        %v3366 = vsel %vm2356, %v3159, 0
        %v3369 = vsel %vm3175, %v3364, 0
        %3371 = vmatpush.bf16.msra.mxu0 0
        %3372 = vmatpush.bf16.msra.mxu0 0
        %3373 = vmatpush.bf16.msra.mxu0 0
        %3374 = vmatpush.bf16.msra.mxu0 0
        %3375 = vmatpush.bf16.msra.mxu0 0
        %3376 = vmatpush.bf16.msra.mxu0 0
        %3377 = vmatpush.bf16.msra.mxu0 0
        %3378 = vmatpush.bf16.msra.mxu0 %v3369
        %3379 = vmatmul.bf16.gmra.mxu0 %v3366
        %v3380 = vpop.f32.mrf.mxu0
        %v3381 = vadd.f32 0.0, %v3380
        %v3382 = vpop.f32.mrf.mxu0
        %3383 = vdwg.mxu0
        %v3385 = vunpack.c.l.b16 %v2342
        %v3386 = vpack.c.b16 %v3385, %v3385
        %3387 = vrot.lane.b32.xlu0 %v3386, 96
        %v3388 = vpop.permute.xlu0 %3387
        %v3390 = vsel %vm2356, %v3160, 0
        %v3393 = vsel %vm3175, %v3388, 0
        %3395 = vmatpush.bf16.msra.mxu0 0
        %3396 = vmatpush.bf16.msra.mxu0 0
        %3397 = vmatpush.bf16.msra.mxu0 0
        %3398 = vmatpush.bf16.msra.mxu0 0
        %3399 = vmatpush.bf16.msra.mxu0 0
        %3400 = vmatpush.bf16.msra.mxu0 0
        %3401 = vmatpush.bf16.msra.mxu0 0
        %3402 = vmatpush.bf16.msra.mxu0 %v3393
        %3403 = vmatmul.bf16.gmra.mxu0 %v3390
        %v3404 = vpop.f32.mrf.mxu0
        %v3405 = vadd.f32 0.0, %v3404
        %v3406 = vpop.f32.mrf.mxu0
        %3407 = vdwg.mxu0
        %v3409 = vunpack.c.l.b16 %v2343
        %v3410 = vpack.c.b16 %v3409, %v3409
        %3411 = vrot.lane.b32.xlu0 %v3410, 96
        %v3412 = vpop.permute.xlu0 %3411
        %v3414 = vsel %vm2356, %v3161, 0
        %v3417 = vsel %vm3175, %v3412, 0
        %3419 = vmatpush.bf16.msra.mxu0 0
        %3420 = vmatpush.bf16.msra.mxu0 0
        %3421 = vmatpush.bf16.msra.mxu0 0
        %3422 = vmatpush.bf16.msra.mxu0 0
        %3423 = vmatpush.bf16.msra.mxu0 0
        %3424 = vmatpush.bf16.msra.mxu0 0
        %3425 = vmatpush.bf16.msra.mxu0 0
        %3426 = vmatpush.bf16.msra.mxu0 %v3417
        %3427 = vmatmul.bf16.gmra.mxu0 %v3414
        %v3428 = vpop.f32.mrf.mxu0
        %v3429 = vadd.f32 0.0, %v3428
        %v3430 = vpop.f32.mrf.mxu0
        %3431 = vdwg.mxu0
        %v3433 = vunpack.c.l.b16 %v2344
        %v3434 = vpack.c.b16 %v3433, %v3433
        %3435 = vrot.lane.b32.xlu0 %v3434, 96
        %v3436 = vpop.permute.xlu0 %3435
        %v3438 = vsel %vm2356, %v3162, 0
        %v3441 = vsel %vm3175, %v3436, 0
        %3443 = vmatpush.bf16.msra.mxu0 0
        %3444 = vmatpush.bf16.msra.mxu0 0
        %3445 = vmatpush.bf16.msra.mxu0 0
        %3446 = vmatpush.bf16.msra.mxu0 0
        %3447 = vmatpush.bf16.msra.mxu0 0
        %3448 = vmatpush.bf16.msra.mxu0 0
        %3449 = vmatpush.bf16.msra.mxu0 0
        %3450 = vmatpush.bf16.msra.mxu0 %v3441
        %3451 = vmatmul.bf16.gmra.mxu0 %v3438
        %v3452 = vpop.f32.mrf.mxu0
        %v3453 = vadd.f32 0.0, %v3452
        %v3454 = vpop.f32.mrf.mxu0
        %3455 = vdwg.mxu0
        %v3457 = vunpack.c.l.b16 %v2345
        %v3458 = vpack.c.b16 %v3457, %v3457
        %3459 = vrot.lane.b32.xlu0 %v3458, 96
        %v3460 = vpop.permute.xlu0 %3459
        %v3462 = vsel %vm2356, %v3163, 0
        %v3465 = vsel %vm3175, %v3460, 0
        %3467 = vmatpush.bf16.msra.mxu0 0
        %3468 = vmatpush.bf16.msra.mxu0 0
        %3469 = vmatpush.bf16.msra.mxu0 0
        %3470 = vmatpush.bf16.msra.mxu0 0
        %3471 = vmatpush.bf16.msra.mxu0 0
        %3472 = vmatpush.bf16.msra.mxu0 0
        %3473 = vmatpush.bf16.msra.mxu0 0
        %3474 = vmatpush.bf16.msra.mxu0 %v3465
        %3475 = vmatmul.bf16.gmra.mxu0 %v3462
        %v3476 = vpop.f32.mrf.mxu0
        %v3477 = vadd.f32 0.0, %v3476
        %v3478 = vpop.f32.mrf.mxu0
        %3479 = vdwg.mxu0
        %v3481 = vunpack.c.l.b16 %v2346
        %v3482 = vpack.c.b16 %v3481, %v3481
        %3483 = vrot.lane.b32.xlu0 %v3482, 96
        %v3484 = vpop.permute.xlu0 %3483
        %v3486 = vsel %vm2356, %v3164, 0
        %v3489 = vsel %vm3175, %v3484, 0
        %3491 = vmatpush.bf16.msra.mxu0 0
        %3492 = vmatpush.bf16.msra.mxu0 0
        %3493 = vmatpush.bf16.msra.mxu0 0
        %3494 = vmatpush.bf16.msra.mxu0 0
        %3495 = vmatpush.bf16.msra.mxu0 0
        %3496 = vmatpush.bf16.msra.mxu0 0
        %3497 = vmatpush.bf16.msra.mxu0 0
        %3498 = vmatpush.bf16.msra.mxu0 %v3489
        %3499 = vmatmul.bf16.gmra.mxu0 %v3486
        %v3500 = vpop.f32.mrf.mxu0
        %v3501 = vadd.f32 0.0, %v3500
        %v3502 = vpop.f32.mrf.mxu0
        %3503 = vdwg.mxu0
        %v3505 = vunpack.c.l.b16 %v2347
        %v3506 = vpack.c.b16 %v3505, %v3505
        %3507 = vrot.lane.b32.xlu0 %v3506, 96
        %v3508 = vpop.permute.xlu0 %3507
        %v3510 = vsel %vm2356, %v3165, 0
        %v3513 = vsel %vm3175, %v3508, 0
        %3515 = vmatpush.bf16.msra.mxu0 0
        %3516 = vmatpush.bf16.msra.mxu0 0
        %3517 = vmatpush.bf16.msra.mxu0 0
        %3518 = vmatpush.bf16.msra.mxu0 0
        %3519 = vmatpush.bf16.msra.mxu0 0
        %3520 = vmatpush.bf16.msra.mxu0 0
        %3521 = vmatpush.bf16.msra.mxu0 0
        %3522 = vmatpush.bf16.msra.mxu0 %v3513
        %3523 = vmatmul.bf16.gmra.mxu0 %v3510
        %v3524 = vpop.f32.mrf.mxu0
        %v3525 = vadd.f32 0.0, %v3524
        %v3526 = vpop.f32.mrf.mxu0
        %3527 = vdwg.mxu0
        %v3529 = vunpack.c.l.b16 %v2348
        %v3530 = vpack.c.b16 %v3529, %v3529
        %3531 = vrot.lane.b32.xlu0 %v3530, 96
        %v3532 = vpop.permute.xlu0 %3531
        %v3534 = vsel %vm2356, %v3166, 0
        %v3537 = vsel %vm3175, %v3532, 0
        %3539 = vmatpush.bf16.msra.mxu0 0
        %3540 = vmatpush.bf16.msra.mxu0 0
        %3541 = vmatpush.bf16.msra.mxu0 0
        %3542 = vmatpush.bf16.msra.mxu0 0
        %3543 = vmatpush.bf16.msra.mxu0 0
        %3544 = vmatpush.bf16.msra.mxu0 0
        %3545 = vmatpush.bf16.msra.mxu0 0
        %3546 = vmatpush.bf16.msra.mxu0 %v3537
        %3547 = vmatmul.bf16.gmra.mxu0 %v3534
        %v3548 = vpop.f32.mrf.mxu0
        %v3549 = vadd.f32 0.0, %v3548
        %v3550 = vpop.f32.mrf.mxu0
        %3551 = vdwg.mxu0
        %v3552 = vpack.c.bf16 %v3213, %v3189
        %v3553 = vpack.c.bf16 %v3261, %v3237
        %v3554 = vpack.c.bf16 %v3309, %v3285
        %v3555 = vpack.c.bf16 %v3357, %v3333
        %v3556 = vpack.c.bf16 %v3405, %v3381
        %v3557 = vpack.c.bf16 %v3453, %v3429
        %v3558 = vpack.c.bf16 %v3501, %v3477
        %v3559 = vpack.c.bf16 %v3549, %v3525
        %v3561 = vsel %vm2356, %v3552, 0
        %v3564 = vsel %vm2356, %v3553, 0
        %v3567 = vsel %vm2356, %v3554, 0
        %v3570 = vsel %vm2356, %v3555, 0
        %v3573 = vsel %vm2356, %v3556, 0
        %v3576 = vsel %vm2356, %v3557, 0
        %v3579 = vsel %vm2356, %v3558, 0
        %v3582 = vsel %vm2356, %v3559, 0
        %v3585 = vsel %vm3175, %v2349, 0
        %3587 = vmatpush.bf16.msra.mxu0 0
        %3588 = vmatpush.bf16.msra.mxu0 0
        %3589 = vmatpush.bf16.msra.mxu0 0
        %3590 = vmatpush.bf16.msra.mxu0 0
        %3591 = vmatpush.bf16.msra.mxu0 0
        %3592 = vmatpush.bf16.msra.mxu0 0
        %3593 = vmatpush.bf16.msra.mxu0 0
        %3594 = vmatpush.bf16.msra.mxu0 %v3585
        %3595 = vmatmul.bf16.gmra.mxu0 %v3561
        %v3596 = vpop.f32.mrf.mxu0
        %v3597 = vadd.f32 0.0, %v3596
        %v3598 = vpop.f32.mrf.mxu0
        %v3599 = vadd.f32 0.0, %v3598
        %3600 = vmatmul.bf16.gmra.mxu0 %v3564
        %v3601 = vpop.f32.mrf.mxu0
        %v3602 = vadd.f32 0.0, %v3601
        %v3603 = vpop.f32.mrf.mxu0
        %v3604 = vadd.f32 0.0, %v3603
        %3605 = vmatmul.bf16.gmra.mxu0 %v3567
        %v3606 = vpop.f32.mrf.mxu0
        %v3607 = vadd.f32 0.0, %v3606
        %v3608 = vpop.f32.mrf.mxu0
        %v3609 = vadd.f32 0.0, %v3608
        %3610 = vmatmul.bf16.gmra.mxu0 %v3570
        %v3611 = vpop.f32.mrf.mxu0
        %v3612 = vadd.f32 0.0, %v3611
        %v3613 = vpop.f32.mrf.mxu0
        %v3614 = vadd.f32 0.0, %v3613
        %3615 = vmatmul.bf16.gmra.mxu0 %v3573
        %v3616 = vpop.f32.mrf.mxu0
        %v3617 = vadd.f32 0.0, %v3616
        %v3618 = vpop.f32.mrf.mxu0
        %v3619 = vadd.f32 0.0, %v3618
        %3620 = vmatmul.bf16.gmra.mxu0 %v3576
        %v3621 = vpop.f32.mrf.mxu0
        %v3622 = vadd.f32 0.0, %v3621
        %v3623 = vpop.f32.mrf.mxu0
        %v3624 = vadd.f32 0.0, %v3623
        %3625 = vmatmul.bf16.gmra.mxu0 %v3579
        %v3626 = vpop.f32.mrf.mxu0
        %v3627 = vadd.f32 0.0, %v3626
        %v3628 = vpop.f32.mrf.mxu0
        %v3629 = vadd.f32 0.0, %v3628
        %3630 = vmatmul.bf16.gmra.mxu0 %v3582
        %v3631 = vpop.f32.mrf.mxu0
        %v3632 = vadd.f32 0.0, %v3631
        %v3633 = vpop.f32.mrf.mxu0
        %v3634 = vadd.f32 0.0, %v3633
        %3635 = vdwg.mxu0
        %v3636 = vadd.f32 %v2278, %v3597
        %v3637 = vadd.f32 %v2280, %v3599
        %v3638 = vadd.f32 %v2283, %v3602
        %v3639 = vadd.f32 %v2285, %v3604
        %v3640 = vadd.f32 %v2288, %v3607
        %v3641 = vadd.f32 %v2290, %v3609
        %v3642 = vadd.f32 %v2293, %v3612
        %v3643 = vadd.f32 %v2295, %v3614
        %v3644 = vadd.f32 %v2298, %v3617
        %v3645 = vadd.f32 %v2300, %v3619
        %v3646 = vadd.f32 %v2303, %v3622
        %v3647 = vadd.f32 %v2305, %v3624
        %v3648 = vadd.f32 %v2308, %v3627
        %v3649 = vadd.f32 %v2310, %v3629
        %v3650 = vadd.f32 %v2313, %v3632
        %v3651 = vadd.f32 %v2315, %v3634
        %3652 = vrot.lane.b32.xlu0 %v2317, 120
        %v3653 = vpop.permute.xlu0 %3652
        %3654 = vrot.lane.b32.xlu0 %v2109, 120
        %v3655 = vpop.permute.xlu0 %3654
        %v3656 = vsel %vm2356, %v3653, 0
        %v3658 = vsel %vm2356, %v3655, 0
        %3660 = vmatpush.xpose.msra.mxu0 0.0
        %3661 = vmatpush.xpose.msra.mxu0 0.0
        %3662 = vmatpush.xpose.msra.mxu0 0.0
        %3663 = vmatpush.xpose.msra.mxu0 0.0
        %3664 = vmatpush.xpose.msra.mxu0 0.0
        %3665 = vmatpush.xpose.msra.mxu0 0.0
        %3666 = vmatpush.xpose.msra.mxu0 0.0
        %3667 = vmatpush.xpose.msra.mxu0 0.0
        %3668 = vmatpush.xpose.msra.mxu0 0.0
        %3669 = vmatpush.xpose.msra.mxu0 0.0
        %3670 = vmatpush.xpose.msra.mxu0 0.0
        %3671 = vmatpush.xpose.msra.mxu0 0.0
        %3672 = vmatpush.xpose.msra.mxu0 0.0
        %3673 = vmatpush.xpose.msra.mxu0 0.0
        %3674 = vmatpush.xpose.msra.mxu0 0.0
        %3675 = vmatpush.xpose.msra.mxu0 %v3658
        %3676 = vmatmul.f32.gmra.mxu0 %v3656
        %v3677 = vpop.f32.mrf.mxu0
        %v3678 = vadd.f32 0.0, %v3677
        %3679 = vdwg.mxu0
        %3680 = vrot.lane.b32.xlu0 %v2318, 120
        %v3681 = vpop.permute.xlu0 %3680
        %3682 = vrot.lane.b32.xlu0 %v2110, 120
        %v3683 = vpop.permute.xlu0 %3682
        %v3684 = vsel %vm2356, %v3681, 0
        %v3686 = vsel %vm2356, %v3683, 0
        %3688 = vmatpush.xpose.msra.mxu0 0.0
        %3689 = vmatpush.xpose.msra.mxu0 0.0
        %3690 = vmatpush.xpose.msra.mxu0 0.0
        %3691 = vmatpush.xpose.msra.mxu0 0.0
        %3692 = vmatpush.xpose.msra.mxu0 0.0
        %3693 = vmatpush.xpose.msra.mxu0 0.0
        %3694 = vmatpush.xpose.msra.mxu0 0.0
        %3695 = vmatpush.xpose.msra.mxu0 0.0
        %3696 = vmatpush.xpose.msra.mxu0 0.0
        %3697 = vmatpush.xpose.msra.mxu0 0.0
        %3698 = vmatpush.xpose.msra.mxu0 0.0
        %3699 = vmatpush.xpose.msra.mxu0 0.0
        %3700 = vmatpush.xpose.msra.mxu0 0.0
        %3701 = vmatpush.xpose.msra.mxu0 0.0
        %3702 = vmatpush.xpose.msra.mxu0 0.0
        %3703 = vmatpush.xpose.msra.mxu0 %v3686
        %3704 = vmatmul.f32.gmra.mxu0 %v3684
        %v3705 = vpop.f32.mrf.mxu0
        %v3706 = vadd.f32 0.0, %v3705
        %3707 = vdwg.mxu0
        %3708 = vrot.lane.b32.xlu0 %v2319, 120
        %v3709 = vpop.permute.xlu0 %3708
        %3710 = vrot.lane.b32.xlu0 %v2111, 120
        %v3711 = vpop.permute.xlu0 %3710
        %v3712 = vsel %vm2356, %v3709, 0
        %v3714 = vsel %vm2356, %v3711, 0
        %3716 = vmatpush.xpose.msra.mxu0 0.0
        %3717 = vmatpush.xpose.msra.mxu0 0.0
        %3718 = vmatpush.xpose.msra.mxu0 0.0
        %3719 = vmatpush.xpose.msra.mxu0 0.0
        %3720 = vmatpush.xpose.msra.mxu0 0.0
        %3721 = vmatpush.xpose.msra.mxu0 0.0
        %3722 = vmatpush.xpose.msra.mxu0 0.0
        %3723 = vmatpush.xpose.msra.mxu0 0.0
        %3724 = vmatpush.xpose.msra.mxu0 0.0
        %3725 = vmatpush.xpose.msra.mxu0 0.0
        %3726 = vmatpush.xpose.msra.mxu0 0.0
        %3727 = vmatpush.xpose.msra.mxu0 0.0
        %3728 = vmatpush.xpose.msra.mxu0 0.0
        %3729 = vmatpush.xpose.msra.mxu0 0.0
        %3730 = vmatpush.xpose.msra.mxu0 0.0
        %3731 = vmatpush.xpose.msra.mxu0 %v3714
        %3732 = vmatmul.f32.gmra.mxu0 %v3712
        %v3733 = vpop.f32.mrf.mxu0
        %v3734 = vadd.f32 0.0, %v3733
        %3735 = vdwg.mxu0
        %3736 = vrot.lane.b32.xlu0 %v2320, 120
        %v3737 = vpop.permute.xlu0 %3736
        %3738 = vrot.lane.b32.xlu0 %v2112, 120
        %v3739 = vpop.permute.xlu0 %3738
        %v3740 = vsel %vm2356, %v3737, 0
        %v3742 = vsel %vm2356, %v3739, 0
        %3744 = vmatpush.xpose.msra.mxu0 0.0
        %3745 = vmatpush.xpose.msra.mxu0 0.0
        %3746 = vmatpush.xpose.msra.mxu0 0.0
        %3747 = vmatpush.xpose.msra.mxu0 0.0
        %3748 = vmatpush.xpose.msra.mxu0 0.0
        %3749 = vmatpush.xpose.msra.mxu0 0.0
        %3750 = vmatpush.xpose.msra.mxu0 0.0
        %3751 = vmatpush.xpose.msra.mxu0 0.0
        %3752 = vmatpush.xpose.msra.mxu0 0.0
        %3753 = vmatpush.xpose.msra.mxu0 0.0
        %3754 = vmatpush.xpose.msra.mxu0 0.0
        %3755 = vmatpush.xpose.msra.mxu0 0.0
        %3756 = vmatpush.xpose.msra.mxu0 0.0
        %3757 = vmatpush.xpose.msra.mxu0 0.0
        %3758 = vmatpush.xpose.msra.mxu0 0.0
        %3759 = vmatpush.xpose.msra.mxu0 %v3742
        %3760 = vmatmul.f32.gmra.mxu0 %v3740
        %v3761 = vpop.f32.mrf.mxu0
        %v3762 = vadd.f32 0.0, %v3761
        %3763 = vdwg.mxu0
        %3764 = vrot.lane.b32.xlu0 %v2321, 120
        %v3765 = vpop.permute.xlu0 %3764
        %3766 = vrot.lane.b32.xlu0 %v2113, 120
        %v3767 = vpop.permute.xlu0 %3766
        %v3768 = vsel %vm2356, %v3765, 0
        %v3770 = vsel %vm2356, %v3767, 0
        %3772 = vmatpush.xpose.msra.mxu0 0.0
        %3773 = vmatpush.xpose.msra.mxu0 0.0
        %3774 = vmatpush.xpose.msra.mxu0 0.0
        %3775 = vmatpush.xpose.msra.mxu0 0.0
        %3776 = vmatpush.xpose.msra.mxu0 0.0
        %3777 = vmatpush.xpose.msra.mxu0 0.0
        %3778 = vmatpush.xpose.msra.mxu0 0.0
        %3779 = vmatpush.xpose.msra.mxu0 0.0
        %3780 = vmatpush.xpose.msra.mxu0 0.0
        %3781 = vmatpush.xpose.msra.mxu0 0.0
        %3782 = vmatpush.xpose.msra.mxu0 0.0
        %3783 = vmatpush.xpose.msra.mxu0 0.0
        %3784 = vmatpush.xpose.msra.mxu0 0.0
        %3785 = vmatpush.xpose.msra.mxu0 0.0
        %3786 = vmatpush.xpose.msra.mxu0 0.0
        %3787 = vmatpush.xpose.msra.mxu0 %v3770
        %3788 = vmatmul.f32.gmra.mxu0 %v3768
        %v3789 = vpop.f32.mrf.mxu0
        %v3790 = vadd.f32 0.0, %v3789
        %3791 = vdwg.mxu0
        %3792 = vrot.lane.b32.xlu0 %v2322, 120
        %v3793 = vpop.permute.xlu0 %3792
        %3794 = vrot.lane.b32.xlu0 %v2114, 120
        %v3795 = vpop.permute.xlu0 %3794
        %v3796 = vsel %vm2356, %v3793, 0
        %v3798 = vsel %vm2356, %v3795, 0
        %3800 = vmatpush.xpose.msra.mxu0 0.0
        %3801 = vmatpush.xpose.msra.mxu0 0.0
        %3802 = vmatpush.xpose.msra.mxu0 0.0
        %3803 = vmatpush.xpose.msra.mxu0 0.0
        %3804 = vmatpush.xpose.msra.mxu0 0.0
        %3805 = vmatpush.xpose.msra.mxu0 0.0
        %3806 = vmatpush.xpose.msra.mxu0 0.0
        %3807 = vmatpush.xpose.msra.mxu0 0.0
        %3808 = vmatpush.xpose.msra.mxu0 0.0
        %3809 = vmatpush.xpose.msra.mxu0 0.0
        %3810 = vmatpush.xpose.msra.mxu0 0.0
        %3811 = vmatpush.xpose.msra.mxu0 0.0
        %3812 = vmatpush.xpose.msra.mxu0 0.0
        %3813 = vmatpush.xpose.msra.mxu0 0.0
        %3814 = vmatpush.xpose.msra.mxu0 0.0
        %3815 = vmatpush.xpose.msra.mxu0 %v3798
        %3816 = vmatmul.f32.gmra.mxu0 %v3796
        %v3817 = vpop.f32.mrf.mxu0
        %v3818 = vadd.f32 0.0, %v3817
        %3819 = vdwg.mxu0
        %3820 = vrot.lane.b32.xlu0 %v2323, 120
        %v3821 = vpop.permute.xlu0 %3820
        %3822 = vrot.lane.b32.xlu0 %v2115, 120
        %v3823 = vpop.permute.xlu0 %3822
        %v3824 = vsel %vm2356, %v3821, 0
        %v3826 = vsel %vm2356, %v3823, 0
        %3828 = vmatpush.xpose.msra.mxu0 0.0
        %3829 = vmatpush.xpose.msra.mxu0 0.0
        %3830 = vmatpush.xpose.msra.mxu0 0.0
        %3831 = vmatpush.xpose.msra.mxu0 0.0
        %3832 = vmatpush.xpose.msra.mxu0 0.0
        %3833 = vmatpush.xpose.msra.mxu0 0.0
        %3834 = vmatpush.xpose.msra.mxu0 0.0
        %3835 = vmatpush.xpose.msra.mxu0 0.0
        %3836 = vmatpush.xpose.msra.mxu0 0.0
        %3837 = vmatpush.xpose.msra.mxu0 0.0
        %3838 = vmatpush.xpose.msra.mxu0 0.0
        %3839 = vmatpush.xpose.msra.mxu0 0.0
        %3840 = vmatpush.xpose.msra.mxu0 0.0
        %3841 = vmatpush.xpose.msra.mxu0 0.0
        %3842 = vmatpush.xpose.msra.mxu0 0.0
        %3843 = vmatpush.xpose.msra.mxu0 %v3826
        %3844 = vmatmul.f32.gmra.mxu0 %v3824
        %v3845 = vpop.f32.mrf.mxu0
        %v3846 = vadd.f32 0.0, %v3845
        %3847 = vdwg.mxu0
        %3848 = vrot.lane.b32.xlu0 %v2324, 120
        %v3849 = vpop.permute.xlu0 %3848
        %3850 = vrot.lane.b32.xlu0 %v2116, 120
        %v3851 = vpop.permute.xlu0 %3850
        %v3852 = vsel %vm2356, %v3849, 0
        %v3854 = vsel %vm2356, %v3851, 0
        %3856 = vmatpush.xpose.msra.mxu0 0.0
        %3857 = vmatpush.xpose.msra.mxu0 0.0
        %3858 = vmatpush.xpose.msra.mxu0 0.0
        %3859 = vmatpush.xpose.msra.mxu0 0.0
        %3860 = vmatpush.xpose.msra.mxu0 0.0
        %3861 = vmatpush.xpose.msra.mxu0 0.0
        %3862 = vmatpush.xpose.msra.mxu0 0.0
        %3863 = vmatpush.xpose.msra.mxu0 0.0
        %3864 = vmatpush.xpose.msra.mxu0 0.0
        %3865 = vmatpush.xpose.msra.mxu0 0.0
        %3866 = vmatpush.xpose.msra.mxu0 0.0
        %3867 = vmatpush.xpose.msra.mxu0 0.0
        %3868 = vmatpush.xpose.msra.mxu0 0.0
        %3869 = vmatpush.xpose.msra.mxu0 0.0
        %3870 = vmatpush.xpose.msra.mxu0 0.0
        %3871 = vmatpush.xpose.msra.mxu0 %v3854
        %3872 = vmatmul.f32.gmra.mxu0 %v3852
        %v3873 = vpop.f32.mrf.mxu0
        %v3874 = vadd.f32 0.0, %v3873
        %3875 = vdwg.mxu0
        %3876 = vrot.lane.b32.xlu0 %v2325, 120
        %v3877 = vpop.permute.xlu0 %3876
        %3878 = vrot.lane.b32.xlu0 %v2117, 120
        %v3879 = vpop.permute.xlu0 %3878
        %v3880 = vsel %vm2356, %v3877, 0
        %v3882 = vsel %vm2356, %v3879, 0
        %3884 = vmatpush.xpose.msra.mxu0 0.0
        %3885 = vmatpush.xpose.msra.mxu0 0.0
        %3886 = vmatpush.xpose.msra.mxu0 0.0
        %3887 = vmatpush.xpose.msra.mxu0 0.0
        %3888 = vmatpush.xpose.msra.mxu0 0.0
        %3889 = vmatpush.xpose.msra.mxu0 0.0
        %3890 = vmatpush.xpose.msra.mxu0 0.0
        %3891 = vmatpush.xpose.msra.mxu0 0.0
        %3892 = vmatpush.xpose.msra.mxu0 0.0
        %3893 = vmatpush.xpose.msra.mxu0 0.0
        %3894 = vmatpush.xpose.msra.mxu0 0.0
        %3895 = vmatpush.xpose.msra.mxu0 0.0
        %3896 = vmatpush.xpose.msra.mxu0 0.0
        %3897 = vmatpush.xpose.msra.mxu0 0.0
        %3898 = vmatpush.xpose.msra.mxu0 0.0
        %3899 = vmatpush.xpose.msra.mxu0 %v3882
        %3900 = vmatmul.f32.gmra.mxu0 %v3880
        %v3901 = vpop.f32.mrf.mxu0
        %v3902 = vadd.f32 0.0, %v3901
        %3903 = vdwg.mxu0
        %3904 = vrot.lane.b32.xlu0 %v2326, 120
        %v3905 = vpop.permute.xlu0 %3904
        %3906 = vrot.lane.b32.xlu0 %v2118, 120
        %v3907 = vpop.permute.xlu0 %3906
        %v3908 = vsel %vm2356, %v3905, 0
        %v3910 = vsel %vm2356, %v3907, 0
        %3912 = vmatpush.xpose.msra.mxu0 0.0
        %3913 = vmatpush.xpose.msra.mxu0 0.0
        %3914 = vmatpush.xpose.msra.mxu0 0.0
        %3915 = vmatpush.xpose.msra.mxu0 0.0
        %3916 = vmatpush.xpose.msra.mxu0 0.0
        %3917 = vmatpush.xpose.msra.mxu0 0.0
        %3918 = vmatpush.xpose.msra.mxu0 0.0
        %3919 = vmatpush.xpose.msra.mxu0 0.0
        %3920 = vmatpush.xpose.msra.mxu0 0.0
        %3921 = vmatpush.xpose.msra.mxu0 0.0
        %3922 = vmatpush.xpose.msra.mxu0 0.0
        %3923 = vmatpush.xpose.msra.mxu0 0.0
        %3924 = vmatpush.xpose.msra.mxu0 0.0
        %3925 = vmatpush.xpose.msra.mxu0 0.0
        %3926 = vmatpush.xpose.msra.mxu0 0.0
        %3927 = vmatpush.xpose.msra.mxu0 %v3910
        %3928 = vmatmul.f32.gmra.mxu0 %v3908
        %v3929 = vpop.f32.mrf.mxu0
        %v3930 = vadd.f32 0.0, %v3929
        %3931 = vdwg.mxu0
        %3932 = vrot.lane.b32.xlu0 %v2327, 120
        %v3933 = vpop.permute.xlu0 %3932
        %3934 = vrot.lane.b32.xlu0 %v2119, 120
        %v3935 = vpop.permute.xlu0 %3934
        %v3936 = vsel %vm2356, %v3933, 0
        %v3938 = vsel %vm2356, %v3935, 0
        %3940 = vmatpush.xpose.msra.mxu0 0.0
        %3941 = vmatpush.xpose.msra.mxu0 0.0
        %3942 = vmatpush.xpose.msra.mxu0 0.0
        %3943 = vmatpush.xpose.msra.mxu0 0.0
        %3944 = vmatpush.xpose.msra.mxu0 0.0
        %3945 = vmatpush.xpose.msra.mxu0 0.0
        %3946 = vmatpush.xpose.msra.mxu0 0.0
        %3947 = vmatpush.xpose.msra.mxu0 0.0
        %3948 = vmatpush.xpose.msra.mxu0 0.0
        %3949 = vmatpush.xpose.msra.mxu0 0.0
        %3950 = vmatpush.xpose.msra.mxu0 0.0
        %3951 = vmatpush.xpose.msra.mxu0 0.0
        %3952 = vmatpush.xpose.msra.mxu0 0.0
        %3953 = vmatpush.xpose.msra.mxu0 0.0
        %3954 = vmatpush.xpose.msra.mxu0 0.0
        %3955 = vmatpush.xpose.msra.mxu0 %v3938
        %3956 = vmatmul.f32.gmra.mxu0 %v3936
        %v3957 = vpop.f32.mrf.mxu0
        %v3958 = vadd.f32 0.0, %v3957
        %3959 = vdwg.mxu0
        %3960 = vrot.lane.b32.xlu0 %v2328, 120
        %v3961 = vpop.permute.xlu0 %3960
        %3962 = vrot.lane.b32.xlu0 %v2120, 120
        %v3963 = vpop.permute.xlu0 %3962
        %v3964 = vsel %vm2356, %v3961, 0
        %v3966 = vsel %vm2356, %v3963, 0
        %3968 = vmatpush.xpose.msra.mxu0 0.0
        %3969 = vmatpush.xpose.msra.mxu0 0.0
        %3970 = vmatpush.xpose.msra.mxu0 0.0
        %3971 = vmatpush.xpose.msra.mxu0 0.0
        %3972 = vmatpush.xpose.msra.mxu0 0.0
        %3973 = vmatpush.xpose.msra.mxu0 0.0
        %3974 = vmatpush.xpose.msra.mxu0 0.0
        %3975 = vmatpush.xpose.msra.mxu0 0.0
        %3976 = vmatpush.xpose.msra.mxu0 0.0
        %3977 = vmatpush.xpose.msra.mxu0 0.0
        %3978 = vmatpush.xpose.msra.mxu0 0.0
        %3979 = vmatpush.xpose.msra.mxu0 0.0
        %3980 = vmatpush.xpose.msra.mxu0 0.0
        %3981 = vmatpush.xpose.msra.mxu0 0.0
        %3982 = vmatpush.xpose.msra.mxu0 0.0
        %3983 = vmatpush.xpose.msra.mxu0 %v3966
        %3984 = vmatmul.f32.gmra.mxu0 %v3964
        %v3985 = vpop.f32.mrf.mxu0
        %v3986 = vadd.f32 0.0, %v3985
        %3987 = vdwg.mxu0
        %3988 = vrot.lane.b32.xlu0 %v2329, 120
        %v3989 = vpop.permute.xlu0 %3988
        %3990 = vrot.lane.b32.xlu0 %v2121, 120
        %v3991 = vpop.permute.xlu0 %3990
        %v3992 = vsel %vm2356, %v3989, 0
        %v3994 = vsel %vm2356, %v3991, 0
        %3996 = vmatpush.xpose.msra.mxu0 0.0
        %3997 = vmatpush.xpose.msra.mxu0 0.0
        %3998 = vmatpush.xpose.msra.mxu0 0.0
        %3999 = vmatpush.xpose.msra.mxu0 0.0
        %4000 = vmatpush.xpose.msra.mxu0 0.0
        %4001 = vmatpush.xpose.msra.mxu0 0.0
        %4002 = vmatpush.xpose.msra.mxu0 0.0
        %4003 = vmatpush.xpose.msra.mxu0 0.0
        %4004 = vmatpush.xpose.msra.mxu0 0.0
        %4005 = vmatpush.xpose.msra.mxu0 0.0
        %4006 = vmatpush.xpose.msra.mxu0 0.0
        %4007 = vmatpush.xpose.msra.mxu0 0.0
        %4008 = vmatpush.xpose.msra.mxu0 0.0
        %4009 = vmatpush.xpose.msra.mxu0 0.0
        %4010 = vmatpush.xpose.msra.mxu0 0.0
        %4011 = vmatpush.xpose.msra.mxu0 %v3994
        %4012 = vmatmul.f32.gmra.mxu0 %v3992
        %v4013 = vpop.f32.mrf.mxu0
        %v4014 = vadd.f32 0.0, %v4013
        %4015 = vdwg.mxu0
        %4016 = vrot.lane.b32.xlu0 %v2330, 120
        %v4017 = vpop.permute.xlu0 %4016
        %4018 = vrot.lane.b32.xlu0 %v2122, 120
        %v4019 = vpop.permute.xlu0 %4018
        %v4020 = vsel %vm2356, %v4017, 0
        %v4022 = vsel %vm2356, %v4019, 0
        %4024 = vmatpush.xpose.msra.mxu0 0.0
        %4025 = vmatpush.xpose.msra.mxu0 0.0
        %4026 = vmatpush.xpose.msra.mxu0 0.0
        %4027 = vmatpush.xpose.msra.mxu0 0.0
        %4028 = vmatpush.xpose.msra.mxu0 0.0
        %4029 = vmatpush.xpose.msra.mxu0 0.0
        %4030 = vmatpush.xpose.msra.mxu0 0.0
        %4031 = vmatpush.xpose.msra.mxu0 0.0
        %4032 = vmatpush.xpose.msra.mxu0 0.0
        %4033 = vmatpush.xpose.msra.mxu0 0.0
        %4034 = vmatpush.xpose.msra.mxu0 0.0
        %4035 = vmatpush.xpose.msra.mxu0 0.0
        %4036 = vmatpush.xpose.msra.mxu0 0.0
        %4037 = vmatpush.xpose.msra.mxu0 0.0
        %4038 = vmatpush.xpose.msra.mxu0 0.0
        %4039 = vmatpush.xpose.msra.mxu0 %v4022
        %4040 = vmatmul.f32.gmra.mxu0 %v4020
        %v4041 = vpop.f32.mrf.mxu0
        %v4042 = vadd.f32 0.0, %v4041
        %4043 = vdwg.mxu0
        %4044 = vrot.lane.b32.xlu0 %v2331, 120
        %v4045 = vpop.permute.xlu0 %4044
        %4046 = vrot.lane.b32.xlu0 %v2123, 120
        %v4047 = vpop.permute.xlu0 %4046
        %v4048 = vsel %vm2356, %v4045, 0
        %v4050 = vsel %vm2356, %v4047, 0
        %4052 = vmatpush.xpose.msra.mxu0 0.0
        %4053 = vmatpush.xpose.msra.mxu0 0.0
        %4054 = vmatpush.xpose.msra.mxu0 0.0
        %4055 = vmatpush.xpose.msra.mxu0 0.0
        %4056 = vmatpush.xpose.msra.mxu0 0.0
        %4057 = vmatpush.xpose.msra.mxu0 0.0
        %4058 = vmatpush.xpose.msra.mxu0 0.0
        %4059 = vmatpush.xpose.msra.mxu0 0.0
        %4060 = vmatpush.xpose.msra.mxu0 0.0
        %4061 = vmatpush.xpose.msra.mxu0 0.0
        %4062 = vmatpush.xpose.msra.mxu0 0.0
        %4063 = vmatpush.xpose.msra.mxu0 0.0
        %4064 = vmatpush.xpose.msra.mxu0 0.0
        %4065 = vmatpush.xpose.msra.mxu0 0.0
        %4066 = vmatpush.xpose.msra.mxu0 0.0
        %4067 = vmatpush.xpose.msra.mxu0 %v4050
        %4068 = vmatmul.f32.gmra.mxu0 %v4048
        %v4069 = vpop.f32.mrf.mxu0
        %v4070 = vadd.f32 0.0, %v4069
        %4071 = vdwg.mxu0
        %4072 = vrot.lane.b32.xlu0 %v2332, 120
        %v4073 = vpop.permute.xlu0 %4072
        %4074 = vrot.lane.b32.xlu0 %v2124, 120
        %v4075 = vpop.permute.xlu0 %4074
        %v4076 = vsel %vm2356, %v4073, 0
        %v4078 = vsel %vm2356, %v4075, 0
        %4080 = vmatpush.xpose.msra.mxu0 0.0
        %4081 = vmatpush.xpose.msra.mxu0 0.0
        %4082 = vmatpush.xpose.msra.mxu0 0.0
        %4083 = vmatpush.xpose.msra.mxu0 0.0
        %4084 = vmatpush.xpose.msra.mxu0 0.0
        %4085 = vmatpush.xpose.msra.mxu0 0.0
        %4086 = vmatpush.xpose.msra.mxu0 0.0
        %4087 = vmatpush.xpose.msra.mxu0 0.0
        %4088 = vmatpush.xpose.msra.mxu0 0.0
        %4089 = vmatpush.xpose.msra.mxu0 0.0
        %4090 = vmatpush.xpose.msra.mxu0 0.0
        %4091 = vmatpush.xpose.msra.mxu0 0.0
        %4092 = vmatpush.xpose.msra.mxu0 0.0
        %4093 = vmatpush.xpose.msra.mxu0 0.0
        %4094 = vmatpush.xpose.msra.mxu0 0.0
        %4095 = vmatpush.xpose.msra.mxu0 %v4078
        %4096 = vmatmul.f32.gmra.mxu0 %v4076
        %v4097 = vpop.f32.mrf.mxu0
        %v4098 = vadd.f32 0.0, %v4097
        %4099 = vdwg.mxu0
        %v4100 = vsel %vm2356, %v3678, -inf
        %4101 = vmax.xlane.f32.xlu0 %v4100
        %v4102 = vpop.xlane.xlu0 %4101
        %v4103 = vsel %vm2356, %v3706, -inf
        %4104 = vmax.xlane.f32.xlu0 %v4103
        %v4105 = vpop.xlane.xlu0 %4104
        %v4106 = vsel %vm2356, %v3734, -inf
        %4107 = vmax.xlane.f32.xlu0 %v4106
        %v4108 = vpop.xlane.xlu0 %4107
        %v4109 = vsel %vm2356, %v3762, -inf
        %4110 = vmax.xlane.f32.xlu0 %v4109
        %v4111 = vpop.xlane.xlu0 %4110
        %v4112 = vsel %vm2356, %v3790, -inf
        %4113 = vmax.xlane.f32.xlu0 %v4112
        %v4114 = vpop.xlane.xlu0 %4113
        %v4115 = vsel %vm2356, %v3818, -inf
        %4116 = vmax.xlane.f32.xlu0 %v4115
        %v4117 = vpop.xlane.xlu0 %4116
        %v4118 = vsel %vm2356, %v3846, -inf
        %4119 = vmax.xlane.f32.xlu0 %v4118
        %v4120 = vpop.xlane.xlu0 %4119
        %v4121 = vsel %vm2356, %v3874, -inf
        %4122 = vmax.xlane.f32.xlu0 %v4121
        %v4123 = vpop.xlane.xlu0 %4122
        %v4124 = vsel %vm2356, %v3902, -inf
        %4125 = vmax.xlane.f32.xlu0 %v4124
        %v4126 = vpop.xlane.xlu0 %4125
        %v4127 = vsel %vm2356, %v3930, -inf
        %4128 = vmax.xlane.f32.xlu0 %v4127
        %v4129 = vpop.xlane.xlu0 %4128
        %v4130 = vsel %vm2356, %v3958, -inf
        %4131 = vmax.xlane.f32.xlu0 %v4130
        %v4132 = vpop.xlane.xlu0 %4131
        %v4133 = vsel %vm2356, %v3986, -inf
        %4134 = vmax.xlane.f32.xlu0 %v4133
        %v4135 = vpop.xlane.xlu0 %4134
        %v4136 = vsel %vm2356, %v4014, -inf
        %4137 = vmax.xlane.f32.xlu0 %v4136
        %v4138 = vpop.xlane.xlu0 %4137
        %v4139 = vsel %vm2356, %v4042, -inf
        %4140 = vmax.xlane.f32.xlu0 %v4139
        %v4141 = vpop.xlane.xlu0 %4140
        %v4142 = vsel %vm2356, %v4070, -inf
        %4143 = vmax.xlane.f32.xlu0 %v4142
        %v4144 = vpop.xlane.xlu0 %4143
        %v4145 = vsel %vm2356, %v4098, -inf
        %4146 = vmax.xlane.f32.xlu0 %v4145
        %v4147 = vpop.xlane.xlu0 %4146
        %v4148 = vsub.f32 %v3678, %v4102
        %v4149 = vsub.f32 %v3706, %v4105
        %v4150 = vsub.f32 %v3734, %v4108
        %v4151 = vsub.f32 %v3762, %v4111
        %v4152 = vsub.f32 %v3790, %v4114
        %v4153 = vsub.f32 %v3818, %v4117
        %v4154 = vsub.f32 %v3846, %v4120
        %v4155 = vsub.f32 %v3874, %v4123
        %v4156 = vsub.f32 %v3902, %v4126
        %v4157 = vsub.f32 %v3930, %v4129
        %v4158 = vsub.f32 %v3958, %v4132
        %v4159 = vsub.f32 %v3986, %v4135
        %v4160 = vsub.f32 %v4014, %v4138
        %v4161 = vsub.f32 %v4042, %v4141
        %v4162 = vsub.f32 %v4070, %v4144
        %v4163 = vsub.f32 %v4098, %v4147
        %v4164 = vmul.f32 %v4148, 1.442695
        %v4165 = vpow.pop %v4164
        %v4166 = vmul.f32 %v4149, 1.442695
        %v4167 = vpow.pop %v4166
        %v4168 = vmul.f32 %v4150, 1.442695
        %v4169 = vpow.pop %v4168
        %v4170 = vmul.f32 %v4151, 1.442695
        %v4171 = vpow.pop %v4170
        %v4172 = vmul.f32 %v4152, 1.442695
        %v4173 = vpow.pop %v4172
        %v4174 = vmul.f32 %v4153, 1.442695
        %v4175 = vpow.pop %v4174
        %v4176 = vmul.f32 %v4154, 1.442695
        %v4177 = vpow.pop %v4176
        %v4178 = vmul.f32 %v4155, 1.442695
        %v4179 = vpow.pop %v4178
        %v4180 = vmul.f32 %v4156, 1.442695
        %v4181 = vpow.pop %v4180
        %v4182 = vmul.f32 %v4157, 1.442695
        %v4183 = vpow.pop %v4182
        %v4184 = vmul.f32 %v4158, 1.442695
        %v4185 = vpow.pop %v4184
        %v4186 = vmul.f32 %v4159, 1.442695
        %v4187 = vpow.pop %v4186
        %v4188 = vmul.f32 %v4160, 1.442695
        %v4189 = vpow.pop %v4188
        %v4190 = vmul.f32 %v4161, 1.442695
        %v4191 = vpow.pop %v4190
        %v4192 = vmul.f32 %v4162, 1.442695
        %v4193 = vpow.pop %v4192
        %v4194 = vmul.f32 %v4163, 1.442695
        %v4195 = vpow.pop %v4194
        %v4196 = vsel %vm2356, %v4165, 0.0
        %4197 = vadd.xlane.f32.xlu0 %v4196
        %v4198 = vpop.xlane.xlu0 %4197
        %v4199 = vsel %vm2356, %v4167, 0.0
        %4200 = vadd.xlane.f32.xlu0 %v4199
        %v4201 = vpop.xlane.xlu0 %4200
        %v4202 = vsel %vm2356, %v4169, 0.0
        %4203 = vadd.xlane.f32.xlu0 %v4202
        %v4204 = vpop.xlane.xlu0 %4203
        %v4205 = vsel %vm2356, %v4171, 0.0
        %4206 = vadd.xlane.f32.xlu0 %v4205
        %v4207 = vpop.xlane.xlu0 %4206
        %v4208 = vsel %vm2356, %v4173, 0.0
        %4209 = vadd.xlane.f32.xlu0 %v4208
        %v4210 = vpop.xlane.xlu0 %4209
        %v4211 = vsel %vm2356, %v4175, 0.0
        %4212 = vadd.xlane.f32.xlu0 %v4211
        %v4213 = vpop.xlane.xlu0 %4212
        %v4214 = vsel %vm2356, %v4177, 0.0
        %4215 = vadd.xlane.f32.xlu0 %v4214
        %v4216 = vpop.xlane.xlu0 %4215
        %v4217 = vsel %vm2356, %v4179, 0.0
        %4218 = vadd.xlane.f32.xlu0 %v4217
        %v4219 = vpop.xlane.xlu0 %4218
        %v4220 = vsel %vm2356, %v4181, 0.0
        %4221 = vadd.xlane.f32.xlu0 %v4220
        %v4222 = vpop.xlane.xlu0 %4221
        %v4223 = vsel %vm2356, %v4183, 0.0
        %4224 = vadd.xlane.f32.xlu0 %v4223
        %v4225 = vpop.xlane.xlu0 %4224
        %v4226 = vsel %vm2356, %v4185, 0.0
        %4227 = vadd.xlane.f32.xlu0 %v4226
        %v4228 = vpop.xlane.xlu0 %4227
        %v4229 = vsel %vm2356, %v4187, 0.0
        %4230 = vadd.xlane.f32.xlu0 %v4229
        %v4231 = vpop.xlane.xlu0 %4230
        %v4232 = vsel %vm2356, %v4189, 0.0
        %4233 = vadd.xlane.f32.xlu0 %v4232
        %v4234 = vpop.xlane.xlu0 %4233
        %v4235 = vsel %vm2356, %v4191, 0.0
        %4236 = vadd.xlane.f32.xlu0 %v4235
        %v4237 = vpop.xlane.xlu0 %4236
        %v4238 = vsel %vm2356, %v4193, 0.0
        %4239 = vadd.xlane.f32.xlu0 %v4238
        %v4240 = vpop.xlane.xlu0 %4239
        %v4241 = vsel %vm2356, %v4195, 0.0
        %4242 = vadd.xlane.f32.xlu0 %v4241
        %v4243 = vpop.xlane.xlu0 %4242
        %v4244 = vrcp.pop %v4198
        %v4245 = vrcp.pop %v4201
        %v4246 = vrcp.pop %v4204
        %v4247 = vrcp.pop %v4207
        %v4248 = vrcp.pop %v4210
        %v4249 = vrcp.pop %v4213
        %v4250 = vrcp.pop %v4216
        %v4251 = vrcp.pop %v4219
        %v4252 = vrcp.pop %v4222
        %v4253 = vrcp.pop %v4225
        %v4254 = vrcp.pop %v4228
        %v4255 = vrcp.pop %v4231
        %v4256 = vrcp.pop %v4234
        %v4257 = vrcp.pop %v4237
        %v4258 = vrcp.pop %v4240
        %v4259 = vrcp.pop %v4243
        %v4260 = vmul.f32 %v4165, %v4244
        %v4261 = vmul.f32 %v4167, %v4245
        %v4262 = vmul.f32 %v4169, %v4246
        %v4263 = vmul.f32 %v4171, %v4247
        %v4264 = vmul.f32 %v4173, %v4248
        %v4265 = vmul.f32 %v4175, %v4249
        %v4266 = vmul.f32 %v4177, %v4250
        %v4267 = vmul.f32 %v4179, %v4251
        %v4268 = vmul.f32 %v4181, %v4252
        %v4269 = vmul.f32 %v4183, %v4253
        %v4270 = vmul.f32 %v4185, %v4254
        %v4271 = vmul.f32 %v4187, %v4255
        %v4272 = vmul.f32 %v4189, %v4256
        %v4273 = vmul.f32 %v4191, %v4257
        %v4274 = vmul.f32 %v4193, %v4258
        %v4275 = vmul.f32 %v4195, %v4259
        %v4277 = vsel %vm2356, %v4260, 0
        %v4280 = vsel %vm2356, %v4261, 0
        %v4283 = vsel %vm2356, %v4262, 0
        %v4286 = vsel %vm2356, %v4263, 0
        %v4289 = vsel %vm2356, %v4264, 0
        %v4292 = vsel %vm2356, %v4265, 0
        %v4295 = vsel %vm2356, %v4266, 0
        %v4298 = vsel %vm2356, %v4267, 0
        %v4301 = vsel %vm2356, %v4268, 0
        %v4304 = vsel %vm2356, %v4269, 0
        %v4307 = vsel %vm2356, %v4270, 0
        %v4310 = vsel %vm2356, %v4271, 0
        %v4313 = vsel %vm2356, %v4272, 0
        %v4316 = vsel %vm2356, %v4273, 0
        %v4319 = vsel %vm2356, %v4274, 0
        %v4322 = vsel %vm2356, %v4275, 0
        %4324 = vmatpush.msra.mxu0 0.0
        %4325 = vmatpush.msra.mxu0 0.0
        %4326 = vmatpush.msra.mxu0 0.0
        %4327 = vmatpush.msra.mxu0 0.0
        %4328 = vmatpush.msra.mxu0 0.0
        %4329 = vmatpush.msra.mxu0 0.0
        %4330 = vmatpush.msra.mxu0 0.0
        %4331 = vmatpush.msra.mxu0 0.0
        %4332 = vmatpush.msra.mxu0 0.0
        %4333 = vmatpush.msra.mxu0 0.0
        %4334 = vmatpush.msra.mxu0 0.0
        %4335 = vmatpush.msra.mxu0 0.0
        %4336 = vmatpush.msra.mxu0 0.0
        %4337 = vmatpush.msra.mxu0 0.0
        %4338 = vmatpush.msra.mxu0 0.0
        %4339 = vmatpush.msra.mxu0 %v2353
        %4340 = vmatmul.f32.gmra.mxu0 %v4277
        %v4341 = vpop.f32.mrf.mxu0
        %v4342 = vadd.f32 0.0, %v4341
        %4343 = vmatmul.f32.gmra.mxu0 %v4280
        %v4344 = vpop.f32.mrf.mxu0
        %v4345 = vadd.f32 0.0, %v4344
        %4346 = vmatmul.f32.gmra.mxu0 %v4283
        %v4347 = vpop.f32.mrf.mxu0
        %v4348 = vadd.f32 0.0, %v4347
        %4349 = vmatmul.f32.gmra.mxu0 %v4286
        %v4350 = vpop.f32.mrf.mxu0
        %v4351 = vadd.f32 0.0, %v4350
        %4352 = vmatmul.f32.gmra.mxu0 %v4289
        %v4353 = vpop.f32.mrf.mxu0
        %v4354 = vadd.f32 0.0, %v4353
        %4355 = vmatmul.f32.gmra.mxu0 %v4292
        %v4356 = vpop.f32.mrf.mxu0
        %v4357 = vadd.f32 0.0, %v4356
        %4358 = vmatmul.f32.gmra.mxu0 %v4295
        %v4359 = vpop.f32.mrf.mxu0
        %v4360 = vadd.f32 0.0, %v4359
        %4361 = vmatmul.f32.gmra.mxu0 %v4298
        %v4362 = vpop.f32.mrf.mxu0
        %v4363 = vadd.f32 0.0, %v4362
        %4364 = vmatmul.f32.gmra.mxu0 %v4301
        %v4365 = vpop.f32.mrf.mxu0
        %v4366 = vadd.f32 0.0, %v4365
        %4367 = vmatmul.f32.gmra.mxu0 %v4304
        %v4368 = vpop.f32.mrf.mxu0
        %v4369 = vadd.f32 0.0, %v4368
        %4370 = vmatmul.f32.gmra.mxu0 %v4307
        %v4371 = vpop.f32.mrf.mxu0
        %v4372 = vadd.f32 0.0, %v4371
        %4373 = vmatmul.f32.gmra.mxu0 %v4310
        %v4374 = vpop.f32.mrf.mxu0
        %v4375 = vadd.f32 0.0, %v4374
        %4376 = vmatmul.f32.gmra.mxu0 %v4313
        %v4377 = vpop.f32.mrf.mxu0
        %v4378 = vadd.f32 0.0, %v4377
        %4379 = vmatmul.f32.gmra.mxu0 %v4316
        %v4380 = vpop.f32.mrf.mxu0
        %v4381 = vadd.f32 0.0, %v4380
        %4382 = vmatmul.f32.gmra.mxu0 %v4319
        %v4383 = vpop.f32.mrf.mxu0
        %v4384 = vadd.f32 0.0, %v4383
        %4385 = vmatmul.f32.gmra.mxu0 %v4322
        %v4386 = vpop.f32.mrf.mxu0
        %v4387 = vadd.f32 0.0, %v4386
        %4388 = vdwg.mxu0
        %v4389 = vmul.f32 %v4342, %v2354
        %v4390 = vmul.f32 %v4345, %v2355
        %v4391 = vmul.f32 %v4348, %v2354
        %v4392 = vmul.f32 %v4351, %v2355
        %v4393 = vmul.f32 %v4354, %v2354
        %v4394 = vmul.f32 %v4357, %v2355
        %v4395 = vmul.f32 %v4360, %v2354
        %v4396 = vmul.f32 %v4363, %v2355
        %v4397 = vmul.f32 %v4366, %v2354
        %v4398 = vmul.f32 %v4369, %v2355
        %v4399 = vmul.f32 %v4372, %v2354
        %v4400 = vmul.f32 %v4375, %v2355
        %v4401 = vmul.f32 %v4378, %v2354
        %v4402 = vmul.f32 %v4381, %v2355
        %v4403 = vmul.f32 %v4384, %v2354
        %v4404 = vmul.f32 %v4387, %v2355
        %v4405 = vadd.f32 %v4389, %v4390
        %v4406 = vrot.slane %v4405, 4
        %v4407 = vadd.f32 %v4405, %v4406
        %v4408 = vrot.slane %v4407, 2
        %v4409 = vadd.f32 %v4407, %v4408
        %v4410 = vrot.slane %v4409, 1
        %v4411 = vadd.f32 %v4409, %v4410
        %v4412 = vadd.f32 %v4391, %v4392
        %v4413 = vrot.slane %v4412, 4
        %v4414 = vadd.f32 %v4412, %v4413
        %v4415 = vrot.slane %v4414, 2
        %v4416 = vadd.f32 %v4414, %v4415
        %v4417 = vrot.slane %v4416, 1
        %v4418 = vadd.f32 %v4416, %v4417
        %v4419 = vadd.f32 %v4393, %v4394
        %v4420 = vrot.slane %v4419, 4
        %v4421 = vadd.f32 %v4419, %v4420
        %v4422 = vrot.slane %v4421, 2
        %v4423 = vadd.f32 %v4421, %v4422
        %v4424 = vrot.slane %v4423, 1
        %v4425 = vadd.f32 %v4423, %v4424
        %v4426 = vadd.f32 %v4395, %v4396
        %v4427 = vrot.slane %v4426, 4
        %v4428 = vadd.f32 %v4426, %v4427
        %v4429 = vrot.slane %v4428, 2
        %v4430 = vadd.f32 %v4428, %v4429
        %v4431 = vrot.slane %v4430, 1
        %v4432 = vadd.f32 %v4430, %v4431
        %v4433 = vadd.f32 %v4397, %v4398
        %v4434 = vrot.slane %v4433, 4
        %v4435 = vadd.f32 %v4433, %v4434
        %v4436 = vrot.slane %v4435, 2
        %v4437 = vadd.f32 %v4435, %v4436
        %v4438 = vrot.slane %v4437, 1
        %v4439 = vadd.f32 %v4437, %v4438
        %v4440 = vadd.f32 %v4399, %v4400
        %v4441 = vrot.slane %v4440, 4
        %v4442 = vadd.f32 %v4440, %v4441
        %v4443 = vrot.slane %v4442, 2
        %v4444 = vadd.f32 %v4442, %v4443
        %v4445 = vrot.slane %v4444, 1
        %v4446 = vadd.f32 %v4444, %v4445
        %v4447 = vadd.f32 %v4401, %v4402
        %v4448 = vrot.slane %v4447, 4
        %v4449 = vadd.f32 %v4447, %v4448
        %v4450 = vrot.slane %v4449, 2
        %v4451 = vadd.f32 %v4449, %v4450
        %v4452 = vrot.slane %v4451, 1
        %v4453 = vadd.f32 %v4451, %v4452
        %v4454 = vadd.f32 %v4403, %v4404
        %v4455 = vrot.slane %v4454, 4
        %v4456 = vadd.f32 %v4454, %v4455
        %v4457 = vrot.slane %v4456, 2
        %v4458 = vadd.f32 %v4456, %v4457
        %v4459 = vrot.slane %v4458, 1
        %v4460 = vadd.f32 %v4458, %v4459
        %v4469 = vsel %vm696, %v4418, %v4411
        %v4470 = vsel %vm698, %v4425, %v4469
        %v4471 = vsel %vm700, %v4432, %v4470
        %v4472 = vsel %vm702, %v4439, %v4471
        %v4473 = vsel %vm704, %v4446, %v4472
        %v4474 = vsel %vm706, %v4453, %v4473
        %v4475 = vsel %vm708, %v4460, %v4474
        %s4477 = scalar_lea.vmem %s574, 8 [#allocation18]
        %4478 = vst [vmem:[%s4477] sm:$0xff] %v4475
        %v4479 = vpack.c.bf16 %v4260, %v4260
        %v4480 = vpack.c.bf16 %v4261, %v4261
        %v4481 = vpack.c.bf16 %v4262, %v4262
        %v4482 = vpack.c.bf16 %v4263, %v4263
        %v4483 = vpack.c.bf16 %v4264, %v4264
        %v4484 = vpack.c.bf16 %v4265, %v4265
        %v4485 = vpack.c.bf16 %v4266, %v4266
        %v4486 = vpack.c.bf16 %v4267, %v4267
        %v4487 = vpack.c.bf16 %v4268, %v4268
        %v4488 = vpack.c.bf16 %v4269, %v4269
        %v4489 = vpack.c.bf16 %v4270, %v4270
        %v4490 = vpack.c.bf16 %v4271, %v4271
        %v4491 = vpack.c.bf16 %v4272, %v4272
        %v4492 = vpack.c.bf16 %v4273, %v4273
        %v4493 = vpack.c.bf16 %v4274, %v4274
        %v4494 = vpack.c.bf16 %v4275, %v4275
        %4495 = vrot.lane.b32.xlu0 %v3169, 88
        %v4496 = vpop.permute.xlu0 %4495
        %v4498 = vsel %vm2356, %v4479, 0
        %v4501 = vsel %vm3175, %v4496, 0
        %4503 = vmatpush.bf16.msra.mxu0 0
        %4504 = vmatpush.bf16.msra.mxu0 0
        %4505 = vmatpush.bf16.msra.mxu0 0
        %4506 = vmatpush.bf16.msra.mxu0 0
        %4507 = vmatpush.bf16.msra.mxu0 0
        %4508 = vmatpush.bf16.msra.mxu0 0
        %4509 = vmatpush.bf16.msra.mxu0 0
        %4510 = vmatpush.bf16.msra.mxu0 %v4501
        %4511 = vmatmul.bf16.gmra.mxu0 %v4498
        %v4512 = vpop.f32.mrf.mxu0
        %v4513 = vadd.f32 0.0, %v4512
        %v4514 = vpop.f32.mrf.mxu0
        %4515 = vdwg.mxu0
        %4516 = vrot.lane.b32.xlu0 %v3194, 88
        %v4517 = vpop.permute.xlu0 %4516
        %v4519 = vsel %vm2356, %v4480, 0
        %v4522 = vsel %vm3175, %v4517, 0
        %4524 = vmatpush.bf16.msra.mxu0 0
        %4525 = vmatpush.bf16.msra.mxu0 0
        %4526 = vmatpush.bf16.msra.mxu0 0
        %4527 = vmatpush.bf16.msra.mxu0 0
        %4528 = vmatpush.bf16.msra.mxu0 0
        %4529 = vmatpush.bf16.msra.mxu0 0
        %4530 = vmatpush.bf16.msra.mxu0 0
        %4531 = vmatpush.bf16.msra.mxu0 %v4522
        %4532 = vmatmul.bf16.gmra.mxu0 %v4519
        %v4533 = vpop.f32.mrf.mxu0
        %v4534 = vadd.f32 0.0, %v4533
        %v4535 = vpop.f32.mrf.mxu0
        %4536 = vdwg.mxu0
        %4537 = vrot.lane.b32.xlu0 %v3218, 88
        %v4538 = vpop.permute.xlu0 %4537
        %v4540 = vsel %vm2356, %v4481, 0
        %v4543 = vsel %vm3175, %v4538, 0
        %4545 = vmatpush.bf16.msra.mxu0 0
        %4546 = vmatpush.bf16.msra.mxu0 0
        %4547 = vmatpush.bf16.msra.mxu0 0
        %4548 = vmatpush.bf16.msra.mxu0 0
        %4549 = vmatpush.bf16.msra.mxu0 0
        %4550 = vmatpush.bf16.msra.mxu0 0
        %4551 = vmatpush.bf16.msra.mxu0 0
        %4552 = vmatpush.bf16.msra.mxu0 %v4543
        %4553 = vmatmul.bf16.gmra.mxu0 %v4540
        %v4554 = vpop.f32.mrf.mxu0
        %v4555 = vadd.f32 0.0, %v4554
        %v4556 = vpop.f32.mrf.mxu0
        %4557 = vdwg.mxu0
        %4558 = vrot.lane.b32.xlu0 %v3242, 88
        %v4559 = vpop.permute.xlu0 %4558
        %v4561 = vsel %vm2356, %v4482, 0
        %v4564 = vsel %vm3175, %v4559, 0
        %4566 = vmatpush.bf16.msra.mxu0 0
        %4567 = vmatpush.bf16.msra.mxu0 0
        %4568 = vmatpush.bf16.msra.mxu0 0
        %4569 = vmatpush.bf16.msra.mxu0 0
        %4570 = vmatpush.bf16.msra.mxu0 0
        %4571 = vmatpush.bf16.msra.mxu0 0
        %4572 = vmatpush.bf16.msra.mxu0 0
        %4573 = vmatpush.bf16.msra.mxu0 %v4564
        %4574 = vmatmul.bf16.gmra.mxu0 %v4561
        %v4575 = vpop.f32.mrf.mxu0
        %v4576 = vadd.f32 0.0, %v4575
        %v4577 = vpop.f32.mrf.mxu0
        %4578 = vdwg.mxu0
        %4579 = vrot.lane.b32.xlu0 %v3266, 88
        %v4580 = vpop.permute.xlu0 %4579
        %v4582 = vsel %vm2356, %v4483, 0
        %v4585 = vsel %vm3175, %v4580, 0
        %4587 = vmatpush.bf16.msra.mxu0 0
        %4588 = vmatpush.bf16.msra.mxu0 0
        %4589 = vmatpush.bf16.msra.mxu0 0
        %4590 = vmatpush.bf16.msra.mxu0 0
        %4591 = vmatpush.bf16.msra.mxu0 0
        %4592 = vmatpush.bf16.msra.mxu0 0
        %4593 = vmatpush.bf16.msra.mxu0 0
        %4594 = vmatpush.bf16.msra.mxu0 %v4585
        %4595 = vmatmul.bf16.gmra.mxu0 %v4582
        %v4596 = vpop.f32.mrf.mxu0
        %v4597 = vadd.f32 0.0, %v4596
        %v4598 = vpop.f32.mrf.mxu0
        %4599 = vdwg.mxu0
        %4600 = vrot.lane.b32.xlu0 %v3290, 88
        %v4601 = vpop.permute.xlu0 %4600
        %v4603 = vsel %vm2356, %v4484, 0
        %v4606 = vsel %vm3175, %v4601, 0
        %4608 = vmatpush.bf16.msra.mxu0 0
        %4609 = vmatpush.bf16.msra.mxu0 0
        %4610 = vmatpush.bf16.msra.mxu0 0
        %4611 = vmatpush.bf16.msra.mxu0 0
        %4612 = vmatpush.bf16.msra.mxu0 0
        %4613 = vmatpush.bf16.msra.mxu0 0
        %4614 = vmatpush.bf16.msra.mxu0 0
        %4615 = vmatpush.bf16.msra.mxu0 %v4606
        %4616 = vmatmul.bf16.gmra.mxu0 %v4603
        %v4617 = vpop.f32.mrf.mxu0
        %v4618 = vadd.f32 0.0, %v4617
        %v4619 = vpop.f32.mrf.mxu0
        %4620 = vdwg.mxu0
        %4621 = vrot.lane.b32.xlu0 %v3314, 88
        %v4622 = vpop.permute.xlu0 %4621
        %v4624 = vsel %vm2356, %v4485, 0
        %v4627 = vsel %vm3175, %v4622, 0
        %4629 = vmatpush.bf16.msra.mxu0 0
        %4630 = vmatpush.bf16.msra.mxu0 0
        %4631 = vmatpush.bf16.msra.mxu0 0
        %4632 = vmatpush.bf16.msra.mxu0 0
        %4633 = vmatpush.bf16.msra.mxu0 0
        %4634 = vmatpush.bf16.msra.mxu0 0
        %4635 = vmatpush.bf16.msra.mxu0 0
        %4636 = vmatpush.bf16.msra.mxu0 %v4627
        %4637 = vmatmul.bf16.gmra.mxu0 %v4624
        %v4638 = vpop.f32.mrf.mxu0
        %v4639 = vadd.f32 0.0, %v4638
        %v4640 = vpop.f32.mrf.mxu0
        %4641 = vdwg.mxu0
        %4642 = vrot.lane.b32.xlu0 %v3338, 88
        %v4643 = vpop.permute.xlu0 %4642
        %v4645 = vsel %vm2356, %v4486, 0
        %v4648 = vsel %vm3175, %v4643, 0
        %4650 = vmatpush.bf16.msra.mxu0 0
        %4651 = vmatpush.bf16.msra.mxu0 0
        %4652 = vmatpush.bf16.msra.mxu0 0
        %4653 = vmatpush.bf16.msra.mxu0 0
        %4654 = vmatpush.bf16.msra.mxu0 0
        %4655 = vmatpush.bf16.msra.mxu0 0
        %4656 = vmatpush.bf16.msra.mxu0 0
        %4657 = vmatpush.bf16.msra.mxu0 %v4648
        %4658 = vmatmul.bf16.gmra.mxu0 %v4645
        %v4659 = vpop.f32.mrf.mxu0
        %v4660 = vadd.f32 0.0, %v4659
        %v4661 = vpop.f32.mrf.mxu0
        %4662 = vdwg.mxu0
        %4663 = vrot.lane.b32.xlu0 %v3362, 88
        %v4664 = vpop.permute.xlu0 %4663
        %v4666 = vsel %vm2356, %v4487, 0
        %v4669 = vsel %vm3175, %v4664, 0
        %4671 = vmatpush.bf16.msra.mxu0 0
        %4672 = vmatpush.bf16.msra.mxu0 0
        %4673 = vmatpush.bf16.msra.mxu0 0
        %4674 = vmatpush.bf16.msra.mxu0 0
        %4675 = vmatpush.bf16.msra.mxu0 0
        %4676 = vmatpush.bf16.msra.mxu0 0
        %4677 = vmatpush.bf16.msra.mxu0 0
        %4678 = vmatpush.bf16.msra.mxu0 %v4669
        %4679 = vmatmul.bf16.gmra.mxu0 %v4666
        %v4680 = vpop.f32.mrf.mxu0
        %v4681 = vadd.f32 0.0, %v4680
        %v4682 = vpop.f32.mrf.mxu0
        %4683 = vdwg.mxu0
        %4684 = vrot.lane.b32.xlu0 %v3386, 88
        %v4685 = vpop.permute.xlu0 %4684
        %v4687 = vsel %vm2356, %v4488, 0
        %v4690 = vsel %vm3175, %v4685, 0
        %4692 = vmatpush.bf16.msra.mxu0 0
        %4693 = vmatpush.bf16.msra.mxu0 0
        %4694 = vmatpush.bf16.msra.mxu0 0
        %4695 = vmatpush.bf16.msra.mxu0 0
        %4696 = vmatpush.bf16.msra.mxu0 0
        %4697 = vmatpush.bf16.msra.mxu0 0
        %4698 = vmatpush.bf16.msra.mxu0 0
        %4699 = vmatpush.bf16.msra.mxu0 %v4690
        %4700 = vmatmul.bf16.gmra.mxu0 %v4687
        %v4701 = vpop.f32.mrf.mxu0
        %v4702 = vadd.f32 0.0, %v4701
        %v4703 = vpop.f32.mrf.mxu0
        %4704 = vdwg.mxu0
        %4705 = vrot.lane.b32.xlu0 %v3410, 88
        %v4706 = vpop.permute.xlu0 %4705
        %v4708 = vsel %vm2356, %v4489, 0
        %v4711 = vsel %vm3175, %v4706, 0
        %4713 = vmatpush.bf16.msra.mxu0 0
        %4714 = vmatpush.bf16.msra.mxu0 0
        %4715 = vmatpush.bf16.msra.mxu0 0
        %4716 = vmatpush.bf16.msra.mxu0 0
        %4717 = vmatpush.bf16.msra.mxu0 0
        %4718 = vmatpush.bf16.msra.mxu0 0
        %4719 = vmatpush.bf16.msra.mxu0 0
        %4720 = vmatpush.bf16.msra.mxu0 %v4711
        %4721 = vmatmul.bf16.gmra.mxu0 %v4708
        %v4722 = vpop.f32.mrf.mxu0
        %v4723 = vadd.f32 0.0, %v4722
        %v4724 = vpop.f32.mrf.mxu0
        %4725 = vdwg.mxu0
        %4726 = vrot.lane.b32.xlu0 %v3434, 88
        %v4727 = vpop.permute.xlu0 %4726
        %v4729 = vsel %vm2356, %v4490, 0
        %v4732 = vsel %vm3175, %v4727, 0
        %4734 = vmatpush.bf16.msra.mxu0 0
        %4735 = vmatpush.bf16.msra.mxu0 0
        %4736 = vmatpush.bf16.msra.mxu0 0
        %4737 = vmatpush.bf16.msra.mxu0 0
        %4738 = vmatpush.bf16.msra.mxu0 0
        %4739 = vmatpush.bf16.msra.mxu0 0
        %4740 = vmatpush.bf16.msra.mxu0 0
        %4741 = vmatpush.bf16.msra.mxu0 %v4732
        %4742 = vmatmul.bf16.gmra.mxu0 %v4729
        %v4743 = vpop.f32.mrf.mxu0
        %v4744 = vadd.f32 0.0, %v4743
        %v4745 = vpop.f32.mrf.mxu0
        %4746 = vdwg.mxu0
        %4747 = vrot.lane.b32.xlu0 %v3458, 88
        %v4748 = vpop.permute.xlu0 %4747
        %v4750 = vsel %vm2356, %v4491, 0
        %v4753 = vsel %vm3175, %v4748, 0
        %4755 = vmatpush.bf16.msra.mxu0 0
        %4756 = vmatpush.bf16.msra.mxu0 0
        %4757 = vmatpush.bf16.msra.mxu0 0
        %4758 = vmatpush.bf16.msra.mxu0 0
        %4759 = vmatpush.bf16.msra.mxu0 0
        %4760 = vmatpush.bf16.msra.mxu0 0
        %4761 = vmatpush.bf16.msra.mxu0 0
        %4762 = vmatpush.bf16.msra.mxu0 %v4753
        %4763 = vmatmul.bf16.gmra.mxu0 %v4750
        %v4764 = vpop.f32.mrf.mxu0
        %v4765 = vadd.f32 0.0, %v4764
        %v4766 = vpop.f32.mrf.mxu0
        %4767 = vdwg.mxu0
        %4768 = vrot.lane.b32.xlu0 %v3482, 88
        %v4769 = vpop.permute.xlu0 %4768
        %v4771 = vsel %vm2356, %v4492, 0
        %v4774 = vsel %vm3175, %v4769, 0
        %4776 = vmatpush.bf16.msra.mxu0 0
        %4777 = vmatpush.bf16.msra.mxu0 0
        %4778 = vmatpush.bf16.msra.mxu0 0
        %4779 = vmatpush.bf16.msra.mxu0 0
        %4780 = vmatpush.bf16.msra.mxu0 0
        %4781 = vmatpush.bf16.msra.mxu0 0
        %4782 = vmatpush.bf16.msra.mxu0 0
        %4783 = vmatpush.bf16.msra.mxu0 %v4774
        %4784 = vmatmul.bf16.gmra.mxu0 %v4771
        %v4785 = vpop.f32.mrf.mxu0
        %v4786 = vadd.f32 0.0, %v4785
        %v4787 = vpop.f32.mrf.mxu0
        %4788 = vdwg.mxu0
        %4789 = vrot.lane.b32.xlu0 %v3506, 88
        %v4790 = vpop.permute.xlu0 %4789
        %v4792 = vsel %vm2356, %v4493, 0
        %v4795 = vsel %vm3175, %v4790, 0
        %4797 = vmatpush.bf16.msra.mxu0 0
        %4798 = vmatpush.bf16.msra.mxu0 0
        %4799 = vmatpush.bf16.msra.mxu0 0
        %4800 = vmatpush.bf16.msra.mxu0 0
        %4801 = vmatpush.bf16.msra.mxu0 0
        %4802 = vmatpush.bf16.msra.mxu0 0
        %4803 = vmatpush.bf16.msra.mxu0 0
        %4804 = vmatpush.bf16.msra.mxu0 %v4795
        %4805 = vmatmul.bf16.gmra.mxu0 %v4792
        %v4806 = vpop.f32.mrf.mxu0
        %v4807 = vadd.f32 0.0, %v4806
        %v4808 = vpop.f32.mrf.mxu0
        %4809 = vdwg.mxu0
        %4810 = vrot.lane.b32.xlu0 %v3530, 88
        %v4811 = vpop.permute.xlu0 %4810
        %v4813 = vsel %vm2356, %v4494, 0
        %v4816 = vsel %vm3175, %v4811, 0
        %4818 = vmatpush.bf16.msra.mxu0 0
        %4819 = vmatpush.bf16.msra.mxu0 0
        %4820 = vmatpush.bf16.msra.mxu0 0
        %4821 = vmatpush.bf16.msra.mxu0 0
        %4822 = vmatpush.bf16.msra.mxu0 0
        %4823 = vmatpush.bf16.msra.mxu0 0
        %4824 = vmatpush.bf16.msra.mxu0 0
        %4825 = vmatpush.bf16.msra.mxu0 %v4816
        %4826 = vmatmul.bf16.gmra.mxu0 %v4813
        %v4827 = vpop.f32.mrf.mxu0
        %v4828 = vadd.f32 0.0, %v4827
        %v4829 = vpop.f32.mrf.mxu0
        %4830 = vdwg.mxu0
        %v4831 = vpack.c.bf16 %v4534, %v4513
        %v4832 = vpack.c.bf16 %v4576, %v4555
        %v4833 = vpack.c.bf16 %v4618, %v4597
        %v4834 = vpack.c.bf16 %v4660, %v4639
        %v4835 = vpack.c.bf16 %v4702, %v4681
        %v4836 = vpack.c.bf16 %v4744, %v4723
        %v4837 = vpack.c.bf16 %v4786, %v4765
        %v4838 = vpack.c.bf16 %v4828, %v4807
        %v4840 = vsel %vm2356, %v4831, 0
        %v4843 = vsel %vm2356, %v4832, 0
        %v4846 = vsel %vm2356, %v4833, 0
        %v4849 = vsel %vm2356, %v4834, 0
        %v4852 = vsel %vm2356, %v4835, 0
        %v4855 = vsel %vm2356, %v4836, 0
        %v4858 = vsel %vm2356, %v4837, 0
        %v4861 = vsel %vm2356, %v4838, 0
        %v4864 = vsel %vm3175, %v2350, 0
        %4866 = vmatpush.bf16.msra.mxu0 0
        %4867 = vmatpush.bf16.msra.mxu0 0
        %4868 = vmatpush.bf16.msra.mxu0 0
        %4869 = vmatpush.bf16.msra.mxu0 0
        %4870 = vmatpush.bf16.msra.mxu0 0
        %4871 = vmatpush.bf16.msra.mxu0 0
        %4872 = vmatpush.bf16.msra.mxu0 0
        %4873 = vmatpush.bf16.msra.mxu0 %v4864
        %4874 = vmatmul.bf16.gmra.mxu0 %v4840
        %v4875 = vpop.f32.mrf.mxu0
        %v4876 = vadd.f32 0.0, %v4875
        %v4877 = vpop.f32.mrf.mxu0
        %v4878 = vadd.f32 0.0, %v4877
        %4879 = vmatmul.bf16.gmra.mxu0 %v4843
        %v4880 = vpop.f32.mrf.mxu0
        %v4881 = vadd.f32 0.0, %v4880
        %v4882 = vpop.f32.mrf.mxu0
        %v4883 = vadd.f32 0.0, %v4882
        %4884 = vmatmul.bf16.gmra.mxu0 %v4846
        %v4885 = vpop.f32.mrf.mxu0
        %v4886 = vadd.f32 0.0, %v4885
        %v4887 = vpop.f32.mrf.mxu0
        %v4888 = vadd.f32 0.0, %v4887
        %4889 = vmatmul.bf16.gmra.mxu0 %v4849
        %v4890 = vpop.f32.mrf.mxu0
        %v4891 = vadd.f32 0.0, %v4890
        %v4892 = vpop.f32.mrf.mxu0
        %v4893 = vadd.f32 0.0, %v4892
        %4894 = vmatmul.bf16.gmra.mxu0 %v4852
        %v4895 = vpop.f32.mrf.mxu0
        %v4896 = vadd.f32 0.0, %v4895
        %v4897 = vpop.f32.mrf.mxu0
        %v4898 = vadd.f32 0.0, %v4897
        %4899 = vmatmul.bf16.gmra.mxu0 %v4855
        %v4900 = vpop.f32.mrf.mxu0
        %v4901 = vadd.f32 0.0, %v4900
        %v4902 = vpop.f32.mrf.mxu0
        %v4903 = vadd.f32 0.0, %v4902
        %4904 = vmatmul.bf16.gmra.mxu0 %v4858
        %v4905 = vpop.f32.mrf.mxu0
        %v4906 = vadd.f32 0.0, %v4905
        %v4907 = vpop.f32.mrf.mxu0
        %v4908 = vadd.f32 0.0, %v4907
        %4909 = vmatmul.bf16.gmra.mxu0 %v4861
        %v4910 = vpop.f32.mrf.mxu0
        %v4911 = vadd.f32 0.0, %v4910
        %v4912 = vpop.f32.mrf.mxu0
        %v4913 = vadd.f32 0.0, %v4912
        %4914 = vdwg.mxu0
        %v4915 = vadd.f32 %v3636, %v4876
        %v4916 = vadd.f32 %v3637, %v4878
        %v4917 = vadd.f32 %v3638, %v4881
        %v4918 = vadd.f32 %v3639, %v4883
        %v4919 = vadd.f32 %v3640, %v4886
        %v4920 = vadd.f32 %v3641, %v4888
        %v4921 = vadd.f32 %v3642, %v4891
        %v4922 = vadd.f32 %v3643, %v4893
        %v4923 = vadd.f32 %v3644, %v4896
        %v4924 = vadd.f32 %v3645, %v4898
        %v4925 = vadd.f32 %v3646, %v4901
        %v4926 = vadd.f32 %v3647, %v4903
        %v4927 = vadd.f32 %v3648, %v4906
        %v4928 = vadd.f32 %v3649, %v4908
        %v4929 = vadd.f32 %v3650, %v4911
        %v4930 = vadd.f32 %v3651, %v4913
        %4931 = vrot.lane.b32.xlu0 %v2317, 112
        %v4932 = vpop.permute.xlu0 %4931
        %4933 = vrot.lane.b32.xlu0 %v2109, 112
        %v4934 = vpop.permute.xlu0 %4933
        %v4935 = vsel %vm2356, %v4932, 0
        %v4937 = vsel %vm2356, %v4934, 0
        %4939 = vmatpush.xpose.msra.mxu0 0.0
        %4940 = vmatpush.xpose.msra.mxu0 0.0
        %4941 = vmatpush.xpose.msra.mxu0 0.0
        %4942 = vmatpush.xpose.msra.mxu0 0.0
        %4943 = vmatpush.xpose.msra.mxu0 0.0
        %4944 = vmatpush.xpose.msra.mxu0 0.0
        %4945 = vmatpush.xpose.msra.mxu0 0.0
        %4946 = vmatpush.xpose.msra.mxu0 0.0
        %4947 = vmatpush.xpose.msra.mxu0 0.0
        %4948 = vmatpush.xpose.msra.mxu0 0.0
        %4949 = vmatpush.xpose.msra.mxu0 0.0
        %4950 = vmatpush.xpose.msra.mxu0 0.0
        %4951 = vmatpush.xpose.msra.mxu0 0.0
        %4952 = vmatpush.xpose.msra.mxu0 0.0
        %4953 = vmatpush.xpose.msra.mxu0 0.0
        %4954 = vmatpush.xpose.msra.mxu0 %v4937
        %4955 = vmatmul.f32.gmra.mxu0 %v4935
        %v4956 = vpop.f32.mrf.mxu0
        %v4957 = vadd.f32 0.0, %v4956
        %4958 = vdwg.mxu0
        %4959 = vrot.lane.b32.xlu0 %v2318, 112
        %v4960 = vpop.permute.xlu0 %4959
        %4961 = vrot.lane.b32.xlu0 %v2110, 112
        %v4962 = vpop.permute.xlu0 %4961
        %v4963 = vsel %vm2356, %v4960, 0
        %v4965 = vsel %vm2356, %v4962, 0
        %4967 = vmatpush.xpose.msra.mxu0 0.0
        %4968 = vmatpush.xpose.msra.mxu0 0.0
        %4969 = vmatpush.xpose.msra.mxu0 0.0
        %4970 = vmatpush.xpose.msra.mxu0 0.0
        %4971 = vmatpush.xpose.msra.mxu0 0.0
        %4972 = vmatpush.xpose.msra.mxu0 0.0
        %4973 = vmatpush.xpose.msra.mxu0 0.0
        %4974 = vmatpush.xpose.msra.mxu0 0.0
        %4975 = vmatpush.xpose.msra.mxu0 0.0
        %4976 = vmatpush.xpose.msra.mxu0 0.0
        %4977 = vmatpush.xpose.msra.mxu0 0.0
        %4978 = vmatpush.xpose.msra.mxu0 0.0
        %4979 = vmatpush.xpose.msra.mxu0 0.0
        %4980 = vmatpush.xpose.msra.mxu0 0.0
        %4981 = vmatpush.xpose.msra.mxu0 0.0
        %4982 = vmatpush.xpose.msra.mxu0 %v4965
        %4983 = vmatmul.f32.gmra.mxu0 %v4963
        %v4984 = vpop.f32.mrf.mxu0
        %v4985 = vadd.f32 0.0, %v4984
        %4986 = vdwg.mxu0
        %4987 = vrot.lane.b32.xlu0 %v2319, 112
        %v4988 = vpop.permute.xlu0 %4987
        %4989 = vrot.lane.b32.xlu0 %v2111, 112
        %v4990 = vpop.permute.xlu0 %4989
        %v4991 = vsel %vm2356, %v4988, 0
        %v4993 = vsel %vm2356, %v4990, 0
        %4995 = vmatpush.xpose.msra.mxu0 0.0
        %4996 = vmatpush.xpose.msra.mxu0 0.0
        %4997 = vmatpush.xpose.msra.mxu0 0.0
        %4998 = vmatpush.xpose.msra.mxu0 0.0
        %4999 = vmatpush.xpose.msra.mxu0 0.0
        %5000 = vmatpush.xpose.msra.mxu0 0.0
        %5001 = vmatpush.xpose.msra.mxu0 0.0
        %5002 = vmatpush.xpose.msra.mxu0 0.0
        %5003 = vmatpush.xpose.msra.mxu0 0.0
        %5004 = vmatpush.xpose.msra.mxu0 0.0
        %5005 = vmatpush.xpose.msra.mxu0 0.0
        %5006 = vmatpush.xpose.msra.mxu0 0.0
        %5007 = vmatpush.xpose.msra.mxu0 0.0
        %5008 = vmatpush.xpose.msra.mxu0 0.0
        %5009 = vmatpush.xpose.msra.mxu0 0.0
        %5010 = vmatpush.xpose.msra.mxu0 %v4993
        %5011 = vmatmul.f32.gmra.mxu0 %v4991
        %v5012 = vpop.f32.mrf.mxu0
        %v5013 = vadd.f32 0.0, %v5012
        %5014 = vdwg.mxu0
        %5015 = vrot.lane.b32.xlu0 %v2320, 112
        %v5016 = vpop.permute.xlu0 %5015
        %5017 = vrot.lane.b32.xlu0 %v2112, 112
        %v5018 = vpop.permute.xlu0 %5017
        %v5019 = vsel %vm2356, %v5016, 0
        %v5021 = vsel %vm2356, %v5018, 0
        %5023 = vmatpush.xpose.msra.mxu0 0.0
        %5024 = vmatpush.xpose.msra.mxu0 0.0
        %5025 = vmatpush.xpose.msra.mxu0 0.0
        %5026 = vmatpush.xpose.msra.mxu0 0.0
        %5027 = vmatpush.xpose.msra.mxu0 0.0
        %5028 = vmatpush.xpose.msra.mxu0 0.0
        %5029 = vmatpush.xpose.msra.mxu0 0.0
        %5030 = vmatpush.xpose.msra.mxu0 0.0
        %5031 = vmatpush.xpose.msra.mxu0 0.0
        %5032 = vmatpush.xpose.msra.mxu0 0.0
        %5033 = vmatpush.xpose.msra.mxu0 0.0
        %5034 = vmatpush.xpose.msra.mxu0 0.0
        %5035 = vmatpush.xpose.msra.mxu0 0.0
        %5036 = vmatpush.xpose.msra.mxu0 0.0
        %5037 = vmatpush.xpose.msra.mxu0 0.0
        %5038 = vmatpush.xpose.msra.mxu0 %v5021
        %5039 = vmatmul.f32.gmra.mxu0 %v5019
        %v5040 = vpop.f32.mrf.mxu0
        %v5041 = vadd.f32 0.0, %v5040
        %5042 = vdwg.mxu0
        %5043 = vrot.lane.b32.xlu0 %v2321, 112
        %v5044 = vpop.permute.xlu0 %5043
        %5045 = vrot.lane.b32.xlu0 %v2113, 112
        %v5046 = vpop.permute.xlu0 %5045
        %v5047 = vsel %vm2356, %v5044, 0
        %v5049 = vsel %vm2356, %v5046, 0
        %5051 = vmatpush.xpose.msra.mxu0 0.0
        %5052 = vmatpush.xpose.msra.mxu0 0.0
        %5053 = vmatpush.xpose.msra.mxu0 0.0
        %5054 = vmatpush.xpose.msra.mxu0 0.0
        %5055 = vmatpush.xpose.msra.mxu0 0.0
        %5056 = vmatpush.xpose.msra.mxu0 0.0
        %5057 = vmatpush.xpose.msra.mxu0 0.0
        %5058 = vmatpush.xpose.msra.mxu0 0.0
        %5059 = vmatpush.xpose.msra.mxu0 0.0
        %5060 = vmatpush.xpose.msra.mxu0 0.0
        %5061 = vmatpush.xpose.msra.mxu0 0.0
        %5062 = vmatpush.xpose.msra.mxu0 0.0
        %5063 = vmatpush.xpose.msra.mxu0 0.0
        %5064 = vmatpush.xpose.msra.mxu0 0.0
        %5065 = vmatpush.xpose.msra.mxu0 0.0
        %5066 = vmatpush.xpose.msra.mxu0 %v5049
        %5067 = vmatmul.f32.gmra.mxu0 %v5047
        %v5068 = vpop.f32.mrf.mxu0
        %v5069 = vadd.f32 0.0, %v5068
        %5070 = vdwg.mxu0
        %5071 = vrot.lane.b32.xlu0 %v2322, 112
        %v5072 = vpop.permute.xlu0 %5071
        %5073 = vrot.lane.b32.xlu0 %v2114, 112
        %v5074 = vpop.permute.xlu0 %5073
        %v5075 = vsel %vm2356, %v5072, 0
        %v5077 = vsel %vm2356, %v5074, 0
        %5079 = vmatpush.xpose.msra.mxu0 0.0
        %5080 = vmatpush.xpose.msra.mxu0 0.0
        %5081 = vmatpush.xpose.msra.mxu0 0.0
        %5082 = vmatpush.xpose.msra.mxu0 0.0
        %5083 = vmatpush.xpose.msra.mxu0 0.0
        %5084 = vmatpush.xpose.msra.mxu0 0.0
        %5085 = vmatpush.xpose.msra.mxu0 0.0
        %5086 = vmatpush.xpose.msra.mxu0 0.0
        %5087 = vmatpush.xpose.msra.mxu0 0.0
        %5088 = vmatpush.xpose.msra.mxu0 0.0
        %5089 = vmatpush.xpose.msra.mxu0 0.0
        %5090 = vmatpush.xpose.msra.mxu0 0.0
        %5091 = vmatpush.xpose.msra.mxu0 0.0
        %5092 = vmatpush.xpose.msra.mxu0 0.0
        %5093 = vmatpush.xpose.msra.mxu0 0.0
        %5094 = vmatpush.xpose.msra.mxu0 %v5077
        %5095 = vmatmul.f32.gmra.mxu0 %v5075
        %v5096 = vpop.f32.mrf.mxu0
        %v5097 = vadd.f32 0.0, %v5096
        %5098 = vdwg.mxu0
        %5099 = vrot.lane.b32.xlu0 %v2323, 112
        %v5100 = vpop.permute.xlu0 %5099
        %5101 = vrot.lane.b32.xlu0 %v2115, 112
        %v5102 = vpop.permute.xlu0 %5101
        %v5103 = vsel %vm2356, %v5100, 0
        %v5105 = vsel %vm2356, %v5102, 0
        %5107 = vmatpush.xpose.msra.mxu0 0.0
        %5108 = vmatpush.xpose.msra.mxu0 0.0
        %5109 = vmatpush.xpose.msra.mxu0 0.0
        %5110 = vmatpush.xpose.msra.mxu0 0.0
        %5111 = vmatpush.xpose.msra.mxu0 0.0
        %5112 = vmatpush.xpose.msra.mxu0 0.0
        %5113 = vmatpush.xpose.msra.mxu0 0.0
        %5114 = vmatpush.xpose.msra.mxu0 0.0
        %5115 = vmatpush.xpose.msra.mxu0 0.0
        %5116 = vmatpush.xpose.msra.mxu0 0.0
        %5117 = vmatpush.xpose.msra.mxu0 0.0
        %5118 = vmatpush.xpose.msra.mxu0 0.0
        %5119 = vmatpush.xpose.msra.mxu0 0.0
        %5120 = vmatpush.xpose.msra.mxu0 0.0
        %5121 = vmatpush.xpose.msra.mxu0 0.0
        %5122 = vmatpush.xpose.msra.mxu0 %v5105
        %5123 = vmatmul.f32.gmra.mxu0 %v5103
        %v5124 = vpop.f32.mrf.mxu0
        %v5125 = vadd.f32 0.0, %v5124
        %5126 = vdwg.mxu0
        %5127 = vrot.lane.b32.xlu0 %v2324, 112
        %v5128 = vpop.permute.xlu0 %5127
        %5129 = vrot.lane.b32.xlu0 %v2116, 112
        %v5130 = vpop.permute.xlu0 %5129
        %v5131 = vsel %vm2356, %v5128, 0
        %v5133 = vsel %vm2356, %v5130, 0
        %5135 = vmatpush.xpose.msra.mxu0 0.0
        %5136 = vmatpush.xpose.msra.mxu0 0.0
        %5137 = vmatpush.xpose.msra.mxu0 0.0
        %5138 = vmatpush.xpose.msra.mxu0 0.0
        %5139 = vmatpush.xpose.msra.mxu0 0.0
        %5140 = vmatpush.xpose.msra.mxu0 0.0
        %5141 = vmatpush.xpose.msra.mxu0 0.0
        %5142 = vmatpush.xpose.msra.mxu0 0.0
        %5143 = vmatpush.xpose.msra.mxu0 0.0
        %5144 = vmatpush.xpose.msra.mxu0 0.0
        %5145 = vmatpush.xpose.msra.mxu0 0.0
        %5146 = vmatpush.xpose.msra.mxu0 0.0
        %5147 = vmatpush.xpose.msra.mxu0 0.0
        %5148 = vmatpush.xpose.msra.mxu0 0.0
        %5149 = vmatpush.xpose.msra.mxu0 0.0
        %5150 = vmatpush.xpose.msra.mxu0 %v5133
        %5151 = vmatmul.f32.gmra.mxu0 %v5131
        %v5152 = vpop.f32.mrf.mxu0
        %v5153 = vadd.f32 0.0, %v5152
        %5154 = vdwg.mxu0
        %5155 = vrot.lane.b32.xlu0 %v2325, 112
        %v5156 = vpop.permute.xlu0 %5155
        %5157 = vrot.lane.b32.xlu0 %v2117, 112
        %v5158 = vpop.permute.xlu0 %5157
        %v5159 = vsel %vm2356, %v5156, 0
        %v5161 = vsel %vm2356, %v5158, 0
        %5163 = vmatpush.xpose.msra.mxu0 0.0
        %5164 = vmatpush.xpose.msra.mxu0 0.0
        %5165 = vmatpush.xpose.msra.mxu0 0.0
        %5166 = vmatpush.xpose.msra.mxu0 0.0
        %5167 = vmatpush.xpose.msra.mxu0 0.0
        %5168 = vmatpush.xpose.msra.mxu0 0.0
        %5169 = vmatpush.xpose.msra.mxu0 0.0
        %5170 = vmatpush.xpose.msra.mxu0 0.0
        %5171 = vmatpush.xpose.msra.mxu0 0.0
        %5172 = vmatpush.xpose.msra.mxu0 0.0
        %5173 = vmatpush.xpose.msra.mxu0 0.0
        %5174 = vmatpush.xpose.msra.mxu0 0.0
        %5175 = vmatpush.xpose.msra.mxu0 0.0
        %5176 = vmatpush.xpose.msra.mxu0 0.0
        %5177 = vmatpush.xpose.msra.mxu0 0.0
        %5178 = vmatpush.xpose.msra.mxu0 %v5161
        %5179 = vmatmul.f32.gmra.mxu0 %v5159
        %v5180 = vpop.f32.mrf.mxu0
        %v5181 = vadd.f32 0.0, %v5180
        %5182 = vdwg.mxu0
        %5183 = vrot.lane.b32.xlu0 %v2326, 112
        %v5184 = vpop.permute.xlu0 %5183
        %5185 = vrot.lane.b32.xlu0 %v2118, 112
        %v5186 = vpop.permute.xlu0 %5185
        %v5187 = vsel %vm2356, %v5184, 0
        %v5189 = vsel %vm2356, %v5186, 0
        %5191 = vmatpush.xpose.msra.mxu0 0.0
        %5192 = vmatpush.xpose.msra.mxu0 0.0
        %5193 = vmatpush.xpose.msra.mxu0 0.0
        %5194 = vmatpush.xpose.msra.mxu0 0.0
        %5195 = vmatpush.xpose.msra.mxu0 0.0
        %5196 = vmatpush.xpose.msra.mxu0 0.0
        %5197 = vmatpush.xpose.msra.mxu0 0.0
        %5198 = vmatpush.xpose.msra.mxu0 0.0
        %5199 = vmatpush.xpose.msra.mxu0 0.0
        %5200 = vmatpush.xpose.msra.mxu0 0.0
        %5201 = vmatpush.xpose.msra.mxu0 0.0
        %5202 = vmatpush.xpose.msra.mxu0 0.0
        %5203 = vmatpush.xpose.msra.mxu0 0.0
        %5204 = vmatpush.xpose.msra.mxu0 0.0
        %5205 = vmatpush.xpose.msra.mxu0 0.0
        %5206 = vmatpush.xpose.msra.mxu0 %v5189
        %5207 = vmatmul.f32.gmra.mxu0 %v5187
        %v5208 = vpop.f32.mrf.mxu0
        %v5209 = vadd.f32 0.0, %v5208
        %5210 = vdwg.mxu0
        %5211 = vrot.lane.b32.xlu0 %v2327, 112
        %v5212 = vpop.permute.xlu0 %5211
        %5213 = vrot.lane.b32.xlu0 %v2119, 112
        %v5214 = vpop.permute.xlu0 %5213
        %v5215 = vsel %vm2356, %v5212, 0
        %v5217 = vsel %vm2356, %v5214, 0
        %5219 = vmatpush.xpose.msra.mxu0 0.0
        %5220 = vmatpush.xpose.msra.mxu0 0.0
        %5221 = vmatpush.xpose.msra.mxu0 0.0
        %5222 = vmatpush.xpose.msra.mxu0 0.0
        %5223 = vmatpush.xpose.msra.mxu0 0.0
        %5224 = vmatpush.xpose.msra.mxu0 0.0
        %5225 = vmatpush.xpose.msra.mxu0 0.0
        %5226 = vmatpush.xpose.msra.mxu0 0.0
        %5227 = vmatpush.xpose.msra.mxu0 0.0
        %5228 = vmatpush.xpose.msra.mxu0 0.0
        %5229 = vmatpush.xpose.msra.mxu0 0.0
        %5230 = vmatpush.xpose.msra.mxu0 0.0
        %5231 = vmatpush.xpose.msra.mxu0 0.0
        %5232 = vmatpush.xpose.msra.mxu0 0.0
        %5233 = vmatpush.xpose.msra.mxu0 0.0
        %5234 = vmatpush.xpose.msra.mxu0 %v5217
        %5235 = vmatmul.f32.gmra.mxu0 %v5215
        %v5236 = vpop.f32.mrf.mxu0
        %v5237 = vadd.f32 0.0, %v5236
        %5238 = vdwg.mxu0
        %5239 = vrot.lane.b32.xlu0 %v2328, 112
        %v5240 = vpop.permute.xlu0 %5239
        %5241 = vrot.lane.b32.xlu0 %v2120, 112
        %v5242 = vpop.permute.xlu0 %5241
        %v5243 = vsel %vm2356, %v5240, 0
        %v5245 = vsel %vm2356, %v5242, 0
        %5247 = vmatpush.xpose.msra.mxu0 0.0
        %5248 = vmatpush.xpose.msra.mxu0 0.0
        %5249 = vmatpush.xpose.msra.mxu0 0.0
        %5250 = vmatpush.xpose.msra.mxu0 0.0
        %5251 = vmatpush.xpose.msra.mxu0 0.0
        %5252 = vmatpush.xpose.msra.mxu0 0.0
        %5253 = vmatpush.xpose.msra.mxu0 0.0
        %5254 = vmatpush.xpose.msra.mxu0 0.0
        %5255 = vmatpush.xpose.msra.mxu0 0.0
        %5256 = vmatpush.xpose.msra.mxu0 0.0
        %5257 = vmatpush.xpose.msra.mxu0 0.0
        %5258 = vmatpush.xpose.msra.mxu0 0.0
        %5259 = vmatpush.xpose.msra.mxu0 0.0
        %5260 = vmatpush.xpose.msra.mxu0 0.0
        %5261 = vmatpush.xpose.msra.mxu0 0.0
        %5262 = vmatpush.xpose.msra.mxu0 %v5245
        %5263 = vmatmul.f32.gmra.mxu0 %v5243
        %v5264 = vpop.f32.mrf.mxu0
        %v5265 = vadd.f32 0.0, %v5264
        %5266 = vdwg.mxu0
        %5267 = vrot.lane.b32.xlu0 %v2329, 112
        %v5268 = vpop.permute.xlu0 %5267
        %5269 = vrot.lane.b32.xlu0 %v2121, 112
        %v5270 = vpop.permute.xlu0 %5269
        %v5271 = vsel %vm2356, %v5268, 0
        %v5273 = vsel %vm2356, %v5270, 0
        %5275 = vmatpush.xpose.msra.mxu0 0.0
        %5276 = vmatpush.xpose.msra.mxu0 0.0
        %5277 = vmatpush.xpose.msra.mxu0 0.0
        %5278 = vmatpush.xpose.msra.mxu0 0.0
        %5279 = vmatpush.xpose.msra.mxu0 0.0
        %5280 = vmatpush.xpose.msra.mxu0 0.0
        %5281 = vmatpush.xpose.msra.mxu0 0.0
        %5282 = vmatpush.xpose.msra.mxu0 0.0
        %5283 = vmatpush.xpose.msra.mxu0 0.0
        %5284 = vmatpush.xpose.msra.mxu0 0.0
        %5285 = vmatpush.xpose.msra.mxu0 0.0
        %5286 = vmatpush.xpose.msra.mxu0 0.0
        %5287 = vmatpush.xpose.msra.mxu0 0.0
        %5288 = vmatpush.xpose.msra.mxu0 0.0
        %5289 = vmatpush.xpose.msra.mxu0 0.0
        %5290 = vmatpush.xpose.msra.mxu0 %v5273
        %5291 = vmatmul.f32.gmra.mxu0 %v5271
        %v5292 = vpop.f32.mrf.mxu0
        %v5293 = vadd.f32 0.0, %v5292
        %5294 = vdwg.mxu0
        %5295 = vrot.lane.b32.xlu0 %v2330, 112
        %v5296 = vpop.permute.xlu0 %5295
        %5297 = vrot.lane.b32.xlu0 %v2122, 112
        %v5298 = vpop.permute.xlu0 %5297
        %v5299 = vsel %vm2356, %v5296, 0
        %v5301 = vsel %vm2356, %v5298, 0
        %5303 = vmatpush.xpose.msra.mxu0 0.0
        %5304 = vmatpush.xpose.msra.mxu0 0.0
        %5305 = vmatpush.xpose.msra.mxu0 0.0
        %5306 = vmatpush.xpose.msra.mxu0 0.0
        %5307 = vmatpush.xpose.msra.mxu0 0.0
        %5308 = vmatpush.xpose.msra.mxu0 0.0
        %5309 = vmatpush.xpose.msra.mxu0 0.0
        %5310 = vmatpush.xpose.msra.mxu0 0.0
        %5311 = vmatpush.xpose.msra.mxu0 0.0
        %5312 = vmatpush.xpose.msra.mxu0 0.0
        %5313 = vmatpush.xpose.msra.mxu0 0.0
        %5314 = vmatpush.xpose.msra.mxu0 0.0
        %5315 = vmatpush.xpose.msra.mxu0 0.0
        %5316 = vmatpush.xpose.msra.mxu0 0.0
        %5317 = vmatpush.xpose.msra.mxu0 0.0
        %5318 = vmatpush.xpose.msra.mxu0 %v5301
        %5319 = vmatmul.f32.gmra.mxu0 %v5299
        %v5320 = vpop.f32.mrf.mxu0
        %v5321 = vadd.f32 0.0, %v5320
        %5322 = vdwg.mxu0
        %5323 = vrot.lane.b32.xlu0 %v2331, 112
        %v5324 = vpop.permute.xlu0 %5323
        %5325 = vrot.lane.b32.xlu0 %v2123, 112
        %v5326 = vpop.permute.xlu0 %5325
        %v5327 = vsel %vm2356, %v5324, 0
        %v5329 = vsel %vm2356, %v5326, 0
        %5331 = vmatpush.xpose.msra.mxu0 0.0
        %5332 = vmatpush.xpose.msra.mxu0 0.0
        %5333 = vmatpush.xpose.msra.mxu0 0.0
        %5334 = vmatpush.xpose.msra.mxu0 0.0
        %5335 = vmatpush.xpose.msra.mxu0 0.0
        %5336 = vmatpush.xpose.msra.mxu0 0.0
        %5337 = vmatpush.xpose.msra.mxu0 0.0
        %5338 = vmatpush.xpose.msra.mxu0 0.0
        %5339 = vmatpush.xpose.msra.mxu0 0.0
        %5340 = vmatpush.xpose.msra.mxu0 0.0
        %5341 = vmatpush.xpose.msra.mxu0 0.0
        %5342 = vmatpush.xpose.msra.mxu0 0.0
        %5343 = vmatpush.xpose.msra.mxu0 0.0
        %5344 = vmatpush.xpose.msra.mxu0 0.0
        %5345 = vmatpush.xpose.msra.mxu0 0.0
        %5346 = vmatpush.xpose.msra.mxu0 %v5329
        %5347 = vmatmul.f32.gmra.mxu0 %v5327
        %v5348 = vpop.f32.mrf.mxu0
        %v5349 = vadd.f32 0.0, %v5348
        %5350 = vdwg.mxu0
        %5351 = vrot.lane.b32.xlu0 %v2332, 112
        %v5352 = vpop.permute.xlu0 %5351
        %5353 = vrot.lane.b32.xlu0 %v2124, 112
        %v5354 = vpop.permute.xlu0 %5353
        %v5355 = vsel %vm2356, %v5352, 0
        %v5357 = vsel %vm2356, %v5354, 0
        %5359 = vmatpush.xpose.msra.mxu0 0.0
        %5360 = vmatpush.xpose.msra.mxu0 0.0
        %5361 = vmatpush.xpose.msra.mxu0 0.0
        %5362 = vmatpush.xpose.msra.mxu0 0.0
        %5363 = vmatpush.xpose.msra.mxu0 0.0
        %5364 = vmatpush.xpose.msra.mxu0 0.0
        %5365 = vmatpush.xpose.msra.mxu0 0.0
        %5366 = vmatpush.xpose.msra.mxu0 0.0
        %5367 = vmatpush.xpose.msra.mxu0 0.0
        %5368 = vmatpush.xpose.msra.mxu0 0.0
        %5369 = vmatpush.xpose.msra.mxu0 0.0
        %5370 = vmatpush.xpose.msra.mxu0 0.0
        %5371 = vmatpush.xpose.msra.mxu0 0.0
        %5372 = vmatpush.xpose.msra.mxu0 0.0
        %5373 = vmatpush.xpose.msra.mxu0 0.0
        %5374 = vmatpush.xpose.msra.mxu0 %v5357
        %5375 = vmatmul.f32.gmra.mxu0 %v5355
        %v5376 = vpop.f32.mrf.mxu0
        %v5377 = vadd.f32 0.0, %v5376
        %5378 = vdwg.mxu0
        %v5379 = vsel %vm2356, %v4957, -inf
        %5380 = vmax.xlane.f32.xlu0 %v5379
        %v5381 = vpop.xlane.xlu0 %5380
        %v5382 = vsel %vm2356, %v4985, -inf
        %5383 = vmax.xlane.f32.xlu0 %v5382
        %v5384 = vpop.xlane.xlu0 %5383
        %v5385 = vsel %vm2356, %v5013, -inf
        %5386 = vmax.xlane.f32.xlu0 %v5385
        %v5387 = vpop.xlane.xlu0 %5386
        %v5388 = vsel %vm2356, %v5041, -inf
        %5389 = vmax.xlane.f32.xlu0 %v5388
        %v5390 = vpop.xlane.xlu0 %5389
        %v5391 = vsel %vm2356, %v5069, -inf
        %5392 = vmax.xlane.f32.xlu0 %v5391
        %v5393 = vpop.xlane.xlu0 %5392
        %v5394 = vsel %vm2356, %v5097, -inf
        %5395 = vmax.xlane.f32.xlu0 %v5394
        %v5396 = vpop.xlane.xlu0 %5395
        %v5397 = vsel %vm2356, %v5125, -inf
        %5398 = vmax.xlane.f32.xlu0 %v5397
        %v5399 = vpop.xlane.xlu0 %5398
        %v5400 = vsel %vm2356, %v5153, -inf
        %5401 = vmax.xlane.f32.xlu0 %v5400
        %v5402 = vpop.xlane.xlu0 %5401
        %v5403 = vsel %vm2356, %v5181, -inf
        %5404 = vmax.xlane.f32.xlu0 %v5403
        %v5405 = vpop.xlane.xlu0 %5404
        %v5406 = vsel %vm2356, %v5209, -inf
        %5407 = vmax.xlane.f32.xlu0 %v5406
        %v5408 = vpop.xlane.xlu0 %5407
        %v5409 = vsel %vm2356, %v5237, -inf
        %5410 = vmax.xlane.f32.xlu0 %v5409
        %v5411 = vpop.xlane.xlu0 %5410
        %v5412 = vsel %vm2356, %v5265, -inf
        %5413 = vmax.xlane.f32.xlu0 %v5412
        %v5414 = vpop.xlane.xlu0 %5413
        %v5415 = vsel %vm2356, %v5293, -inf
        %5416 = vmax.xlane.f32.xlu0 %v5415
        %v5417 = vpop.xlane.xlu0 %5416
        %v5418 = vsel %vm2356, %v5321, -inf
        %5419 = vmax.xlane.f32.xlu0 %v5418
        %v5420 = vpop.xlane.xlu0 %5419
        %v5421 = vsel %vm2356, %v5349, -inf
        %5422 = vmax.xlane.f32.xlu0 %v5421
        %v5423 = vpop.xlane.xlu0 %5422
        %v5424 = vsel %vm2356, %v5377, -inf
        %5425 = vmax.xlane.f32.xlu0 %v5424
        %v5426 = vpop.xlane.xlu0 %5425
        %v5427 = vsub.f32 %v4957, %v5381
        %v5428 = vsub.f32 %v4985, %v5384
        %v5429 = vsub.f32 %v5013, %v5387
        %v5430 = vsub.f32 %v5041, %v5390
        %v5431 = vsub.f32 %v5069, %v5393
        %v5432 = vsub.f32 %v5097, %v5396
        %v5433 = vsub.f32 %v5125, %v5399
        %v5434 = vsub.f32 %v5153, %v5402
        %v5435 = vsub.f32 %v5181, %v5405
        %v5436 = vsub.f32 %v5209, %v5408
        %v5437 = vsub.f32 %v5237, %v5411
        %v5438 = vsub.f32 %v5265, %v5414
        %v5439 = vsub.f32 %v5293, %v5417
        %v5440 = vsub.f32 %v5321, %v5420
        %v5441 = vsub.f32 %v5349, %v5423
        %v5442 = vsub.f32 %v5377, %v5426
        %v5443 = vmul.f32 %v5427, 1.442695
        %v5444 = vpow.pop %v5443
        %v5445 = vmul.f32 %v5428, 1.442695
        %v5446 = vpow.pop %v5445
        %v5447 = vmul.f32 %v5429, 1.442695
        %v5448 = vpow.pop %v5447
        %v5449 = vmul.f32 %v5430, 1.442695
        %v5450 = vpow.pop %v5449
        %v5451 = vmul.f32 %v5431, 1.442695
        %v5452 = vpow.pop %v5451
        %v5453 = vmul.f32 %v5432, 1.442695
        %v5454 = vpow.pop %v5453
        %v5455 = vmul.f32 %v5433, 1.442695
        %v5456 = vpow.pop %v5455
        %v5457 = vmul.f32 %v5434, 1.442695
        %v5458 = vpow.pop %v5457
        %v5459 = vmul.f32 %v5435, 1.442695
        %v5460 = vpow.pop %v5459
        %v5461 = vmul.f32 %v5436, 1.442695
        %v5462 = vpow.pop %v5461
        %v5463 = vmul.f32 %v5437, 1.442695
        %v5464 = vpow.pop %v5463
        %v5465 = vmul.f32 %v5438, 1.442695
        %v5466 = vpow.pop %v5465
        %v5467 = vmul.f32 %v5439, 1.442695
        %v5468 = vpow.pop %v5467
        %v5469 = vmul.f32 %v5440, 1.442695
        %v5470 = vpow.pop %v5469
        %v5471 = vmul.f32 %v5441, 1.442695
        %v5472 = vpow.pop %v5471
        %v5473 = vmul.f32 %v5442, 1.442695
        %v5474 = vpow.pop %v5473
        %v5475 = vsel %vm2356, %v5444, 0.0
        %5476 = vadd.xlane.f32.xlu0 %v5475
        %v5477 = vpop.xlane.xlu0 %5476
        %v5478 = vsel %vm2356, %v5446, 0.0
        %5479 = vadd.xlane.f32.xlu0 %v5478
        %v5480 = vpop.xlane.xlu0 %5479
        %v5481 = vsel %vm2356, %v5448, 0.0
        %5482 = vadd.xlane.f32.xlu0 %v5481
        %v5483 = vpop.xlane.xlu0 %5482
        %v5484 = vsel %vm2356, %v5450, 0.0
        %5485 = vadd.xlane.f32.xlu0 %v5484
        %v5486 = vpop.xlane.xlu0 %5485
        %v5487 = vsel %vm2356, %v5452, 0.0
        %5488 = vadd.xlane.f32.xlu0 %v5487
        %v5489 = vpop.xlane.xlu0 %5488
        %v5490 = vsel %vm2356, %v5454, 0.0
        %5491 = vadd.xlane.f32.xlu0 %v5490
        %v5492 = vpop.xlane.xlu0 %5491
        %v5493 = vsel %vm2356, %v5456, 0.0
        %5494 = vadd.xlane.f32.xlu0 %v5493
        %v5495 = vpop.xlane.xlu0 %5494
        %v5496 = vsel %vm2356, %v5458, 0.0
        %5497 = vadd.xlane.f32.xlu0 %v5496
        %v5498 = vpop.xlane.xlu0 %5497
        %v5499 = vsel %vm2356, %v5460, 0.0
        %5500 = vadd.xlane.f32.xlu0 %v5499
        %v5501 = vpop.xlane.xlu0 %5500
        %v5502 = vsel %vm2356, %v5462, 0.0
        %5503 = vadd.xlane.f32.xlu0 %v5502
        %v5504 = vpop.xlane.xlu0 %5503
        %v5505 = vsel %vm2356, %v5464, 0.0
        %5506 = vadd.xlane.f32.xlu0 %v5505
        %v5507 = vpop.xlane.xlu0 %5506
        %v5508 = vsel %vm2356, %v5466, 0.0
        %5509 = vadd.xlane.f32.xlu0 %v5508
        %v5510 = vpop.xlane.xlu0 %5509
        %v5511 = vsel %vm2356, %v5468, 0.0
        %5512 = vadd.xlane.f32.xlu0 %v5511
        %v5513 = vpop.xlane.xlu0 %5512
        %v5514 = vsel %vm2356, %v5470, 0.0
        %5515 = vadd.xlane.f32.xlu0 %v5514
        %v5516 = vpop.xlane.xlu0 %5515
        %v5517 = vsel %vm2356, %v5472, 0.0
        %5518 = vadd.xlane.f32.xlu0 %v5517
        %v5519 = vpop.xlane.xlu0 %5518
        %v5520 = vsel %vm2356, %v5474, 0.0
        %5521 = vadd.xlane.f32.xlu0 %v5520
        %v5522 = vpop.xlane.xlu0 %5521
        %v5523 = vrcp.pop %v5477
        %v5524 = vrcp.pop %v5480
        %v5525 = vrcp.pop %v5483
        %v5526 = vrcp.pop %v5486
        %v5527 = vrcp.pop %v5489
        %v5528 = vrcp.pop %v5492
        %v5529 = vrcp.pop %v5495
        %v5530 = vrcp.pop %v5498
        %v5531 = vrcp.pop %v5501
        %v5532 = vrcp.pop %v5504
        %v5533 = vrcp.pop %v5507
        %v5534 = vrcp.pop %v5510
        %v5535 = vrcp.pop %v5513
        %v5536 = vrcp.pop %v5516
        %v5537 = vrcp.pop %v5519
        %v5538 = vrcp.pop %v5522
        %v5539 = vmul.f32 %v5444, %v5523
        %v5540 = vmul.f32 %v5446, %v5524
        %v5541 = vmul.f32 %v5448, %v5525
        %v5542 = vmul.f32 %v5450, %v5526
        %v5543 = vmul.f32 %v5452, %v5527
        %v5544 = vmul.f32 %v5454, %v5528
        %v5545 = vmul.f32 %v5456, %v5529
        %v5546 = vmul.f32 %v5458, %v5530
        %v5547 = vmul.f32 %v5460, %v5531
        %v5548 = vmul.f32 %v5462, %v5532
        %v5549 = vmul.f32 %v5464, %v5533
        %v5550 = vmul.f32 %v5466, %v5534
        %v5551 = vmul.f32 %v5468, %v5535
        %v5552 = vmul.f32 %v5470, %v5536
        %v5553 = vmul.f32 %v5472, %v5537
        %v5554 = vmul.f32 %v5474, %v5538
        %v5556 = vsel %vm2356, %v5539, 0
        %v5559 = vsel %vm2356, %v5540, 0
        %v5562 = vsel %vm2356, %v5541, 0
        %v5565 = vsel %vm2356, %v5542, 0
        %v5568 = vsel %vm2356, %v5543, 0
        %v5571 = vsel %vm2356, %v5544, 0
        %v5574 = vsel %vm2356, %v5545, 0
        %v5577 = vsel %vm2356, %v5546, 0
        %v5580 = vsel %vm2356, %v5547, 0
        %v5583 = vsel %vm2356, %v5548, 0
        %v5586 = vsel %vm2356, %v5549, 0
        %v5589 = vsel %vm2356, %v5550, 0
        %v5592 = vsel %vm2356, %v5551, 0
        %v5595 = vsel %vm2356, %v5552, 0
        %v5598 = vsel %vm2356, %v5553, 0
        %v5601 = vsel %vm2356, %v5554, 0
        %5603 = vmatpush.msra.mxu0 0.0
        %5604 = vmatpush.msra.mxu0 0.0
        %5605 = vmatpush.msra.mxu0 0.0
        %5606 = vmatpush.msra.mxu0 0.0
        %5607 = vmatpush.msra.mxu0 0.0
        %5608 = vmatpush.msra.mxu0 0.0
        %5609 = vmatpush.msra.mxu0 0.0
        %5610 = vmatpush.msra.mxu0 0.0
        %5611 = vmatpush.msra.mxu0 0.0
        %5612 = vmatpush.msra.mxu0 0.0
        %5613 = vmatpush.msra.mxu0 0.0
        %5614 = vmatpush.msra.mxu0 0.0
        %5615 = vmatpush.msra.mxu0 0.0
        %5616 = vmatpush.msra.mxu0 0.0
        %5617 = vmatpush.msra.mxu0 0.0
        %5618 = vmatpush.msra.mxu0 %v2353
        %5619 = vmatmul.f32.gmra.mxu0 %v5556
        %v5620 = vpop.f32.mrf.mxu0
        %v5621 = vadd.f32 0.0, %v5620
        %5622 = vmatmul.f32.gmra.mxu0 %v5559
        %v5623 = vpop.f32.mrf.mxu0
        %v5624 = vadd.f32 0.0, %v5623
        %5625 = vmatmul.f32.gmra.mxu0 %v5562
        %v5626 = vpop.f32.mrf.mxu0
        %v5627 = vadd.f32 0.0, %v5626
        %5628 = vmatmul.f32.gmra.mxu0 %v5565
        %v5629 = vpop.f32.mrf.mxu0
        %v5630 = vadd.f32 0.0, %v5629
        %5631 = vmatmul.f32.gmra.mxu0 %v5568
        %v5632 = vpop.f32.mrf.mxu0
        %v5633 = vadd.f32 0.0, %v5632
        %5634 = vmatmul.f32.gmra.mxu0 %v5571
        %v5635 = vpop.f32.mrf.mxu0
        %v5636 = vadd.f32 0.0, %v5635
        %5637 = vmatmul.f32.gmra.mxu0 %v5574
        %v5638 = vpop.f32.mrf.mxu0
        %v5639 = vadd.f32 0.0, %v5638
        %5640 = vmatmul.f32.gmra.mxu0 %v5577
        %v5641 = vpop.f32.mrf.mxu0
        %v5642 = vadd.f32 0.0, %v5641
        %5643 = vmatmul.f32.gmra.mxu0 %v5580
        %v5644 = vpop.f32.mrf.mxu0
        %v5645 = vadd.f32 0.0, %v5644
        %5646 = vmatmul.f32.gmra.mxu0 %v5583
        %v5647 = vpop.f32.mrf.mxu0
        %v5648 = vadd.f32 0.0, %v5647
        %5649 = vmatmul.f32.gmra.mxu0 %v5586
        %v5650 = vpop.f32.mrf.mxu0
        %v5651 = vadd.f32 0.0, %v5650
        %5652 = vmatmul.f32.gmra.mxu0 %v5589
        %v5653 = vpop.f32.mrf.mxu0
        %v5654 = vadd.f32 0.0, %v5653
        %5655 = vmatmul.f32.gmra.mxu0 %v5592
        %v5656 = vpop.f32.mrf.mxu0
        %v5657 = vadd.f32 0.0, %v5656
        %5658 = vmatmul.f32.gmra.mxu0 %v5595
        %v5659 = vpop.f32.mrf.mxu0
        %v5660 = vadd.f32 0.0, %v5659
        %5661 = vmatmul.f32.gmra.mxu0 %v5598
        %v5662 = vpop.f32.mrf.mxu0
        %v5663 = vadd.f32 0.0, %v5662
        %5664 = vmatmul.f32.gmra.mxu0 %v5601
        %v5665 = vpop.f32.mrf.mxu0
        %v5666 = vadd.f32 0.0, %v5665
        %5667 = vdwg.mxu0
        %v5668 = vmul.f32 %v5621, %v2354
        %v5669 = vmul.f32 %v5624, %v2355
        %v5670 = vmul.f32 %v5627, %v2354
        %v5671 = vmul.f32 %v5630, %v2355
        %v5672 = vmul.f32 %v5633, %v2354
        %v5673 = vmul.f32 %v5636, %v2355
        %v5674 = vmul.f32 %v5639, %v2354
        %v5675 = vmul.f32 %v5642, %v2355
        %v5676 = vmul.f32 %v5645, %v2354
        %v5677 = vmul.f32 %v5648, %v2355
        %v5678 = vmul.f32 %v5651, %v2354
        %v5679 = vmul.f32 %v5654, %v2355
        %v5680 = vmul.f32 %v5657, %v2354
        %v5681 = vmul.f32 %v5660, %v2355
        %v5682 = vmul.f32 %v5663, %v2354
        %v5683 = vmul.f32 %v5666, %v2355
        %v5684 = vadd.f32 %v5668, %v5669
        %v5685 = vrot.slane %v5684, 4
        %v5686 = vadd.f32 %v5684, %v5685
        %v5687 = vrot.slane %v5686, 2
        %v5688 = vadd.f32 %v5686, %v5687
        %v5689 = vrot.slane %v5688, 1
        %v5690 = vadd.f32 %v5688, %v5689
        %v5691 = vadd.f32 %v5670, %v5671
        %v5692 = vrot.slane %v5691, 4
        %v5693 = vadd.f32 %v5691, %v5692
        %v5694 = vrot.slane %v5693, 2
        %v5695 = vadd.f32 %v5693, %v5694
        %v5696 = vrot.slane %v5695, 1
        %v5697 = vadd.f32 %v5695, %v5696
        %v5698 = vadd.f32 %v5672, %v5673
        %v5699 = vrot.slane %v5698, 4
        %v5700 = vadd.f32 %v5698, %v5699
        %v5701 = vrot.slane %v5700, 2
        %v5702 = vadd.f32 %v5700, %v5701
        %v5703 = vrot.slane %v5702, 1
        %v5704 = vadd.f32 %v5702, %v5703
        %v5705 = vadd.f32 %v5674, %v5675
        %v5706 = vrot.slane %v5705, 4
        %v5707 = vadd.f32 %v5705, %v5706
        %v5708 = vrot.slane %v5707, 2
        %v5709 = vadd.f32 %v5707, %v5708
        %v5710 = vrot.slane %v5709, 1
        %v5711 = vadd.f32 %v5709, %v5710
        %v5712 = vadd.f32 %v5676, %v5677
        %v5713 = vrot.slane %v5712, 4
        %v5714 = vadd.f32 %v5712, %v5713
        %v5715 = vrot.slane %v5714, 2
        %v5716 = vadd.f32 %v5714, %v5715
        %v5717 = vrot.slane %v5716, 1
        %v5718 = vadd.f32 %v5716, %v5717
        %v5719 = vadd.f32 %v5678, %v5679
        %v5720 = vrot.slane %v5719, 4
        %v5721 = vadd.f32 %v5719, %v5720
        %v5722 = vrot.slane %v5721, 2
        %v5723 = vadd.f32 %v5721, %v5722
        %v5724 = vrot.slane %v5723, 1
        %v5725 = vadd.f32 %v5723, %v5724
        %v5726 = vadd.f32 %v5680, %v5681
        %v5727 = vrot.slane %v5726, 4
        %v5728 = vadd.f32 %v5726, %v5727
        %v5729 = vrot.slane %v5728, 2
        %v5730 = vadd.f32 %v5728, %v5729
        %v5731 = vrot.slane %v5730, 1
        %v5732 = vadd.f32 %v5730, %v5731
        %v5733 = vadd.f32 %v5682, %v5683
        %v5734 = vrot.slane %v5733, 4
        %v5735 = vadd.f32 %v5733, %v5734
        %v5736 = vrot.slane %v5735, 2
        %v5737 = vadd.f32 %v5735, %v5736
        %v5738 = vrot.slane %v5737, 1
        %v5739 = vadd.f32 %v5737, %v5738
        %v5748 = vsel %vm696, %v5697, %v5690
        %v5749 = vsel %vm698, %v5704, %v5748
        %v5750 = vsel %vm700, %v5711, %v5749
        %v5751 = vsel %vm702, %v5718, %v5750
        %v5752 = vsel %vm704, %v5725, %v5751
        %v5753 = vsel %vm706, %v5732, %v5752
        %v5754 = vsel %vm708, %v5739, %v5753
        %s5756 = scalar_lea.vmem %s574, 16 [#allocation18]
        %5757 = vst [vmem:[%s5756] sm:$0xff] %v5754
        %v5758 = vpack.c.bf16 %v5539, %v5539
        %v5759 = vpack.c.bf16 %v5540, %v5540
        %v5760 = vpack.c.bf16 %v5541, %v5541
        %v5761 = vpack.c.bf16 %v5542, %v5542
        %v5762 = vpack.c.bf16 %v5543, %v5543
        %v5763 = vpack.c.bf16 %v5544, %v5544
        %v5764 = vpack.c.bf16 %v5545, %v5545
        %v5765 = vpack.c.bf16 %v5546, %v5546
        %v5766 = vpack.c.bf16 %v5547, %v5547
        %v5767 = vpack.c.bf16 %v5548, %v5548
        %v5768 = vpack.c.bf16 %v5549, %v5549
        %v5769 = vpack.c.bf16 %v5550, %v5550
        %v5770 = vpack.c.bf16 %v5551, %v5551
        %v5771 = vpack.c.bf16 %v5552, %v5552
        %v5772 = vpack.c.bf16 %v5553, %v5553
        %v5773 = vpack.c.bf16 %v5554, %v5554
        %5774 = vrot.lane.b32.xlu0 %v3169, 80
        %v5775 = vpop.permute.xlu0 %5774
        %v5777 = vsel %vm2356, %v5758, 0
        %v5780 = vsel %vm3175, %v5775, 0
        %5782 = vmatpush.bf16.msra.mxu0 0
        %5783 = vmatpush.bf16.msra.mxu0 0
        %5784 = vmatpush.bf16.msra.mxu0 0
        %5785 = vmatpush.bf16.msra.mxu0 0
        %5786 = vmatpush.bf16.msra.mxu0 0
        %5787 = vmatpush.bf16.msra.mxu0 0
        %5788 = vmatpush.bf16.msra.mxu0 0
        %5789 = vmatpush.bf16.msra.mxu0 %v5780
        %5790 = vmatmul.bf16.gmra.mxu0 %v5777
        %v5791 = vpop.f32.mrf.mxu0
        %v5792 = vadd.f32 0.0, %v5791
        %v5793 = vpop.f32.mrf.mxu0
        %5794 = vdwg.mxu0
        %5795 = vrot.lane.b32.xlu0 %v3194, 80
        %v5796 = vpop.permute.xlu0 %5795
        %v5798 = vsel %vm2356, %v5759, 0
        %v5801 = vsel %vm3175, %v5796, 0
        %5803 = vmatpush.bf16.msra.mxu0 0
        %5804 = vmatpush.bf16.msra.mxu0 0
        %5805 = vmatpush.bf16.msra.mxu0 0
        %5806 = vmatpush.bf16.msra.mxu0 0
        %5807 = vmatpush.bf16.msra.mxu0 0
        %5808 = vmatpush.bf16.msra.mxu0 0
        %5809 = vmatpush.bf16.msra.mxu0 0
        %5810 = vmatpush.bf16.msra.mxu0 %v5801
        %5811 = vmatmul.bf16.gmra.mxu0 %v5798
        %v5812 = vpop.f32.mrf.mxu0
        %v5813 = vadd.f32 0.0, %v5812
        %v5814 = vpop.f32.mrf.mxu0
        %5815 = vdwg.mxu0
        %5816 = vrot.lane.b32.xlu0 %v3218, 80
        %v5817 = vpop.permute.xlu0 %5816
        %v5819 = vsel %vm2356, %v5760, 0
        %v5822 = vsel %vm3175, %v5817, 0
        %5824 = vmatpush.bf16.msra.mxu0 0
        %5825 = vmatpush.bf16.msra.mxu0 0
        %5826 = vmatpush.bf16.msra.mxu0 0
        %5827 = vmatpush.bf16.msra.mxu0 0
        %5828 = vmatpush.bf16.msra.mxu0 0
        %5829 = vmatpush.bf16.msra.mxu0 0
        %5830 = vmatpush.bf16.msra.mxu0 0
        %5831 = vmatpush.bf16.msra.mxu0 %v5822
        %5832 = vmatmul.bf16.gmra.mxu0 %v5819
        %v5833 = vpop.f32.mrf.mxu0
        %v5834 = vadd.f32 0.0, %v5833
        %v5835 = vpop.f32.mrf.mxu0
        %5836 = vdwg.mxu0
        %5837 = vrot.lane.b32.xlu0 %v3242, 80
        %v5838 = vpop.permute.xlu0 %5837
        %v5840 = vsel %vm2356, %v5761, 0
        %v5843 = vsel %vm3175, %v5838, 0
        %5845 = vmatpush.bf16.msra.mxu0 0
        %5846 = vmatpush.bf16.msra.mxu0 0
        %5847 = vmatpush.bf16.msra.mxu0 0
        %5848 = vmatpush.bf16.msra.mxu0 0
        %5849 = vmatpush.bf16.msra.mxu0 0
        %5850 = vmatpush.bf16.msra.mxu0 0
        %5851 = vmatpush.bf16.msra.mxu0 0
        %5852 = vmatpush.bf16.msra.mxu0 %v5843
        %5853 = vmatmul.bf16.gmra.mxu0 %v5840
        %v5854 = vpop.f32.mrf.mxu0
        %v5855 = vadd.f32 0.0, %v5854
        %v5856 = vpop.f32.mrf.mxu0
        %5857 = vdwg.mxu0
        %5858 = vrot.lane.b32.xlu0 %v3266, 80
        %v5859 = vpop.permute.xlu0 %5858
        %v5861 = vsel %vm2356, %v5762, 0
        %v5864 = vsel %vm3175, %v5859, 0
        %5866 = vmatpush.bf16.msra.mxu0 0
        %5867 = vmatpush.bf16.msra.mxu0 0
        %5868 = vmatpush.bf16.msra.mxu0 0
        %5869 = vmatpush.bf16.msra.mxu0 0
        %5870 = vmatpush.bf16.msra.mxu0 0
        %5871 = vmatpush.bf16.msra.mxu0 0
        %5872 = vmatpush.bf16.msra.mxu0 0
        %5873 = vmatpush.bf16.msra.mxu0 %v5864
        %5874 = vmatmul.bf16.gmra.mxu0 %v5861
        %v5875 = vpop.f32.mrf.mxu0
        %v5876 = vadd.f32 0.0, %v5875
        %v5877 = vpop.f32.mrf.mxu0
        %5878 = vdwg.mxu0
        %5879 = vrot.lane.b32.xlu0 %v3290, 80
        %v5880 = vpop.permute.xlu0 %5879
        %v5882 = vsel %vm2356, %v5763, 0
        %v5885 = vsel %vm3175, %v5880, 0
        %5887 = vmatpush.bf16.msra.mxu0 0
        %5888 = vmatpush.bf16.msra.mxu0 0
        %5889 = vmatpush.bf16.msra.mxu0 0
        %5890 = vmatpush.bf16.msra.mxu0 0
        %5891 = vmatpush.bf16.msra.mxu0 0
        %5892 = vmatpush.bf16.msra.mxu0 0
        %5893 = vmatpush.bf16.msra.mxu0 0
        %5894 = vmatpush.bf16.msra.mxu0 %v5885
        %5895 = vmatmul.bf16.gmra.mxu0 %v5882
        %v5896 = vpop.f32.mrf.mxu0
        %v5897 = vadd.f32 0.0, %v5896
        %v5898 = vpop.f32.mrf.mxu0
        %5899 = vdwg.mxu0
        %5900 = vrot.lane.b32.xlu0 %v3314, 80
        %v5901 = vpop.permute.xlu0 %5900
        %v5903 = vsel %vm2356, %v5764, 0
        %v5906 = vsel %vm3175, %v5901, 0
        %5908 = vmatpush.bf16.msra.mxu0 0
        %5909 = vmatpush.bf16.msra.mxu0 0
        %5910 = vmatpush.bf16.msra.mxu0 0
        %5911 = vmatpush.bf16.msra.mxu0 0
        %5912 = vmatpush.bf16.msra.mxu0 0
        %5913 = vmatpush.bf16.msra.mxu0 0
        %5914 = vmatpush.bf16.msra.mxu0 0
        %5915 = vmatpush.bf16.msra.mxu0 %v5906
        %5916 = vmatmul.bf16.gmra.mxu0 %v5903
        %v5917 = vpop.f32.mrf.mxu0
        %v5918 = vadd.f32 0.0, %v5917
        %v5919 = vpop.f32.mrf.mxu0
        %5920 = vdwg.mxu0
        %5921 = vrot.lane.b32.xlu0 %v3338, 80
        %v5922 = vpop.permute.xlu0 %5921
        %v5924 = vsel %vm2356, %v5765, 0
        %v5927 = vsel %vm3175, %v5922, 0
        %5929 = vmatpush.bf16.msra.mxu0 0
        %5930 = vmatpush.bf16.msra.mxu0 0
        %5931 = vmatpush.bf16.msra.mxu0 0
        %5932 = vmatpush.bf16.msra.mxu0 0
        %5933 = vmatpush.bf16.msra.mxu0 0
        %5934 = vmatpush.bf16.msra.mxu0 0
        %5935 = vmatpush.bf16.msra.mxu0 0
        %5936 = vmatpush.bf16.msra.mxu0 %v5927
        %5937 = vmatmul.bf16.gmra.mxu0 %v5924
        %v5938 = vpop.f32.mrf.mxu0
        %v5939 = vadd.f32 0.0, %v5938
        %v5940 = vpop.f32.mrf.mxu0
        %5941 = vdwg.mxu0
        %5942 = vrot.lane.b32.xlu0 %v3362, 80
        %v5943 = vpop.permute.xlu0 %5942
        %v5945 = vsel %vm2356, %v5766, 0
        %v5948 = vsel %vm3175, %v5943, 0
        %5950 = vmatpush.bf16.msra.mxu0 0
        %5951 = vmatpush.bf16.msra.mxu0 0
        %5952 = vmatpush.bf16.msra.mxu0 0
        %5953 = vmatpush.bf16.msra.mxu0 0
        %5954 = vmatpush.bf16.msra.mxu0 0
        %5955 = vmatpush.bf16.msra.mxu0 0
        %5956 = vmatpush.bf16.msra.mxu0 0
        %5957 = vmatpush.bf16.msra.mxu0 %v5948
        %5958 = vmatmul.bf16.gmra.mxu0 %v5945
        %v5959 = vpop.f32.mrf.mxu0
        %v5960 = vadd.f32 0.0, %v5959
        %v5961 = vpop.f32.mrf.mxu0
        %5962 = vdwg.mxu0
        %5963 = vrot.lane.b32.xlu0 %v3386, 80
        %v5964 = vpop.permute.xlu0 %5963
        %v5966 = vsel %vm2356, %v5767, 0
        %v5969 = vsel %vm3175, %v5964, 0
        %5971 = vmatpush.bf16.msra.mxu0 0
        %5972 = vmatpush.bf16.msra.mxu0 0
        %5973 = vmatpush.bf16.msra.mxu0 0
        %5974 = vmatpush.bf16.msra.mxu0 0
        %5975 = vmatpush.bf16.msra.mxu0 0
        %5976 = vmatpush.bf16.msra.mxu0 0
        %5977 = vmatpush.bf16.msra.mxu0 0
        %5978 = vmatpush.bf16.msra.mxu0 %v5969
        %5979 = vmatmul.bf16.gmra.mxu0 %v5966
        %v5980 = vpop.f32.mrf.mxu0
        %v5981 = vadd.f32 0.0, %v5980
        %v5982 = vpop.f32.mrf.mxu0
        %5983 = vdwg.mxu0
        %5984 = vrot.lane.b32.xlu0 %v3410, 80
        %v5985 = vpop.permute.xlu0 %5984
        %v5987 = vsel %vm2356, %v5768, 0
        %v5990 = vsel %vm3175, %v5985, 0
        %5992 = vmatpush.bf16.msra.mxu0 0
        %5993 = vmatpush.bf16.msra.mxu0 0
        %5994 = vmatpush.bf16.msra.mxu0 0
        %5995 = vmatpush.bf16.msra.mxu0 0
        %5996 = vmatpush.bf16.msra.mxu0 0
        %5997 = vmatpush.bf16.msra.mxu0 0
        %5998 = vmatpush.bf16.msra.mxu0 0
        %5999 = vmatpush.bf16.msra.mxu0 %v5990
        %6000 = vmatmul.bf16.gmra.mxu0 %v5987
        %v6001 = vpop.f32.mrf.mxu0
        %v6002 = vadd.f32 0.0, %v6001
        %v6003 = vpop.f32.mrf.mxu0
        %6004 = vdwg.mxu0
        %6005 = vrot.lane.b32.xlu0 %v3434, 80
        %v6006 = vpop.permute.xlu0 %6005
        %v6008 = vsel %vm2356, %v5769, 0
        %v6011 = vsel %vm3175, %v6006, 0
        %6013 = vmatpush.bf16.msra.mxu0 0
        %6014 = vmatpush.bf16.msra.mxu0 0
        %6015 = vmatpush.bf16.msra.mxu0 0
        %6016 = vmatpush.bf16.msra.mxu0 0
        %6017 = vmatpush.bf16.msra.mxu0 0
        %6018 = vmatpush.bf16.msra.mxu0 0
        %6019 = vmatpush.bf16.msra.mxu0 0
        %6020 = vmatpush.bf16.msra.mxu0 %v6011
        %6021 = vmatmul.bf16.gmra.mxu0 %v6008
        %v6022 = vpop.f32.mrf.mxu0
        %v6023 = vadd.f32 0.0, %v6022
        %v6024 = vpop.f32.mrf.mxu0
        %6025 = vdwg.mxu0
        %6026 = vrot.lane.b32.xlu0 %v3458, 80
        %v6027 = vpop.permute.xlu0 %6026
        %v6029 = vsel %vm2356, %v5770, 0
        %v6032 = vsel %vm3175, %v6027, 0
        %6034 = vmatpush.bf16.msra.mxu0 0
        %6035 = vmatpush.bf16.msra.mxu0 0
        %6036 = vmatpush.bf16.msra.mxu0 0
        %6037 = vmatpush.bf16.msra.mxu0 0
        %6038 = vmatpush.bf16.msra.mxu0 0
        %6039 = vmatpush.bf16.msra.mxu0 0
        %6040 = vmatpush.bf16.msra.mxu0 0
        %6041 = vmatpush.bf16.msra.mxu0 %v6032
        %6042 = vmatmul.bf16.gmra.mxu0 %v6029
        %v6043 = vpop.f32.mrf.mxu0
        %v6044 = vadd.f32 0.0, %v6043
        %v6045 = vpop.f32.mrf.mxu0
        %6046 = vdwg.mxu0
        %6047 = vrot.lane.b32.xlu0 %v3482, 80
        %v6048 = vpop.permute.xlu0 %6047
        %v6050 = vsel %vm2356, %v5771, 0
        %v6053 = vsel %vm3175, %v6048, 0
        %6055 = vmatpush.bf16.msra.mxu0 0
        %6056 = vmatpush.bf16.msra.mxu0 0
        %6057 = vmatpush.bf16.msra.mxu0 0
        %6058 = vmatpush.bf16.msra.mxu0 0
        %6059 = vmatpush.bf16.msra.mxu0 0
        %6060 = vmatpush.bf16.msra.mxu0 0
        %6061 = vmatpush.bf16.msra.mxu0 0
        %6062 = vmatpush.bf16.msra.mxu0 %v6053
        %6063 = vmatmul.bf16.gmra.mxu0 %v6050
        %v6064 = vpop.f32.mrf.mxu0
        %v6065 = vadd.f32 0.0, %v6064
        %v6066 = vpop.f32.mrf.mxu0
        %6067 = vdwg.mxu0
        %6068 = vrot.lane.b32.xlu0 %v3506, 80
        %v6069 = vpop.permute.xlu0 %6068
        %v6071 = vsel %vm2356, %v5772, 0
        %v6074 = vsel %vm3175, %v6069, 0
        %6076 = vmatpush.bf16.msra.mxu0 0
        %6077 = vmatpush.bf16.msra.mxu0 0
        %6078 = vmatpush.bf16.msra.mxu0 0
        %6079 = vmatpush.bf16.msra.mxu0 0
        %6080 = vmatpush.bf16.msra.mxu0 0
        %6081 = vmatpush.bf16.msra.mxu0 0
        %6082 = vmatpush.bf16.msra.mxu0 0
        %6083 = vmatpush.bf16.msra.mxu0 %v6074
        %6084 = vmatmul.bf16.gmra.mxu0 %v6071
        %v6085 = vpop.f32.mrf.mxu0
        %v6086 = vadd.f32 0.0, %v6085
        %v6087 = vpop.f32.mrf.mxu0
        %6088 = vdwg.mxu0
        %6089 = vrot.lane.b32.xlu0 %v3530, 80
        %v6090 = vpop.permute.xlu0 %6089
        %v6092 = vsel %vm2356, %v5773, 0
        %v6095 = vsel %vm3175, %v6090, 0
        %6097 = vmatpush.bf16.msra.mxu0 0
        %6098 = vmatpush.bf16.msra.mxu0 0
        %6099 = vmatpush.bf16.msra.mxu0 0
        %6100 = vmatpush.bf16.msra.mxu0 0
        %6101 = vmatpush.bf16.msra.mxu0 0
        %6102 = vmatpush.bf16.msra.mxu0 0
        %6103 = vmatpush.bf16.msra.mxu0 0
        %6104 = vmatpush.bf16.msra.mxu0 %v6095
        %6105 = vmatmul.bf16.gmra.mxu0 %v6092
        %v6106 = vpop.f32.mrf.mxu0
        %v6107 = vadd.f32 0.0, %v6106
        %v6108 = vpop.f32.mrf.mxu0
        %6109 = vdwg.mxu0
        %v6110 = vpack.c.bf16 %v5813, %v5792
        %v6111 = vpack.c.bf16 %v5855, %v5834
        %v6112 = vpack.c.bf16 %v5897, %v5876
        %v6113 = vpack.c.bf16 %v5939, %v5918
        %v6114 = vpack.c.bf16 %v5981, %v5960
        %v6115 = vpack.c.bf16 %v6023, %v6002
        %v6116 = vpack.c.bf16 %v6065, %v6044
        %v6117 = vpack.c.bf16 %v6107, %v6086
        %v6119 = vsel %vm2356, %v6110, 0
        %v6122 = vsel %vm2356, %v6111, 0
        %v6125 = vsel %vm2356, %v6112, 0
        %v6128 = vsel %vm2356, %v6113, 0
        %v6131 = vsel %vm2356, %v6114, 0
        %v6134 = vsel %vm2356, %v6115, 0
        %v6137 = vsel %vm2356, %v6116, 0
        %v6140 = vsel %vm2356, %v6117, 0
        %v6143 = vsel %vm3175, %v2351, 0
        %6145 = vmatpush.bf16.msra.mxu0 0
        %6146 = vmatpush.bf16.msra.mxu0 0
        %6147 = vmatpush.bf16.msra.mxu0 0
        %6148 = vmatpush.bf16.msra.mxu0 0
        %6149 = vmatpush.bf16.msra.mxu0 0
        %6150 = vmatpush.bf16.msra.mxu0 0
        %6151 = vmatpush.bf16.msra.mxu0 0
        %6152 = vmatpush.bf16.msra.mxu0 %v6143
        %6153 = vmatmul.bf16.gmra.mxu0 %v6119
        %v6154 = vpop.f32.mrf.mxu0
        %v6155 = vadd.f32 0.0, %v6154
        %v6156 = vpop.f32.mrf.mxu0
        %v6157 = vadd.f32 0.0, %v6156
        %6158 = vmatmul.bf16.gmra.mxu0 %v6122
        %v6159 = vpop.f32.mrf.mxu0
        %v6160 = vadd.f32 0.0, %v6159
        %v6161 = vpop.f32.mrf.mxu0
        %v6162 = vadd.f32 0.0, %v6161
        %6163 = vmatmul.bf16.gmra.mxu0 %v6125
        %v6164 = vpop.f32.mrf.mxu0
        %v6165 = vadd.f32 0.0, %v6164
        %v6166 = vpop.f32.mrf.mxu0
        %v6167 = vadd.f32 0.0, %v6166
        %6168 = vmatmul.bf16.gmra.mxu0 %v6128
        %v6169 = vpop.f32.mrf.mxu0
        %v6170 = vadd.f32 0.0, %v6169
        %v6171 = vpop.f32.mrf.mxu0
        %v6172 = vadd.f32 0.0, %v6171
        %6173 = vmatmul.bf16.gmra.mxu0 %v6131
        %v6174 = vpop.f32.mrf.mxu0
        %v6175 = vadd.f32 0.0, %v6174
        %v6176 = vpop.f32.mrf.mxu0
        %v6177 = vadd.f32 0.0, %v6176
        %6178 = vmatmul.bf16.gmra.mxu0 %v6134
        %v6179 = vpop.f32.mrf.mxu0
        %v6180 = vadd.f32 0.0, %v6179
        %v6181 = vpop.f32.mrf.mxu0
        %v6182 = vadd.f32 0.0, %v6181
        %6183 = vmatmul.bf16.gmra.mxu0 %v6137
        %v6184 = vpop.f32.mrf.mxu0
        %v6185 = vadd.f32 0.0, %v6184
        %v6186 = vpop.f32.mrf.mxu0
        %v6187 = vadd.f32 0.0, %v6186
        %6188 = vmatmul.bf16.gmra.mxu0 %v6140
        %v6189 = vpop.f32.mrf.mxu0
        %v6190 = vadd.f32 0.0, %v6189
        %v6191 = vpop.f32.mrf.mxu0
        %v6192 = vadd.f32 0.0, %v6191
        %6193 = vdwg.mxu0
        %v6194 = vadd.f32 %v4915, %v6155
        %v6195 = vadd.f32 %v4916, %v6157
        %v6196 = vadd.f32 %v4917, %v6160
        %v6197 = vadd.f32 %v4918, %v6162
        %v6198 = vadd.f32 %v4919, %v6165
        %v6199 = vadd.f32 %v4920, %v6167
        %v6200 = vadd.f32 %v4921, %v6170
        %v6201 = vadd.f32 %v4922, %v6172
        %v6202 = vadd.f32 %v4923, %v6175
        %v6203 = vadd.f32 %v4924, %v6177
        %v6204 = vadd.f32 %v4925, %v6180
        %v6205 = vadd.f32 %v4926, %v6182
        %v6206 = vadd.f32 %v4927, %v6185
        %v6207 = vadd.f32 %v4928, %v6187
        %v6208 = vadd.f32 %v4929, %v6190
        %v6209 = vadd.f32 %v4930, %v6192
        %6210 = vrot.lane.b32.xlu0 %v2317, 104
        %v6211 = vpop.permute.xlu0 %6210
        %6212 = vrot.lane.b32.xlu0 %v2109, 104
        %v6213 = vpop.permute.xlu0 %6212
        %v6214 = vsel %vm2356, %v6211, 0
        %v6216 = vsel %vm2356, %v6213, 0
        %6218 = vmatpush.xpose.msra.mxu0 0.0
        %6219 = vmatpush.xpose.msra.mxu0 0.0
        %6220 = vmatpush.xpose.msra.mxu0 0.0
        %6221 = vmatpush.xpose.msra.mxu0 0.0
        %6222 = vmatpush.xpose.msra.mxu0 0.0
        %6223 = vmatpush.xpose.msra.mxu0 0.0
        %6224 = vmatpush.xpose.msra.mxu0 0.0
        %6225 = vmatpush.xpose.msra.mxu0 0.0
        %6226 = vmatpush.xpose.msra.mxu0 0.0
        %6227 = vmatpush.xpose.msra.mxu0 0.0
        %6228 = vmatpush.xpose.msra.mxu0 0.0
        %6229 = vmatpush.xpose.msra.mxu0 0.0
        %6230 = vmatpush.xpose.msra.mxu0 0.0
        %6231 = vmatpush.xpose.msra.mxu0 0.0
        %6232 = vmatpush.xpose.msra.mxu0 0.0
        %6233 = vmatpush.xpose.msra.mxu0 %v6216
        %6234 = vmatmul.f32.gmra.mxu0 %v6214
        %v6235 = vpop.f32.mrf.mxu0
        %v6236 = vadd.f32 0.0, %v6235
        %6237 = vdwg.mxu0
        %6238 = vrot.lane.b32.xlu0 %v2318, 104
        %v6239 = vpop.permute.xlu0 %6238
        %6240 = vrot.lane.b32.xlu0 %v2110, 104
        %v6241 = vpop.permute.xlu0 %6240
        %v6242 = vsel %vm2356, %v6239, 0
        %v6244 = vsel %vm2356, %v6241, 0
        %6246 = vmatpush.xpose.msra.mxu0 0.0
        %6247 = vmatpush.xpose.msra.mxu0 0.0
        %6248 = vmatpush.xpose.msra.mxu0 0.0
        %6249 = vmatpush.xpose.msra.mxu0 0.0
        %6250 = vmatpush.xpose.msra.mxu0 0.0
        %6251 = vmatpush.xpose.msra.mxu0 0.0
        %6252 = vmatpush.xpose.msra.mxu0 0.0
        %6253 = vmatpush.xpose.msra.mxu0 0.0
        %6254 = vmatpush.xpose.msra.mxu0 0.0
        %6255 = vmatpush.xpose.msra.mxu0 0.0
        %6256 = vmatpush.xpose.msra.mxu0 0.0
        %6257 = vmatpush.xpose.msra.mxu0 0.0
        %6258 = vmatpush.xpose.msra.mxu0 0.0
        %6259 = vmatpush.xpose.msra.mxu0 0.0
        %6260 = vmatpush.xpose.msra.mxu0 0.0
        %6261 = vmatpush.xpose.msra.mxu0 %v6244
        %6262 = vmatmul.f32.gmra.mxu0 %v6242
        %v6263 = vpop.f32.mrf.mxu0
        %v6264 = vadd.f32 0.0, %v6263
        %6265 = vdwg.mxu0
        %6266 = vrot.lane.b32.xlu0 %v2319, 104
        %v6267 = vpop.permute.xlu0 %6266
        %6268 = vrot.lane.b32.xlu0 %v2111, 104
        %v6269 = vpop.permute.xlu0 %6268
        %v6270 = vsel %vm2356, %v6267, 0
        %v6272 = vsel %vm2356, %v6269, 0
        %6274 = vmatpush.xpose.msra.mxu0 0.0
        %6275 = vmatpush.xpose.msra.mxu0 0.0
        %6276 = vmatpush.xpose.msra.mxu0 0.0
        %6277 = vmatpush.xpose.msra.mxu0 0.0
        %6278 = vmatpush.xpose.msra.mxu0 0.0
        %6279 = vmatpush.xpose.msra.mxu0 0.0
        %6280 = vmatpush.xpose.msra.mxu0 0.0
        %6281 = vmatpush.xpose.msra.mxu0 0.0
        %6282 = vmatpush.xpose.msra.mxu0 0.0
        %6283 = vmatpush.xpose.msra.mxu0 0.0
        %6284 = vmatpush.xpose.msra.mxu0 0.0
        %6285 = vmatpush.xpose.msra.mxu0 0.0
        %6286 = vmatpush.xpose.msra.mxu0 0.0
        %6287 = vmatpush.xpose.msra.mxu0 0.0
        %6288 = vmatpush.xpose.msra.mxu0 0.0
        %6289 = vmatpush.xpose.msra.mxu0 %v6272
        %6290 = vmatmul.f32.gmra.mxu0 %v6270
        %v6291 = vpop.f32.mrf.mxu0
        %v6292 = vadd.f32 0.0, %v6291
        %6293 = vdwg.mxu0
        %6294 = vrot.lane.b32.xlu0 %v2320, 104
        %v6295 = vpop.permute.xlu0 %6294
        %6296 = vrot.lane.b32.xlu0 %v2112, 104
        %v6297 = vpop.permute.xlu0 %6296
        %v6298 = vsel %vm2356, %v6295, 0
        %v6300 = vsel %vm2356, %v6297, 0
        %6302 = vmatpush.xpose.msra.mxu0 0.0
        %6303 = vmatpush.xpose.msra.mxu0 0.0
        %6304 = vmatpush.xpose.msra.mxu0 0.0
        %6305 = vmatpush.xpose.msra.mxu0 0.0
        %6306 = vmatpush.xpose.msra.mxu0 0.0
        %6307 = vmatpush.xpose.msra.mxu0 0.0
        %6308 = vmatpush.xpose.msra.mxu0 0.0
        %6309 = vmatpush.xpose.msra.mxu0 0.0
        %6310 = vmatpush.xpose.msra.mxu0 0.0
        %6311 = vmatpush.xpose.msra.mxu0 0.0
        %6312 = vmatpush.xpose.msra.mxu0 0.0
        %6313 = vmatpush.xpose.msra.mxu0 0.0
        %6314 = vmatpush.xpose.msra.mxu0 0.0
        %6315 = vmatpush.xpose.msra.mxu0 0.0
        %6316 = vmatpush.xpose.msra.mxu0 0.0
        %6317 = vmatpush.xpose.msra.mxu0 %v6300
        %6318 = vmatmul.f32.gmra.mxu0 %v6298
        %v6319 = vpop.f32.mrf.mxu0
        %v6320 = vadd.f32 0.0, %v6319
        %6321 = vdwg.mxu0
        %6322 = vrot.lane.b32.xlu0 %v2321, 104
        %v6323 = vpop.permute.xlu0 %6322
        %6324 = vrot.lane.b32.xlu0 %v2113, 104
        %v6325 = vpop.permute.xlu0 %6324
        %v6326 = vsel %vm2356, %v6323, 0
        %v6328 = vsel %vm2356, %v6325, 0
        %6330 = vmatpush.xpose.msra.mxu0 0.0
        %6331 = vmatpush.xpose.msra.mxu0 0.0
        %6332 = vmatpush.xpose.msra.mxu0 0.0
        %6333 = vmatpush.xpose.msra.mxu0 0.0
        %6334 = vmatpush.xpose.msra.mxu0 0.0
        %6335 = vmatpush.xpose.msra.mxu0 0.0
        %6336 = vmatpush.xpose.msra.mxu0 0.0
        %6337 = vmatpush.xpose.msra.mxu0 0.0
        %6338 = vmatpush.xpose.msra.mxu0 0.0
        %6339 = vmatpush.xpose.msra.mxu0 0.0
        %6340 = vmatpush.xpose.msra.mxu0 0.0
        %6341 = vmatpush.xpose.msra.mxu0 0.0
        %6342 = vmatpush.xpose.msra.mxu0 0.0
        %6343 = vmatpush.xpose.msra.mxu0 0.0
        %6344 = vmatpush.xpose.msra.mxu0 0.0
        %6345 = vmatpush.xpose.msra.mxu0 %v6328
        %6346 = vmatmul.f32.gmra.mxu0 %v6326
        %v6347 = vpop.f32.mrf.mxu0
        %v6348 = vadd.f32 0.0, %v6347
        %6349 = vdwg.mxu0
        %6350 = vrot.lane.b32.xlu0 %v2322, 104
        %v6351 = vpop.permute.xlu0 %6350
        %6352 = vrot.lane.b32.xlu0 %v2114, 104
        %v6353 = vpop.permute.xlu0 %6352
        %v6354 = vsel %vm2356, %v6351, 0
        %v6356 = vsel %vm2356, %v6353, 0
        %6358 = vmatpush.xpose.msra.mxu0 0.0
        %6359 = vmatpush.xpose.msra.mxu0 0.0
        %6360 = vmatpush.xpose.msra.mxu0 0.0
        %6361 = vmatpush.xpose.msra.mxu0 0.0
        %6362 = vmatpush.xpose.msra.mxu0 0.0
        %6363 = vmatpush.xpose.msra.mxu0 0.0
        %6364 = vmatpush.xpose.msra.mxu0 0.0
        %6365 = vmatpush.xpose.msra.mxu0 0.0
        %6366 = vmatpush.xpose.msra.mxu0 0.0
        %6367 = vmatpush.xpose.msra.mxu0 0.0
        %6368 = vmatpush.xpose.msra.mxu0 0.0
        %6369 = vmatpush.xpose.msra.mxu0 0.0
        %6370 = vmatpush.xpose.msra.mxu0 0.0
        %6371 = vmatpush.xpose.msra.mxu0 0.0
        %6372 = vmatpush.xpose.msra.mxu0 0.0
        %6373 = vmatpush.xpose.msra.mxu0 %v6356
        %6374 = vmatmul.f32.gmra.mxu0 %v6354
        %v6375 = vpop.f32.mrf.mxu0
        %v6376 = vadd.f32 0.0, %v6375
        %6377 = vdwg.mxu0
        %6378 = vrot.lane.b32.xlu0 %v2323, 104
        %v6379 = vpop.permute.xlu0 %6378
        %6380 = vrot.lane.b32.xlu0 %v2115, 104
        %v6381 = vpop.permute.xlu0 %6380
        %v6382 = vsel %vm2356, %v6379, 0
        %v6384 = vsel %vm2356, %v6381, 0
        %6386 = vmatpush.xpose.msra.mxu0 0.0
        %6387 = vmatpush.xpose.msra.mxu0 0.0
        %6388 = vmatpush.xpose.msra.mxu0 0.0
        %6389 = vmatpush.xpose.msra.mxu0 0.0
        %6390 = vmatpush.xpose.msra.mxu0 0.0
        %6391 = vmatpush.xpose.msra.mxu0 0.0
        %6392 = vmatpush.xpose.msra.mxu0 0.0
        %6393 = vmatpush.xpose.msra.mxu0 0.0
        %6394 = vmatpush.xpose.msra.mxu0 0.0
        %6395 = vmatpush.xpose.msra.mxu0 0.0
        %6396 = vmatpush.xpose.msra.mxu0 0.0
        %6397 = vmatpush.xpose.msra.mxu0 0.0
        %6398 = vmatpush.xpose.msra.mxu0 0.0
        %6399 = vmatpush.xpose.msra.mxu0 0.0
        %6400 = vmatpush.xpose.msra.mxu0 0.0
        %6401 = vmatpush.xpose.msra.mxu0 %v6384
        %6402 = vmatmul.f32.gmra.mxu0 %v6382
        %v6403 = vpop.f32.mrf.mxu0
        %v6404 = vadd.f32 0.0, %v6403
        %6405 = vdwg.mxu0
        %6406 = vrot.lane.b32.xlu0 %v2324, 104
        %v6407 = vpop.permute.xlu0 %6406
        %6408 = vrot.lane.b32.xlu0 %v2116, 104
        %v6409 = vpop.permute.xlu0 %6408
        %v6410 = vsel %vm2356, %v6407, 0
        %v6412 = vsel %vm2356, %v6409, 0
        %6414 = vmatpush.xpose.msra.mxu0 0.0
        %6415 = vmatpush.xpose.msra.mxu0 0.0
        %6416 = vmatpush.xpose.msra.mxu0 0.0
        %6417 = vmatpush.xpose.msra.mxu0 0.0
        %6418 = vmatpush.xpose.msra.mxu0 0.0
        %6419 = vmatpush.xpose.msra.mxu0 0.0
        %6420 = vmatpush.xpose.msra.mxu0 0.0
        %6421 = vmatpush.xpose.msra.mxu0 0.0
        %6422 = vmatpush.xpose.msra.mxu0 0.0
        %6423 = vmatpush.xpose.msra.mxu0 0.0
        %6424 = vmatpush.xpose.msra.mxu0 0.0
        %6425 = vmatpush.xpose.msra.mxu0 0.0
        %6426 = vmatpush.xpose.msra.mxu0 0.0
        %6427 = vmatpush.xpose.msra.mxu0 0.0
        %6428 = vmatpush.xpose.msra.mxu0 0.0
        %6429 = vmatpush.xpose.msra.mxu0 %v6412
        %6430 = vmatmul.f32.gmra.mxu0 %v6410
        %v6431 = vpop.f32.mrf.mxu0
        %v6432 = vadd.f32 0.0, %v6431
        %6433 = vdwg.mxu0
        %6434 = vrot.lane.b32.xlu0 %v2325, 104
        %v6435 = vpop.permute.xlu0 %6434
        %6436 = vrot.lane.b32.xlu0 %v2117, 104
        %v6437 = vpop.permute.xlu0 %6436
        %v6438 = vsel %vm2356, %v6435, 0
        %v6440 = vsel %vm2356, %v6437, 0
        %6442 = vmatpush.xpose.msra.mxu0 0.0
        %6443 = vmatpush.xpose.msra.mxu0 0.0
        %6444 = vmatpush.xpose.msra.mxu0 0.0
        %6445 = vmatpush.xpose.msra.mxu0 0.0
        %6446 = vmatpush.xpose.msra.mxu0 0.0
        %6447 = vmatpush.xpose.msra.mxu0 0.0
        %6448 = vmatpush.xpose.msra.mxu0 0.0
        %6449 = vmatpush.xpose.msra.mxu0 0.0
        %6450 = vmatpush.xpose.msra.mxu0 0.0
        %6451 = vmatpush.xpose.msra.mxu0 0.0
        %6452 = vmatpush.xpose.msra.mxu0 0.0
        %6453 = vmatpush.xpose.msra.mxu0 0.0
        %6454 = vmatpush.xpose.msra.mxu0 0.0
        %6455 = vmatpush.xpose.msra.mxu0 0.0
        %6456 = vmatpush.xpose.msra.mxu0 0.0
        %6457 = vmatpush.xpose.msra.mxu0 %v6440
        %6458 = vmatmul.f32.gmra.mxu0 %v6438
        %v6459 = vpop.f32.mrf.mxu0
        %v6460 = vadd.f32 0.0, %v6459
        %6461 = vdwg.mxu0
        %6462 = vrot.lane.b32.xlu0 %v2326, 104
        %v6463 = vpop.permute.xlu0 %6462
        %6464 = vrot.lane.b32.xlu0 %v2118, 104
        %v6465 = vpop.permute.xlu0 %6464
        %v6466 = vsel %vm2356, %v6463, 0
        %v6468 = vsel %vm2356, %v6465, 0
        %6470 = vmatpush.xpose.msra.mxu0 0.0
        %6471 = vmatpush.xpose.msra.mxu0 0.0
        %6472 = vmatpush.xpose.msra.mxu0 0.0
        %6473 = vmatpush.xpose.msra.mxu0 0.0
        %6474 = vmatpush.xpose.msra.mxu0 0.0
        %6475 = vmatpush.xpose.msra.mxu0 0.0
        %6476 = vmatpush.xpose.msra.mxu0 0.0
        %6477 = vmatpush.xpose.msra.mxu0 0.0
        %6478 = vmatpush.xpose.msra.mxu0 0.0
        %6479 = vmatpush.xpose.msra.mxu0 0.0
        %6480 = vmatpush.xpose.msra.mxu0 0.0
        %6481 = vmatpush.xpose.msra.mxu0 0.0
        %6482 = vmatpush.xpose.msra.mxu0 0.0
        %6483 = vmatpush.xpose.msra.mxu0 0.0
        %6484 = vmatpush.xpose.msra.mxu0 0.0
        %6485 = vmatpush.xpose.msra.mxu0 %v6468
        %6486 = vmatmul.f32.gmra.mxu0 %v6466
        %v6487 = vpop.f32.mrf.mxu0
        %v6488 = vadd.f32 0.0, %v6487
        %6489 = vdwg.mxu0
        %6490 = vrot.lane.b32.xlu0 %v2327, 104
        %v6491 = vpop.permute.xlu0 %6490
        %6492 = vrot.lane.b32.xlu0 %v2119, 104
        %v6493 = vpop.permute.xlu0 %6492
        %v6494 = vsel %vm2356, %v6491, 0
        %v6496 = vsel %vm2356, %v6493, 0
        %6498 = vmatpush.xpose.msra.mxu0 0.0
        %6499 = vmatpush.xpose.msra.mxu0 0.0
        %6500 = vmatpush.xpose.msra.mxu0 0.0
        %6501 = vmatpush.xpose.msra.mxu0 0.0
        %6502 = vmatpush.xpose.msra.mxu0 0.0
        %6503 = vmatpush.xpose.msra.mxu0 0.0
        %6504 = vmatpush.xpose.msra.mxu0 0.0
        %6505 = vmatpush.xpose.msra.mxu0 0.0
        %6506 = vmatpush.xpose.msra.mxu0 0.0
        %6507 = vmatpush.xpose.msra.mxu0 0.0
        %6508 = vmatpush.xpose.msra.mxu0 0.0
        %6509 = vmatpush.xpose.msra.mxu0 0.0
        %6510 = vmatpush.xpose.msra.mxu0 0.0
        %6511 = vmatpush.xpose.msra.mxu0 0.0
        %6512 = vmatpush.xpose.msra.mxu0 0.0
        %6513 = vmatpush.xpose.msra.mxu0 %v6496
        %6514 = vmatmul.f32.gmra.mxu0 %v6494
        %v6515 = vpop.f32.mrf.mxu0
        %v6516 = vadd.f32 0.0, %v6515
        %6517 = vdwg.mxu0
        %6518 = vrot.lane.b32.xlu0 %v2328, 104
        %v6519 = vpop.permute.xlu0 %6518
        %6520 = vrot.lane.b32.xlu0 %v2120, 104
        %v6521 = vpop.permute.xlu0 %6520
        %v6522 = vsel %vm2356, %v6519, 0
        %v6524 = vsel %vm2356, %v6521, 0
        %6526 = vmatpush.xpose.msra.mxu0 0.0
        %6527 = vmatpush.xpose.msra.mxu0 0.0
        %6528 = vmatpush.xpose.msra.mxu0 0.0
        %6529 = vmatpush.xpose.msra.mxu0 0.0
        %6530 = vmatpush.xpose.msra.mxu0 0.0
        %6531 = vmatpush.xpose.msra.mxu0 0.0
        %6532 = vmatpush.xpose.msra.mxu0 0.0
        %6533 = vmatpush.xpose.msra.mxu0 0.0
        %6534 = vmatpush.xpose.msra.mxu0 0.0
        %6535 = vmatpush.xpose.msra.mxu0 0.0
        %6536 = vmatpush.xpose.msra.mxu0 0.0
        %6537 = vmatpush.xpose.msra.mxu0 0.0
        %6538 = vmatpush.xpose.msra.mxu0 0.0
        %6539 = vmatpush.xpose.msra.mxu0 0.0
        %6540 = vmatpush.xpose.msra.mxu0 0.0
        %6541 = vmatpush.xpose.msra.mxu0 %v6524
        %6542 = vmatmul.f32.gmra.mxu0 %v6522
        %v6543 = vpop.f32.mrf.mxu0
        %v6544 = vadd.f32 0.0, %v6543
        %6545 = vdwg.mxu0
        %6546 = vrot.lane.b32.xlu0 %v2329, 104
        %v6547 = vpop.permute.xlu0 %6546
        %6548 = vrot.lane.b32.xlu0 %v2121, 104
        %v6549 = vpop.permute.xlu0 %6548
        %v6550 = vsel %vm2356, %v6547, 0
        %v6552 = vsel %vm2356, %v6549, 0
        %6554 = vmatpush.xpose.msra.mxu0 0.0
        %6555 = vmatpush.xpose.msra.mxu0 0.0
        %6556 = vmatpush.xpose.msra.mxu0 0.0
        %6557 = vmatpush.xpose.msra.mxu0 0.0
        %6558 = vmatpush.xpose.msra.mxu0 0.0
        %6559 = vmatpush.xpose.msra.mxu0 0.0
        %6560 = vmatpush.xpose.msra.mxu0 0.0
        %6561 = vmatpush.xpose.msra.mxu0 0.0
        %6562 = vmatpush.xpose.msra.mxu0 0.0
        %6563 = vmatpush.xpose.msra.mxu0 0.0
        %6564 = vmatpush.xpose.msra.mxu0 0.0
        %6565 = vmatpush.xpose.msra.mxu0 0.0
        %6566 = vmatpush.xpose.msra.mxu0 0.0
        %6567 = vmatpush.xpose.msra.mxu0 0.0
        %6568 = vmatpush.xpose.msra.mxu0 0.0
        %6569 = vmatpush.xpose.msra.mxu0 %v6552
        %6570 = vmatmul.f32.gmra.mxu0 %v6550
        %v6571 = vpop.f32.mrf.mxu0
        %v6572 = vadd.f32 0.0, %v6571
        %6573 = vdwg.mxu0
        %6574 = vrot.lane.b32.xlu0 %v2330, 104
        %v6575 = vpop.permute.xlu0 %6574
        %6576 = vrot.lane.b32.xlu0 %v2122, 104
        %v6577 = vpop.permute.xlu0 %6576
        %v6578 = vsel %vm2356, %v6575, 0
        %v6580 = vsel %vm2356, %v6577, 0
        %6582 = vmatpush.xpose.msra.mxu0 0.0
        %6583 = vmatpush.xpose.msra.mxu0 0.0
        %6584 = vmatpush.xpose.msra.mxu0 0.0
        %6585 = vmatpush.xpose.msra.mxu0 0.0
        %6586 = vmatpush.xpose.msra.mxu0 0.0
        %6587 = vmatpush.xpose.msra.mxu0 0.0
        %6588 = vmatpush.xpose.msra.mxu0 0.0
        %6589 = vmatpush.xpose.msra.mxu0 0.0
        %6590 = vmatpush.xpose.msra.mxu0 0.0
        %6591 = vmatpush.xpose.msra.mxu0 0.0
        %6592 = vmatpush.xpose.msra.mxu0 0.0
        %6593 = vmatpush.xpose.msra.mxu0 0.0
        %6594 = vmatpush.xpose.msra.mxu0 0.0
        %6595 = vmatpush.xpose.msra.mxu0 0.0
        %6596 = vmatpush.xpose.msra.mxu0 0.0
        %6597 = vmatpush.xpose.msra.mxu0 %v6580
        %6598 = vmatmul.f32.gmra.mxu0 %v6578
        %v6599 = vpop.f32.mrf.mxu0
        %v6600 = vadd.f32 0.0, %v6599
        %6601 = vdwg.mxu0
        %6602 = vrot.lane.b32.xlu0 %v2331, 104
        %v6603 = vpop.permute.xlu0 %6602
        %6604 = vrot.lane.b32.xlu0 %v2123, 104
        %v6605 = vpop.permute.xlu0 %6604
        %v6606 = vsel %vm2356, %v6603, 0
        %v6608 = vsel %vm2356, %v6605, 0
        %6610 = vmatpush.xpose.msra.mxu0 0.0
        %6611 = vmatpush.xpose.msra.mxu0 0.0
        %6612 = vmatpush.xpose.msra.mxu0 0.0
        %6613 = vmatpush.xpose.msra.mxu0 0.0
        %6614 = vmatpush.xpose.msra.mxu0 0.0
        %6615 = vmatpush.xpose.msra.mxu0 0.0
        %6616 = vmatpush.xpose.msra.mxu0 0.0
        %6617 = vmatpush.xpose.msra.mxu0 0.0
        %6618 = vmatpush.xpose.msra.mxu0 0.0
        %6619 = vmatpush.xpose.msra.mxu0 0.0
        %6620 = vmatpush.xpose.msra.mxu0 0.0
        %6621 = vmatpush.xpose.msra.mxu0 0.0
        %6622 = vmatpush.xpose.msra.mxu0 0.0
        %6623 = vmatpush.xpose.msra.mxu0 0.0
        %6624 = vmatpush.xpose.msra.mxu0 0.0
        %6625 = vmatpush.xpose.msra.mxu0 %v6608
        %6626 = vmatmul.f32.gmra.mxu0 %v6606
        %v6627 = vpop.f32.mrf.mxu0
        %v6628 = vadd.f32 0.0, %v6627
        %6629 = vdwg.mxu0
        %6630 = vrot.lane.b32.xlu0 %v2332, 104
        %v6631 = vpop.permute.xlu0 %6630
        %6632 = vrot.lane.b32.xlu0 %v2124, 104
        %v6633 = vpop.permute.xlu0 %6632
        %v6634 = vsel %vm2356, %v6631, 0
        %v6636 = vsel %vm2356, %v6633, 0
        %6638 = vmatpush.xpose.msra.mxu0 0.0
        %6639 = vmatpush.xpose.msra.mxu0 0.0
        %6640 = vmatpush.xpose.msra.mxu0 0.0
        %6641 = vmatpush.xpose.msra.mxu0 0.0
        %6642 = vmatpush.xpose.msra.mxu0 0.0
        %6643 = vmatpush.xpose.msra.mxu0 0.0
        %6644 = vmatpush.xpose.msra.mxu0 0.0
        %6645 = vmatpush.xpose.msra.mxu0 0.0
        %6646 = vmatpush.xpose.msra.mxu0 0.0
        %6647 = vmatpush.xpose.msra.mxu0 0.0
        %6648 = vmatpush.xpose.msra.mxu0 0.0
        %6649 = vmatpush.xpose.msra.mxu0 0.0
        %6650 = vmatpush.xpose.msra.mxu0 0.0
        %6651 = vmatpush.xpose.msra.mxu0 0.0
        %6652 = vmatpush.xpose.msra.mxu0 0.0
        %6653 = vmatpush.xpose.msra.mxu0 %v6636
        %6654 = vmatmul.f32.gmra.mxu0 %v6634
        %v6655 = vpop.f32.mrf.mxu0
        %v6656 = vadd.f32 0.0, %v6655
        %6657 = vdwg.mxu0
        %v6658 = vsel %vm2356, %v6236, -inf
        %6659 = vmax.xlane.f32.xlu0 %v6658
        %v6660 = vpop.xlane.xlu0 %6659
        %v6661 = vsel %vm2356, %v6264, -inf
        %6662 = vmax.xlane.f32.xlu0 %v6661
        %v6663 = vpop.xlane.xlu0 %6662
        %v6664 = vsel %vm2356, %v6292, -inf
        %6665 = vmax.xlane.f32.xlu0 %v6664
        %v6666 = vpop.xlane.xlu0 %6665
        %v6667 = vsel %vm2356, %v6320, -inf
        %6668 = vmax.xlane.f32.xlu0 %v6667
        %v6669 = vpop.xlane.xlu0 %6668
        %v6670 = vsel %vm2356, %v6348, -inf
        %6671 = vmax.xlane.f32.xlu0 %v6670
        %v6672 = vpop.xlane.xlu0 %6671
        %v6673 = vsel %vm2356, %v6376, -inf
        %6674 = vmax.xlane.f32.xlu0 %v6673
        %v6675 = vpop.xlane.xlu0 %6674
        %v6676 = vsel %vm2356, %v6404, -inf
        %6677 = vmax.xlane.f32.xlu0 %v6676
        %v6678 = vpop.xlane.xlu0 %6677
        %v6679 = vsel %vm2356, %v6432, -inf
        %6680 = vmax.xlane.f32.xlu0 %v6679
        %v6681 = vpop.xlane.xlu0 %6680
        %v6682 = vsel %vm2356, %v6460, -inf
        %6683 = vmax.xlane.f32.xlu0 %v6682
        %v6684 = vpop.xlane.xlu0 %6683
        %v6685 = vsel %vm2356, %v6488, -inf
        %6686 = vmax.xlane.f32.xlu0 %v6685
        %v6687 = vpop.xlane.xlu0 %6686
        %v6688 = vsel %vm2356, %v6516, -inf
        %6689 = vmax.xlane.f32.xlu0 %v6688
        %v6690 = vpop.xlane.xlu0 %6689
        %v6691 = vsel %vm2356, %v6544, -inf
        %6692 = vmax.xlane.f32.xlu0 %v6691
        %v6693 = vpop.xlane.xlu0 %6692
        %v6694 = vsel %vm2356, %v6572, -inf
        %6695 = vmax.xlane.f32.xlu0 %v6694
        %v6696 = vpop.xlane.xlu0 %6695
        %v6697 = vsel %vm2356, %v6600, -inf
        %6698 = vmax.xlane.f32.xlu0 %v6697
        %v6699 = vpop.xlane.xlu0 %6698
        %v6700 = vsel %vm2356, %v6628, -inf
        %6701 = vmax.xlane.f32.xlu0 %v6700
        %v6702 = vpop.xlane.xlu0 %6701
        %v6703 = vsel %vm2356, %v6656, -inf
        %6704 = vmax.xlane.f32.xlu0 %v6703
        %v6705 = vpop.xlane.xlu0 %6704
        %v6706 = vsub.f32 %v6236, %v6660
        %v6707 = vsub.f32 %v6264, %v6663
        %v6708 = vsub.f32 %v6292, %v6666
        %v6709 = vsub.f32 %v6320, %v6669
        %v6710 = vsub.f32 %v6348, %v6672
        %v6711 = vsub.f32 %v6376, %v6675
        %v6712 = vsub.f32 %v6404, %v6678
        %v6713 = vsub.f32 %v6432, %v6681
        %v6714 = vsub.f32 %v6460, %v6684
        %v6715 = vsub.f32 %v6488, %v6687
        %v6716 = vsub.f32 %v6516, %v6690
        %v6717 = vsub.f32 %v6544, %v6693
        %v6718 = vsub.f32 %v6572, %v6696
        %v6719 = vsub.f32 %v6600, %v6699
        %v6720 = vsub.f32 %v6628, %v6702
        %v6721 = vsub.f32 %v6656, %v6705
        %v6722 = vmul.f32 %v6706, 1.442695
        %v6723 = vpow.pop %v6722
        %v6724 = vmul.f32 %v6707, 1.442695
        %v6725 = vpow.pop %v6724
        %v6726 = vmul.f32 %v6708, 1.442695
        %v6727 = vpow.pop %v6726
        %v6728 = vmul.f32 %v6709, 1.442695
        %v6729 = vpow.pop %v6728
        %v6730 = vmul.f32 %v6710, 1.442695
        %v6731 = vpow.pop %v6730
        %v6732 = vmul.f32 %v6711, 1.442695
        %v6733 = vpow.pop %v6732
        %v6734 = vmul.f32 %v6712, 1.442695
        %v6735 = vpow.pop %v6734
        %v6736 = vmul.f32 %v6713, 1.442695
        %v6737 = vpow.pop %v6736
        %v6738 = vmul.f32 %v6714, 1.442695
        %v6739 = vpow.pop %v6738
        %v6740 = vmul.f32 %v6715, 1.442695
        %v6741 = vpow.pop %v6740
        %v6742 = vmul.f32 %v6716, 1.442695
        %v6743 = vpow.pop %v6742
        %v6744 = vmul.f32 %v6717, 1.442695
        %v6745 = vpow.pop %v6744
        %v6746 = vmul.f32 %v6718, 1.442695
        %v6747 = vpow.pop %v6746
        %v6748 = vmul.f32 %v6719, 1.442695
        %v6749 = vpow.pop %v6748
        %v6750 = vmul.f32 %v6720, 1.442695
        %v6751 = vpow.pop %v6750
        %v6752 = vmul.f32 %v6721, 1.442695
        %v6753 = vpow.pop %v6752
        %v6754 = vsel %vm2356, %v6723, 0.0
        %6755 = vadd.xlane.f32.xlu0 %v6754
        %v6756 = vpop.xlane.xlu0 %6755
        %v6757 = vsel %vm2356, %v6725, 0.0
        %6758 = vadd.xlane.f32.xlu0 %v6757
        %v6759 = vpop.xlane.xlu0 %6758
        %v6760 = vsel %vm2356, %v6727, 0.0
        %6761 = vadd.xlane.f32.xlu0 %v6760
        %v6762 = vpop.xlane.xlu0 %6761
        %v6763 = vsel %vm2356, %v6729, 0.0
        %6764 = vadd.xlane.f32.xlu0 %v6763
        %v6765 = vpop.xlane.xlu0 %6764
        %v6766 = vsel %vm2356, %v6731, 0.0
        %6767 = vadd.xlane.f32.xlu0 %v6766
        %v6768 = vpop.xlane.xlu0 %6767
        %v6769 = vsel %vm2356, %v6733, 0.0
        %6770 = vadd.xlane.f32.xlu0 %v6769
        %v6771 = vpop.xlane.xlu0 %6770
        %v6772 = vsel %vm2356, %v6735, 0.0
        %6773 = vadd.xlane.f32.xlu0 %v6772
        %v6774 = vpop.xlane.xlu0 %6773
        %v6775 = vsel %vm2356, %v6737, 0.0
        %6776 = vadd.xlane.f32.xlu0 %v6775
        %v6777 = vpop.xlane.xlu0 %6776
        %v6778 = vsel %vm2356, %v6739, 0.0
        %6779 = vadd.xlane.f32.xlu0 %v6778
        %v6780 = vpop.xlane.xlu0 %6779
        %v6781 = vsel %vm2356, %v6741, 0.0
        %6782 = vadd.xlane.f32.xlu0 %v6781
        %v6783 = vpop.xlane.xlu0 %6782
        %v6784 = vsel %vm2356, %v6743, 0.0
        %6785 = vadd.xlane.f32.xlu0 %v6784
        %v6786 = vpop.xlane.xlu0 %6785
        %v6787 = vsel %vm2356, %v6745, 0.0
        %6788 = vadd.xlane.f32.xlu0 %v6787
        %v6789 = vpop.xlane.xlu0 %6788
        %v6790 = vsel %vm2356, %v6747, 0.0
        %6791 = vadd.xlane.f32.xlu0 %v6790
        %v6792 = vpop.xlane.xlu0 %6791
        %v6793 = vsel %vm2356, %v6749, 0.0
        %6794 = vadd.xlane.f32.xlu0 %v6793
        %v6795 = vpop.xlane.xlu0 %6794
        %v6796 = vsel %vm2356, %v6751, 0.0
        %6797 = vadd.xlane.f32.xlu0 %v6796
        %v6798 = vpop.xlane.xlu0 %6797
        %v6799 = vsel %vm2356, %v6753, 0.0
        %6800 = vadd.xlane.f32.xlu0 %v6799
        %v6801 = vpop.xlane.xlu0 %6800
        %v6802 = vrcp.pop %v6756
        %v6803 = vrcp.pop %v6759
        %v6804 = vrcp.pop %v6762
        %v6805 = vrcp.pop %v6765
        %v6806 = vrcp.pop %v6768
        %v6807 = vrcp.pop %v6771
        %v6808 = vrcp.pop %v6774
        %v6809 = vrcp.pop %v6777
        %v6810 = vrcp.pop %v6780
        %v6811 = vrcp.pop %v6783
        %v6812 = vrcp.pop %v6786
        %v6813 = vrcp.pop %v6789
        %v6814 = vrcp.pop %v6792
        %v6815 = vrcp.pop %v6795
        %v6816 = vrcp.pop %v6798
        %v6817 = vrcp.pop %v6801
        %v6818 = vmul.f32 %v6723, %v6802
        %v6819 = vmul.f32 %v6725, %v6803
        %v6820 = vmul.f32 %v6727, %v6804
        %v6821 = vmul.f32 %v6729, %v6805
        %v6822 = vmul.f32 %v6731, %v6806
        %v6823 = vmul.f32 %v6733, %v6807
        %v6824 = vmul.f32 %v6735, %v6808
        %v6825 = vmul.f32 %v6737, %v6809
        %v6826 = vmul.f32 %v6739, %v6810
        %v6827 = vmul.f32 %v6741, %v6811
        %v6828 = vmul.f32 %v6743, %v6812
        %v6829 = vmul.f32 %v6745, %v6813
        %v6830 = vmul.f32 %v6747, %v6814
        %v6831 = vmul.f32 %v6749, %v6815
        %v6832 = vmul.f32 %v6751, %v6816
        %v6833 = vmul.f32 %v6753, %v6817
        %v6835 = vsel %vm2356, %v6818, 0
        %v6838 = vsel %vm2356, %v6819, 0
        %v6841 = vsel %vm2356, %v6820, 0
        %v6844 = vsel %vm2356, %v6821, 0
        %v6847 = vsel %vm2356, %v6822, 0
        %v6850 = vsel %vm2356, %v6823, 0
        %v6853 = vsel %vm2356, %v6824, 0
        %v6856 = vsel %vm2356, %v6825, 0
        %v6859 = vsel %vm2356, %v6826, 0
        %v6862 = vsel %vm2356, %v6827, 0
        %v6865 = vsel %vm2356, %v6828, 0
        %v6868 = vsel %vm2356, %v6829, 0
        %v6871 = vsel %vm2356, %v6830, 0
        %v6874 = vsel %vm2356, %v6831, 0
        %v6877 = vsel %vm2356, %v6832, 0
        %v6880 = vsel %vm2356, %v6833, 0
        %6882 = vmatpush.msra.mxu0 0.0
        %6883 = vmatpush.msra.mxu0 0.0
        %6884 = vmatpush.msra.mxu0 0.0
        %6885 = vmatpush.msra.mxu0 0.0
        %6886 = vmatpush.msra.mxu0 0.0
        %6887 = vmatpush.msra.mxu0 0.0
        %6888 = vmatpush.msra.mxu0 0.0
        %6889 = vmatpush.msra.mxu0 0.0
        %6890 = vmatpush.msra.mxu0 0.0
        %6891 = vmatpush.msra.mxu0 0.0
        %6892 = vmatpush.msra.mxu0 0.0
        %6893 = vmatpush.msra.mxu0 0.0
        %6894 = vmatpush.msra.mxu0 0.0
        %6895 = vmatpush.msra.mxu0 0.0
        %6896 = vmatpush.msra.mxu0 0.0
        %6897 = vmatpush.msra.mxu0 %v2353
        %6898 = vmatmul.f32.gmra.mxu0 %v6835
        %v6899 = vpop.f32.mrf.mxu0
        %v6900 = vadd.f32 0.0, %v6899
        %6901 = vmatmul.f32.gmra.mxu0 %v6838
        %v6902 = vpop.f32.mrf.mxu0
        %v6903 = vadd.f32 0.0, %v6902
        %6904 = vmatmul.f32.gmra.mxu0 %v6841
        %v6905 = vpop.f32.mrf.mxu0
        %v6906 = vadd.f32 0.0, %v6905
        %6907 = vmatmul.f32.gmra.mxu0 %v6844
        %v6908 = vpop.f32.mrf.mxu0
        %v6909 = vadd.f32 0.0, %v6908
        %6910 = vmatmul.f32.gmra.mxu0 %v6847
        %v6911 = vpop.f32.mrf.mxu0
        %v6912 = vadd.f32 0.0, %v6911
        %6913 = vmatmul.f32.gmra.mxu0 %v6850
        %v6914 = vpop.f32.mrf.mxu0
        %v6915 = vadd.f32 0.0, %v6914
        %6916 = vmatmul.f32.gmra.mxu0 %v6853
        %v6917 = vpop.f32.mrf.mxu0
        %v6918 = vadd.f32 0.0, %v6917
        %6919 = vmatmul.f32.gmra.mxu0 %v6856
        %v6920 = vpop.f32.mrf.mxu0
        %v6921 = vadd.f32 0.0, %v6920
        %6922 = vmatmul.f32.gmra.mxu0 %v6859
        %v6923 = vpop.f32.mrf.mxu0
        %v6924 = vadd.f32 0.0, %v6923
        %6925 = vmatmul.f32.gmra.mxu0 %v6862
        %v6926 = vpop.f32.mrf.mxu0
        %v6927 = vadd.f32 0.0, %v6926
        %6928 = vmatmul.f32.gmra.mxu0 %v6865
        %v6929 = vpop.f32.mrf.mxu0
        %v6930 = vadd.f32 0.0, %v6929
        %6931 = vmatmul.f32.gmra.mxu0 %v6868
        %v6932 = vpop.f32.mrf.mxu0
        %v6933 = vadd.f32 0.0, %v6932
        %6934 = vmatmul.f32.gmra.mxu0 %v6871
        %v6935 = vpop.f32.mrf.mxu0
        %v6936 = vadd.f32 0.0, %v6935
        %6937 = vmatmul.f32.gmra.mxu0 %v6874
        %v6938 = vpop.f32.mrf.mxu0
        %v6939 = vadd.f32 0.0, %v6938
        %6940 = vmatmul.f32.gmra.mxu0 %v6877
        %v6941 = vpop.f32.mrf.mxu0
        %v6942 = vadd.f32 0.0, %v6941
        %6943 = vmatmul.f32.gmra.mxu0 %v6880
        %v6944 = vpop.f32.mrf.mxu0
        %v6945 = vadd.f32 0.0, %v6944
        %6946 = vdwg.mxu0
        %v6947 = vmul.f32 %v6900, %v2354
        %v6948 = vmul.f32 %v6903, %v2355
        %v6949 = vmul.f32 %v6906, %v2354
        %v6950 = vmul.f32 %v6909, %v2355
        %v6951 = vmul.f32 %v6912, %v2354
        %v6952 = vmul.f32 %v6915, %v2355
        %v6953 = vmul.f32 %v6918, %v2354
        %v6954 = vmul.f32 %v6921, %v2355
        %v6955 = vmul.f32 %v6924, %v2354
        %v6956 = vmul.f32 %v6927, %v2355
        %v6957 = vmul.f32 %v6930, %v2354
        %v6958 = vmul.f32 %v6933, %v2355
        %v6959 = vmul.f32 %v6936, %v2354
        %v6960 = vmul.f32 %v6939, %v2355
        %v6961 = vmul.f32 %v6942, %v2354
        %v6962 = vmul.f32 %v6945, %v2355
        %v6963 = vadd.f32 %v6947, %v6948
        %v6964 = vrot.slane %v6963, 4
        %v6965 = vadd.f32 %v6963, %v6964
        %v6966 = vrot.slane %v6965, 2
        %v6967 = vadd.f32 %v6965, %v6966
        %v6968 = vrot.slane %v6967, 1
        %v6969 = vadd.f32 %v6967, %v6968
        %v6970 = vadd.f32 %v6949, %v6950
        %v6971 = vrot.slane %v6970, 4
        %v6972 = vadd.f32 %v6970, %v6971
        %v6973 = vrot.slane %v6972, 2
        %v6974 = vadd.f32 %v6972, %v6973
        %v6975 = vrot.slane %v6974, 1
        %v6976 = vadd.f32 %v6974, %v6975
        %v6977 = vadd.f32 %v6951, %v6952
        %v6978 = vrot.slane %v6977, 4
        %v6979 = vadd.f32 %v6977, %v6978
        %v6980 = vrot.slane %v6979, 2
        %v6981 = vadd.f32 %v6979, %v6980
        %v6982 = vrot.slane %v6981, 1
        %v6983 = vadd.f32 %v6981, %v6982
        %v6984 = vadd.f32 %v6953, %v6954
        %v6985 = vrot.slane %v6984, 4
        %v6986 = vadd.f32 %v6984, %v6985
        %v6987 = vrot.slane %v6986, 2
        %v6988 = vadd.f32 %v6986, %v6987
        %v6989 = vrot.slane %v6988, 1
        %v6990 = vadd.f32 %v6988, %v6989
        %v6991 = vadd.f32 %v6955, %v6956
        %v6992 = vrot.slane %v6991, 4
        %v6993 = vadd.f32 %v6991, %v6992
        %v6994 = vrot.slane %v6993, 2
        %v6995 = vadd.f32 %v6993, %v6994
        %v6996 = vrot.slane %v6995, 1
        %v6997 = vadd.f32 %v6995, %v6996
        %v6998 = vadd.f32 %v6957, %v6958
        %v6999 = vrot.slane %v6998, 4
        %v7000 = vadd.f32 %v6998, %v6999
        %v7001 = vrot.slane %v7000, 2
        %v7002 = vadd.f32 %v7000, %v7001
        %v7003 = vrot.slane %v7002, 1
        %v7004 = vadd.f32 %v7002, %v7003
        %v7005 = vadd.f32 %v6959, %v6960
        %v7006 = vrot.slane %v7005, 4
        %v7007 = vadd.f32 %v7005, %v7006
        %v7008 = vrot.slane %v7007, 2
        %v7009 = vadd.f32 %v7007, %v7008
        %v7010 = vrot.slane %v7009, 1
        %v7011 = vadd.f32 %v7009, %v7010
        %v7012 = vadd.f32 %v6961, %v6962
        %v7013 = vrot.slane %v7012, 4
        %v7014 = vadd.f32 %v7012, %v7013
        %v7015 = vrot.slane %v7014, 2
        %v7016 = vadd.f32 %v7014, %v7015
        %v7017 = vrot.slane %v7016, 1
        %v7018 = vadd.f32 %v7016, %v7017
        %v7027 = vsel %vm696, %v6976, %v6969
        %v7028 = vsel %vm698, %v6983, %v7027
        %v7029 = vsel %vm700, %v6990, %v7028
        %v7030 = vsel %vm702, %v6997, %v7029
        %v7031 = vsel %vm704, %v7004, %v7030
        %v7032 = vsel %vm706, %v7011, %v7031
        %v7033 = vsel %vm708, %v7018, %v7032
        %s7035 = scalar_lea.vmem %s574, 24 [#allocation18]
        %7036 = vst [vmem:[%s7035] sm:$0xff] %v7033
        %v7037 = vpack.c.bf16 %v6818, %v6818
        %v7038 = vpack.c.bf16 %v6819, %v6819
        %v7039 = vpack.c.bf16 %v6820, %v6820
        %v7040 = vpack.c.bf16 %v6821, %v6821
        %v7041 = vpack.c.bf16 %v6822, %v6822
        %v7042 = vpack.c.bf16 %v6823, %v6823
        %v7043 = vpack.c.bf16 %v6824, %v6824
        %v7044 = vpack.c.bf16 %v6825, %v6825
        %v7045 = vpack.c.bf16 %v6826, %v6826
        %v7046 = vpack.c.bf16 %v6827, %v6827
        %v7047 = vpack.c.bf16 %v6828, %v6828
        %v7048 = vpack.c.bf16 %v6829, %v6829
        %v7049 = vpack.c.bf16 %v6830, %v6830
        %v7050 = vpack.c.bf16 %v6831, %v6831
        %v7051 = vpack.c.bf16 %v6832, %v6832
        %v7052 = vpack.c.bf16 %v6833, %v6833
        %7053 = vrot.lane.b32.xlu0 %v3169, 72
        %v7054 = vpop.permute.xlu0 %7053
        %v7056 = vsel %vm2356, %v7037, 0
        %v7059 = vsel %vm3175, %v7054, 0
        %7061 = vmatpush.bf16.msra.mxu0 0
        %7062 = vmatpush.bf16.msra.mxu0 0
        %7063 = vmatpush.bf16.msra.mxu0 0
        %7064 = vmatpush.bf16.msra.mxu0 0
        %7065 = vmatpush.bf16.msra.mxu0 0
        %7066 = vmatpush.bf16.msra.mxu0 0
        %7067 = vmatpush.bf16.msra.mxu0 0
        %7068 = vmatpush.bf16.msra.mxu0 %v7059
        %7069 = vmatmul.bf16.gmra.mxu0 %v7056
        %v7070 = vpop.f32.mrf.mxu0
        %v7071 = vadd.f32 0.0, %v7070
        %v7072 = vpop.f32.mrf.mxu0
        %7073 = vdwg.mxu0
        %7074 = vrot.lane.b32.xlu0 %v3194, 72
        %v7075 = vpop.permute.xlu0 %7074
        %v7077 = vsel %vm2356, %v7038, 0
        %v7080 = vsel %vm3175, %v7075, 0
        %7082 = vmatpush.bf16.msra.mxu0 0
        %7083 = vmatpush.bf16.msra.mxu0 0
        %7084 = vmatpush.bf16.msra.mxu0 0
        %7085 = vmatpush.bf16.msra.mxu0 0
        %7086 = vmatpush.bf16.msra.mxu0 0
        %7087 = vmatpush.bf16.msra.mxu0 0
        %7088 = vmatpush.bf16.msra.mxu0 0
        %7089 = vmatpush.bf16.msra.mxu0 %v7080
        %7090 = vmatmul.bf16.gmra.mxu0 %v7077
        %v7091 = vpop.f32.mrf.mxu0
        %v7092 = vadd.f32 0.0, %v7091
        %v7093 = vpop.f32.mrf.mxu0
        %7094 = vdwg.mxu0
        %7095 = vrot.lane.b32.xlu0 %v3218, 72
        %v7096 = vpop.permute.xlu0 %7095
        %v7098 = vsel %vm2356, %v7039, 0
        %v7101 = vsel %vm3175, %v7096, 0
        %7103 = vmatpush.bf16.msra.mxu0 0
        %7104 = vmatpush.bf16.msra.mxu0 0
        %7105 = vmatpush.bf16.msra.mxu0 0
        %7106 = vmatpush.bf16.msra.mxu0 0
        %7107 = vmatpush.bf16.msra.mxu0 0
        %7108 = vmatpush.bf16.msra.mxu0 0
        %7109 = vmatpush.bf16.msra.mxu0 0
        %7110 = vmatpush.bf16.msra.mxu0 %v7101
        %7111 = vmatmul.bf16.gmra.mxu0 %v7098
        %v7112 = vpop.f32.mrf.mxu0
        %v7113 = vadd.f32 0.0, %v7112
        %v7114 = vpop.f32.mrf.mxu0
        %7115 = vdwg.mxu0
        %7116 = vrot.lane.b32.xlu0 %v3242, 72
        %v7117 = vpop.permute.xlu0 %7116
        %v7119 = vsel %vm2356, %v7040, 0
        %v7122 = vsel %vm3175, %v7117, 0
        %7124 = vmatpush.bf16.msra.mxu0 0
        %7125 = vmatpush.bf16.msra.mxu0 0
        %7126 = vmatpush.bf16.msra.mxu0 0
        %7127 = vmatpush.bf16.msra.mxu0 0
        %7128 = vmatpush.bf16.msra.mxu0 0
        %7129 = vmatpush.bf16.msra.mxu0 0
        %7130 = vmatpush.bf16.msra.mxu0 0
        %7131 = vmatpush.bf16.msra.mxu0 %v7122
        %7132 = vmatmul.bf16.gmra.mxu0 %v7119
        %v7133 = vpop.f32.mrf.mxu0
        %v7134 = vadd.f32 0.0, %v7133
        %v7135 = vpop.f32.mrf.mxu0
        %7136 = vdwg.mxu0
        %7137 = vrot.lane.b32.xlu0 %v3266, 72
        %v7138 = vpop.permute.xlu0 %7137
        %v7140 = vsel %vm2356, %v7041, 0
        %v7143 = vsel %vm3175, %v7138, 0
        %7145 = vmatpush.bf16.msra.mxu0 0
        %7146 = vmatpush.bf16.msra.mxu0 0
        %7147 = vmatpush.bf16.msra.mxu0 0
        %7148 = vmatpush.bf16.msra.mxu0 0
        %7149 = vmatpush.bf16.msra.mxu0 0
        %7150 = vmatpush.bf16.msra.mxu0 0
        %7151 = vmatpush.bf16.msra.mxu0 0
        %7152 = vmatpush.bf16.msra.mxu0 %v7143
        %7153 = vmatmul.bf16.gmra.mxu0 %v7140
        %v7154 = vpop.f32.mrf.mxu0
        %v7155 = vadd.f32 0.0, %v7154
        %v7156 = vpop.f32.mrf.mxu0
        %7157 = vdwg.mxu0
        %7158 = vrot.lane.b32.xlu0 %v3290, 72
        %v7159 = vpop.permute.xlu0 %7158
        %v7161 = vsel %vm2356, %v7042, 0
        %v7164 = vsel %vm3175, %v7159, 0
        %7166 = vmatpush.bf16.msra.mxu0 0
        %7167 = vmatpush.bf16.msra.mxu0 0
        %7168 = vmatpush.bf16.msra.mxu0 0
        %7169 = vmatpush.bf16.msra.mxu0 0
        %7170 = vmatpush.bf16.msra.mxu0 0
        %7171 = vmatpush.bf16.msra.mxu0 0
        %7172 = vmatpush.bf16.msra.mxu0 0
        %7173 = vmatpush.bf16.msra.mxu0 %v7164
        %7174 = vmatmul.bf16.gmra.mxu0 %v7161
        %v7175 = vpop.f32.mrf.mxu0
        %v7176 = vadd.f32 0.0, %v7175
        %v7177 = vpop.f32.mrf.mxu0
        %7178 = vdwg.mxu0
        %7179 = vrot.lane.b32.xlu0 %v3314, 72
        %v7180 = vpop.permute.xlu0 %7179
        %v7182 = vsel %vm2356, %v7043, 0
        %v7185 = vsel %vm3175, %v7180, 0
        %7187 = vmatpush.bf16.msra.mxu0 0
        %7188 = vmatpush.bf16.msra.mxu0 0
        %7189 = vmatpush.bf16.msra.mxu0 0
        %7190 = vmatpush.bf16.msra.mxu0 0
        %7191 = vmatpush.bf16.msra.mxu0 0
        %7192 = vmatpush.bf16.msra.mxu0 0
        %7193 = vmatpush.bf16.msra.mxu0 0
        %7194 = vmatpush.bf16.msra.mxu0 %v7185
        %7195 = vmatmul.bf16.gmra.mxu0 %v7182
        %v7196 = vpop.f32.mrf.mxu0
        %v7197 = vadd.f32 0.0, %v7196
        %v7198 = vpop.f32.mrf.mxu0
        %7199 = vdwg.mxu0
        %7200 = vrot.lane.b32.xlu0 %v3338, 72
        %v7201 = vpop.permute.xlu0 %7200
        %v7203 = vsel %vm2356, %v7044, 0
        %v7206 = vsel %vm3175, %v7201, 0
        %7208 = vmatpush.bf16.msra.mxu0 0
        %7209 = vmatpush.bf16.msra.mxu0 0
        %7210 = vmatpush.bf16.msra.mxu0 0
        %7211 = vmatpush.bf16.msra.mxu0 0
        %7212 = vmatpush.bf16.msra.mxu0 0
        %7213 = vmatpush.bf16.msra.mxu0 0
        %7214 = vmatpush.bf16.msra.mxu0 0
        %7215 = vmatpush.bf16.msra.mxu0 %v7206
        %7216 = vmatmul.bf16.gmra.mxu0 %v7203
        %v7217 = vpop.f32.mrf.mxu0
        %v7218 = vadd.f32 0.0, %v7217
        %v7219 = vpop.f32.mrf.mxu0
        %7220 = vdwg.mxu0
        %7221 = vrot.lane.b32.xlu0 %v3362, 72
        %v7222 = vpop.permute.xlu0 %7221
        %v7224 = vsel %vm2356, %v7045, 0
        %v7227 = vsel %vm3175, %v7222, 0
        %7229 = vmatpush.bf16.msra.mxu0 0
        %7230 = vmatpush.bf16.msra.mxu0 0
        %7231 = vmatpush.bf16.msra.mxu0 0
        %7232 = vmatpush.bf16.msra.mxu0 0
        %7233 = vmatpush.bf16.msra.mxu0 0
        %7234 = vmatpush.bf16.msra.mxu0 0
        %7235 = vmatpush.bf16.msra.mxu0 0
        %7236 = vmatpush.bf16.msra.mxu0 %v7227
        %7237 = vmatmul.bf16.gmra.mxu0 %v7224
        %v7238 = vpop.f32.mrf.mxu0
        %v7239 = vadd.f32 0.0, %v7238
        %v7240 = vpop.f32.mrf.mxu0
        %7241 = vdwg.mxu0
        %7242 = vrot.lane.b32.xlu0 %v3386, 72
        %v7243 = vpop.permute.xlu0 %7242
        %v7245 = vsel %vm2356, %v7046, 0
        %v7248 = vsel %vm3175, %v7243, 0
        %7250 = vmatpush.bf16.msra.mxu0 0
        %7251 = vmatpush.bf16.msra.mxu0 0
        %7252 = vmatpush.bf16.msra.mxu0 0
        %7253 = vmatpush.bf16.msra.mxu0 0
        %7254 = vmatpush.bf16.msra.mxu0 0
        %7255 = vmatpush.bf16.msra.mxu0 0
        %7256 = vmatpush.bf16.msra.mxu0 0
        %7257 = vmatpush.bf16.msra.mxu0 %v7248
        %7258 = vmatmul.bf16.gmra.mxu0 %v7245
        %v7259 = vpop.f32.mrf.mxu0
        %v7260 = vadd.f32 0.0, %v7259
        %v7261 = vpop.f32.mrf.mxu0
        %7262 = vdwg.mxu0
        %7263 = vrot.lane.b32.xlu0 %v3410, 72
        %v7264 = vpop.permute.xlu0 %7263
        %v7266 = vsel %vm2356, %v7047, 0
        %v7269 = vsel %vm3175, %v7264, 0
        %7271 = vmatpush.bf16.msra.mxu0 0
        %7272 = vmatpush.bf16.msra.mxu0 0
        %7273 = vmatpush.bf16.msra.mxu0 0
        %7274 = vmatpush.bf16.msra.mxu0 0
        %7275 = vmatpush.bf16.msra.mxu0 0
        %7276 = vmatpush.bf16.msra.mxu0 0
        %7277 = vmatpush.bf16.msra.mxu0 0
        %7278 = vmatpush.bf16.msra.mxu0 %v7269
        %7279 = vmatmul.bf16.gmra.mxu0 %v7266
        %v7280 = vpop.f32.mrf.mxu0
        %v7281 = vadd.f32 0.0, %v7280
        %v7282 = vpop.f32.mrf.mxu0
        %7283 = vdwg.mxu0
        %7284 = vrot.lane.b32.xlu0 %v3434, 72
        %v7285 = vpop.permute.xlu0 %7284
        %v7287 = vsel %vm2356, %v7048, 0
        %v7290 = vsel %vm3175, %v7285, 0
        %7292 = vmatpush.bf16.msra.mxu0 0
        %7293 = vmatpush.bf16.msra.mxu0 0
        %7294 = vmatpush.bf16.msra.mxu0 0
        %7295 = vmatpush.bf16.msra.mxu0 0
        %7296 = vmatpush.bf16.msra.mxu0 0
        %7297 = vmatpush.bf16.msra.mxu0 0
        %7298 = vmatpush.bf16.msra.mxu0 0
        %7299 = vmatpush.bf16.msra.mxu0 %v7290
        %7300 = vmatmul.bf16.gmra.mxu0 %v7287
        %v7301 = vpop.f32.mrf.mxu0
        %v7302 = vadd.f32 0.0, %v7301
        %v7303 = vpop.f32.mrf.mxu0
        %7304 = vdwg.mxu0
        %7305 = vrot.lane.b32.xlu0 %v3458, 72
        %v7306 = vpop.permute.xlu0 %7305
        %v7308 = vsel %vm2356, %v7049, 0
        %v7311 = vsel %vm3175, %v7306, 0
        %7313 = vmatpush.bf16.msra.mxu0 0
        %7314 = vmatpush.bf16.msra.mxu0 0
        %7315 = vmatpush.bf16.msra.mxu0 0
        %7316 = vmatpush.bf16.msra.mxu0 0
        %7317 = vmatpush.bf16.msra.mxu0 0
        %7318 = vmatpush.bf16.msra.mxu0 0
        %7319 = vmatpush.bf16.msra.mxu0 0
        %7320 = vmatpush.bf16.msra.mxu0 %v7311
        %7321 = vmatmul.bf16.gmra.mxu0 %v7308
        %v7322 = vpop.f32.mrf.mxu0
        %v7323 = vadd.f32 0.0, %v7322
        %v7324 = vpop.f32.mrf.mxu0
        %7325 = vdwg.mxu0
        %7326 = vrot.lane.b32.xlu0 %v3482, 72
        %v7327 = vpop.permute.xlu0 %7326
        %v7329 = vsel %vm2356, %v7050, 0
        %v7332 = vsel %vm3175, %v7327, 0
        %7334 = vmatpush.bf16.msra.mxu0 0
        %7335 = vmatpush.bf16.msra.mxu0 0
        %7336 = vmatpush.bf16.msra.mxu0 0
        %7337 = vmatpush.bf16.msra.mxu0 0
        %7338 = vmatpush.bf16.msra.mxu0 0
        %7339 = vmatpush.bf16.msra.mxu0 0
        %7340 = vmatpush.bf16.msra.mxu0 0
        %7341 = vmatpush.bf16.msra.mxu0 %v7332
        %7342 = vmatmul.bf16.gmra.mxu0 %v7329
        %v7343 = vpop.f32.mrf.mxu0
        %v7344 = vadd.f32 0.0, %v7343
        %v7345 = vpop.f32.mrf.mxu0
        %7346 = vdwg.mxu0
        %7347 = vrot.lane.b32.xlu0 %v3506, 72
        %v7348 = vpop.permute.xlu0 %7347
        %v7350 = vsel %vm2356, %v7051, 0
        %v7353 = vsel %vm3175, %v7348, 0
        %7355 = vmatpush.bf16.msra.mxu0 0
        %7356 = vmatpush.bf16.msra.mxu0 0
        %7357 = vmatpush.bf16.msra.mxu0 0
        %7358 = vmatpush.bf16.msra.mxu0 0
        %7359 = vmatpush.bf16.msra.mxu0 0
        %7360 = vmatpush.bf16.msra.mxu0 0
        %7361 = vmatpush.bf16.msra.mxu0 0
        %7362 = vmatpush.bf16.msra.mxu0 %v7353
        %7363 = vmatmul.bf16.gmra.mxu0 %v7350
        %v7364 = vpop.f32.mrf.mxu0
        %v7365 = vadd.f32 0.0, %v7364
        %v7366 = vpop.f32.mrf.mxu0
        %7367 = vdwg.mxu0
        %7368 = vrot.lane.b32.xlu0 %v3530, 72
        %v7369 = vpop.permute.xlu0 %7368
        %v7371 = vsel %vm2356, %v7052, 0
        %v7374 = vsel %vm3175, %v7369, 0
        %7376 = vmatpush.bf16.msra.mxu0 0
        %7377 = vmatpush.bf16.msra.mxu0 0
        %7378 = vmatpush.bf16.msra.mxu0 0
        %7379 = vmatpush.bf16.msra.mxu0 0
        %7380 = vmatpush.bf16.msra.mxu0 0
        %7381 = vmatpush.bf16.msra.mxu0 0
        %7382 = vmatpush.bf16.msra.mxu0 0
        %7383 = vmatpush.bf16.msra.mxu0 %v7374
        %7384 = vmatmul.bf16.gmra.mxu0 %v7371
        %v7385 = vpop.f32.mrf.mxu0
        %v7386 = vadd.f32 0.0, %v7385
        %v7387 = vpop.f32.mrf.mxu0
        %7388 = vdwg.mxu0
        %v7389 = vpack.c.bf16 %v7092, %v7071
        %v7390 = vpack.c.bf16 %v7134, %v7113
        %v7391 = vpack.c.bf16 %v7176, %v7155
        %v7392 = vpack.c.bf16 %v7218, %v7197
        %v7393 = vpack.c.bf16 %v7260, %v7239
        %v7394 = vpack.c.bf16 %v7302, %v7281
        %v7395 = vpack.c.bf16 %v7344, %v7323
        %v7396 = vpack.c.bf16 %v7386, %v7365
        %v7398 = vsel %vm2356, %v7389, 0
        %v7401 = vsel %vm2356, %v7390, 0
        %v7404 = vsel %vm2356, %v7391, 0
        %v7407 = vsel %vm2356, %v7392, 0
        %v7410 = vsel %vm2356, %v7393, 0
        %v7413 = vsel %vm2356, %v7394, 0
        %v7416 = vsel %vm2356, %v7395, 0
        %v7419 = vsel %vm2356, %v7396, 0
        %v7422 = vsel %vm3175, %v2352, 0
        %7424 = vmatpush.bf16.msra.mxu0 0
        %7425 = vmatpush.bf16.msra.mxu0 0
        %7426 = vmatpush.bf16.msra.mxu0 0
        %7427 = vmatpush.bf16.msra.mxu0 0
        %7428 = vmatpush.bf16.msra.mxu0 0
        %7429 = vmatpush.bf16.msra.mxu0 0
        %7430 = vmatpush.bf16.msra.mxu0 0
        %7431 = vmatpush.bf16.msra.mxu0 %v7422
        %7432 = vmatmul.bf16.gmra.mxu0 %v7398
        %v7433 = vpop.f32.mrf.mxu0
        %v7434 = vadd.f32 0.0, %v7433
        %v7435 = vpop.f32.mrf.mxu0
        %v7436 = vadd.f32 0.0, %v7435
        %7437 = vmatmul.bf16.gmra.mxu0 %v7401
        %v7438 = vpop.f32.mrf.mxu0
        %v7439 = vadd.f32 0.0, %v7438
        %v7440 = vpop.f32.mrf.mxu0
        %v7441 = vadd.f32 0.0, %v7440
        %7442 = vmatmul.bf16.gmra.mxu0 %v7404
        %v7443 = vpop.f32.mrf.mxu0
        %v7444 = vadd.f32 0.0, %v7443
        %v7445 = vpop.f32.mrf.mxu0
        %v7446 = vadd.f32 0.0, %v7445
        %7447 = vmatmul.bf16.gmra.mxu0 %v7407
        %v7448 = vpop.f32.mrf.mxu0
        %v7449 = vadd.f32 0.0, %v7448
        %v7450 = vpop.f32.mrf.mxu0
        %v7451 = vadd.f32 0.0, %v7450
        %7452 = vmatmul.bf16.gmra.mxu0 %v7410
        %v7453 = vpop.f32.mrf.mxu0
        %v7454 = vadd.f32 0.0, %v7453
        %v7455 = vpop.f32.mrf.mxu0
        %v7456 = vadd.f32 0.0, %v7455
        %7457 = vmatmul.bf16.gmra.mxu0 %v7413
        %v7458 = vpop.f32.mrf.mxu0
        %v7459 = vadd.f32 0.0, %v7458
        %v7460 = vpop.f32.mrf.mxu0
        %v7461 = vadd.f32 0.0, %v7460
        %7462 = vmatmul.bf16.gmra.mxu0 %v7416
        %v7463 = vpop.f32.mrf.mxu0
        %v7464 = vadd.f32 0.0, %v7463
        %v7465 = vpop.f32.mrf.mxu0
        %v7466 = vadd.f32 0.0, %v7465
        %7467 = vmatmul.bf16.gmra.mxu0 %v7419
        %v7468 = vpop.f32.mrf.mxu0
        %v7469 = vadd.f32 0.0, %v7468
        %v7470 = vpop.f32.mrf.mxu0
        %v7471 = vadd.f32 0.0, %v7470
        %7472 = vdwg.mxu0
        %v7473 = vadd.f32 %v6194, %v7434
        %v7474 = vadd.f32 %v6195, %v7436
        %v7475 = vadd.f32 %v6196, %v7439
        %v7476 = vadd.f32 %v6197, %v7441
        %v7477 = vadd.f32 %v6198, %v7444
        %v7478 = vadd.f32 %v6199, %v7446
        %v7479 = vadd.f32 %v6200, %v7449
        %v7480 = vadd.f32 %v6201, %v7451
        %v7481 = vadd.f32 %v6202, %v7454
        %v7482 = vadd.f32 %v6203, %v7456
        %v7483 = vadd.f32 %v6204, %v7459
        %v7484 = vadd.f32 %v6205, %v7461
        %v7485 = vadd.f32 %v6206, %v7464
        %v7486 = vadd.f32 %v6207, %v7466
        %v7487 = vadd.f32 %v6208, %v7469
        %v7488 = vadd.f32 %v6209, %v7471
        %v7489 = vadd.f32 %v579, %v7473
        %v7490 = vadd.f32 %v580, %v7474
        %v7491 = vadd.f32 %v581, %v7475
        %v7492 = vadd.f32 %v582, %v7476
        %v7493 = vadd.f32 %v583, %v7477
        %v7494 = vadd.f32 %v584, %v7478
        %v7495 = vadd.f32 %v585, %v7479
        %v7496 = vadd.f32 %v586, %v7480
        %v7497 = vadd.f32 %v587, %v7481
        %v7498 = vadd.f32 %v588, %v7482
        %v7499 = vadd.f32 %v589, %v7483
        %v7500 = vadd.f32 %v590, %v7484
        %v7501 = vadd.f32 %v591, %v7485
        %v7502 = vadd.f32 %v592, %v7486
        %v7503 = vadd.f32 %v593, %v7487
        %v7504 = vadd.f32 %v594, %v7488
        %7505 = vst.msk [vmem:[%s567] sm:$0xff] %vm615, %v7489
        %7506 = vst.msk [vmem:[%s567 + $0x8] sm:$0xff] %vm615, %v7490
        %7507 = vst.msk [vmem:[%s567 + $0x10] sm:$0xff] %vm615, %v7491
        %7508 = vst.msk [vmem:[%s567 + $0x18] sm:$0xff] %vm615, %v7492
        %7509 = vst.msk [vmem:[%s567 + $0x20] sm:$0xff] %vm615, %v7493
        %7510 = vst.msk [vmem:[%s567 + $0x28] sm:$0xff] %vm615, %v7494
        %7511 = vst.msk [vmem:[%s567 + $0x30] sm:$0xff] %vm615, %v7495
        %7512 = vst.msk [vmem:[%s567 + $0x38] sm:$0xff] %vm615, %v7496
        %7513 = vst.msk [vmem:[%s567 + $0x40] sm:$0xff] %vm615, %v7497
        %7514 = vst.msk [vmem:[%s567 + $0x48] sm:$0xff] %vm615, %v7498
        %7515 = vst.msk [vmem:[%s567 + $0x50] sm:$0xff] %vm615, %v7499
        %7516 = vst.msk [vmem:[%s567 + $0x58] sm:$0xff] %vm615, %v7500
        %7517 = vst.msk [vmem:[%s567 + $0x60] sm:$0xff] %vm615, %v7501
        %7518 = vst.msk [vmem:[%s567 + $0x68] sm:$0xff] %vm615, %v7502
        %7519 = vst.msk [vmem:[%s567 + $0x70] sm:$0xff] %vm615, %v7503
        %7520 = vst.msk [vmem:[%s567 + $0x78] sm:$0xff] %vm615, %v7504
        %s7521 = sand.u32 %s266, 1
        %s7522 = scalar_lea.sflag [#allocation4], %s7521
        %s7523 = sand.u32 %s266, 1
        %s7524 = smul.addr %s7523, 128
        %s7525 = scalar_lea.vmem [#allocation17], %s7524
        %s7526 = sand.u32 %s292, 1
        %s7527 = scalar_lea.sflag [#allocation19], %s7526
        %s7528 = sand.u32 %s292, 1
        %s7529 = smul.addr %s7528, 32
        %s7530 = scalar_lea.vmem [#allocation18], %s7529
        // Predicated region
        $region97: #{tpu_custom_call.1} parent=59 // pred_check
          %p7531 = pneg %p276
        $region98: #{tpu_custom_call.1} parent=59 // pred_check_branch
          %7533 = sbr.rel (%p7531) target = $region100
        $region99: #{tpu_custom_call.1} parent=59 // pred_region
          %s7534 = smul.u32 8, %s38
          %7536 = vsyncadd %s7522, 0
          %s7537 = smul.addr %s7534, 2
          %s7538 = smul.addr %s7537, 8
          %s7539 = scalar_lea.hbm %s10, %s7538
          %s7540 = sshll.u32 %s7525, 4
          %s7541 = int_to_ptr.vmem [resolvable:$true] %s7540
          %s7542 = sshll.u32 %s7539, 4
          %s7543 = int_to_ptr.hbm [resolvable:$true] %s7542
          %7548 = dma.vmem_to_hbm [thread:$0]  %s7541, 2048, %s7543, %s7522, 128, 128, 8
        $region100: #{tpu_custom_call.1} parent=59 // pred_fallthru
          _
        // Predicated region
        $region101: #{tpu_custom_call.1} parent=59 // pred_check
          %p7549 = pneg %p302
        $region102: #{tpu_custom_call.1} parent=59 // pred_check_branch
          %7551 = sbr.rel (%p7549) target = $region104
        $region103: #{tpu_custom_call.1} parent=59 // pred_region
          %7553 = vsyncadd %s7527, 0
          %s7554 = smul.addr %s38, 8
          %s7555 = scalar_lea.hbm %s11, %s7554
          %s7556 = sshll.u32 %s7530, 4
          %s7557 = int_to_ptr.vmem [resolvable:$true] %s7556
          %s7558 = sshll.u32 %s7555, 4
          %s7559 = int_to_ptr.hbm [resolvable:$true] %s7558
          %7564 = dma.vmem_to_hbm [thread:$0]  %s7557, 512, %s7559, %s7527, 128, 256, 8
        $region104: #{tpu_custom_call.1} parent=59 // pred_fallthru
          _
      $region60: #{tpu_custom_call.1} parent=5 // pred_fallthru
        _
      %p7565 = scmp.le.s32.totalorder 2, %s33
      // Predicated region
      $region105: #{tpu_custom_call.1} parent=5 // pred_check
        %p7566 = pneg %p7565
      $region106: #{tpu_custom_call.1} parent=5 // pred_check_branch
        %7568 = sbr.rel (%p7566) target = $region108
      $region107: #{tpu_custom_call.1} parent=5 // pred_region
        %s7569 = ssub.s32 %s33, 2
        // Predicated region
        $region109: #{tpu_custom_call.1} parent=107 // pred_check
          %p7570 = pneg %p282
        $region110: #{tpu_custom_call.1} parent=107 // pred_check_branch
          %7572 = sbr.rel (%p7570) target = $region112
        $region111: #{tpu_custom_call.1} parent=107 // pred_region
          %s7573 = sand.u32 %s267, 1
          %s7574 = scalar_lea.sflag [#allocation4], %s7573
          %s7575 = sand.u32 %s267, 1
          %s7576 = smul.addr %s7575, 128
          %s7577 = scalar_lea.vmem [#allocation17], %s7576
          %7579 = dma.done %s7574, 2048
        $region112: #{tpu_custom_call.1} parent=107 // pred_fallthru
          _
        // Predicated region
        $region113: #{tpu_custom_call.1} parent=107 // pred_check
          %p7580 = pneg %p308
        $region114: #{tpu_custom_call.1} parent=107 // pred_check_branch
          %7582 = sbr.rel (%p7580) target = $region116
        $region115: #{tpu_custom_call.1} parent=107 // pred_region
          %s7583 = sand.u32 %s293, 1
          %s7584 = scalar_lea.sflag [#allocation19], %s7583
          %s7585 = sand.u32 %s293, 1
          %s7586 = smul.addr %s7585, 32
          %s7587 = scalar_lea.vmem [#allocation18], %s7586
          %7589 = dma.done %s7584, 512
        $region116: #{tpu_custom_call.1} parent=107 // pred_fallthru
          _
      $region108: #{tpu_custom_call.1} parent=5 // pred_fallthru
        _
    $region6: #{tpu_custom_call.1} parent=1 // loop_footer
      %s37 = sadd.s32 1, %s33
    $region7: #{tpu_custom_call.1} parent=1 // loop_footer_branch
      %32 = sbr.rel target = $region3
    $region8: #{tpu_custom_call.1} parent=1 // loop_exit
      _
    %7590 = vsyncpa [#allocation3], 1
    %s7591 = scalar_lea.sflag [#allocation3], 1
    %7592 = vsyncpa %s7591, 1
    %7593 = vsyncpa [#allocation6], 1
    %s7594 = scalar_lea.sflag [#allocation6], 1
    %7595 = vsyncpa %s7594, 1
    %7596 = vsyncpa [#allocation9], 1
    %7597 = vsyncpa [#allocation12], 1
    %7598 = vsyncpa [#allocation15], 1
    %7599 = vsyncpa [#allocation4], 1
    %s7600 = scalar_lea.sflag [#allocation4], 1
    %7601 = vsyncpa %s7600, 1
    %7602 = vsyncpa [#allocation19], 1
    %s7603 = scalar_lea.sflag [#allocation19], 1
    %7604 = vsyncpa %s7603, 1

</llo_original>
